<compile_context>
chip_gen: v5e
topology: v5e:2x2
jax: 0.10.0
libtpu: 0.0.40
codegen_flags: <defaults>
</compile_context>

<pallas_src>
import math

import numpy as np
import jax
import jax.numpy as jnp
from jax.experimental import pallas as pl
from jax.experimental.pallas import tpu as pltpu

EPS = 1e-5
MXU_DTYPE = jnp.bfloat16   # conv matmul operand dtype; epilogue stays f32 (OK on v5e/v6e/v7x)


# ============================================================================
# Parameters (deterministic kaiming-style conv init; BN gamma=1, beta=0 as in
# nn.BatchNorm2d.__init__).  PyTorch weight layout (Cout, Cin, kh, kw).
# ============================================================================
def _conv_init(key, cout, cin, k):
    fan_in = cin * k * k
    return jax.random.normal(key, (cout, cin, k, k), jnp.float32) * math.sqrt(2.0 / fan_in)


def make_basic_block_params(key, in_planes, planes, stride):
    k1, k2, k3 = jax.random.split(key, 3)
    p = {
        "stride": stride,
        "conv1_w": _conv_init(k1, planes, in_planes, 3),
        "bn1_g": jnp.ones((planes,), jnp.float32),
        "bn1_b": jnp.zeros((planes,), jnp.float32),
        "conv2_w": _conv_init(k2, planes, planes, 3),
        "bn2_g": jnp.ones((planes,), jnp.float32),
        "bn2_b": jnp.zeros((planes,), jnp.float32),
        "downsample": None,
    }
    if stride != 1 or in_planes != planes:   # BasicBlock.expansion == 1
        p["downsample"] = {
            "conv_w": _conv_init(k3, planes, in_planes, 1),
            "bn_g": jnp.ones((planes,), jnp.float32),
            "bn_b": jnp.zeros((planes,), jnp.float32),
        }
    return p


def make_backbone_params(key, scale_macrokernel=16, num_blocks=(1, 1, 1, 1)):
    keys = jax.random.split(key, 16)
    ki = iter(range(16))
    c0 = int(64 / scale_macrokernel)
    params = {
        "conv1_w": _conv_init(keys[next(ki)], c0, 3, 3),
        "bn1_g": jnp.ones((c0,), jnp.float32),
        "bn1_b": jnp.zeros((c0,), jnp.float32),
        "layers": [],
    }
    in_planes = c0
    plane_list = [int(64 / scale_macrokernel), int(128 / scale_macrokernel),
                  int(256 / scale_macrokernel), int(512 / scale_macrokernel)]
    stride_list = [1, 2, 2, 2]
    for planes, nb, s in zip(plane_list, num_blocks, stride_list):
        strides = [s] + [1] * (nb - 1)
        layer = []
        for st in strides:
            layer.append(make_basic_block_params(keys[next(ki)], in_planes, planes, st))
            in_planes = planes
        params["layers"].append(layer)
    return params


# ============================================================================
# Host-side packing.
#
# In-kernel activation layout (per tensor): a zero-padded 2-D f32 buffer of shape
#   (N * (H + 2), (W + 2) * C)   with   buf[n*(H+2) + r, q*C + c] = xpad[n, r, q, c]
# (r, q are *padded* spatial coords, border is zero).
#
# A 3x3 conv (pad=1, stride=s) is then, per image n and per vertical tap di:
#   rows  = the Ho rows  (s*i + di)           of that image's padded block
#   Y    += rows @ Wdi                        where Wdi is a host-built "banded" matrix
#           Wdi[q*Cin + ci, j*Cout + co] = w[co, ci, di, q - s*j]  (0 if q - s*j not in {0,1,2})
# which simultaneously applies the horizontal taps, the stride subsampling along W and the
# channel mixing.  For stride 2 the row selection is a (Ho, Hp) 0/1 matrix applied on the left.
# The 1x1 downsample is a single such banded matmul.
# ============================================================================
def _prep(params, N, H, W):
    w_mats, aux_mats = [], []

    def _pad8(m):
        pad = (-m.shape[0]) % 8
        return np.pad(m, ((0, pad), (0, 0))) if pad else m

    def add_w(m):
        off = sum(x.shape[0] for x in w_mats)
        w_mats.append(_pad8(np.asarray(m, np.float32)))
        return off

    def add_aux(m):
        m = np.asarray(m, np.float32)
        if m.ndim == 1:
            m = m[None, :]
        off = sum(x.shape[0] for x in aux_mats)
        aux_mats.append(_pad8(m))
        return off

    ppt_cache = {}

    def get_ppt(Wo, Cout):
        key = (Wo, Cout)
        if key not in ppt_cache:
            P = np.tile(np.eye(Cout, dtype=np.float32), (Wo, 1))     # (Wo*Cout, Cout)
            ppt_cache[key] = (add_aux(P), add_aux(P.T))
        return ppt_cache[key]

    sel_cache = {}

    def get_sel(Ho, Hp, stride, di):
        key = (Ho, Hp, stride, di)
        if key not in sel_cache:
            S = np.zeros((Ho, Hp), np.float32)
            for i in range(Ho):
                S[i, stride * i + di] = 1.0
            sel_cache[key] = add_aux(S)
        return sel_cache[key]

    def conv3x3_spec(w, Hin, Win, Cin, Cout, stride, gamma, beta):
        wn = np.asarray(w, np.float32)                 # (Cout, Cin, 3, 3)
        Hp, Wp = Hin + 2, Win + 2
        Ho = (Hin - 1) // stride + 1
        Wo = (Win - 1) // stride + 1
        w_offs = []
        for di in range(3):
            m = np.zeros((Wp, Cin, Wo, Cout), np.float32)
            for j in range(Wo):
                for dj in range(3):
                    m[stride * j + dj, :, j, :] = wn[:, :, di, dj].T
            w_offs.append(add_w(m.reshape(Wp * Cin, Wo * Cout)))
        sel_offs = [get_sel(Ho, Hp, stride, di) for di in range(3)] if stride != 1 else None
        p_off, pt_off = get_ppt(Wo, Cout)
        return dict(kind=3, w_offs=w_offs, w_rows=Wp * Cin, stride=stride,
                    Hp=Hp, Ho=Ho, Wo=Wo, Cout=Cout, width=Wo * Cout,
                    sel_offs=sel_offs, p_off=p_off, pt_off=pt_off,
                    g_off=add_aux(gamma), b_off=add_aux(beta))

    def conv1x1_spec(w, Hin, Win, Cin, Cout, stride, gamma, beta):
        wn = np.asarray(w, np.float32)                 # (Cout, Cin, 1, 1)
        Hp, Wp = Hin + 2, Win + 2
        Ho = (Hin - 1) // stride + 1
        Wo = (Win - 1) // stride + 1
        m = np.zeros((Wp, Cin, Wo, Cout), np.float32)
        for j in range(Wo):
            m[stride * j + 1, :, j, :] = wn[:, :, 0, 0].T
        w_off = add_w(m.reshape(Wp * Cin, Wo * Cout))
        sel_offs = [get_sel(Ho, Hp, stride, 1)] if stride != 1 else None
        p_off, pt_off = get_ppt(Wo, Cout)
        return dict(kind=1, w_offs=[w_off], w_rows=Wp * Cin, stride=stride,
                    Hp=Hp, Ho=Ho, Wo=Wo, Cout=Cout, width=Wo * Cout,
                    sel_offs=sel_offs, p_off=p_off, pt_off=pt_off,
                    g_off=add_aux(gamma), b_off=add_aux(beta))

    buffers = []

    def new_buf(Hout, Wout, Cout):
        buffers.append((N * (Hout + 2), (Wout + 2) * Cout))
        return len(buffers) - 1

    # ---- stem ----
    c0 = params["conv1_w"].shape[0]
    stem = conv3x3_spec(params["conv1_w"], H, W, 3, c0, 1, params["bn1_g"], params["bn1_b"])
    stem_buf = new_buf(stem["Ho"], stem["Wo"], c0)

    # ---- residual blocks ----
    blocks = []
    curH, curW, curC = stem["Ho"], stem["Wo"], c0
    flat_blocks = [bp for layer in params["layers"] for bp in layer]
    for idx, bp in enumerate(flat_blocks):
        planes = bp["conv1_w"].shape[0]
        stride = bp["stride"]
        c1 = conv3x3_spec(bp["conv1_w"], curH, curW, curC, planes, stride,
                          bp["bn1_g"], bp["bn1_b"])
        c2 = conv3x3_spec(bp["conv2_w"], c1["Ho"], c1["Wo"], planes, planes, 1,
                          bp["bn2_g"], bp["bn2_b"])
        ds = None
        if bp["downsample"] is not None:
            d = bp["downsample"]
            ds = conv1x1_spec(d["conv_w"], curH, curW, curC, planes, stride,
                              d["bn_g"], d["bn_b"])
        mid_buf = new_buf(c1["Ho"], c1["Wo"], planes)
        is_last = idx == len(flat_blocks) - 1
        out_buf = None if is_last else new_buf(c2["Ho"], c2["Wo"], planes)
        blocks.append(dict(conv1=c1, conv2=c2, ds=ds,
                           Hin=curH, Win=curW, Cin=curC, Hp_in=curH + 2,
                           mid_buf=mid_buf, out_buf=out_buf))
        curH, curW, curC = c2["Ho"], c2["Wo"], planes

    # ---- pack everything into two rectangular arrays ----
    w_cols = max(m.shape[1] for m in w_mats)
    w_packed = np.zeros((sum(m.shape[0] for m in w_mats), w_cols), np.float32)
    r = 0
    for m in w_mats:
        w_packed[r:r + m.shape[0], :m.shape[1]] = m
        r += m.shape[0]

    aux_cols = max(m.shape[1] for m in aux_mats)
    aux_packed = np.zeros((sum(m.shape[0] for m in aux_mats), aux_cols), np.float32)
    r = 0
    for m in aux_mats:
        aux_packed[r:r + m.shape[0], :m.shape[1]] = m
        r += m.shape[0]

    plan = dict(N=N, stem=stem, stem_buf=stem_buf, blocks=blocks, buffers=buffers,
                outH=curH, outW=curW, outC=curC)
    return (jnp.asarray(w_packed, dtype=MXU_DTYPE),     # bf16 weights for the MXU
            jnp.asarray(aux_packed, dtype=jnp.float32),  # exact 0/1 / gamma / beta tables
            plan)


# ============================================================================
# The single fused kernel.
# ============================================================================
def _make_kernel(plan):
    N = plan["N"]

    def kernel(x_ref, w_ref, aux_ref, out_ref, *bufs):
        # Zero every scratch buffer once (the borders of the padded activation
        # buffers must be exactly zero; interiors are overwritten below).
        for b in bufs:
            b[...] = jnp.zeros_like(b)

        def wmat(off, rows, cols):
            return w_ref[off:off + rows, 0:cols]           # bf16 value

        def aux(off, rows, cols):
            return aux_ref[off:off + rows, 0:cols]          # f32 value

        def conv(cd, src):
            """Raw conv, no BN.  Returns a list of N values, each (Ho, Wo*Cout) f32."""
            Hp, Ho, stride = cd["Hp"], cd["Ho"], cd["stride"]
            taps = range(3) if cd["kind"] == 3 else (0,)
            ys = []
            for n in range(N):
                base = n * Hp
                full_img = src[base:base + Hp, :] if stride != 1 else None
                acc = None
                for t_i, di in enumerate(taps):
                    if stride == 1:
                        r0 = base + (di if cd["kind"] == 3 else 1)
                        xs = src[r0:r0 + Ho, :]
                    else:
                        sel = aux(cd["sel_offs"][t_i], Ho, Hp)
                        xs = jnp.dot(sel, full_img, preferred_element_type=jnp.float32)
                    t = jnp.dot(xs.astype(MXU_DTYPE),
                                wmat(cd["w_offs"][t_i], cd["w_rows"], cd["width"]),
                                preferred_element_type=jnp.float32)
                    acc = t if acc is None else acc + t
                ys.append(acc)
            return ys

        def bn(cd, ys, relu, residuals=None):
            """Training-mode BatchNorm (batch stats, biased var) + residual + ReLU. f32."""
            Ho, Wo, Cout, width = cd["Ho"], cd["Wo"], cd["Cout"], cd["width"]
            inv_cnt = 1.0 / float(N * Ho * Wo)
            P = aux(cd["p_off"], width, Cout)      # (Wo*Cout, Cout) channel-pooling matrix
            PT = aux(cd["pt_off"], Cout, width)    # (Cout, Wo*Cout) channel-broadcast matrix
            col_sum = jnp.sum(ys[0], axis=0, keepdims=True)
            for n in range(1, N):
                col_sum = col_sum + jnp.sum(ys[n], axis=0, keepdims=True)
            mean_c = jnp.dot(col_sum, P, preferred_element_type=jnp.float32) * inv_cnt
            mean_il = jnp.dot(mean_c, PT, preferred_element_type=jnp.float32)
            cs = [y - mean_il for y in ys]
            sq_sum = jnp.sum(cs[0] * cs[0], axis=0, keepdims=True)
            for n in range(1, N):
                sq_sum = sq_sum + jnp.sum(cs[n] * cs[n], axis=0, keepdims=True)
            var_c = jnp.dot(sq_sum, P, preferred_element_type=jnp.float32) * inv_cnt
            inv_std = jax.lax.rsqrt(var_c + EPS)                     # EUP
            gamma = aux(cd["g_off"], 1, Cout)
            beta = aux(cd["b_off"], 1, Cout)
            scale_il = jnp.dot(gamma * inv_std, PT, preferred_element_type=jnp.float32)
            shift_il = jnp.dot(beta, PT, preferred_element_type=jnp.float32)
            outs = []
            for n in range(N):
                o = cs[n] * scale_il + shift_il
                if residuals is not None:
                    o = o + residuals[n]
                if relu:
                    o = jnp.maximum(o, 0.0)
                outs.append(o)
            return outs

        def store_padded(buf, cd, vals):
            HpO = cd["Ho"] + 2
            Cout, Wo = cd["Cout"], cd["Wo"]
            for n in range(N):
                r0 = n * HpO + 1
                buf[r0:r0 + cd["Ho"], Cout:Cout + Wo * Cout] = vals[n]

        def read_interior(src, Hp, Hin, Win, Cin):
            return [src[n * Hp + 1:n * Hp + 1 + Hin, Cin:Cin + Win * Cin]
                    for n in range(N)]

        # ---- stem: conv1 + bn1 + relu ----
        stem = plan["stem"]
        acts = bn(stem, conv(stem, x_ref), relu=True)
        store_padded(bufs[plan["stem_buf"]], stem, acts)
        cur = plan["stem_buf"]

        # ---- BasicBlocks ----
        for blk in plan["blocks"]:
            src = bufs[cur]
            c1, c2, ds = blk["conv1"], blk["conv2"], blk["ds"]

            y1 = bn(c1, conv(c1, src), relu=True)            # conv1 + bn1 + relu
            store_padded(bufs[blk["mid_buf"]], c1, y1)

            if ds is None:                                   # shortcut (captured from src)
                shortcut = read_interior(src, blk["Hp_in"], blk["Hin"], blk["Win"], blk["Cin"])
            else:
                shortcut = bn(ds, conv(ds, src), relu=False)  # conv1x1 + bn (no relu)

            # conv2 + bn2 + residual + relu
            y2 = bn(c2, conv(c2, bufs[blk["mid_buf"]]), relu=True, residuals=shortcut)

            if blk["out_buf"] is not None:
                store_padded(bufs[blk["out_buf"]], c2, y2)
                cur = blk["out_buf"]
            else:                                            # last block -> kernel output
                Ho = c2["Ho"]
                for n in range(N):
                    out_ref[n * Ho:(n + 1) * Ho, :] = y2[n]

    return kernel


# ============================================================================
# Forward pass: (one-time) input layout prep -> single fused pallas_call -> un-interleave.
# ============================================================================
def tiny_resnet_backbone_forward(x_nchw, w_packed, aux_packed, plan):
    N, Cin, H, W = x_nchw.shape
    # NCHW -> zero-padded interleaved layout (N*(H+2), (W+2)*Cin), done once in XLA.
    x = jnp.transpose(x_nchw, (0, 2, 3, 1)).astype(jnp.float32)
    x = jnp.pad(x, ((0, 0), (1, 1), (1, 1), (0, 0)))
    x2d = x.reshape(N * (H + 2), (W + 2) * Cin)

    out_rows = plan["N"] * plan["outH"]
    out_cols = plan["outW"] * plan["outC"]

    out2d = pl.pallas_call(
        _make_kernel(plan),
        out_shape=jax.ShapeDtypeStruct((out_rows, out_cols), jnp.float32),
        in_specs=[
            pl.BlockSpec(x2d.shape, lambda: (0, 0)),
            pl.BlockSpec(w_packed.shape, lambda: (0, 0)),
            pl.BlockSpec(aux_packed.shape, lambda: (0, 0)),
        ],
        out_specs=pl.BlockSpec((out_rows, out_cols), lambda: (0, 0)),
        scratch_shapes=[pltpu.VMEM(shape, jnp.float32) for shape in plan["buffers"]],
    )(x2d, w_packed, aux_packed)

    out = out2d.reshape(plan["N"], plan["outH"], plan["outW"], plan["outC"])
    return jnp.transpose(out, (0, 3, 1, 2))   # back to NCHW


if __name__ == "__main__":
    key = jax.random.PRNGKey(0)
    kx, kp = jax.random.split(key)

    # scale_macrokernel=16, block=BasicBlock, num_blocks=[1,1,1,1]
    params = make_backbone_params(kp, scale_macrokernel=16, num_blocks=(1, 1, 1, 1))
    x = jax.random.normal(kx, (2, 3, 16, 16), jnp.float32)   # NCHW

    # Host-side weight packing happens once, outside the jitted forward.
    w_packed, aux_packed, plan = _prep(params, N=2, H=16, W=16)

    fwd = jax.jit(lambda inp: tiny_resnet_backbone_forward(inp, w_packed, aux_packed, plan))
    out = fwd(x)
    jax.block_until_ready(out)

    assert out.shape == (2, 32, 2, 2), out.shape
    assert bool(jnp.all(jnp.isfinite(out)))
    print("KERNEL_OK")
</pallas_src>

<mosaic_0001>
module attributes {stable_mosaic.version = 11 : i64} {
  func.func @kernel(%arg0: memref<36x54xf32, #tpu.memory_space<vmem>>, %arg1: memref<2504x64xbf16, #tpu.memory_space<vmem>>, %arg2: memref<584x64xf32, #tpu.memory_space<vmem>>, %arg3: memref<4x64xf32, #tpu.memory_space<vmem>>, %arg4: memref<36x72xf32, #tpu.memory_space<vmem>>, %arg5: memref<36x72xf32, #tpu.memory_space<vmem>>, %arg6: memref<36x72xf32, #tpu.memory_space<vmem>>, %arg7: memref<20x80xf32, #tpu.memory_space<vmem>>, %arg8: memref<20x80xf32, #tpu.memory_space<vmem>>, %arg9: memref<12x96xf32, #tpu.memory_space<vmem>>, %arg10: memref<12x96xf32, #tpu.memory_space<vmem>>, %arg11: memref<8x128xf32, #tpu.memory_space<vmem>>) attributes {dimension_semantics = [], scalar_prefetch = 0 : i64, scratch_operands = 8 : i64, tpu.core_type = #tpu.core_type<tc>} {
    %cst = arith.constant 0.000000e+00 : f32
    %0 = vector.broadcast %cst : f32 to vector<36x72xf32>
    %c0 = arith.constant 0 : index
    %c0_0 = arith.constant 0 : index
    %1 = vector.load %arg4[%c0, %c0_0] : memref<36x72xf32, #tpu.memory_space<vmem>>, vector<36x72xf32>
    tpu.vector_store %arg4[%c0, %c0_0], %0 {strides = array<i32>} : memref<36x72xf32, #tpu.memory_space<vmem>>, vector<36x72xf32>,
    %cst_1 = arith.constant 0.000000e+00 : f32
    %2 = vector.broadcast %cst_1 : f32 to vector<36x72xf32>
    %c0_2 = arith.constant 0 : index
    %c0_3 = arith.constant 0 : index
    %3 = vector.load %arg5[%c0_2, %c0_3] : memref<36x72xf32, #tpu.memory_space<vmem>>, vector<36x72xf32>
    tpu.vector_store %arg5[%c0_2, %c0_3], %2 {strides = array<i32>} : memref<36x72xf32, #tpu.memory_space<vmem>>, vector<36x72xf32>,
    %cst_4 = arith.constant 0.000000e+00 : f32
    %4 = vector.broadcast %cst_4 : f32 to vector<36x72xf32>
    %c0_5 = arith.constant 0 : index
    %c0_6 = arith.constant 0 : index
    %5 = vector.load %arg6[%c0_5, %c0_6] : memref<36x72xf32, #tpu.memory_space<vmem>>, vector<36x72xf32>
    tpu.vector_store %arg6[%c0_5, %c0_6], %4 {strides = array<i32>} : memref<36x72xf32, #tpu.memory_space<vmem>>, vector<36x72xf32>,
    %cst_7 = arith.constant 0.000000e+00 : f32
    %6 = vector.broadcast %cst_7 : f32 to vector<20x80xf32>
    %c0_8 = arith.constant 0 : index
    %c0_9 = arith.constant 0 : index
    %7 = vector.load %arg7[%c0_8, %c0_9] : memref<20x80xf32, #tpu.memory_space<vmem>>, vector<20x80xf32>
    tpu.vector_store %arg7[%c0_8, %c0_9], %6 {strides = array<i32>} : memref<20x80xf32, #tpu.memory_space<vmem>>, vector<20x80xf32>,
    %cst_10 = arith.constant 0.000000e+00 : f32
    %8 = vector.broadcast %cst_10 : f32 to vector<20x80xf32>
    %c0_11 = arith.constant 0 : index
    %c0_12 = arith.constant 0 : index
    %9 = vector.load %arg8[%c0_11, %c0_12] : memref<20x80xf32, #tpu.memory_space<vmem>>, vector<20x80xf32>
    tpu.vector_store %arg8[%c0_11, %c0_12], %8 {strides = array<i32>} : memref<20x80xf32, #tpu.memory_space<vmem>>, vector<20x80xf32>,
    %cst_13 = arith.constant 0.000000e+00 : f32
    %10 = vector.broadcast %cst_13 : f32 to vector<12x96xf32>
    %c0_14 = arith.constant 0 : index
    %c0_15 = arith.constant 0 : index
    %11 = vector.load %arg9[%c0_14, %c0_15] : memref<12x96xf32, #tpu.memory_space<vmem>>, vector<12x96xf32>
    tpu.vector_store %arg9[%c0_14, %c0_15], %10 {strides = array<i32>} : memref<12x96xf32, #tpu.memory_space<vmem>>, vector<12x96xf32>,
    %cst_16 = arith.constant 0.000000e+00 : f32
    %12 = vector.broadcast %cst_16 : f32 to vector<12x96xf32>
    %c0_17 = arith.constant 0 : index
    %c0_18 = arith.constant 0 : index
    %13 = vector.load %arg10[%c0_17, %c0_18] : memref<12x96xf32, #tpu.memory_space<vmem>>, vector<12x96xf32>
    tpu.vector_store %arg10[%c0_17, %c0_18], %12 {strides = array<i32>} : memref<12x96xf32, #tpu.memory_space<vmem>>, vector<12x96xf32>,
    %cst_19 = arith.constant 0.000000e+00 : f32
    %14 = vector.broadcast %cst_19 : f32 to vector<8x128xf32>
    %c0_20 = arith.constant 0 : index
    %c0_21 = arith.constant 0 : index
    %15 = vector.load %arg11[%c0_20, %c0_21] : memref<8x128xf32, #tpu.memory_space<vmem>>, vector<8x128xf32>
    tpu.vector_store %arg11[%c0_20, %c0_21], %14 {strides = array<i32>} : memref<8x128xf32, #tpu.memory_space<vmem>>, vector<8x128xf32>,
    %c0_22 = arith.constant 0 : index
    %c0_23 = arith.constant 0 : index
    %16 = vector.load %arg0[%c0_22, %c0_23] : memref<36x54xf32, #tpu.memory_space<vmem>>, vector<16x54xf32>
    %17 = arith.truncf %16 : vector<16x54xf32> to vector<16x54xbf16>
    %c0_24 = arith.constant 0 : index
    %c0_25 = arith.constant 0 : index
    %18 = vector.load %arg1[%c0_24, %c0_25] : memref<2504x64xbf16, #tpu.memory_space<vmem>>, vector<54x64xbf16>
    %cst_26 = arith.constant dense<0.000000e+00> : vector<16x64xf32>
    %19 = tpu.matmul %17, %18, %cst_26 {dimension_numbers = #tpu.dot_dimension_numbers<[1], [0], [0], [1], [0, 0, 1, 1], [], []>} : vector<16x54xbf16>, vector<54x64xbf16>, vector<16x64xf32> -> vector<16x64xf32>
    %c1 = arith.constant 1 : index
    %c0_27 = arith.constant 0 : index
    %20 = vector.load %arg0[%c1, %c0_27] : memref<36x54xf32, #tpu.memory_space<vmem>>, vector<16x54xf32>
    %21 = arith.truncf %20 : vector<16x54xf32> to vector<16x54xbf16>
    %c56 = arith.constant 56 : index
    %c0_28 = arith.constant 0 : index
    %22 = vector.load %arg1[%c56, %c0_28] : memref<2504x64xbf16, #tpu.memory_space<vmem>>, vector<54x64xbf16>
    %cst_29 = arith.constant dense<0.000000e+00> : vector<16x64xf32>
    %23 = tpu.matmul %21, %22, %cst_29 {dimension_numbers = #tpu.dot_dimension_numbers<[1], [0], [0], [1], [0, 0, 1, 1], [], []>} : vector<16x54xbf16>, vector<54x64xbf16>, vector<16x64xf32> -> vector<16x64xf32>
    %24 = arith.addf %19, %23 : vector<16x64xf32>
    %c2 = arith.constant 2 : index
    %c0_30 = arith.constant 0 : index
    %25 = vector.load %arg0[%c2, %c0_30] : memref<36x54xf32, #tpu.memory_space<vmem>>, vector<16x54xf32>
    %26 = arith.truncf %25 : vector<16x54xf32> to vector<16x54xbf16>
    %c112 = arith.constant 112 : index
    %c0_31 = arith.constant 0 : index
    %27 = vector.load %arg1[%c112, %c0_31] : memref<2504x64xbf16, #tpu.memory_space<vmem>>, vector<54x64xbf16>
    %cst_32 = arith.constant dense<0.000000e+00> : vector<16x64xf32>
    %28 = tpu.matmul %26, %27, %cst_32 {dimension_numbers = #tpu.dot_dimension_numbers<[1], [0], [0], [1], [0, 0, 1, 1], [], []>} : vector<16x54xbf16>, vector<54x64xbf16>, vector<16x64xf32> -> vector<16x64xf32>
    %29 = arith.addf %24, %28 : vector<16x64xf32>
    %c18 = arith.constant 18 : index
    %c0_33 = arith.constant 0 : index
    %30 = vector.load %arg0[%c18, %c0_33] : memref<36x54xf32, #tpu.memory_space<vmem>>, vector<16x54xf32>
    %31 = arith.truncf %30 : vector<16x54xf32> to vector<16x54xbf16>
    %c0_34 = arith.constant 0 : index
    %c0_35 = arith.constant 0 : index
    %32 = vector.load %arg1[%c0_34, %c0_35] : memref<2504x64xbf16, #tpu.memory_space<vmem>>, vector<54x64xbf16>
    %cst_36 = arith.constant dense<0.000000e+00> : vector<16x64xf32>
    %33 = tpu.matmul %31, %32, %cst_36 {dimension_numbers = #tpu.dot_dimension_numbers<[1], [0], [0], [1], [0, 0, 1, 1], [], []>} : vector<16x54xbf16>, vector<54x64xbf16>, vector<16x64xf32> -> vector<16x64xf32>
    %c19 = arith.constant 19 : index
    %c0_37 = arith.constant 0 : index
    %34 = vector.load %arg0[%c19, %c0_37] : memref<36x54xf32, #tpu.memory_space<vmem>>, vector<16x54xf32>
    %35 = arith.truncf %34 : vector<16x54xf32> to vector<16x54xbf16>
    %c56_38 = arith.constant 56 : index
    %c0_39 = arith.constant 0 : index
    %36 = vector.load %arg1[%c56_38, %c0_39] : memref<2504x64xbf16, #tpu.memory_space<vmem>>, vector<54x64xbf16>
    %cst_40 = arith.constant dense<0.000000e+00> : vector<16x64xf32>
    %37 = tpu.matmul %35, %36, %cst_40 {dimension_numbers = #tpu.dot_dimension_numbers<[1], [0], [0], [1], [0, 0, 1, 1], [], []>} : vector<16x54xbf16>, vector<54x64xbf16>, vector<16x64xf32> -> vector<16x64xf32>
    %38 = arith.addf %33, %37 : vector<16x64xf32>
    %c20 = arith.constant 20 : index
    %c0_41 = arith.constant 0 : index
    %39 = vector.load %arg0[%c20, %c0_41] : memref<36x54xf32, #tpu.memory_space<vmem>>, vector<16x54xf32>
    %40 = arith.truncf %39 : vector<16x54xf32> to vector<16x54xbf16>
    %c112_42 = arith.constant 112 : index
    %c0_43 = arith.constant 0 : index
    %41 = vector.load %arg1[%c112_42, %c0_43] : memref<2504x64xbf16, #tpu.memory_space<vmem>>, vector<54x64xbf16>
    %cst_44 = arith.constant dense<0.000000e+00> : vector<16x64xf32>
    %42 = tpu.matmul %40, %41, %cst_44 {dimension_numbers = #tpu.dot_dimension_numbers<[1], [0], [0], [1], [0, 0, 1, 1], [], []>} : vector<16x54xbf16>, vector<54x64xbf16>, vector<16x64xf32> -> vector<16x64xf32>
    %43 = arith.addf %38, %42 : vector<16x64xf32>
    %c0_45 = arith.constant 0 : index
    %c0_46 = arith.constant 0 : index
    %44 = vector.load %arg2[%c0_45, %c0_46] : memref<584x64xf32, #tpu.memory_space<vmem>>, vector<64x4xf32>
    %c64 = arith.constant 64 : index
    %c0_47 = arith.constant 0 : index
    %45 = vector.load %arg2[%c64, %c0_47] : memref<584x64xf32, #tpu.memory_space<vmem>>, vector<4x64xf32>
    %cst_48 = arith.constant dense<0.000000e+00> : vector<64xf32>
    %46 = vector.multi_reduction <add>, %29, %cst_48 [0] : vector<16x64xf32> to vector<64xf32>
    %47 = vector.shape_cast %46 : vector<64xf32> to vector<1x64xf32>
    %cst_49 = arith.constant dense<0.000000e+00> : vector<64xf32>
    %48 = vector.multi_reduction <add>, %43, %cst_49 [0] : vector<16x64xf32> to vector<64xf32>
    %49 = vector.shape_cast %48 : vector<64xf32> to vector<1x64xf32>
    %50 = arith.addf %47, %49 : vector<1x64xf32>
    %cst_50 = arith.constant dense<0.000000e+00> : vector<1x4xf32>
    %51 = tpu.matmul %50, %44, %cst_50 {dimension_numbers = #tpu.dot_dimension_numbers<[1], [0], [0], [1], [0, 0, 1, 1], [], []>} : vector<1x64xf32>, vector<64x4xf32>, vector<1x4xf32> -> vector<1x4xf32>
    %cst_51 = arith.constant 0.001953125 : f32
    %52 = vector.broadcast %cst_51 : f32 to vector<1x4xf32>
    %53 = arith.mulf %51, %52 : vector<1x4xf32>
    %cst_52 = arith.constant dense<0.000000e+00> : vector<1x64xf32>
    %54 = tpu.matmul %53, %45, %cst_52 {dimension_numbers = #tpu.dot_dimension_numbers<[1], [0], [0], [1], [0, 0, 1, 1], [], []>} : vector<1x4xf32>, vector<4x64xf32>, vector<1x64xf32> -> vector<1x64xf32>
    %55 = vector.broadcast %54 : vector<1x64xf32> to vector<16x64xf32>
    %56 = arith.subf %29, %55 : vector<16x64xf32>
    %57 = vector.broadcast %54 : vector<1x64xf32> to vector<16x64xf32>
    %58 = arith.subf %43, %57 : vector<16x64xf32>
    %59 = arith.mulf %56, %56 : vector<16x64xf32>
    %cst_53 = arith.constant dense<0.000000e+00> : vector<64xf32>
    %60 = vector.multi_reduction <add>, %59, %cst_53 [0] : vector<16x64xf32> to vector<64xf32>
    %61 = vector.shape_cast %60 : vector<64xf32> to vector<1x64xf32>
    %62 = arith.mulf %58, %58 : vector<16x64xf32>
    %cst_54 = arith.constant dense<0.000000e+00> : vector<64xf32>
    %63 = vector.multi_reduction <add>, %62, %cst_54 [0] : vector<16x64xf32> to vector<64xf32>
    %64 = vector.shape_cast %63 : vector<64xf32> to vector<1x64xf32>
    %65 = arith.addf %61, %64 : vector<1x64xf32>
    %cst_55 = arith.constant dense<0.000000e+00> : vector<1x4xf32>
    %66 = tpu.matmul %65, %44, %cst_55 {dimension_numbers = #tpu.dot_dimension_numbers<[1], [0], [0], [1], [0, 0, 1, 1], [], []>} : vector<1x64xf32>, vector<64x4xf32>, vector<1x4xf32> -> vector<1x4xf32>
    %cst_56 = arith.constant 0.001953125 : f32
    %67 = vector.broadcast %cst_56 : f32 to vector<1x4xf32>
    %68 = arith.mulf %66, %67 : vector<1x4xf32>
    %cst_57 = arith.constant 9.99999974E-6 : f32
    %69 = vector.broadcast %cst_57 : f32 to vector<1x4xf32>
    %70 = arith.addf %68, %69 : vector<1x4xf32>
    %71 = math.rsqrt %70 : vector<1x4xf32>
    %c72 = arith.constant 72 : index
    %c0_58 = arith.constant 0 : index
    %72 = vector.load %arg2[%c72, %c0_58] : memref<584x64xf32, #tpu.memory_space<vmem>>, vector<1x4xf32>
    %c80 = arith.constant 80 : index
    %c0_59 = arith.constant 0 : index
    %73 = vector.load %arg2[%c80, %c0_59] : memref<584x64xf32, #tpu.memory_space<vmem>>, vector<1x4xf32>
    %74 = arith.mulf %72, %71 : vector<1x4xf32>
    %cst_60 = arith.constant dense<0.000000e+00> : vector<1x64xf32>
    %75 = tpu.matmul %74, %45, %cst_60 {dimension_numbers = #tpu.dot_dimension_numbers<[1], [0], [0], [1], [0, 0, 1, 1], [], []>} : vector<1x4xf32>, vector<4x64xf32>, vector<1x64xf32> -> vector<1x64xf32>
    %cst_61 = arith.constant dense<0.000000e+00> : vector<1x64xf32>
    %76 = tpu.matmul %73, %45, %cst_61 {dimension_numbers = #tpu.dot_dimension_numbers<[1], [0], [0], [1], [0, 0, 1, 1], [], []>} : vector<1x4xf32>, vector<4x64xf32>, vector<1x64xf32> -> vector<1x64xf32>
    %77 = vector.broadcast %75 : vector<1x64xf32> to vector<16x64xf32>
    %78 = arith.mulf %56, %77 : vector<16x64xf32>
    %79 = vector.broadcast %76 : vector<1x64xf32> to vector<16x64xf32>
    %80 = arith.addf %78, %79 : vector<16x64xf32>
    %cst_62 = arith.constant 0.000000e+00 : f32
    %81 = vector.broadcast %cst_62 : f32 to vector<16x64xf32>
    %82 = arith.maximumf %80, %81 : vector<16x64xf32>
    %83 = vector.broadcast %75 : vector<1x64xf32> to vector<16x64xf32>
    %84 = arith.mulf %58, %83 : vector<16x64xf32>
    %85 = vector.broadcast %76 : vector<1x64xf32> to vector<16x64xf32>
    %86 = arith.addf %84, %85 : vector<16x64xf32>
    %cst_63 = arith.constant 0.000000e+00 : f32
    %87 = vector.broadcast %cst_63 : f32 to vector<16x64xf32>
    %88 = arith.maximumf %86, %87 : vector<16x64xf32>
    %c1_64 = arith.constant 1 : index
    %c4 = arith.constant 4 : index
    %89 = vector.load %arg4[%c1_64, %c4] : memref<36x72xf32, #tpu.memory_space<vmem>>, vector<16x64xf32>
    tpu.vector_store %arg4[%c1_64, %c4], %82 {strides = array<i32>} : memref<36x72xf32, #tpu.memory_space<vmem>>, vector<16x64xf32>,
    %c19_65 = arith.constant 19 : index
    %c4_66 = arith.constant 4 : index
    %90 = vector.load %arg4[%c19_65, %c4_66] : memref<36x72xf32, #tpu.memory_space<vmem>>, vector<16x64xf32>
    tpu.vector_store %arg4[%c19_65, %c4_66], %88 {strides = array<i32>} : memref<36x72xf32, #tpu.memory_space<vmem>>, vector<16x64xf32>,
    %c0_67 = arith.constant 0 : index
    %c0_68 = arith.constant 0 : index
    %91 = vector.load %arg4[%c0_67, %c0_68] : memref<36x72xf32, #tpu.memory_space<vmem>>, vector<16x72xf32>
    %92 = arith.truncf %91 : vector<16x72xf32> to vector<16x72xbf16>
    %c168 = arith.constant 168 : index
    %c0_69 = arith.constant 0 : index
    %93 = vector.load %arg1[%c168, %c0_69] : memref<2504x64xbf16, #tpu.memory_space<vmem>>, vector<72x64xbf16>
    %cst_70 = arith.constant dense<0.000000e+00> : vector<16x64xf32>
    %94 = tpu.matmul %92, %93, %cst_70 {dimension_numbers = #tpu.dot_dimension_numbers<[1], [0], [0], [1], [0, 0, 1, 1], [], []>} : vector<16x72xbf16>, vector<72x64xbf16>, vector<16x64xf32> -> vector<16x64xf32>
    %c1_71 = arith.constant 1 : index
    %c0_72 = arith.constant 0 : index
    %95 = vector.load %arg4[%c1_71, %c0_72] : memref<36x72xf32, #tpu.memory_space<vmem>>, vector<16x72xf32>
    %96 = arith.truncf %95 : vector<16x72xf32> to vector<16x72xbf16>
    %c240 = arith.constant 240 : index
    %c0_73 = arith.constant 0 : index
    %97 = vector.load %arg1[%c240, %c0_73] : memref<2504x64xbf16, #tpu.memory_space<vmem>>, vector<72x64xbf16>
    %cst_74 = arith.constant dense<0.000000e+00> : vector<16x64xf32>
    %98 = tpu.matmul %96, %97, %cst_74 {dimension_numbers = #tpu.dot_dimension_numbers<[1], [0], [0], [1], [0, 0, 1, 1], [], []>} : vector<16x72xbf16>, vector<72x64xbf16>, vector<16x64xf32> -> vector<16x64xf32>
    %99 = arith.addf %94, %98 : vector<16x64xf32>
    %c2_75 = arith.constant 2 : index
    %c0_76 = arith.constant 0 : index
    %100 = vector.load %arg4[%c2_75, %c0_76] : memref<36x72xf32, #tpu.memory_space<vmem>>, vector<16x72xf32>
    %101 = arith.truncf %100 : vector<16x72xf32> to vector<16x72xbf16>
    %c312 = arith.constant 312 : index
    %c0_77 = arith.constant 0 : index
    %102 = vector.load %arg1[%c312, %c0_77] : memref<2504x64xbf16, #tpu.memory_space<vmem>>, vector<72x64xbf16>
    %cst_78 = arith.constant dense<0.000000e+00> : vector<16x64xf32>
    %103 = tpu.matmul %101, %102, %cst_78 {dimension_numbers = #tpu.dot_dimension_numbers<[1], [0], [0], [1], [0, 0, 1, 1], [], []>} : vector<16x72xbf16>, vector<72x64xbf16>, vector<16x64xf32> -> vector<16x64xf32>
    %104 = arith.addf %99, %103 : vector<16x64xf32>
    %c18_79 = arith.constant 18 : index
    %c0_80 = arith.constant 0 : index
    %105 = vector.load %arg4[%c18_79, %c0_80] : memref<36x72xf32, #tpu.memory_space<vmem>>, vector<16x72xf32>
    %106 = arith.truncf %105 : vector<16x72xf32> to vector<16x72xbf16>
    %c168_81 = arith.constant 168 : index
    %c0_82 = arith.constant 0 : index
    %107 = vector.load %arg1[%c168_81, %c0_82] : memref<2504x64xbf16, #tpu.memory_space<vmem>>, vector<72x64xbf16>
    %cst_83 = arith.constant dense<0.000000e+00> : vector<16x64xf32>
    %108 = tpu.matmul %106, %107, %cst_83 {dimension_numbers = #tpu.dot_dimension_numbers<[1], [0], [0], [1], [0, 0, 1, 1], [], []>} : vector<16x72xbf16>, vector<72x64xbf16>, vector<16x64xf32> -> vector<16x64xf32>
    %c19_84 = arith.constant 19 : index
    %c0_85 = arith.constant 0 : index
    %109 = vector.load %arg4[%c19_84, %c0_85] : memref<36x72xf32, #tpu.memory_space<vmem>>, vector<16x72xf32>
    %110 = arith.truncf %109 : vector<16x72xf32> to vector<16x72xbf16>
    %c240_86 = arith.constant 240 : index
    %c0_87 = arith.constant 0 : index
    %111 = vector.load %arg1[%c240_86, %c0_87] : memref<2504x64xbf16, #tpu.memory_space<vmem>>, vector<72x64xbf16>
    %cst_88 = arith.constant dense<0.000000e+00> : vector<16x64xf32>
    %112 = tpu.matmul %110, %111, %cst_88 {dimension_numbers = #tpu.dot_dimension_numbers<[1], [0], [0], [1], [0, 0, 1, 1], [], []>} : vector<16x72xbf16>, vector<72x64xbf16>, vector<16x64xf32> -> vector<16x64xf32>
    %113 = arith.addf %108, %112 : vector<16x64xf32>
    %c20_89 = arith.constant 20 : index
    %c0_90 = arith.constant 0 : index
    %114 = vector.load %arg4[%c20_89, %c0_90] : memref<36x72xf32, #tpu.memory_space<vmem>>, vector<16x72xf32>
    %115 = arith.truncf %114 : vector<16x72xf32> to vector<16x72xbf16>
    %c312_91 = arith.constant 312 : index
    %c0_92 = arith.constant 0 : index
    %116 = vector.load %arg1[%c312_91, %c0_92] : memref<2504x64xbf16, #tpu.memory_space<vmem>>, vector<72x64xbf16>
    %cst_93 = arith.constant dense<0.000000e+00> : vector<16x64xf32>
    %117 = tpu.matmul %115, %116, %cst_93 {dimension_numbers = #tpu.dot_dimension_numbers<[1], [0], [0], [1], [0, 0, 1, 1], [], []>} : vector<16x72xbf16>, vector<72x64xbf16>, vector<16x64xf32> -> vector<16x64xf32>
    %118 = arith.addf %113, %117 : vector<16x64xf32>
    %c0_94 = arith.constant 0 : index
    %c0_95 = arith.constant 0 : index
    %119 = vector.load %arg2[%c0_94, %c0_95] : memref<584x64xf32, #tpu.memory_space<vmem>>, vector<64x4xf32>
    %c64_96 = arith.constant 64 : index
    %c0_97 = arith.constant 0 : index
    %120 = vector.load %arg2[%c64_96, %c0_97] : memref<584x64xf32, #tpu.memory_space<vmem>>, vector<4x64xf32>
    %cst_98 = arith.constant dense<0.000000e+00> : vector<64xf32>
    %121 = vector.multi_reduction <add>, %104, %cst_98 [0] : vector<16x64xf32> to vector<64xf32>
    %122 = vector.shape_cast %121 : vector<64xf32> to vector<1x64xf32>
    %cst_99 = arith.constant dense<0.000000e+00> : vector<64xf32>
    %123 = vector.multi_reduction <add>, %118, %cst_99 [0] : vector<16x64xf32> to vector<64xf32>
    %124 = vector.shape_cast %123 : vector<64xf32> to vector<1x64xf32>
    %125 = arith.addf %122, %124 : vector<1x64xf32>
    %cst_100 = arith.constant dense<0.000000e+00> : vector<1x4xf32>
    %126 = tpu.matmul %125, %119, %cst_100 {dimension_numbers = #tpu.dot_dimension_numbers<[1], [0], [0], [1], [0, 0, 1, 1], [], []>} : vector<1x64xf32>, vector<64x4xf32>, vector<1x4xf32> -> vector<1x4xf32>
    %cst_101 = arith.constant 0.001953125 : f32
    %127 = vector.broadcast %cst_101 : f32 to vector<1x4xf32>
    %128 = arith.mulf %126, %127 : vector<1x4xf32>
    %cst_102 = arith.constant dense<0.000000e+00> : vector<1x64xf32>
    %129 = tpu.matmul %128, %120, %cst_102 {dimension_numbers = #tpu.dot_dimension_numbers<[1], [0], [0], [1], [0, 0, 1, 1], [], []>} : vector<1x4xf32>, vector<4x64xf32>, vector<1x64xf32> -> vector<1x64xf32>
    %130 = vector.broadcast %129 : vector<1x64xf32> to vector<16x64xf32>
    %131 = arith.subf %104, %130 : vector<16x64xf32>
    %132 = vector.broadcast %129 : vector<1x64xf32> to vector<16x64xf32>
    %133 = arith.subf %118, %132 : vector<16x64xf32>
    %134 = arith.mulf %131, %131 : vector<16x64xf32>
    %cst_103 = arith.constant dense<0.000000e+00> : vector<64xf32>
    %135 = vector.multi_reduction <add>, %134, %cst_103 [0] : vector<16x64xf32> to vector<64xf32>
    %136 = vector.shape_cast %135 : vector<64xf32> to vector<1x64xf32>
    %137 = arith.mulf %133, %133 : vector<16x64xf32>
    %cst_104 = arith.constant dense<0.000000e+00> : vector<64xf32>
    %138 = vector.multi_reduction <add>, %137, %cst_104 [0] : vector<16x64xf32> to vector<64xf32>
    %139 = vector.shape_cast %138 : vector<64xf32> to vector<1x64xf32>
    %140 = arith.addf %136, %139 : vector<1x64xf32>
    %cst_105 = arith.constant dense<0.000000e+00> : vector<1x4xf32>
    %141 = tpu.matmul %140, %119, %cst_105 {dimension_numbers = #tpu.dot_dimension_numbers<[1], [0], [0], [1], [0, 0, 1, 1], [], []>} : vector<1x64xf32>, vector<64x4xf32>, vector<1x4xf32> -> vector<1x4xf32>
    %cst_106 = arith.constant 0.001953125 : f32
    %142 = vector.broadcast %cst_106 : f32 to vector<1x4xf32>
    %143 = arith.mulf %141, %142 : vector<1x4xf32>
    %cst_107 = arith.constant 9.99999974E-6 : f32
    %144 = vector.broadcast %cst_107 : f32 to vector<1x4xf32>
    %145 = arith.addf %143, %144 : vector<1x4xf32>
    %146 = math.rsqrt %145 : vector<1x4xf32>
    %c88 = arith.constant 88 : index
    %c0_108 = arith.constant 0 : index
    %147 = vector.load %arg2[%c88, %c0_108] : memref<584x64xf32, #tpu.memory_space<vmem>>, vector<1x4xf32>
    %c96 = arith.constant 96 : index
    %c0_109 = arith.constant 0 : index
    %148 = vector.load %arg2[%c96, %c0_109] : memref<584x64xf32, #tpu.memory_space<vmem>>, vector<1x4xf32>
    %149 = arith.mulf %147, %146 : vector<1x4xf32>
    %cst_110 = arith.constant dense<0.000000e+00> : vector<1x64xf32>
    %150 = tpu.matmul %149, %120, %cst_110 {dimension_numbers = #tpu.dot_dimension_numbers<[1], [0], [0], [1], [0, 0, 1, 1], [], []>} : vector<1x4xf32>, vector<4x64xf32>, vector<1x64xf32> -> vector<1x64xf32>
    %cst_111 = arith.constant dense<0.000000e+00> : vector<1x64xf32>
    %151 = tpu.matmul %148, %120, %cst_111 {dimension_numbers = #tpu.dot_dimension_numbers<[1], [0], [0], [1], [0, 0, 1, 1], [], []>} : vector<1x4xf32>, vector<4x64xf32>, vector<1x64xf32> -> vector<1x64xf32>
    %152 = vector.broadcast %150 : vector<1x64xf32> to vector<16x64xf32>
    %153 = arith.mulf %131, %152 : vector<16x64xf32>
    %154 = vector.broadcast %151 : vector<1x64xf32> to vector<16x64xf32>
    %155 = arith.addf %153, %154 : vector<16x64xf32>
    %cst_112 = arith.constant 0.000000e+00 : f32
    %156 = vector.broadcast %cst_112 : f32 to vector<16x64xf32>
    %157 = arith.maximumf %155, %156 : vector<16x64xf32>
    %158 = vector.broadcast %150 : vector<1x64xf32> to vector<16x64xf32>
    %159 = arith.mulf %133, %158 : vector<16x64xf32>
    %160 = vector.broadcast %151 : vector<1x64xf32> to vector<16x64xf32>
    %161 = arith.addf %159, %160 : vector<16x64xf32>
    %cst_113 = arith.constant 0.000000e+00 : f32
    %162 = vector.broadcast %cst_113 : f32 to vector<16x64xf32>
    %163 = arith.maximumf %161, %162 : vector<16x64xf32>
    %c1_114 = arith.constant 1 : index
    %c4_115 = arith.constant 4 : index
    %164 = vector.load %arg5[%c1_114, %c4_115] : memref<36x72xf32, #tpu.memory_space<vmem>>, vector<16x64xf32>
    tpu.vector_store %arg5[%c1_114, %c4_115], %157 {strides = array<i32>} : memref<36x72xf32, #tpu.memory_space<vmem>>, vector<16x64xf32>,
    %c19_116 = arith.constant 19 : index
    %c4_117 = arith.constant 4 : index
    %165 = vector.load %arg5[%c19_116, %c4_117] : memref<36x72xf32, #tpu.memory_space<vmem>>, vector<16x64xf32>
    tpu.vector_store %arg5[%c19_116, %c4_117], %163 {strides = array<i32>} : memref<36x72xf32, #tpu.memory_space<vmem>>, vector<16x64xf32>,
    %c1_118 = arith.constant 1 : index
    %c4_119 = arith.constant 4 : index
    %166 = vector.load %arg4[%c1_118, %c4_119] : memref<36x72xf32, #tpu.memory_space<vmem>>, vector<16x64xf32>
    %c19_120 = arith.constant 19 : index
    %c4_121 = arith.constant 4 : index
    %167 = vector.load %arg4[%c19_120, %c4_121] : memref<36x72xf32, #tpu.memory_space<vmem>>, vector<16x64xf32>
    %c0_122 = arith.constant 0 : index
    %c0_123 = arith.constant 0 : index
    %168 = vector.load %arg5[%c0_122, %c0_123] : memref<36x72xf32, #tpu.memory_space<vmem>>, vector<16x72xf32>
    %169 = arith.truncf %168 : vector<16x72xf32> to vector<16x72xbf16>
    %c384 = arith.constant 384 : index
    %c0_124 = arith.constant 0 : index
    %170 = vector.load %arg1[%c384, %c0_124] : memref<2504x64xbf16, #tpu.memory_space<vmem>>, vector<72x64xbf16>
    %cst_125 = arith.constant dense<0.000000e+00> : vector<16x64xf32>
    %171 = tpu.matmul %169, %170, %cst_125 {dimension_numbers = #tpu.dot_dimension_numbers<[1], [0], [0], [1], [0, 0, 1, 1], [], []>} : vector<16x72xbf16>, vector<72x64xbf16>, vector<16x64xf32> -> vector<16x64xf32>
    %c1_126 = arith.constant 1 : index
    %c0_127 = arith.constant 0 : index
    %172 = vector.load %arg5[%c1_126, %c0_127] : memref<36x72xf32, #tpu.memory_space<vmem>>, vector<16x72xf32>
    %173 = arith.truncf %172 : vector<16x72xf32> to vector<16x72xbf16>
    %c456 = arith.constant 456 : index
    %c0_128 = arith.constant 0 : index
    %174 = vector.load %arg1[%c456, %c0_128] : memref<2504x64xbf16, #tpu.memory_space<vmem>>, vector<72x64xbf16>
    %cst_129 = arith.constant dense<0.000000e+00> : vector<16x64xf32>
    %175 = tpu.matmul %173, %174, %cst_129 {dimension_numbers = #tpu.dot_dimension_numbers<[1], [0], [0], [1], [0, 0, 1, 1], [], []>} : vector<16x72xbf16>, vector<72x64xbf16>, vector<16x64xf32> -> vector<16x64xf32>
    %176 = arith.addf %171, %175 : vector<16x64xf32>
    %c2_130 = arith.constant 2 : index
    %c0_131 = arith.constant 0 : index
    %177 = vector.load %arg5[%c2_130, %c0_131] : memref<36x72xf32, #tpu.memory_space<vmem>>, vector<16x72xf32>
    %178 = arith.truncf %177 : vector<16x72xf32> to vector<16x72xbf16>
    %c528 = arith.constant 528 : index
    %c0_132 = arith.constant 0 : index
    %179 = vector.load %arg1[%c528, %c0_132] : memref<2504x64xbf16, #tpu.memory_space<vmem>>, vector<72x64xbf16>
    %cst_133 = arith.constant dense<0.000000e+00> : vector<16x64xf32>
    %180 = tpu.matmul %178, %179, %cst_133 {dimension_numbers = #tpu.dot_dimension_numbers<[1], [0], [0], [1], [0, 0, 1, 1], [], []>} : vector<16x72xbf16>, vector<72x64xbf16>, vector<16x64xf32> -> vector<16x64xf32>
    %181 = arith.addf %176, %180 : vector<16x64xf32>
    %c18_134 = arith.constant 18 : index
    %c0_135 = arith.constant 0 : index
    %182 = vector.load %arg5[%c18_134, %c0_135] : memref<36x72xf32, #tpu.memory_space<vmem>>, vector<16x72xf32>
    %183 = arith.truncf %182 : vector<16x72xf32> to vector<16x72xbf16>
    %c384_136 = arith.constant 384 : index
    %c0_137 = arith.constant 0 : index
    %184 = vector.load %arg1[%c384_136, %c0_137] : memref<2504x64xbf16, #tpu.memory_space<vmem>>, vector<72x64xbf16>
    %cst_138 = arith.constant dense<0.000000e+00> : vector<16x64xf32>
    %185 = tpu.matmul %183, %184, %cst_138 {dimension_numbers = #tpu.dot_dimension_numbers<[1], [0], [0], [1], [0, 0, 1, 1], [], []>} : vector<16x72xbf16>, vector<72x64xbf16>, vector<16x64xf32> -> vector<16x64xf32>
    %c19_139 = arith.constant 19 : index
    %c0_140 = arith.constant 0 : index
    %186 = vector.load %arg5[%c19_139, %c0_140] : memref<36x72xf32, #tpu.memory_space<vmem>>, vector<16x72xf32>
    %187 = arith.truncf %186 : vector<16x72xf32> to vector<16x72xbf16>
    %c456_141 = arith.constant 456 : index
    %c0_142 = arith.constant 0 : index
    %188 = vector.load %arg1[%c456_141, %c0_142] : memref<2504x64xbf16, #tpu.memory_space<vmem>>, vector<72x64xbf16>
    %cst_143 = arith.constant dense<0.000000e+00> : vector<16x64xf32>
    %189 = tpu.matmul %187, %188, %cst_143 {dimension_numbers = #tpu.dot_dimension_numbers<[1], [0], [0], [1], [0, 0, 1, 1], [], []>} : vector<16x72xbf16>, vector<72x64xbf16>, vector<16x64xf32> -> vector<16x64xf32>
    %190 = arith.addf %185, %189 : vector<16x64xf32>
    %c20_144 = arith.constant 20 : index
    %c0_145 = arith.constant 0 : index
    %191 = vector.load %arg5[%c20_144, %c0_145] : memref<36x72xf32, #tpu.memory_space<vmem>>, vector<16x72xf32>
    %192 = arith.truncf %191 : vector<16x72xf32> to vector<16x72xbf16>
    %c528_146 = arith.constant 528 : index
    %c0_147 = arith.constant 0 : index
    %193 = vector.load %arg1[%c528_146, %c0_147] : memref<2504x64xbf16, #tpu.memory_space<vmem>>, vector<72x64xbf16>
    %cst_148 = arith.constant dense<0.000000e+00> : vector<16x64xf32>
    %194 = tpu.matmul %192, %193, %cst_148 {dimension_numbers = #tpu.dot_dimension_numbers<[1], [0], [0], [1], [0, 0, 1, 1], [], []>} : vector<16x72xbf16>, vector<72x64xbf16>, vector<16x64xf32> -> vector<16x64xf32>
    %195 = arith.addf %190, %194 : vector<16x64xf32>
    %c0_149 = arith.constant 0 : index
    %c0_150 = arith.constant 0 : index
    %196 = vector.load %arg2[%c0_149, %c0_150] : memref<584x64xf32, #tpu.memory_space<vmem>>, vector<64x4xf32>
    %c64_151 = arith.constant 64 : index
    %c0_152 = arith.constant 0 : index
    %197 = vector.load %arg2[%c64_151, %c0_152] : memref<584x64xf32, #tpu.memory_space<vmem>>, vector<4x64xf32>
    %cst_153 = arith.constant dense<0.000000e+00> : vector<64xf32>
    %198 = vector.multi_reduction <add>, %181, %cst_153 [0] : vector<16x64xf32> to vector<64xf32>
    %199 = vector.shape_cast %198 : vector<64xf32> to vector<1x64xf32>
    %cst_154 = arith.constant dense<0.000000e+00> : vector<64xf32>
    %200 = vector.multi_reduction <add>, %195, %cst_154 [0] : vector<16x64xf32> to vector<64xf32>
    %201 = vector.shape_cast %200 : vector<64xf32> to vector<1x64xf32>
    %202 = arith.addf %199, %201 : vector<1x64xf32>
    %cst_155 = arith.constant dense<0.000000e+00> : vector<1x4xf32>
    %203 = tpu.matmul %202, %196, %cst_155 {dimension_numbers = #tpu.dot_dimension_numbers<[1], [0], [0], [1], [0, 0, 1, 1], [], []>} : vector<1x64xf32>, vector<64x4xf32>, vector<1x4xf32> -> vector<1x4xf32>
    %cst_156 = arith.constant 0.001953125 : f32
    %204 = vector.broadcast %cst_156 : f32 to vector<1x4xf32>
    %205 = arith.mulf %203, %204 : vector<1x4xf32>
    %cst_157 = arith.constant dense<0.000000e+00> : vector<1x64xf32>
    %206 = tpu.matmul %205, %197, %cst_157 {dimension_numbers = #tpu.dot_dimension_numbers<[1], [0], [0], [1], [0, 0, 1, 1], [], []>} : vector<1x4xf32>, vector<4x64xf32>, vector<1x64xf32> -> vector<1x64xf32>
    %207 = vector.broadcast %206 : vector<1x64xf32> to vector<16x64xf32>
    %208 = arith.subf %181, %207 : vector<16x64xf32>
    %209 = vector.broadcast %206 : vector<1x64xf32> to vector<16x64xf32>
    %210 = arith.subf %195, %209 : vector<16x64xf32>
    %211 = arith.mulf %208, %208 : vector<16x64xf32>
    %cst_158 = arith.constant dense<0.000000e+00> : vector<64xf32>
    %212 = vector.multi_reduction <add>, %211, %cst_158 [0] : vector<16x64xf32> to vector<64xf32>
    %213 = vector.shape_cast %212 : vector<64xf32> to vector<1x64xf32>
    %214 = arith.mulf %210, %210 : vector<16x64xf32>
    %cst_159 = arith.constant dense<0.000000e+00> : vector<64xf32>
    %215 = vector.multi_reduction <add>, %214, %cst_159 [0] : vector<16x64xf32> to vector<64xf32>
    %216 = vector.shape_cast %215 : vector<64xf32> to vector<1x64xf32>
    %217 = arith.addf %213, %216 : vector<1x64xf32>
    %cst_160 = arith.constant dense<0.000000e+00> : vector<1x4xf32>
    %218 = tpu.matmul %217, %196, %cst_160 {dimension_numbers = #tpu.dot_dimension_numbers<[1], [0], [0], [1], [0, 0, 1, 1], [], []>} : vector<1x64xf32>, vector<64x4xf32>, vector<1x4xf32> -> vector<1x4xf32>
    %cst_161 = arith.constant 0.001953125 : f32
    %219 = vector.broadcast %cst_161 : f32 to vector<1x4xf32>
    %220 = arith.mulf %218, %219 : vector<1x4xf32>
    %cst_162 = arith.constant 9.99999974E-6 : f32
    %221 = vector.broadcast %cst_162 : f32 to vector<1x4xf32>
    %222 = arith.addf %220, %221 : vector<1x4xf32>
    %223 = math.rsqrt %222 : vector<1x4xf32>
    %c104 = arith.constant 104 : index
    %c0_163 = arith.constant 0 : index
    %224 = vector.load %arg2[%c104, %c0_163] : memref<584x64xf32, #tpu.memory_space<vmem>>, vector<1x4xf32>
    %c112_164 = arith.constant 112 : index
    %c0_165 = arith.constant 0 : index
    %225 = vector.load %arg2[%c112_164, %c0_165] : memref<584x64xf32, #tpu.memory_space<vmem>>, vector<1x4xf32>
    %226 = arith.mulf %224, %223 : vector<1x4xf32>
    %cst_166 = arith.constant dense<0.000000e+00> : vector<1x64xf32>
    %227 = tpu.matmul %226, %197, %cst_166 {dimension_numbers = #tpu.dot_dimension_numbers<[1], [0], [0], [1], [0, 0, 1, 1], [], []>} : vector<1x4xf32>, vector<4x64xf32>, vector<1x64xf32> -> vector<1x64xf32>
    %cst_167 = arith.constant dense<0.000000e+00> : vector<1x64xf32>
    %228 = tpu.matmul %225, %197, %cst_167 {dimension_numbers = #tpu.dot_dimension_numbers<[1], [0], [0], [1], [0, 0, 1, 1], [], []>} : vector<1x4xf32>, vector<4x64xf32>, vector<1x64xf32> -> vector<1x64xf32>
    %229 = vector.broadcast %227 : vector<1x64xf32> to vector<16x64xf32>
    %230 = arith.mulf %208, %229 : vector<16x64xf32>
    %231 = vector.broadcast %228 : vector<1x64xf32> to vector<16x64xf32>
    %232 = arith.addf %230, %231 : vector<16x64xf32>
    %233 = arith.addf %232, %166 : vector<16x64xf32>
    %cst_168 = arith.constant 0.000000e+00 : f32
    %234 = vector.broadcast %cst_168 : f32 to vector<16x64xf32>
    %235 = arith.maximumf %233, %234 : vector<16x64xf32>
    %236 = vector.broadcast %227 : vector<1x64xf32> to vector<16x64xf32>
    %237 = arith.mulf %210, %236 : vector<16x64xf32>
    %238 = vector.broadcast %228 : vector<1x64xf32> to vector<16x64xf32>
    %239 = arith.addf %237, %238 : vector<16x64xf32>
    %240 = arith.addf %239, %167 : vector<16x64xf32>
    %cst_169 = arith.constant 0.000000e+00 : f32
    %241 = vector.broadcast %cst_169 : f32 to vector<16x64xf32>
    %242 = arith.maximumf %240, %241 : vector<16x64xf32>
    %c1_170 = arith.constant 1 : index
    %c4_171 = arith.constant 4 : index
    %243 = vector.load %arg6[%c1_170, %c4_171] : memref<36x72xf32, #tpu.memory_space<vmem>>, vector<16x64xf32>
    tpu.vector_store %arg6[%c1_170, %c4_171], %235 {strides = array<i32>} : memref<36x72xf32, #tpu.memory_space<vmem>>, vector<16x64xf32>,
    %c19_172 = arith.constant 19 : index
    %c4_173 = arith.constant 4 : index
    %244 = vector.load %arg6[%c19_172, %c4_173] : memref<36x72xf32, #tpu.memory_space<vmem>>, vector<16x64xf32>
    tpu.vector_store %arg6[%c19_172, %c4_173], %242 {strides = array<i32>} : memref<36x72xf32, #tpu.memory_space<vmem>>, vector<16x64xf32>,
    %c0_174 = arith.constant 0 : index
    %c0_175 = arith.constant 0 : index
    %245 = vector.load %arg6[%c0_174, %c0_175] : memref<36x72xf32, #tpu.memory_space<vmem>>, vector<18x72xf32>
    %c120 = arith.constant 120 : index
    %c0_176 = arith.constant 0 : index
    %246 = vector.load %arg2[%c120, %c0_176] : memref<584x64xf32, #tpu.memory_space<vmem>>, vector<8x18xf32>
    %cst_177 = arith.constant dense<0.000000e+00> : vector<8x72xf32>
    %247 = tpu.matmul %246, %245, %cst_177 {dimension_numbers = #tpu.dot_dimension_numbers<[1], [0], [0], [1], [0, 0, 1, 1], [], []>} : vector<8x18xf32>, vector<18x72xf32>, vector<8x72xf32> -> vector<8x72xf32>
    %248 = arith.truncf %247 : vector<8x72xf32> to vector<8x72xbf16>
    %c600 = arith.constant 600 : index
    %c0_178 = arith.constant 0 : index
    %249 = vector.load %arg1[%c600, %c0_178] : memref<2504x64xbf16, #tpu.memory_space<vmem>>, vector<72x64xbf16>
    %cst_179 = arith.constant dense<0.000000e+00> : vector<8x64xf32>
    %250 = tpu.matmul %248, %249, %cst_179 {dimension_numbers = #tpu.dot_dimension_numbers<[1], [0], [0], [1], [0, 0, 1, 1], [], []>} : vector<8x72xbf16>, vector<72x64xbf16>, vector<8x64xf32> -> vector<8x64xf32>
    %c128 = arith.constant 128 : index
    %c0_180 = arith.constant 0 : index
    %251 = vector.load %arg2[%c128, %c0_180] : memref<584x64xf32, #tpu.memory_space<vmem>>, vector<8x18xf32>
    %cst_181 = arith.constant dense<0.000000e+00> : vector<8x72xf32>
    %252 = tpu.matmul %251, %245, %cst_181 {dimension_numbers = #tpu.dot_dimension_numbers<[1], [0], [0], [1], [0, 0, 1, 1], [], []>} : vector<8x18xf32>, vector<18x72xf32>, vector<8x72xf32> -> vector<8x72xf32>
    %253 = arith.truncf %252 : vector<8x72xf32> to vector<8x72xbf16>
    %c672 = arith.constant 672 : index
    %c0_182 = arith.constant 0 : index
    %254 = vector.load %arg1[%c672, %c0_182] : memref<2504x64xbf16, #tpu.memory_space<vmem>>, vector<72x64xbf16>
    %cst_183 = arith.constant dense<0.000000e+00> : vector<8x64xf32>
    %255 = tpu.matmul %253, %254, %cst_183 {dimension_numbers = #tpu.dot_dimension_numbers<[1], [0], [0], [1], [0, 0, 1, 1], [], []>} : vector<8x72xbf16>, vector<72x64xbf16>, vector<8x64xf32> -> vector<8x64xf32>
    %256 = arith.addf %250, %255 : vector<8x64xf32>
    %c136 = arith.constant 136 : index
    %c0_184 = arith.constant 0 : index
    %257 = vector.load %arg2[%c136, %c0_184] : memref<584x64xf32, #tpu.memory_space<vmem>>, vector<8x18xf32>
    %cst_185 = arith.constant dense<0.000000e+00> : vector<8x72xf32>
    %258 = tpu.matmul %257, %245, %cst_185 {dimension_numbers = #tpu.dot_dimension_numbers<[1], [0], [0], [1], [0, 0, 1, 1], [], []>} : vector<8x18xf32>, vector<18x72xf32>, vector<8x72xf32> -> vector<8x72xf32>
    %259 = arith.truncf %258 : vector<8x72xf32> to vector<8x72xbf16>
    %c744 = arith.constant 744 : index
    %c0_186 = arith.constant 0 : index
    %260 = vector.load %arg1[%c744, %c0_186] : memref<2504x64xbf16, #tpu.memory_space<vmem>>, vector<72x64xbf16>
    %cst_187 = arith.constant dense<0.000000e+00> : vector<8x64xf32>
    %261 = tpu.matmul %259, %260, %cst_187 {dimension_numbers = #tpu.dot_dimension_numbers<[1], [0], [0], [1], [0, 0, 1, 1], [], []>} : vector<8x72xbf16>, vector<72x64xbf16>, vector<8x64xf32> -> vector<8x64xf32>
    %262 = arith.addf %256, %261 : vector<8x64xf32>
    %c18_188 = arith.constant 18 : index
    %c0_189 = arith.constant 0 : index
    %263 = vector.load %arg6[%c18_188, %c0_189] : memref<36x72xf32, #tpu.memory_space<vmem>>, vector<18x72xf32>
    %c120_190 = arith.constant 120 : index
    %c0_191 = arith.constant 0 : index
    %264 = vector.load %arg2[%c120_190, %c0_191] : memref<584x64xf32, #tpu.memory_space<vmem>>, vector<8x18xf32>
    %cst_192 = arith.constant dense<0.000000e+00> : vector<8x72xf32>
    %265 = tpu.matmul %264, %263, %cst_192 {dimension_numbers = #tpu.dot_dimension_numbers<[1], [0], [0], [1], [0, 0, 1, 1], [], []>} : vector<8x18xf32>, vector<18x72xf32>, vector<8x72xf32> -> vector<8x72xf32>
    %266 = arith.truncf %265 : vector<8x72xf32> to vector<8x72xbf16>
    %c600_193 = arith.constant 600 : index
    %c0_194 = arith.constant 0 : index
    %267 = vector.load %arg1[%c600_193, %c0_194] : memref<2504x64xbf16, #tpu.memory_space<vmem>>, vector<72x64xbf16>
    %cst_195 = arith.constant dense<0.000000e+00> : vector<8x64xf32>
    %268 = tpu.matmul %266, %267, %cst_195 {dimension_numbers = #tpu.dot_dimension_numbers<[1], [0], [0], [1], [0, 0, 1, 1], [], []>} : vector<8x72xbf16>, vector<72x64xbf16>, vector<8x64xf32> -> vector<8x64xf32>
    %c128_196 = arith.constant 128 : index
    %c0_197 = arith.constant 0 : index
    %269 = vector.load %arg2[%c128_196, %c0_197] : memref<584x64xf32, #tpu.memory_space<vmem>>, vector<8x18xf32>
    %cst_198 = arith.constant dense<0.000000e+00> : vector<8x72xf32>
    %270 = tpu.matmul %269, %263, %cst_198 {dimension_numbers = #tpu.dot_dimension_numbers<[1], [0], [0], [1], [0, 0, 1, 1], [], []>} : vector<8x18xf32>, vector<18x72xf32>, vector<8x72xf32> -> vector<8x72xf32>
    %271 = arith.truncf %270 : vector<8x72xf32> to vector<8x72xbf16>
    %c672_199 = arith.constant 672 : index
    %c0_200 = arith.constant 0 : index
    %272 = vector.load %arg1[%c672_199, %c0_200] : memref<2504x64xbf16, #tpu.memory_space<vmem>>, vector<72x64xbf16>
    %cst_201 = arith.constant dense<0.000000e+00> : vector<8x64xf32>
    %273 = tpu.matmul %271, %272, %cst_201 {dimension_numbers = #tpu.dot_dimension_numbers<[1], [0], [0], [1], [0, 0, 1, 1], [], []>} : vector<8x72xbf16>, vector<72x64xbf16>, vector<8x64xf32> -> vector<8x64xf32>
    %274 = arith.addf %268, %273 : vector<8x64xf32>
    %c136_202 = arith.constant 136 : index
    %c0_203 = arith.constant 0 : index
    %275 = vector.load %arg2[%c136_202, %c0_203] : memref<584x64xf32, #tpu.memory_space<vmem>>, vector<8x18xf32>
    %cst_204 = arith.constant dense<0.000000e+00> : vector<8x72xf32>
    %276 = tpu.matmul %275, %263, %cst_204 {dimension_numbers = #tpu.dot_dimension_numbers<[1], [0], [0], [1], [0, 0, 1, 1], [], []>} : vector<8x18xf32>, vector<18x72xf32>, vector<8x72xf32> -> vector<8x72xf32>
    %277 = arith.truncf %276 : vector<8x72xf32> to vector<8x72xbf16>
    %c744_205 = arith.constant 744 : index
    %c0_206 = arith.constant 0 : index
    %278 = vector.load %arg1[%c744_205, %c0_206] : memref<2504x64xbf16, #tpu.memory_space<vmem>>, vector<72x64xbf16>
    %cst_207 = arith.constant dense<0.000000e+00> : vector<8x64xf32>
    %279 = tpu.matmul %277, %278, %cst_207 {dimension_numbers = #tpu.dot_dimension_numbers<[1], [0], [0], [1], [0, 0, 1, 1], [], []>} : vector<8x72xbf16>, vector<72x64xbf16>, vector<8x64xf32> -> vector<8x64xf32>
    %280 = arith.addf %274, %279 : vector<8x64xf32>
    %c144 = arith.constant 144 : index
    %c0_208 = arith.constant 0 : index
    %281 = vector.load %arg2[%c144, %c0_208] : memref<584x64xf32, #tpu.memory_space<vmem>>, vector<64x8xf32>
    %c208 = arith.constant 208 : index
    %c0_209 = arith.constant 0 : index
    %282 = vector.load %arg2[%c208, %c0_209] : memref<584x64xf32, #tpu.memory_space<vmem>>, vector<8x64xf32>
    %cst_210 = arith.constant dense<0.000000e+00> : vector<64xf32>
    %283 = vector.multi_reduction <add>, %262, %cst_210 [0] : vector<8x64xf32> to vector<64xf32>
    %284 = vector.shape_cast %283 : vector<64xf32> to vector<1x64xf32>
    %cst_211 = arith.constant dense<0.000000e+00> : vector<64xf32>
    %285 = vector.multi_reduction <add>, %280, %cst_211 [0] : vector<8x64xf32> to vector<64xf32>
    %286 = vector.shape_cast %285 : vector<64xf32> to vector<1x64xf32>
    %287 = arith.addf %284, %286 : vector<1x64xf32>
    %cst_212 = arith.constant dense<0.000000e+00> : vector<1x8xf32>
    %288 = tpu.matmul %287, %281, %cst_212 {dimension_numbers = #tpu.dot_dimension_numbers<[1], [0], [0], [1], [0, 0, 1, 1], [], []>} : vector<1x64xf32>, vector<64x8xf32>, vector<1x8xf32> -> vector<1x8xf32>
    %cst_213 = arith.constant 7.812500e-03 : f32
    %289 = vector.broadcast %cst_213 : f32 to vector<1x8xf32>
    %290 = arith.mulf %288, %289 : vector<1x8xf32>
    %cst_214 = arith.constant dense<0.000000e+00> : vector<1x64xf32>
    %291 = tpu.matmul %290, %282, %cst_214 {dimension_numbers = #tpu.dot_dimension_numbers<[1], [0], [0], [1], [0, 0, 1, 1], [], []>} : vector<1x8xf32>, vector<8x64xf32>, vector<1x64xf32> -> vector<1x64xf32>
    %292 = vector.broadcast %291 : vector<1x64xf32> to vector<8x64xf32>
    %293 = arith.subf %262, %292 : vector<8x64xf32>
    %294 = vector.broadcast %291 : vector<1x64xf32> to vector<8x64xf32>
    %295 = arith.subf %280, %294 : vector<8x64xf32>
    %296 = arith.mulf %293, %293 : vector<8x64xf32>
    %cst_215 = arith.constant dense<0.000000e+00> : vector<64xf32>
    %297 = vector.multi_reduction <add>, %296, %cst_215 [0] : vector<8x64xf32> to vector<64xf32>
    %298 = vector.shape_cast %297 : vector<64xf32> to vector<1x64xf32>
    %299 = arith.mulf %295, %295 : vector<8x64xf32>
    %cst_216 = arith.constant dense<0.000000e+00> : vector<64xf32>
    %300 = vector.multi_reduction <add>, %299, %cst_216 [0] : vector<8x64xf32> to vector<64xf32>
    %301 = vector.shape_cast %300 : vector<64xf32> to vector<1x64xf32>
    %302 = arith.addf %298, %301 : vector<1x64xf32>
    %cst_217 = arith.constant dense<0.000000e+00> : vector<1x8xf32>
    %303 = tpu.matmul %302, %281, %cst_217 {dimension_numbers = #tpu.dot_dimension_numbers<[1], [0], [0], [1], [0, 0, 1, 1], [], []>} : vector<1x64xf32>, vector<64x8xf32>, vector<1x8xf32> -> vector<1x8xf32>
    %cst_218 = arith.constant 7.812500e-03 : f32
    %304 = vector.broadcast %cst_218 : f32 to vector<1x8xf32>
    %305 = arith.mulf %303, %304 : vector<1x8xf32>
    %cst_219 = arith.constant 9.99999974E-6 : f32
    %306 = vector.broadcast %cst_219 : f32 to vector<1x8xf32>
    %307 = arith.addf %305, %306 : vector<1x8xf32>
    %308 = math.rsqrt %307 : vector<1x8xf32>
    %c216 = arith.constant 216 : index
    %c0_220 = arith.constant 0 : index
    %309 = vector.load %arg2[%c216, %c0_220] : memref<584x64xf32, #tpu.memory_space<vmem>>, vector<1x8xf32>
    %c224 = arith.constant 224 : index
    %c0_221 = arith.constant 0 : index
    %310 = vector.load %arg2[%c224, %c0_221] : memref<584x64xf32, #tpu.memory_space<vmem>>, vector<1x8xf32>
    %311 = arith.mulf %309, %308 : vector<1x8xf32>
    %cst_222 = arith.constant dense<0.000000e+00> : vector<1x64xf32>
    %312 = tpu.matmul %311, %282, %cst_222 {dimension_numbers = #tpu.dot_dimension_numbers<[1], [0], [0], [1], [0, 0, 1, 1], [], []>} : vector<1x8xf32>, vector<8x64xf32>, vector<1x64xf32> -> vector<1x64xf32>
    %cst_223 = arith.constant dense<0.000000e+00> : vector<1x64xf32>
    %313 = tpu.matmul %310, %282, %cst_223 {dimension_numbers = #tpu.dot_dimension_numbers<[1], [0], [0], [1], [0, 0, 1, 1], [], []>} : vector<1x8xf32>, vector<8x64xf32>, vector<1x64xf32> -> vector<1x64xf32>
    %314 = vector.broadcast %312 : vector<1x64xf32> to vector<8x64xf32>
    %315 = arith.mulf %293, %314 : vector<8x64xf32>
    %316 = vector.broadcast %313 : vector<1x64xf32> to vector<8x64xf32>
    %317 = arith.addf %315, %316 : vector<8x64xf32>
    %cst_224 = arith.constant 0.000000e+00 : f32
    %318 = vector.broadcast %cst_224 : f32 to vector<8x64xf32>
    %319 = arith.maximumf %317, %318 : vector<8x64xf32>
    %320 = vector.broadcast %312 : vector<1x64xf32> to vector<8x64xf32>
    %321 = arith.mulf %295, %320 : vector<8x64xf32>
    %322 = vector.broadcast %313 : vector<1x64xf32> to vector<8x64xf32>
    %323 = arith.addf %321, %322 : vector<8x64xf32>
    %cst_225 = arith.constant 0.000000e+00 : f32
    %324 = vector.broadcast %cst_225 : f32 to vector<8x64xf32>
    %325 = arith.maximumf %323, %324 : vector<8x64xf32>
    %c1_226 = arith.constant 1 : index
    %c8 = arith.constant 8 : index
    %326 = vector.load %arg7[%c1_226, %c8] : memref<20x80xf32, #tpu.memory_space<vmem>>, vector<8x64xf32>
    tpu.vector_store %arg7[%c1_226, %c8], %319 {strides = array<i32>} : memref<20x80xf32, #tpu.memory_space<vmem>>, vector<8x64xf32>,
    %c11 = arith.constant 11 : index
    %c8_227 = arith.constant 8 : index
    %327 = vector.load %arg7[%c11, %c8_227] : memref<20x80xf32, #tpu.memory_space<vmem>>, vector<8x64xf32>
    tpu.vector_store %arg7[%c11, %c8_227], %325 {strides = array<i32>} : memref<20x80xf32, #tpu.memory_space<vmem>>, vector<8x64xf32>,
    %c0_228 = arith.constant 0 : index
    %c0_229 = arith.constant 0 : index
    %328 = vector.load %arg6[%c0_228, %c0_229] : memref<36x72xf32, #tpu.memory_space<vmem>>, vector<18x72xf32>
    %c128_230 = arith.constant 128 : index
    %c0_231 = arith.constant 0 : index
    %329 = vector.load %arg2[%c128_230, %c0_231] : memref<584x64xf32, #tpu.memory_space<vmem>>, vector<8x18xf32>
    %cst_232 = arith.constant dense<0.000000e+00> : vector<8x72xf32>
    %330 = tpu.matmul %329, %328, %cst_232 {dimension_numbers = #tpu.dot_dimension_numbers<[1], [0], [0], [1], [0, 0, 1, 1], [], []>} : vector<8x18xf32>, vector<18x72xf32>, vector<8x72xf32> -> vector<8x72xf32>
    %331 = arith.truncf %330 : vector<8x72xf32> to vector<8x72xbf16>
    %c1056 = arith.constant 1056 : index
    %c0_233 = arith.constant 0 : index
    %332 = vector.load %arg1[%c1056, %c0_233] : memref<2504x64xbf16, #tpu.memory_space<vmem>>, vector<72x64xbf16>
    %cst_234 = arith.constant dense<0.000000e+00> : vector<8x64xf32>
    %333 = tpu.matmul %331, %332, %cst_234 {dimension_numbers = #tpu.dot_dimension_numbers<[1], [0], [0], [1], [0, 0, 1, 1], [], []>} : vector<8x72xbf16>, vector<72x64xbf16>, vector<8x64xf32> -> vector<8x64xf32>
    %c18_235 = arith.constant 18 : index
    %c0_236 = arith.constant 0 : index
    %334 = vector.load %arg6[%c18_235, %c0_236] : memref<36x72xf32, #tpu.memory_space<vmem>>, vector<18x72xf32>
    %c128_237 = arith.constant 128 : index
    %c0_238 = arith.constant 0 : index
    %335 = vector.load %arg2[%c128_237, %c0_238] : memref<584x64xf32, #tpu.memory_space<vmem>>, vector<8x18xf32>
    %cst_239 = arith.constant dense<0.000000e+00> : vector<8x72xf32>
    %336 = tpu.matmul %335, %334, %cst_239 {dimension_numbers = #tpu.dot_dimension_numbers<[1], [0], [0], [1], [0, 0, 1, 1], [], []>} : vector<8x18xf32>, vector<18x72xf32>, vector<8x72xf32> -> vector<8x72xf32>
    %337 = arith.truncf %336 : vector<8x72xf32> to vector<8x72xbf16>
    %c1056_240 = arith.constant 1056 : index
    %c0_241 = arith.constant 0 : index
    %338 = vector.load %arg1[%c1056_240, %c0_241] : memref<2504x64xbf16, #tpu.memory_space<vmem>>, vector<72x64xbf16>
    %cst_242 = arith.constant dense<0.000000e+00> : vector<8x64xf32>
    %339 = tpu.matmul %337, %338, %cst_242 {dimension_numbers = #tpu.dot_dimension_numbers<[1], [0], [0], [1], [0, 0, 1, 1], [], []>} : vector<8x72xbf16>, vector<72x64xbf16>, vector<8x64xf32> -> vector<8x64xf32>
    %c144_243 = arith.constant 144 : index
    %c0_244 = arith.constant 0 : index
    %340 = vector.load %arg2[%c144_243, %c0_244] : memref<584x64xf32, #tpu.memory_space<vmem>>, vector<64x8xf32>
    %c208_245 = arith.constant 208 : index
    %c0_246 = arith.constant 0 : index
    %341 = vector.load %arg2[%c208_245, %c0_246] : memref<584x64xf32, #tpu.memory_space<vmem>>, vector<8x64xf32>
    %cst_247 = arith.constant dense<0.000000e+00> : vector<64xf32>
    %342 = vector.multi_reduction <add>, %333, %cst_247 [0] : vector<8x64xf32> to vector<64xf32>
    %343 = vector.shape_cast %342 : vector<64xf32> to vector<1x64xf32>
    %cst_248 = arith.constant dense<0.000000e+00> : vector<64xf32>
    %344 = vector.multi_reduction <add>, %339, %cst_248 [0] : vector<8x64xf32> to vector<64xf32>
    %345 = vector.shape_cast %344 : vector<64xf32> to vector<1x64xf32>
    %346 = arith.addf %343, %345 : vector<1x64xf32>
    %cst_249 = arith.constant dense<0.000000e+00> : vector<1x8xf32>
    %347 = tpu.matmul %346, %340, %cst_249 {dimension_numbers = #tpu.dot_dimension_numbers<[1], [0], [0], [1], [0, 0, 1, 1], [], []>} : vector<1x64xf32>, vector<64x8xf32>, vector<1x8xf32> -> vector<1x8xf32>
    %cst_250 = arith.constant 7.812500e-03 : f32
    %348 = vector.broadcast %cst_250 : f32 to vector<1x8xf32>
    %349 = arith.mulf %347, %348 : vector<1x8xf32>
    %cst_251 = arith.constant dense<0.000000e+00> : vector<1x64xf32>
    %350 = tpu.matmul %349, %341, %cst_251 {dimension_numbers = #tpu.dot_dimension_numbers<[1], [0], [0], [1], [0, 0, 1, 1], [], []>} : vector<1x8xf32>, vector<8x64xf32>, vector<1x64xf32> -> vector<1x64xf32>
    %351 = vector.broadcast %350 : vector<1x64xf32> to vector<8x64xf32>
    %352 = arith.subf %333, %351 : vector<8x64xf32>
    %353 = vector.broadcast %350 : vector<1x64xf32> to vector<8x64xf32>
    %354 = arith.subf %339, %353 : vector<8x64xf32>
    %355 = arith.mulf %352, %352 : vector<8x64xf32>
    %cst_252 = arith.constant dense<0.000000e+00> : vector<64xf32>
    %356 = vector.multi_reduction <add>, %355, %cst_252 [0] : vector<8x64xf32> to vector<64xf32>
    %357 = vector.shape_cast %356 : vector<64xf32> to vector<1x64xf32>
    %358 = arith.mulf %354, %354 : vector<8x64xf32>
    %cst_253 = arith.constant dense<0.000000e+00> : vector<64xf32>
    %359 = vector.multi_reduction <add>, %358, %cst_253 [0] : vector<8x64xf32> to vector<64xf32>
    %360 = vector.shape_cast %359 : vector<64xf32> to vector<1x64xf32>
    %361 = arith.addf %357, %360 : vector<1x64xf32>
    %cst_254 = arith.constant dense<0.000000e+00> : vector<1x8xf32>
    %362 = tpu.matmul %361, %340, %cst_254 {dimension_numbers = #tpu.dot_dimension_numbers<[1], [0], [0], [1], [0, 0, 1, 1], [], []>} : vector<1x64xf32>, vector<64x8xf32>, vector<1x8xf32> -> vector<1x8xf32>
    %cst_255 = arith.constant 7.812500e-03 : f32
    %363 = vector.broadcast %cst_255 : f32 to vector<1x8xf32>
    %364 = arith.mulf %362, %363 : vector<1x8xf32>
    %cst_256 = arith.constant 9.99999974E-6 : f32
    %365 = vector.broadcast %cst_256 : f32 to vector<1x8xf32>
    %366 = arith.addf %364, %365 : vector<1x8xf32>
    %367 = math.rsqrt %366 : vector<1x8xf32>
    %c248 = arith.constant 248 : index
    %c0_257 = arith.constant 0 : index
    %368 = vector.load %arg2[%c248, %c0_257] : memref<584x64xf32, #tpu.memory_space<vmem>>, vector<1x8xf32>
    %c256 = arith.constant 256 : index
    %c0_258 = arith.constant 0 : index
    %369 = vector.load %arg2[%c256, %c0_258] : memref<584x64xf32, #tpu.memory_space<vmem>>, vector<1x8xf32>
    %370 = arith.mulf %368, %367 : vector<1x8xf32>
    %cst_259 = arith.constant dense<0.000000e+00> : vector<1x64xf32>
    %371 = tpu.matmul %370, %341, %cst_259 {dimension_numbers = #tpu.dot_dimension_numbers<[1], [0], [0], [1], [0, 0, 1, 1], [], []>} : vector<1x8xf32>, vector<8x64xf32>, vector<1x64xf32> -> vector<1x64xf32>
    %cst_260 = arith.constant dense<0.000000e+00> : vector<1x64xf32>
    %372 = tpu.matmul %369, %341, %cst_260 {dimension_numbers = #tpu.dot_dimension_numbers<[1], [0], [0], [1], [0, 0, 1, 1], [], []>} : vector<1x8xf32>, vector<8x64xf32>, vector<1x64xf32> -> vector<1x64xf32>
    %373 = vector.broadcast %371 : vector<1x64xf32> to vector<8x64xf32>
    %374 = arith.mulf %352, %373 : vector<8x64xf32>
    %375 = vector.broadcast %372 : vector<1x64xf32> to vector<8x64xf32>
    %376 = arith.addf %374, %375 : vector<8x64xf32>
    %377 = vector.broadcast %371 : vector<1x64xf32> to vector<8x64xf32>
    %378 = arith.mulf %354, %377 : vector<8x64xf32>
    %379 = vector.broadcast %372 : vector<1x64xf32> to vector<8x64xf32>
    %380 = arith.addf %378, %379 : vector<8x64xf32>
    %c0_261 = arith.constant 0 : index
    %c0_262 = arith.constant 0 : index
    %381 = vector.load %arg7[%c0_261, %c0_262] : memref<20x80xf32, #tpu.memory_space<vmem>>, vector<8x80xf32>
    %382 = arith.truncf %381 : vector<8x80xf32> to vector<8x80xbf16>
    %c816 = arith.constant 816 : index
    %c0_263 = arith.constant 0 : index
    %383 = vector.load %arg1[%c816, %c0_263] : memref<2504x64xbf16, #tpu.memory_space<vmem>>, vector<80x64xbf16>
    %cst_264 = arith.constant dense<0.000000e+00> : vector<8x64xf32>
    %384 = tpu.matmul %382, %383, %cst_264 {dimension_numbers = #tpu.dot_dimension_numbers<[1], [0], [0], [1], [0, 0, 1, 1], [], []>} : vector<8x80xbf16>, vector<80x64xbf16>, vector<8x64xf32> -> vector<8x64xf32>
    %c1_265 = arith.constant 1 : index
    %c0_266 = arith.constant 0 : index
    %385 = vector.load %arg7[%c1_265, %c0_266] : memref<20x80xf32, #tpu.memory_space<vmem>>, vector<8x80xf32>
    %386 = arith.truncf %385 : vector<8x80xf32> to vector<8x80xbf16>
    %c896 = arith.constant 896 : index
    %c0_267 = arith.constant 0 : index
    %387 = vector.load %arg1[%c896, %c0_267] : memref<2504x64xbf16, #tpu.memory_space<vmem>>, vector<80x64xbf16>
    %cst_268 = arith.constant dense<0.000000e+00> : vector<8x64xf32>
    %388 = tpu.matmul %386, %387, %cst_268 {dimension_numbers = #tpu.dot_dimension_numbers<[1], [0], [0], [1], [0, 0, 1, 1], [], []>} : vector<8x80xbf16>, vector<80x64xbf16>, vector<8x64xf32> -> vector<8x64xf32>
    %389 = arith.addf %384, %388 : vector<8x64xf32>
    %c2_269 = arith.constant 2 : index
    %c0_270 = arith.constant 0 : index
    %390 = vector.load %arg7[%c2_269, %c0_270] : memref<20x80xf32, #tpu.memory_space<vmem>>, vector<8x80xf32>
    %391 = arith.truncf %390 : vector<8x80xf32> to vector<8x80xbf16>
    %c976 = arith.constant 976 : index
    %c0_271 = arith.constant 0 : index
    %392 = vector.load %arg1[%c976, %c0_271] : memref<2504x64xbf16, #tpu.memory_space<vmem>>, vector<80x64xbf16>
    %cst_272 = arith.constant dense<0.000000e+00> : vector<8x64xf32>
    %393 = tpu.matmul %391, %392, %cst_272 {dimension_numbers = #tpu.dot_dimension_numbers<[1], [0], [0], [1], [0, 0, 1, 1], [], []>} : vector<8x80xbf16>, vector<80x64xbf16>, vector<8x64xf32> -> vector<8x64xf32>
    %394 = arith.addf %389, %393 : vector<8x64xf32>
    %c10 = arith.constant 10 : index
    %c0_273 = arith.constant 0 : index
    %395 = vector.load %arg7[%c10, %c0_273] : memref<20x80xf32, #tpu.memory_space<vmem>>, vector<8x80xf32>
    %396 = arith.truncf %395 : vector<8x80xf32> to vector<8x80xbf16>
    %c816_274 = arith.constant 816 : index
    %c0_275 = arith.constant 0 : index
    %397 = vector.load %arg1[%c816_274, %c0_275] : memref<2504x64xbf16, #tpu.memory_space<vmem>>, vector<80x64xbf16>
    %cst_276 = arith.constant dense<0.000000e+00> : vector<8x64xf32>
    %398 = tpu.matmul %396, %397, %cst_276 {dimension_numbers = #tpu.dot_dimension_numbers<[1], [0], [0], [1], [0, 0, 1, 1], [], []>} : vector<8x80xbf16>, vector<80x64xbf16>, vector<8x64xf32> -> vector<8x64xf32>
    %c11_277 = arith.constant 11 : index
    %c0_278 = arith.constant 0 : index
    %399 = vector.load %arg7[%c11_277, %c0_278] : memref<20x80xf32, #tpu.memory_space<vmem>>, vector<8x80xf32>
    %400 = arith.truncf %399 : vector<8x80xf32> to vector<8x80xbf16>
    %c896_279 = arith.constant 896 : index
    %c0_280 = arith.constant 0 : index
    %401 = vector.load %arg1[%c896_279, %c0_280] : memref<2504x64xbf16, #tpu.memory_space<vmem>>, vector<80x64xbf16>
    %cst_281 = arith.constant dense<0.000000e+00> : vector<8x64xf32>
    %402 = tpu.matmul %400, %401, %cst_281 {dimension_numbers = #tpu.dot_dimension_numbers<[1], [0], [0], [1], [0, 0, 1, 1], [], []>} : vector<8x80xbf16>, vector<80x64xbf16>, vector<8x64xf32> -> vector<8x64xf32>
    %403 = arith.addf %398, %402 : vector<8x64xf32>
    %c12 = arith.constant 12 : index
    %c0_282 = arith.constant 0 : index
    %404 = vector.load %arg7[%c12, %c0_282] : memref<20x80xf32, #tpu.memory_space<vmem>>, vector<8x80xf32>
    %405 = arith.truncf %404 : vector<8x80xf32> to vector<8x80xbf16>
    %c976_283 = arith.constant 976 : index
    %c0_284 = arith.constant 0 : index
    %406 = vector.load %arg1[%c976_283, %c0_284] : memref<2504x64xbf16, #tpu.memory_space<vmem>>, vector<80x64xbf16>
    %cst_285 = arith.constant dense<0.000000e+00> : vector<8x64xf32>
    %407 = tpu.matmul %405, %406, %cst_285 {dimension_numbers = #tpu.dot_dimension_numbers<[1], [0], [0], [1], [0, 0, 1, 1], [], []>} : vector<8x80xbf16>, vector<80x64xbf16>, vector<8x64xf32> -> vector<8x64xf32>
    %408 = arith.addf %403, %407 : vector<8x64xf32>
    %c144_286 = arith.constant 144 : index
    %c0_287 = arith.constant 0 : index
    %409 = vector.load %arg2[%c144_286, %c0_287] : memref<584x64xf32, #tpu.memory_space<vmem>>, vector<64x8xf32>
    %c208_288 = arith.constant 208 : index
    %c0_289 = arith.constant 0 : index
    %410 = vector.load %arg2[%c208_288, %c0_289] : memref<584x64xf32, #tpu.memory_space<vmem>>, vector<8x64xf32>
    %cst_290 = arith.constant dense<0.000000e+00> : vector<64xf32>
    %411 = vector.multi_reduction <add>, %394, %cst_290 [0] : vector<8x64xf32> to vector<64xf32>
    %412 = vector.shape_cast %411 : vector<64xf32> to vector<1x64xf32>
    %cst_291 = arith.constant dense<0.000000e+00> : vector<64xf32>
    %413 = vector.multi_reduction <add>, %408, %cst_291 [0] : vector<8x64xf32> to vector<64xf32>
    %414 = vector.shape_cast %413 : vector<64xf32> to vector<1x64xf32>
    %415 = arith.addf %412, %414 : vector<1x64xf32>
    %cst_292 = arith.constant dense<0.000000e+00> : vector<1x8xf32>
    %416 = tpu.matmul %415, %409, %cst_292 {dimension_numbers = #tpu.dot_dimension_numbers<[1], [0], [0], [1], [0, 0, 1, 1], [], []>} : vector<1x64xf32>, vector<64x8xf32>, vector<1x8xf32> -> vector<1x8xf32>
    %cst_293 = arith.constant 7.812500e-03 : f32
    %417 = vector.broadcast %cst_293 : f32 to vector<1x8xf32>
    %418 = arith.mulf %416, %417 : vector<1x8xf32>
    %cst_294 = arith.constant dense<0.000000e+00> : vector<1x64xf32>
    %419 = tpu.matmul %418, %410, %cst_294 {dimension_numbers = #tpu.dot_dimension_numbers<[1], [0], [0], [1], [0, 0, 1, 1], [], []>} : vector<1x8xf32>, vector<8x64xf32>, vector<1x64xf32> -> vector<1x64xf32>
    %420 = vector.broadcast %419 : vector<1x64xf32> to vector<8x64xf32>
    %421 = arith.subf %394, %420 : vector<8x64xf32>
    %422 = vector.broadcast %419 : vector<1x64xf32> to vector<8x64xf32>
    %423 = arith.subf %408, %422 : vector<8x64xf32>
    %424 = arith.mulf %421, %421 : vector<8x64xf32>
    %cst_295 = arith.constant dense<0.000000e+00> : vector<64xf32>
    %425 = vector.multi_reduction <add>, %424, %cst_295 [0] : vector<8x64xf32> to vector<64xf32>
    %426 = vector.shape_cast %425 : vector<64xf32> to vector<1x64xf32>
    %427 = arith.mulf %423, %423 : vector<8x64xf32>
    %cst_296 = arith.constant dense<0.000000e+00> : vector<64xf32>
    %428 = vector.multi_reduction <add>, %427, %cst_296 [0] : vector<8x64xf32> to vector<64xf32>
    %429 = vector.shape_cast %428 : vector<64xf32> to vector<1x64xf32>
    %430 = arith.addf %426, %429 : vector<1x64xf32>
    %cst_297 = arith.constant dense<0.000000e+00> : vector<1x8xf32>
    %431 = tpu.matmul %430, %409, %cst_297 {dimension_numbers = #tpu.dot_dimension_numbers<[1], [0], [0], [1], [0, 0, 1, 1], [], []>} : vector<1x64xf32>, vector<64x8xf32>, vector<1x8xf32> -> vector<1x8xf32>
    %cst_298 = arith.constant 7.812500e-03 : f32
    %432 = vector.broadcast %cst_298 : f32 to vector<1x8xf32>
    %433 = arith.mulf %431, %432 : vector<1x8xf32>
    %cst_299 = arith.constant 9.99999974E-6 : f32
    %434 = vector.broadcast %cst_299 : f32 to vector<1x8xf32>
    %435 = arith.addf %433, %434 : vector<1x8xf32>
    %436 = math.rsqrt %435 : vector<1x8xf32>
    %c232 = arith.constant 232 : index
    %c0_300 = arith.constant 0 : index
    %437 = vector.load %arg2[%c232, %c0_300] : memref<584x64xf32, #tpu.memory_space<vmem>>, vector<1x8xf32>
    %c240_301 = arith.constant 240 : index
    %c0_302 = arith.constant 0 : index
    %438 = vector.load %arg2[%c240_301, %c0_302] : memref<584x64xf32, #tpu.memory_space<vmem>>, vector<1x8xf32>
    %439 = arith.mulf %437, %436 : vector<1x8xf32>
    %cst_303 = arith.constant dense<0.000000e+00> : vector<1x64xf32>
    %440 = tpu.matmul %439, %410, %cst_303 {dimension_numbers = #tpu.dot_dimension_numbers<[1], [0], [0], [1], [0, 0, 1, 1], [], []>} : vector<1x8xf32>, vector<8x64xf32>, vector<1x64xf32> -> vector<1x64xf32>
    %cst_304 = arith.constant dense<0.000000e+00> : vector<1x64xf32>
    %441 = tpu.matmul %438, %410, %cst_304 {dimension_numbers = #tpu.dot_dimension_numbers<[1], [0], [0], [1], [0, 0, 1, 1], [], []>} : vector<1x8xf32>, vector<8x64xf32>, vector<1x64xf32> -> vector<1x64xf32>
    %442 = vector.broadcast %440 : vector<1x64xf32> to vector<8x64xf32>
    %443 = arith.mulf %421, %442 : vector<8x64xf32>
    %444 = vector.broadcast %441 : vector<1x64xf32> to vector<8x64xf32>
    %445 = arith.addf %443, %444 : vector<8x64xf32>
    %446 = arith.addf %445, %376 : vector<8x64xf32>
    %cst_305 = arith.constant 0.000000e+00 : f32
    %447 = vector.broadcast %cst_305 : f32 to vector<8x64xf32>
    %448 = arith.maximumf %446, %447 : vector<8x64xf32>
    %449 = vector.broadcast %440 : vector<1x64xf32> to vector<8x64xf32>
    %450 = arith.mulf %423, %449 : vector<8x64xf32>
    %451 = vector.broadcast %441 : vector<1x64xf32> to vector<8x64xf32>
    %452 = arith.addf %450, %451 : vector<8x64xf32>
    %453 = arith.addf %452, %380 : vector<8x64xf32>
    %cst_306 = arith.constant 0.000000e+00 : f32
    %454 = vector.broadcast %cst_306 : f32 to vector<8x64xf32>
    %455 = arith.maximumf %453, %454 : vector<8x64xf32>
    %c1_307 = arith.constant 1 : index
    %c8_308 = arith.constant 8 : index
    %456 = vector.load %arg8[%c1_307, %c8_308] : memref<20x80xf32, #tpu.memory_space<vmem>>, vector<8x64xf32>
    tpu.vector_store %arg8[%c1_307, %c8_308], %448 {strides = array<i32>} : memref<20x80xf32, #tpu.memory_space<vmem>>, vector<8x64xf32>,
    %c11_309 = arith.constant 11 : index
    %c8_310 = arith.constant 8 : index
    %457 = vector.load %arg8[%c11_309, %c8_310] : memref<20x80xf32, #tpu.memory_space<vmem>>, vector<8x64xf32>
    tpu.vector_store %arg8[%c11_309, %c8_310], %455 {strides = array<i32>} : memref<20x80xf32, #tpu.memory_space<vmem>>, vector<8x64xf32>,
    %c0_311 = arith.constant 0 : index
    %c0_312 = arith.constant 0 : index
    %458 = vector.load %arg8[%c0_311, %c0_312] : memref<20x80xf32, #tpu.memory_space<vmem>>, vector<10x80xf32>
    %c264 = arith.constant 264 : index
    %c0_313 = arith.constant 0 : index
    %459 = vector.load %arg2[%c264, %c0_313] : memref<584x64xf32, #tpu.memory_space<vmem>>, vector<4x10xf32>
    %cst_314 = arith.constant dense<0.000000e+00> : vector<4x80xf32>
    %460 = tpu.matmul %459, %458, %cst_314 {dimension_numbers = #tpu.dot_dimension_numbers<[1], [0], [0], [1], [0, 0, 1, 1], [], []>} : vector<4x10xf32>, vector<10x80xf32>, vector<4x80xf32> -> vector<4x80xf32>
    %461 = arith.truncf %460 : vector<4x80xf32> to vector<4x80xbf16>
    %c1128 = arith.constant 1128 : index
    %c0_315 = arith.constant 0 : index
    %462 = vector.load %arg1[%c1128, %c0_315] : memref<2504x64xbf16, #tpu.memory_space<vmem>>, vector<80x64xbf16>
    %cst_316 = arith.constant dense<0.000000e+00> : vector<4x64xf32>
    %463 = tpu.matmul %461, %462, %cst_316 {dimension_numbers = #tpu.dot_dimension_numbers<[1], [0], [0], [1], [0, 0, 1, 1], [], []>} : vector<4x80xbf16>, vector<80x64xbf16>, vector<4x64xf32> -> vector<4x64xf32>
    %c272 = arith.constant 272 : index
    %c0_317 = arith.constant 0 : index
    %464 = vector.load %arg2[%c272, %c0_317] : memref<584x64xf32, #tpu.memory_space<vmem>>, vector<4x10xf32>
    %cst_318 = arith.constant dense<0.000000e+00> : vector<4x80xf32>
    %465 = tpu.matmul %464, %458, %cst_318 {dimension_numbers = #tpu.dot_dimension_numbers<[1], [0], [0], [1], [0, 0, 1, 1], [], []>} : vector<4x10xf32>, vector<10x80xf32>, vector<4x80xf32> -> vector<4x80xf32>
    %466 = arith.truncf %465 : vector<4x80xf32> to vector<4x80xbf16>
    %c1208 = arith.constant 1208 : index
    %c0_319 = arith.constant 0 : index
    %467 = vector.load %arg1[%c1208, %c0_319] : memref<2504x64xbf16, #tpu.memory_space<vmem>>, vector<80x64xbf16>
    %cst_320 = arith.constant dense<0.000000e+00> : vector<4x64xf32>
    %468 = tpu.matmul %466, %467, %cst_320 {dimension_numbers = #tpu.dot_dimension_numbers<[1], [0], [0], [1], [0, 0, 1, 1], [], []>} : vector<4x80xbf16>, vector<80x64xbf16>, vector<4x64xf32> -> vector<4x64xf32>
    %469 = arith.addf %463, %468 : vector<4x64xf32>
    %c280 = arith.constant 280 : index
    %c0_321 = arith.constant 0 : index
    %470 = vector.load %arg2[%c280, %c0_321] : memref<584x64xf32, #tpu.memory_space<vmem>>, vector<4x10xf32>
    %cst_322 = arith.constant dense<0.000000e+00> : vector<4x80xf32>
    %471 = tpu.matmul %470, %458, %cst_322 {dimension_numbers = #tpu.dot_dimension_numbers<[1], [0], [0], [1], [0, 0, 1, 1], [], []>} : vector<4x10xf32>, vector<10x80xf32>, vector<4x80xf32> -> vector<4x80xf32>
    %472 = arith.truncf %471 : vector<4x80xf32> to vector<4x80xbf16>
    %c1288 = arith.constant 1288 : index
    %c0_323 = arith.constant 0 : index
    %473 = vector.load %arg1[%c1288, %c0_323] : memref<2504x64xbf16, #tpu.memory_space<vmem>>, vector<80x64xbf16>
    %cst_324 = arith.constant dense<0.000000e+00> : vector<4x64xf32>
    %474 = tpu.matmul %472, %473, %cst_324 {dimension_numbers = #tpu.dot_dimension_numbers<[1], [0], [0], [1], [0, 0, 1, 1], [], []>} : vector<4x80xbf16>, vector<80x64xbf16>, vector<4x64xf32> -> vector<4x64xf32>
    %475 = arith.addf %469, %474 : vector<4x64xf32>
    %c10_325 = arith.constant 10 : index
    %c0_326 = arith.constant 0 : index
    %476 = vector.load %arg8[%c10_325, %c0_326] : memref<20x80xf32, #tpu.memory_space<vmem>>, vector<10x80xf32>
    %c264_327 = arith.constant 264 : index
    %c0_328 = arith.constant 0 : index
    %477 = vector.load %arg2[%c264_327, %c0_328] : memref<584x64xf32, #tpu.memory_space<vmem>>, vector<4x10xf32>
    %cst_329 = arith.constant dense<0.000000e+00> : vector<4x80xf32>
    %478 = tpu.matmul %477, %476, %cst_329 {dimension_numbers = #tpu.dot_dimension_numbers<[1], [0], [0], [1], [0, 0, 1, 1], [], []>} : vector<4x10xf32>, vector<10x80xf32>, vector<4x80xf32> -> vector<4x80xf32>
    %479 = arith.truncf %478 : vector<4x80xf32> to vector<4x80xbf16>
    %c1128_330 = arith.constant 1128 : index
    %c0_331 = arith.constant 0 : index
    %480 = vector.load %arg1[%c1128_330, %c0_331] : memref<2504x64xbf16, #tpu.memory_space<vmem>>, vector<80x64xbf16>
    %cst_332 = arith.constant dense<0.000000e+00> : vector<4x64xf32>
    %481 = tpu.matmul %479, %480, %cst_332 {dimension_numbers = #tpu.dot_dimension_numbers<[1], [0], [0], [1], [0, 0, 1, 1], [], []>} : vector<4x80xbf16>, vector<80x64xbf16>, vector<4x64xf32> -> vector<4x64xf32>
    %c272_333 = arith.constant 272 : index
    %c0_334 = arith.constant 0 : index
    %482 = vector.load %arg2[%c272_333, %c0_334] : memref<584x64xf32, #tpu.memory_space<vmem>>, vector<4x10xf32>
    %cst_335 = arith.constant dense<0.000000e+00> : vector<4x80xf32>
    %483 = tpu.matmul %482, %476, %cst_335 {dimension_numbers = #tpu.dot_dimension_numbers<[1], [0], [0], [1], [0, 0, 1, 1], [], []>} : vector<4x10xf32>, vector<10x80xf32>, vector<4x80xf32> -> vector<4x80xf32>
    %484 = arith.truncf %483 : vector<4x80xf32> to vector<4x80xbf16>
    %c1208_336 = arith.constant 1208 : index
    %c0_337 = arith.constant 0 : index
    %485 = vector.load %arg1[%c1208_336, %c0_337] : memref<2504x64xbf16, #tpu.memory_space<vmem>>, vector<80x64xbf16>
    %cst_338 = arith.constant dense<0.000000e+00> : vector<4x64xf32>
    %486 = tpu.matmul %484, %485, %cst_338 {dimension_numbers = #tpu.dot_dimension_numbers<[1], [0], [0], [1], [0, 0, 1, 1], [], []>} : vector<4x80xbf16>, vector<80x64xbf16>, vector<4x64xf32> -> vector<4x64xf32>
    %487 = arith.addf %481, %486 : vector<4x64xf32>
    %c280_339 = arith.constant 280 : index
    %c0_340 = arith.constant 0 : index
    %488 = vector.load %arg2[%c280_339, %c0_340] : memref<584x64xf32, #tpu.memory_space<vmem>>, vector<4x10xf32>
    %cst_341 = arith.constant dense<0.000000e+00> : vector<4x80xf32>
    %489 = tpu.matmul %488, %476, %cst_341 {dimension_numbers = #tpu.dot_dimension_numbers<[1], [0], [0], [1], [0, 0, 1, 1], [], []>} : vector<4x10xf32>, vector<10x80xf32>, vector<4x80xf32> -> vector<4x80xf32>
    %490 = arith.truncf %489 : vector<4x80xf32> to vector<4x80xbf16>
    %c1288_342 = arith.constant 1288 : index
    %c0_343 = arith.constant 0 : index
    %491 = vector.load %arg1[%c1288_342, %c0_343] : memref<2504x64xbf16, #tpu.memory_space<vmem>>, vector<80x64xbf16>
    %cst_344 = arith.constant dense<0.000000e+00> : vector<4x64xf32>
    %492 = tpu.matmul %490, %491, %cst_344 {dimension_numbers = #tpu.dot_dimension_numbers<[1], [0], [0], [1], [0, 0, 1, 1], [], []>} : vector<4x80xbf16>, vector<80x64xbf16>, vector<4x64xf32> -> vector<4x64xf32>
    %493 = arith.addf %487, %492 : vector<4x64xf32>
    %c288 = arith.constant 288 : index
    %c0_345 = arith.constant 0 : index
    %494 = vector.load %arg2[%c288, %c0_345] : memref<584x64xf32, #tpu.memory_space<vmem>>, vector<64x16xf32>
    %c352 = arith.constant 352 : index
    %c0_346 = arith.constant 0 : index
    %495 = vector.load %arg2[%c352, %c0_346] : memref<584x64xf32, #tpu.memory_space<vmem>>, vector<16x64xf32>
    %cst_347 = arith.constant dense<0.000000e+00> : vector<64xf32>
    %496 = vector.multi_reduction <add>, %475, %cst_347 [0] : vector<4x64xf32> to vector<64xf32>
    %497 = vector.shape_cast %496 : vector<64xf32> to vector<1x64xf32>
    %cst_348 = arith.constant dense<0.000000e+00> : vector<64xf32>
    %498 = vector.multi_reduction <add>, %493, %cst_348 [0] : vector<4x64xf32> to vector<64xf32>
    %499 = vector.shape_cast %498 : vector<64xf32> to vector<1x64xf32>
    %500 = arith.addf %497, %499 : vector<1x64xf32>
    %cst_349 = arith.constant dense<0.000000e+00> : vector<1x16xf32>
    %501 = tpu.matmul %500, %494, %cst_349 {dimension_numbers = #tpu.dot_dimension_numbers<[1], [0], [0], [1], [0, 0, 1, 1], [], []>} : vector<1x64xf32>, vector<64x16xf32>, vector<1x16xf32> -> vector<1x16xf32>
    %cst_350 = arith.constant 3.125000e-02 : f32
    %502 = vector.broadcast %cst_350 : f32 to vector<1x16xf32>
    %503 = arith.mulf %501, %502 : vector<1x16xf32>
    %cst_351 = arith.constant dense<0.000000e+00> : vector<1x64xf32>
    %504 = tpu.matmul %503, %495, %cst_351 {dimension_numbers = #tpu.dot_dimension_numbers<[1], [0], [0], [1], [0, 0, 1, 1], [], []>} : vector<1x16xf32>, vector<16x64xf32>, vector<1x64xf32> -> vector<1x64xf32>
    %505 = vector.broadcast %504 : vector<1x64xf32> to vector<4x64xf32>
    %506 = arith.subf %475, %505 : vector<4x64xf32>
    %507 = vector.broadcast %504 : vector<1x64xf32> to vector<4x64xf32>
    %508 = arith.subf %493, %507 : vector<4x64xf32>
    %509 = arith.mulf %506, %506 : vector<4x64xf32>
    %cst_352 = arith.constant dense<0.000000e+00> : vector<64xf32>
    %510 = vector.multi_reduction <add>, %509, %cst_352 [0] : vector<4x64xf32> to vector<64xf32>
    %511 = vector.shape_cast %510 : vector<64xf32> to vector<1x64xf32>
    %512 = arith.mulf %508, %508 : vector<4x64xf32>
    %cst_353 = arith.constant dense<0.000000e+00> : vector<64xf32>
    %513 = vector.multi_reduction <add>, %512, %cst_353 [0] : vector<4x64xf32> to vector<64xf32>
    %514 = vector.shape_cast %513 : vector<64xf32> to vector<1x64xf32>
    %515 = arith.addf %511, %514 : vector<1x64xf32>
    %cst_354 = arith.constant dense<0.000000e+00> : vector<1x16xf32>
    %516 = tpu.matmul %515, %494, %cst_354 {dimension_numbers = #tpu.dot_dimension_numbers<[1], [0], [0], [1], [0, 0, 1, 1], [], []>} : vector<1x64xf32>, vector<64x16xf32>, vector<1x16xf32> -> vector<1x16xf32>
    %cst_355 = arith.constant 3.125000e-02 : f32
    %517 = vector.broadcast %cst_355 : f32 to vector<1x16xf32>
    %518 = arith.mulf %516, %517 : vector<1x16xf32>
    %cst_356 = arith.constant 9.99999974E-6 : f32
    %519 = vector.broadcast %cst_356 : f32 to vector<1x16xf32>
    %520 = arith.addf %518, %519 : vector<1x16xf32>
    %521 = math.rsqrt %520 : vector<1x16xf32>
    %c368 = arith.constant 368 : index
    %c0_357 = arith.constant 0 : index
    %522 = vector.load %arg2[%c368, %c0_357] : memref<584x64xf32, #tpu.memory_space<vmem>>, vector<1x16xf32>
    %c376 = arith.constant 376 : index
    %c0_358 = arith.constant 0 : index
    %523 = vector.load %arg2[%c376, %c0_358] : memref<584x64xf32, #tpu.memory_space<vmem>>, vector<1x16xf32>
    %524 = arith.mulf %522, %521 : vector<1x16xf32>
    %cst_359 = arith.constant dense<0.000000e+00> : vector<1x64xf32>
    %525 = tpu.matmul %524, %495, %cst_359 {dimension_numbers = #tpu.dot_dimension_numbers<[1], [0], [0], [1], [0, 0, 1, 1], [], []>} : vector<1x16xf32>, vector<16x64xf32>, vector<1x64xf32> -> vector<1x64xf32>
    %cst_360 = arith.constant dense<0.000000e+00> : vector<1x64xf32>
    %526 = tpu.matmul %523, %495, %cst_360 {dimension_numbers = #tpu.dot_dimension_numbers<[1], [0], [0], [1], [0, 0, 1, 1], [], []>} : vector<1x16xf32>, vector<16x64xf32>, vector<1x64xf32> -> vector<1x64xf32>
    %527 = vector.broadcast %525 : vector<1x64xf32> to vector<4x64xf32>
    %528 = arith.mulf %506, %527 : vector<4x64xf32>
    %529 = vector.broadcast %526 : vector<1x64xf32> to vector<4x64xf32>
    %530 = arith.addf %528, %529 : vector<4x64xf32>
    %cst_361 = arith.constant 0.000000e+00 : f32
    %531 = vector.broadcast %cst_361 : f32 to vector<4x64xf32>
    %532 = arith.maximumf %530, %531 : vector<4x64xf32>
    %533 = vector.broadcast %525 : vector<1x64xf32> to vector<4x64xf32>
    %534 = arith.mulf %508, %533 : vector<4x64xf32>
    %535 = vector.broadcast %526 : vector<1x64xf32> to vector<4x64xf32>
    %536 = arith.addf %534, %535 : vector<4x64xf32>
    %cst_362 = arith.constant 0.000000e+00 : f32
    %537 = vector.broadcast %cst_362 : f32 to vector<4x64xf32>
    %538 = arith.maximumf %536, %537 : vector<4x64xf32>
    %c1_363 = arith.constant 1 : index
    %c16 = arith.constant 16 : index
    %539 = vector.load %arg9[%c1_363, %c16] : memref<12x96xf32, #tpu.memory_space<vmem>>, vector<4x64xf32>
    tpu.vector_store %arg9[%c1_363, %c16], %532 {strides = array<i32>} : memref<12x96xf32, #tpu.memory_space<vmem>>, vector<4x64xf32>,
    %c7 = arith.constant 7 : index
    %c16_364 = arith.constant 16 : index
    %540 = vector.load %arg9[%c7, %c16_364] : memref<12x96xf32, #tpu.memory_space<vmem>>, vector<4x64xf32>
    tpu.vector_store %arg9[%c7, %c16_364], %538 {strides = array<i32>} : memref<12x96xf32, #tpu.memory_space<vmem>>, vector<4x64xf32>,
    %c0_365 = arith.constant 0 : index
    %c0_366 = arith.constant 0 : index
    %541 = vector.load %arg8[%c0_365, %c0_366] : memref<20x80xf32, #tpu.memory_space<vmem>>, vector<10x80xf32>
    %c272_367 = arith.constant 272 : index
    %c0_368 = arith.constant 0 : index
    %542 = vector.load %arg2[%c272_367, %c0_368] : memref<584x64xf32, #tpu.memory_space<vmem>>, vector<4x10xf32>
    %cst_369 = arith.constant dense<0.000000e+00> : vector<4x80xf32>
    %543 = tpu.matmul %542, %541, %cst_369 {dimension_numbers = #tpu.dot_dimension_numbers<[1], [0], [0], [1], [0, 0, 1, 1], [], []>} : vector<4x10xf32>, vector<10x80xf32>, vector<4x80xf32> -> vector<4x80xf32>
    %544 = arith.truncf %543 : vector<4x80xf32> to vector<4x80xbf16>
    %c1656 = arith.constant 1656 : index
    %c0_370 = arith.constant 0 : index
    %545 = vector.load %arg1[%c1656, %c0_370] : memref<2504x64xbf16, #tpu.memory_space<vmem>>, vector<80x64xbf16>
    %cst_371 = arith.constant dense<0.000000e+00> : vector<4x64xf32>
    %546 = tpu.matmul %544, %545, %cst_371 {dimension_numbers = #tpu.dot_dimension_numbers<[1], [0], [0], [1], [0, 0, 1, 1], [], []>} : vector<4x80xbf16>, vector<80x64xbf16>, vector<4x64xf32> -> vector<4x64xf32>
    %c10_372 = arith.constant 10 : index
    %c0_373 = arith.constant 0 : index
    %547 = vector.load %arg8[%c10_372, %c0_373] : memref<20x80xf32, #tpu.memory_space<vmem>>, vector<10x80xf32>
    %c272_374 = arith.constant 272 : index
    %c0_375 = arith.constant 0 : index
    %548 = vector.load %arg2[%c272_374, %c0_375] : memref<584x64xf32, #tpu.memory_space<vmem>>, vector<4x10xf32>
    %cst_376 = arith.constant dense<0.000000e+00> : vector<4x80xf32>
    %549 = tpu.matmul %548, %547, %cst_376 {dimension_numbers = #tpu.dot_dimension_numbers<[1], [0], [0], [1], [0, 0, 1, 1], [], []>} : vector<4x10xf32>, vector<10x80xf32>, vector<4x80xf32> -> vector<4x80xf32>
    %550 = arith.truncf %549 : vector<4x80xf32> to vector<4x80xbf16>
    %c1656_377 = arith.constant 1656 : index
    %c0_378 = arith.constant 0 : index
    %551 = vector.load %arg1[%c1656_377, %c0_378] : memref<2504x64xbf16, #tpu.memory_space<vmem>>, vector<80x64xbf16>
    %cst_379 = arith.constant dense<0.000000e+00> : vector<4x64xf32>
    %552 = tpu.matmul %550, %551, %cst_379 {dimension_numbers = #tpu.dot_dimension_numbers<[1], [0], [0], [1], [0, 0, 1, 1], [], []>} : vector<4x80xbf16>, vector<80x64xbf16>, vector<4x64xf32> -> vector<4x64xf32>
    %c288_380 = arith.constant 288 : index
    %c0_381 = arith.constant 0 : index
    %553 = vector.load %arg2[%c288_380, %c0_381] : memref<584x64xf32, #tpu.memory_space<vmem>>, vector<64x16xf32>
    %c352_382 = arith.constant 352 : index
    %c0_383 = arith.constant 0 : index
    %554 = vector.load %arg2[%c352_382, %c0_383] : memref<584x64xf32, #tpu.memory_space<vmem>>, vector<16x64xf32>
    %cst_384 = arith.constant dense<0.000000e+00> : vector<64xf32>
    %555 = vector.multi_reduction <add>, %546, %cst_384 [0] : vector<4x64xf32> to vector<64xf32>
    %556 = vector.shape_cast %555 : vector<64xf32> to vector<1x64xf32>
    %cst_385 = arith.constant dense<0.000000e+00> : vector<64xf32>
    %557 = vector.multi_reduction <add>, %552, %cst_385 [0] : vector<4x64xf32> to vector<64xf32>
    %558 = vector.shape_cast %557 : vector<64xf32> to vector<1x64xf32>
    %559 = arith.addf %556, %558 : vector<1x64xf32>
    %cst_386 = arith.constant dense<0.000000e+00> : vector<1x16xf32>
    %560 = tpu.matmul %559, %553, %cst_386 {dimension_numbers = #tpu.dot_dimension_numbers<[1], [0], [0], [1], [0, 0, 1, 1], [], []>} : vector<1x64xf32>, vector<64x16xf32>, vector<1x16xf32> -> vector<1x16xf32>
    %cst_387 = arith.constant 3.125000e-02 : f32
    %561 = vector.broadcast %cst_387 : f32 to vector<1x16xf32>
    %562 = arith.mulf %560, %561 : vector<1x16xf32>
    %cst_388 = arith.constant dense<0.000000e+00> : vector<1x64xf32>
    %563 = tpu.matmul %562, %554, %cst_388 {dimension_numbers = #tpu.dot_dimension_numbers<[1], [0], [0], [1], [0, 0, 1, 1], [], []>} : vector<1x16xf32>, vector<16x64xf32>, vector<1x64xf32> -> vector<1x64xf32>
    %564 = vector.broadcast %563 : vector<1x64xf32> to vector<4x64xf32>
    %565 = arith.subf %546, %564 : vector<4x64xf32>
    %566 = vector.broadcast %563 : vector<1x64xf32> to vector<4x64xf32>
    %567 = arith.subf %552, %566 : vector<4x64xf32>
    %568 = arith.mulf %565, %565 : vector<4x64xf32>
    %cst_389 = arith.constant dense<0.000000e+00> : vector<64xf32>
    %569 = vector.multi_reduction <add>, %568, %cst_389 [0] : vector<4x64xf32> to vector<64xf32>
    %570 = vector.shape_cast %569 : vector<64xf32> to vector<1x64xf32>
    %571 = arith.mulf %567, %567 : vector<4x64xf32>
    %cst_390 = arith.constant dense<0.000000e+00> : vector<64xf32>
    %572 = vector.multi_reduction <add>, %571, %cst_390 [0] : vector<4x64xf32> to vector<64xf32>
    %573 = vector.shape_cast %572 : vector<64xf32> to vector<1x64xf32>
    %574 = arith.addf %570, %573 : vector<1x64xf32>
    %cst_391 = arith.constant dense<0.000000e+00> : vector<1x16xf32>
    %575 = tpu.matmul %574, %553, %cst_391 {dimension_numbers = #tpu.dot_dimension_numbers<[1], [0], [0], [1], [0, 0, 1, 1], [], []>} : vector<1x64xf32>, vector<64x16xf32>, vector<1x16xf32> -> vector<1x16xf32>
    %cst_392 = arith.constant 3.125000e-02 : f32
    %576 = vector.broadcast %cst_392 : f32 to vector<1x16xf32>
    %577 = arith.mulf %575, %576 : vector<1x16xf32>
    %cst_393 = arith.constant 9.99999974E-6 : f32
    %578 = vector.broadcast %cst_393 : f32 to vector<1x16xf32>
    %579 = arith.addf %577, %578 : vector<1x16xf32>
    %580 = math.rsqrt %579 : vector<1x16xf32>
    %c400 = arith.constant 400 : index
    %c0_394 = arith.constant 0 : index
    %581 = vector.load %arg2[%c400, %c0_394] : memref<584x64xf32, #tpu.memory_space<vmem>>, vector<1x16xf32>
    %c408 = arith.constant 408 : index
    %c0_395 = arith.constant 0 : index
    %582 = vector.load %arg2[%c408, %c0_395] : memref<584x64xf32, #tpu.memory_space<vmem>>, vector<1x16xf32>
    %583 = arith.mulf %581, %580 : vector<1x16xf32>
    %cst_396 = arith.constant dense<0.000000e+00> : vector<1x64xf32>
    %584 = tpu.matmul %583, %554, %cst_396 {dimension_numbers = #tpu.dot_dimension_numbers<[1], [0], [0], [1], [0, 0, 1, 1], [], []>} : vector<1x16xf32>, vector<16x64xf32>, vector<1x64xf32> -> vector<1x64xf32>
    %cst_397 = arith.constant dense<0.000000e+00> : vector<1x64xf32>
    %585 = tpu.matmul %582, %554, %cst_397 {dimension_numbers = #tpu.dot_dimension_numbers<[1], [0], [0], [1], [0, 0, 1, 1], [], []>} : vector<1x16xf32>, vector<16x64xf32>, vector<1x64xf32> -> vector<1x64xf32>
    %586 = vector.broadcast %584 : vector<1x64xf32> to vector<4x64xf32>
    %587 = arith.mulf %565, %586 : vector<4x64xf32>
    %588 = vector.broadcast %585 : vector<1x64xf32> to vector<4x64xf32>
    %589 = arith.addf %587, %588 : vector<4x64xf32>
    %590 = vector.broadcast %584 : vector<1x64xf32> to vector<4x64xf32>
    %591 = arith.mulf %567, %590 : vector<4x64xf32>
    %592 = vector.broadcast %585 : vector<1x64xf32> to vector<4x64xf32>
    %593 = arith.addf %591, %592 : vector<4x64xf32>
    %c0_398 = arith.constant 0 : index
    %c0_399 = arith.constant 0 : index
    %594 = vector.load %arg9[%c0_398, %c0_399] : memref<12x96xf32, #tpu.memory_space<vmem>>, vector<4x96xf32>
    %595 = arith.truncf %594 : vector<4x96xf32> to vector<4x96xbf16>
    %c1368 = arith.constant 1368 : index
    %c0_400 = arith.constant 0 : index
    %596 = vector.load %arg1[%c1368, %c0_400] : memref<2504x64xbf16, #tpu.memory_space<vmem>>, vector<96x64xbf16>
    %cst_401 = arith.constant dense<0.000000e+00> : vector<4x64xf32>
    %597 = tpu.matmul %595, %596, %cst_401 {dimension_numbers = #tpu.dot_dimension_numbers<[1], [0], [0], [1], [0, 0, 1, 1], [], []>} : vector<4x96xbf16>, vector<96x64xbf16>, vector<4x64xf32> -> vector<4x64xf32>
    %c1_402 = arith.constant 1 : index
    %c0_403 = arith.constant 0 : index
    %598 = vector.load %arg9[%c1_402, %c0_403] : memref<12x96xf32, #tpu.memory_space<vmem>>, vector<4x96xf32>
    %599 = arith.truncf %598 : vector<4x96xf32> to vector<4x96xbf16>
    %c1464 = arith.constant 1464 : index
    %c0_404 = arith.constant 0 : index
    %600 = vector.load %arg1[%c1464, %c0_404] : memref<2504x64xbf16, #tpu.memory_space<vmem>>, vector<96x64xbf16>
    %cst_405 = arith.constant dense<0.000000e+00> : vector<4x64xf32>
    %601 = tpu.matmul %599, %600, %cst_405 {dimension_numbers = #tpu.dot_dimension_numbers<[1], [0], [0], [1], [0, 0, 1, 1], [], []>} : vector<4x96xbf16>, vector<96x64xbf16>, vector<4x64xf32> -> vector<4x64xf32>
    %602 = arith.addf %597, %601 : vector<4x64xf32>
    %c2_406 = arith.constant 2 : index
    %c0_407 = arith.constant 0 : index
    %603 = vector.load %arg9[%c2_406, %c0_407] : memref<12x96xf32, #tpu.memory_space<vmem>>, vector<4x96xf32>
    %604 = arith.truncf %603 : vector<4x96xf32> to vector<4x96xbf16>
    %c1560 = arith.constant 1560 : index
    %c0_408 = arith.constant 0 : index
    %605 = vector.load %arg1[%c1560, %c0_408] : memref<2504x64xbf16, #tpu.memory_space<vmem>>, vector<96x64xbf16>
    %cst_409 = arith.constant dense<0.000000e+00> : vector<4x64xf32>
    %606 = tpu.matmul %604, %605, %cst_409 {dimension_numbers = #tpu.dot_dimension_numbers<[1], [0], [0], [1], [0, 0, 1, 1], [], []>} : vector<4x96xbf16>, vector<96x64xbf16>, vector<4x64xf32> -> vector<4x64xf32>
    %607 = arith.addf %602, %606 : vector<4x64xf32>
    %c6 = arith.constant 6 : index
    %c0_410 = arith.constant 0 : index
    %608 = vector.load %arg9[%c6, %c0_410] : memref<12x96xf32, #tpu.memory_space<vmem>>, vector<4x96xf32>
    %609 = arith.truncf %608 : vector<4x96xf32> to vector<4x96xbf16>
    %c1368_411 = arith.constant 1368 : index
    %c0_412 = arith.constant 0 : index
    %610 = vector.load %arg1[%c1368_411, %c0_412] : memref<2504x64xbf16, #tpu.memory_space<vmem>>, vector<96x64xbf16>
    %cst_413 = arith.constant dense<0.000000e+00> : vector<4x64xf32>
    %611 = tpu.matmul %609, %610, %cst_413 {dimension_numbers = #tpu.dot_dimension_numbers<[1], [0], [0], [1], [0, 0, 1, 1], [], []>} : vector<4x96xbf16>, vector<96x64xbf16>, vector<4x64xf32> -> vector<4x64xf32>
    %c7_414 = arith.constant 7 : index
    %c0_415 = arith.constant 0 : index
    %612 = vector.load %arg9[%c7_414, %c0_415] : memref<12x96xf32, #tpu.memory_space<vmem>>, vector<4x96xf32>
    %613 = arith.truncf %612 : vector<4x96xf32> to vector<4x96xbf16>
    %c1464_416 = arith.constant 1464 : index
    %c0_417 = arith.constant 0 : index
    %614 = vector.load %arg1[%c1464_416, %c0_417] : memref<2504x64xbf16, #tpu.memory_space<vmem>>, vector<96x64xbf16>
    %cst_418 = arith.constant dense<0.000000e+00> : vector<4x64xf32>
    %615 = tpu.matmul %613, %614, %cst_418 {dimension_numbers = #tpu.dot_dimension_numbers<[1], [0], [0], [1], [0, 0, 1, 1], [], []>} : vector<4x96xbf16>, vector<96x64xbf16>, vector<4x64xf32> -> vector<4x64xf32>
    %616 = arith.addf %611, %615 : vector<4x64xf32>
    %c8_419 = arith.constant 8 : index
    %c0_420 = arith.constant 0 : index
    %617 = vector.load %arg9[%c8_419, %c0_420] : memref<12x96xf32, #tpu.memory_space<vmem>>, vector<4x96xf32>
    %618 = arith.truncf %617 : vector<4x96xf32> to vector<4x96xbf16>
    %c1560_421 = arith.constant 1560 : index
    %c0_422 = arith.constant 0 : index
    %619 = vector.load %arg1[%c1560_421, %c0_422] : memref<2504x64xbf16, #tpu.memory_space<vmem>>, vector<96x64xbf16>
    %cst_423 = arith.constant dense<0.000000e+00> : vector<4x64xf32>
    %620 = tpu.matmul %618, %619, %cst_423 {dimension_numbers = #tpu.dot_dimension_numbers<[1], [0], [0], [1], [0, 0, 1, 1], [], []>} : vector<4x96xbf16>, vector<96x64xbf16>, vector<4x64xf32> -> vector<4x64xf32>
    %621 = arith.addf %616, %620 : vector<4x64xf32>
    %c288_424 = arith.constant 288 : index
    %c0_425 = arith.constant 0 : index
    %622 = vector.load %arg2[%c288_424, %c0_425] : memref<584x64xf32, #tpu.memory_space<vmem>>, vector<64x16xf32>
    %c352_426 = arith.constant 352 : index
    %c0_427 = arith.constant 0 : index
    %623 = vector.load %arg2[%c352_426, %c0_427] : memref<584x64xf32, #tpu.memory_space<vmem>>, vector<16x64xf32>
    %cst_428 = arith.constant dense<0.000000e+00> : vector<64xf32>
    %624 = vector.multi_reduction <add>, %607, %cst_428 [0] : vector<4x64xf32> to vector<64xf32>
    %625 = vector.shape_cast %624 : vector<64xf32> to vector<1x64xf32>
    %cst_429 = arith.constant dense<0.000000e+00> : vector<64xf32>
    %626 = vector.multi_reduction <add>, %621, %cst_429 [0] : vector<4x64xf32> to vector<64xf32>
    %627 = vector.shape_cast %626 : vector<64xf32> to vector<1x64xf32>
    %628 = arith.addf %625, %627 : vector<1x64xf32>
    %cst_430 = arith.constant dense<0.000000e+00> : vector<1x16xf32>
    %629 = tpu.matmul %628, %622, %cst_430 {dimension_numbers = #tpu.dot_dimension_numbers<[1], [0], [0], [1], [0, 0, 1, 1], [], []>} : vector<1x64xf32>, vector<64x16xf32>, vector<1x16xf32> -> vector<1x16xf32>
    %cst_431 = arith.constant 3.125000e-02 : f32
    %630 = vector.broadcast %cst_431 : f32 to vector<1x16xf32>
    %631 = arith.mulf %629, %630 : vector<1x16xf32>
    %cst_432 = arith.constant dense<0.000000e+00> : vector<1x64xf32>
    %632 = tpu.matmul %631, %623, %cst_432 {dimension_numbers = #tpu.dot_dimension_numbers<[1], [0], [0], [1], [0, 0, 1, 1], [], []>} : vector<1x16xf32>, vector<16x64xf32>, vector<1x64xf32> -> vector<1x64xf32>
    %633 = vector.broadcast %632 : vector<1x64xf32> to vector<4x64xf32>
    %634 = arith.subf %607, %633 : vector<4x64xf32>
    %635 = vector.broadcast %632 : vector<1x64xf32> to vector<4x64xf32>
    %636 = arith.subf %621, %635 : vector<4x64xf32>
    %637 = arith.mulf %634, %634 : vector<4x64xf32>
    %cst_433 = arith.constant dense<0.000000e+00> : vector<64xf32>
    %638 = vector.multi_reduction <add>, %637, %cst_433 [0] : vector<4x64xf32> to vector<64xf32>
    %639 = vector.shape_cast %638 : vector<64xf32> to vector<1x64xf32>
    %640 = arith.mulf %636, %636 : vector<4x64xf32>
    %cst_434 = arith.constant dense<0.000000e+00> : vector<64xf32>
    %641 = vector.multi_reduction <add>, %640, %cst_434 [0] : vector<4x64xf32> to vector<64xf32>
    %642 = vector.shape_cast %641 : vector<64xf32> to vector<1x64xf32>
    %643 = arith.addf %639, %642 : vector<1x64xf32>
    %cst_435 = arith.constant dense<0.000000e+00> : vector<1x16xf32>
    %644 = tpu.matmul %643, %622, %cst_435 {dimension_numbers = #tpu.dot_dimension_numbers<[1], [0], [0], [1], [0, 0, 1, 1], [], []>} : vector<1x64xf32>, vector<64x16xf32>, vector<1x16xf32> -> vector<1x16xf32>
    %cst_436 = arith.constant 3.125000e-02 : f32
    %645 = vector.broadcast %cst_436 : f32 to vector<1x16xf32>
    %646 = arith.mulf %644, %645 : vector<1x16xf32>
    %cst_437 = arith.constant 9.99999974E-6 : f32
    %647 = vector.broadcast %cst_437 : f32 to vector<1x16xf32>
    %648 = arith.addf %646, %647 : vector<1x16xf32>
    %649 = math.rsqrt %648 : vector<1x16xf32>
    %c384_438 = arith.constant 384 : index
    %c0_439 = arith.constant 0 : index
    %650 = vector.load %arg2[%c384_438, %c0_439] : memref<584x64xf32, #tpu.memory_space<vmem>>, vector<1x16xf32>
    %c392 = arith.constant 392 : index
    %c0_440 = arith.constant 0 : index
    %651 = vector.load %arg2[%c392, %c0_440] : memref<584x64xf32, #tpu.memory_space<vmem>>, vector<1x16xf32>
    %652 = arith.mulf %650, %649 : vector<1x16xf32>
    %cst_441 = arith.constant dense<0.000000e+00> : vector<1x64xf32>
    %653 = tpu.matmul %652, %623, %cst_441 {dimension_numbers = #tpu.dot_dimension_numbers<[1], [0], [0], [1], [0, 0, 1, 1], [], []>} : vector<1x16xf32>, vector<16x64xf32>, vector<1x64xf32> -> vector<1x64xf32>
    %cst_442 = arith.constant dense<0.000000e+00> : vector<1x64xf32>
    %654 = tpu.matmul %651, %623, %cst_442 {dimension_numbers = #tpu.dot_dimension_numbers<[1], [0], [0], [1], [0, 0, 1, 1], [], []>} : vector<1x16xf32>, vector<16x64xf32>, vector<1x64xf32> -> vector<1x64xf32>
    %655 = vector.broadcast %653 : vector<1x64xf32> to vector<4x64xf32>
    %656 = arith.mulf %634, %655 : vector<4x64xf32>
    %657 = vector.broadcast %654 : vector<1x64xf32> to vector<4x64xf32>
    %658 = arith.addf %656, %657 : vector<4x64xf32>
    %659 = arith.addf %658, %589 : vector<4x64xf32>
    %cst_443 = arith.constant 0.000000e+00 : f32
    %660 = vector.broadcast %cst_443 : f32 to vector<4x64xf32>
    %661 = arith.maximumf %659, %660 : vector<4x64xf32>
    %662 = vector.broadcast %653 : vector<1x64xf32> to vector<4x64xf32>
    %663 = arith.mulf %636, %662 : vector<4x64xf32>
    %664 = vector.broadcast %654 : vector<1x64xf32> to vector<4x64xf32>
    %665 = arith.addf %663, %664 : vector<4x64xf32>
    %666 = arith.addf %665, %593 : vector<4x64xf32>
    %cst_444 = arith.constant 0.000000e+00 : f32
    %667 = vector.broadcast %cst_444 : f32 to vector<4x64xf32>
    %668 = arith.maximumf %666, %667 : vector<4x64xf32>
    %c1_445 = arith.constant 1 : index
    %c16_446 = arith.constant 16 : index
    %669 = vector.load %arg10[%c1_445, %c16_446] : memref<12x96xf32, #tpu.memory_space<vmem>>, vector<4x64xf32>
    tpu.vector_store %arg10[%c1_445, %c16_446], %661 {strides = array<i32>} : memref<12x96xf32, #tpu.memory_space<vmem>>, vector<4x64xf32>,
    %c7_447 = arith.constant 7 : index
    %c16_448 = arith.constant 16 : index
    %670 = vector.load %arg10[%c7_447, %c16_448] : memref<12x96xf32, #tpu.memory_space<vmem>>, vector<4x64xf32>
    tpu.vector_store %arg10[%c7_447, %c16_448], %668 {strides = array<i32>} : memref<12x96xf32, #tpu.memory_space<vmem>>, vector<4x64xf32>,
    %c0_449 = arith.constant 0 : index
    %c0_450 = arith.constant 0 : index
    %671 = vector.load %arg10[%c0_449, %c0_450] : memref<12x96xf32, #tpu.memory_space<vmem>>, vector<6x96xf32>
    %c416 = arith.constant 416 : index
    %c0_451 = arith.constant 0 : index
    %672 = vector.load %arg2[%c416, %c0_451] : memref<584x64xf32, #tpu.memory_space<vmem>>, vector<2x6xf32>
    %cst_452 = arith.constant dense<0.000000e+00> : vector<2x96xf32>
    %673 = tpu.matmul %672, %671, %cst_452 {dimension_numbers = #tpu.dot_dimension_numbers<[1], [0], [0], [1], [0, 0, 1, 1], [], []>} : vector<2x6xf32>, vector<6x96xf32>, vector<2x96xf32> -> vector<2x96xf32>
    %674 = arith.truncf %673 : vector<2x96xf32> to vector<2x96xbf16>
    %c1736 = arith.constant 1736 : index
    %c0_453 = arith.constant 0 : index
    %675 = vector.load %arg1[%c1736, %c0_453] : memref<2504x64xbf16, #tpu.memory_space<vmem>>, vector<96x64xbf16>
    %cst_454 = arith.constant dense<0.000000e+00> : vector<2x64xf32>
    %676 = tpu.matmul %674, %675, %cst_454 {dimension_numbers = #tpu.dot_dimension_numbers<[1], [0], [0], [1], [0, 0, 1, 1], [], []>} : vector<2x96xbf16>, vector<96x64xbf16>, vector<2x64xf32> -> vector<2x64xf32>
    %c424 = arith.constant 424 : index
    %c0_455 = arith.constant 0 : index
    %677 = vector.load %arg2[%c424, %c0_455] : memref<584x64xf32, #tpu.memory_space<vmem>>, vector<2x6xf32>
    %cst_456 = arith.constant dense<0.000000e+00> : vector<2x96xf32>
    %678 = tpu.matmul %677, %671, %cst_456 {dimension_numbers = #tpu.dot_dimension_numbers<[1], [0], [0], [1], [0, 0, 1, 1], [], []>} : vector<2x6xf32>, vector<6x96xf32>, vector<2x96xf32> -> vector<2x96xf32>
    %679 = arith.truncf %678 : vector<2x96xf32> to vector<2x96xbf16>
    %c1832 = arith.constant 1832 : index
    %c0_457 = arith.constant 0 : index
    %680 = vector.load %arg1[%c1832, %c0_457] : memref<2504x64xbf16, #tpu.memory_space<vmem>>, vector<96x64xbf16>
    %cst_458 = arith.constant dense<0.000000e+00> : vector<2x64xf32>
    %681 = tpu.matmul %679, %680, %cst_458 {dimension_numbers = #tpu.dot_dimension_numbers<[1], [0], [0], [1], [0, 0, 1, 1], [], []>} : vector<2x96xbf16>, vector<96x64xbf16>, vector<2x64xf32> -> vector<2x64xf32>
    %682 = arith.addf %676, %681 : vector<2x64xf32>
    %c432 = arith.constant 432 : index
    %c0_459 = arith.constant 0 : index
    %683 = vector.load %arg2[%c432, %c0_459] : memref<584x64xf32, #tpu.memory_space<vmem>>, vector<2x6xf32>
    %cst_460 = arith.constant dense<0.000000e+00> : vector<2x96xf32>
    %684 = tpu.matmul %683, %671, %cst_460 {dimension_numbers = #tpu.dot_dimension_numbers<[1], [0], [0], [1], [0, 0, 1, 1], [], []>} : vector<2x6xf32>, vector<6x96xf32>, vector<2x96xf32> -> vector<2x96xf32>
    %685 = arith.truncf %684 : vector<2x96xf32> to vector<2x96xbf16>
    %c1928 = arith.constant 1928 : index
    %c0_461 = arith.constant 0 : index
    %686 = vector.load %arg1[%c1928, %c0_461] : memref<2504x64xbf16, #tpu.memory_space<vmem>>, vector<96x64xbf16>
    %cst_462 = arith.constant dense<0.000000e+00> : vector<2x64xf32>
    %687 = tpu.matmul %685, %686, %cst_462 {dimension_numbers = #tpu.dot_dimension_numbers<[1], [0], [0], [1], [0, 0, 1, 1], [], []>} : vector<2x96xbf16>, vector<96x64xbf16>, vector<2x64xf32> -> vector<2x64xf32>
    %688 = arith.addf %682, %687 : vector<2x64xf32>
    %c6_463 = arith.constant 6 : index
    %c0_464 = arith.constant 0 : index
    %689 = vector.load %arg10[%c6_463, %c0_464] : memref<12x96xf32, #tpu.memory_space<vmem>>, vector<6x96xf32>
    %c416_465 = arith.constant 416 : index
    %c0_466 = arith.constant 0 : index
    %690 = vector.load %arg2[%c416_465, %c0_466] : memref<584x64xf32, #tpu.memory_space<vmem>>, vector<2x6xf32>
    %cst_467 = arith.constant dense<0.000000e+00> : vector<2x96xf32>
    %691 = tpu.matmul %690, %689, %cst_467 {dimension_numbers = #tpu.dot_dimension_numbers<[1], [0], [0], [1], [0, 0, 1, 1], [], []>} : vector<2x6xf32>, vector<6x96xf32>, vector<2x96xf32> -> vector<2x96xf32>
    %692 = arith.truncf %691 : vector<2x96xf32> to vector<2x96xbf16>
    %c1736_468 = arith.constant 1736 : index
    %c0_469 = arith.constant 0 : index
    %693 = vector.load %arg1[%c1736_468, %c0_469] : memref<2504x64xbf16, #tpu.memory_space<vmem>>, vector<96x64xbf16>
    %cst_470 = arith.constant dense<0.000000e+00> : vector<2x64xf32>
    %694 = tpu.matmul %692, %693, %cst_470 {dimension_numbers = #tpu.dot_dimension_numbers<[1], [0], [0], [1], [0, 0, 1, 1], [], []>} : vector<2x96xbf16>, vector<96x64xbf16>, vector<2x64xf32> -> vector<2x64xf32>
    %c424_471 = arith.constant 424 : index
    %c0_472 = arith.constant 0 : index
    %695 = vector.load %arg2[%c424_471, %c0_472] : memref<584x64xf32, #tpu.memory_space<vmem>>, vector<2x6xf32>
    %cst_473 = arith.constant dense<0.000000e+00> : vector<2x96xf32>
    %696 = tpu.matmul %695, %689, %cst_473 {dimension_numbers = #tpu.dot_dimension_numbers<[1], [0], [0], [1], [0, 0, 1, 1], [], []>} : vector<2x6xf32>, vector<6x96xf32>, vector<2x96xf32> -> vector<2x96xf32>
    %697 = arith.truncf %696 : vector<2x96xf32> to vector<2x96xbf16>
    %c1832_474 = arith.constant 1832 : index
    %c0_475 = arith.constant 0 : index
    %698 = vector.load %arg1[%c1832_474, %c0_475] : memref<2504x64xbf16, #tpu.memory_space<vmem>>, vector<96x64xbf16>
    %cst_476 = arith.constant dense<0.000000e+00> : vector<2x64xf32>
    %699 = tpu.matmul %697, %698, %cst_476 {dimension_numbers = #tpu.dot_dimension_numbers<[1], [0], [0], [1], [0, 0, 1, 1], [], []>} : vector<2x96xbf16>, vector<96x64xbf16>, vector<2x64xf32> -> vector<2x64xf32>
    %700 = arith.addf %694, %699 : vector<2x64xf32>
    %c432_477 = arith.constant 432 : index
    %c0_478 = arith.constant 0 : index
    %701 = vector.load %arg2[%c432_477, %c0_478] : memref<584x64xf32, #tpu.memory_space<vmem>>, vector<2x6xf32>
    %cst_479 = arith.constant dense<0.000000e+00> : vector<2x96xf32>
    %702 = tpu.matmul %701, %689, %cst_479 {dimension_numbers = #tpu.dot_dimension_numbers<[1], [0], [0], [1], [0, 0, 1, 1], [], []>} : vector<2x6xf32>, vector<6x96xf32>, vector<2x96xf32> -> vector<2x96xf32>
    %703 = arith.truncf %702 : vector<2x96xf32> to vector<2x96xbf16>
    %c1928_480 = arith.constant 1928 : index
    %c0_481 = arith.constant 0 : index
    %704 = vector.load %arg1[%c1928_480, %c0_481] : memref<2504x64xbf16, #tpu.memory_space<vmem>>, vector<96x64xbf16>
    %cst_482 = arith.constant dense<0.000000e+00> : vector<2x64xf32>
    %705 = tpu.matmul %703, %704, %cst_482 {dimension_numbers = #tpu.dot_dimension_numbers<[1], [0], [0], [1], [0, 0, 1, 1], [], []>} : vector<2x96xbf16>, vector<96x64xbf16>, vector<2x64xf32> -> vector<2x64xf32>
    %706 = arith.addf %700, %705 : vector<2x64xf32>
    %c440 = arith.constant 440 : index
    %c0_483 = arith.constant 0 : index
    %707 = vector.load %arg2[%c440, %c0_483] : memref<584x64xf32, #tpu.memory_space<vmem>>, vector<64x32xf32>
    %c504 = arith.constant 504 : index
    %c0_484 = arith.constant 0 : index
    %708 = vector.load %arg2[%c504, %c0_484] : memref<584x64xf32, #tpu.memory_space<vmem>>, vector<32x64xf32>
    %cst_485 = arith.constant dense<0.000000e+00> : vector<64xf32>
    %709 = vector.multi_reduction <add>, %688, %cst_485 [0] : vector<2x64xf32> to vector<64xf32>
    %710 = vector.shape_cast %709 : vector<64xf32> to vector<1x64xf32>
    %cst_486 = arith.constant dense<0.000000e+00> : vector<64xf32>
    %711 = vector.multi_reduction <add>, %706, %cst_486 [0] : vector<2x64xf32> to vector<64xf32>
    %712 = vector.shape_cast %711 : vector<64xf32> to vector<1x64xf32>
    %713 = arith.addf %710, %712 : vector<1x64xf32>
    %cst_487 = arith.constant dense<0.000000e+00> : vector<1x32xf32>
    %714 = tpu.matmul %713, %707, %cst_487 {dimension_numbers = #tpu.dot_dimension_numbers<[1], [0], [0], [1], [0, 0, 1, 1], [], []>} : vector<1x64xf32>, vector<64x32xf32>, vector<1x32xf32> -> vector<1x32xf32>
    %cst_488 = arith.constant 1.250000e-01 : f32
    %715 = vector.broadcast %cst_488 : f32 to vector<1x32xf32>
    %716 = arith.mulf %714, %715 : vector<1x32xf32>
    %cst_489 = arith.constant dense<0.000000e+00> : vector<1x64xf32>
    %717 = tpu.matmul %716, %708, %cst_489 {dimension_numbers = #tpu.dot_dimension_numbers<[1], [0], [0], [1], [0, 0, 1, 1], [], []>} : vector<1x32xf32>, vector<32x64xf32>, vector<1x64xf32> -> vector<1x64xf32>
    %718 = vector.broadcast %717 : vector<1x64xf32> to vector<2x64xf32>
    %719 = arith.subf %688, %718 : vector<2x64xf32>
    %720 = vector.broadcast %717 : vector<1x64xf32> to vector<2x64xf32>
    %721 = arith.subf %706, %720 : vector<2x64xf32>
    %722 = arith.mulf %719, %719 : vector<2x64xf32>
    %cst_490 = arith.constant dense<0.000000e+00> : vector<64xf32>
    %723 = vector.multi_reduction <add>, %722, %cst_490 [0] : vector<2x64xf32> to vector<64xf32>
    %724 = vector.shape_cast %723 : vector<64xf32> to vector<1x64xf32>
    %725 = arith.mulf %721, %721 : vector<2x64xf32>
    %cst_491 = arith.constant dense<0.000000e+00> : vector<64xf32>
    %726 = vector.multi_reduction <add>, %725, %cst_491 [0] : vector<2x64xf32> to vector<64xf32>
    %727 = vector.shape_cast %726 : vector<64xf32> to vector<1x64xf32>
    %728 = arith.addf %724, %727 : vector<1x64xf32>
    %cst_492 = arith.constant dense<0.000000e+00> : vector<1x32xf32>
    %729 = tpu.matmul %728, %707, %cst_492 {dimension_numbers = #tpu.dot_dimension_numbers<[1], [0], [0], [1], [0, 0, 1, 1], [], []>} : vector<1x64xf32>, vector<64x32xf32>, vector<1x32xf32> -> vector<1x32xf32>
    %cst_493 = arith.constant 1.250000e-01 : f32
    %730 = vector.broadcast %cst_493 : f32 to vector<1x32xf32>
    %731 = arith.mulf %729, %730 : vector<1x32xf32>
    %cst_494 = arith.constant 9.99999974E-6 : f32
    %732 = vector.broadcast %cst_494 : f32 to vector<1x32xf32>
    %733 = arith.addf %731, %732 : vector<1x32xf32>
    %734 = math.rsqrt %733 : vector<1x32xf32>
    %c536 = arith.constant 536 : index
    %c0_495 = arith.constant 0 : index
    %735 = vector.load %arg2[%c536, %c0_495] : memref<584x64xf32, #tpu.memory_space<vmem>>, vector<1x32xf32>
    %c544 = arith.constant 544 : index
    %c0_496 = arith.constant 0 : index
    %736 = vector.load %arg2[%c544, %c0_496] : memref<584x64xf32, #tpu.memory_space<vmem>>, vector<1x32xf32>
    %737 = arith.mulf %735, %734 : vector<1x32xf32>
    %cst_497 = arith.constant dense<0.000000e+00> : vector<1x64xf32>
    %738 = tpu.matmul %737, %708, %cst_497 {dimension_numbers = #tpu.dot_dimension_numbers<[1], [0], [0], [1], [0, 0, 1, 1], [], []>} : vector<1x32xf32>, vector<32x64xf32>, vector<1x64xf32> -> vector<1x64xf32>
    %cst_498 = arith.constant dense<0.000000e+00> : vector<1x64xf32>
    %739 = tpu.matmul %736, %708, %cst_498 {dimension_numbers = #tpu.dot_dimension_numbers<[1], [0], [0], [1], [0, 0, 1, 1], [], []>} : vector<1x32xf32>, vector<32x64xf32>, vector<1x64xf32> -> vector<1x64xf32>
    %740 = vector.broadcast %738 : vector<1x64xf32> to vector<2x64xf32>
    %741 = arith.mulf %719, %740 : vector<2x64xf32>
    %742 = vector.broadcast %739 : vector<1x64xf32> to vector<2x64xf32>
    %743 = arith.addf %741, %742 : vector<2x64xf32>
    %cst_499 = arith.constant 0.000000e+00 : f32
    %744 = vector.broadcast %cst_499 : f32 to vector<2x64xf32>
    %745 = arith.maximumf %743, %744 : vector<2x64xf32>
    %746 = vector.broadcast %738 : vector<1x64xf32> to vector<2x64xf32>
    %747 = arith.mulf %721, %746 : vector<2x64xf32>
    %748 = vector.broadcast %739 : vector<1x64xf32> to vector<2x64xf32>
    %749 = arith.addf %747, %748 : vector<2x64xf32>
    %cst_500 = arith.constant 0.000000e+00 : f32
    %750 = vector.broadcast %cst_500 : f32 to vector<2x64xf32>
    %751 = arith.maximumf %749, %750 : vector<2x64xf32>
    %c1_501 = arith.constant 1 : index
    %c32 = arith.constant 32 : index
    %752 = vector.load %arg11[%c1_501, %c32] : memref<8x128xf32, #tpu.memory_space<vmem>>, vector<2x64xf32>
    tpu.vector_store %arg11[%c1_501, %c32], %745 {strides = array<i32>} : memref<8x128xf32, #tpu.memory_space<vmem>>, vector<2x64xf32>,
    %c5 = arith.constant 5 : index
    %c32_502 = arith.constant 32 : index
    %753 = vector.load %arg11[%c5, %c32_502] : memref<8x128xf32, #tpu.memory_space<vmem>>, vector<2x64xf32>
    tpu.vector_store %arg11[%c5, %c32_502], %751 {strides = array<i32>} : memref<8x128xf32, #tpu.memory_space<vmem>>, vector<2x64xf32>,
    %c0_503 = arith.constant 0 : index
    %c0_504 = arith.constant 0 : index
    %754 = vector.load %arg10[%c0_503, %c0_504] : memref<12x96xf32, #tpu.memory_space<vmem>>, vector<6x96xf32>
    %c424_505 = arith.constant 424 : index
    %c0_506 = arith.constant 0 : index
    %755 = vector.load %arg2[%c424_505, %c0_506] : memref<584x64xf32, #tpu.memory_space<vmem>>, vector<2x6xf32>
    %cst_507 = arith.constant dense<0.000000e+00> : vector<2x96xf32>
    %756 = tpu.matmul %755, %754, %cst_507 {dimension_numbers = #tpu.dot_dimension_numbers<[1], [0], [0], [1], [0, 0, 1, 1], [], []>} : vector<2x6xf32>, vector<6x96xf32>, vector<2x96xf32> -> vector<2x96xf32>
    %757 = arith.truncf %756 : vector<2x96xf32> to vector<2x96xbf16>
    %c2408 = arith.constant 2408 : index
    %c0_508 = arith.constant 0 : index
    %758 = vector.load %arg1[%c2408, %c0_508] : memref<2504x64xbf16, #tpu.memory_space<vmem>>, vector<96x64xbf16>
    %cst_509 = arith.constant dense<0.000000e+00> : vector<2x64xf32>
    %759 = tpu.matmul %757, %758, %cst_509 {dimension_numbers = #tpu.dot_dimension_numbers<[1], [0], [0], [1], [0, 0, 1, 1], [], []>} : vector<2x96xbf16>, vector<96x64xbf16>, vector<2x64xf32> -> vector<2x64xf32>
    %c6_510 = arith.constant 6 : index
    %c0_511 = arith.constant 0 : index
    %760 = vector.load %arg10[%c6_510, %c0_511] : memref<12x96xf32, #tpu.memory_space<vmem>>, vector<6x96xf32>
    %c424_512 = arith.constant 424 : index
    %c0_513 = arith.constant 0 : index
    %761 = vector.load %arg2[%c424_512, %c0_513] : memref<584x64xf32, #tpu.memory_space<vmem>>, vector<2x6xf32>
    %cst_514 = arith.constant dense<0.000000e+00> : vector<2x96xf32>
    %762 = tpu.matmul %761, %760, %cst_514 {dimension_numbers = #tpu.dot_dimension_numbers<[1], [0], [0], [1], [0, 0, 1, 1], [], []>} : vector<2x6xf32>, vector<6x96xf32>, vector<2x96xf32> -> vector<2x96xf32>
    %763 = arith.truncf %762 : vector<2x96xf32> to vector<2x96xbf16>
    %c2408_515 = arith.constant 2408 : index
    %c0_516 = arith.constant 0 : index
    %764 = vector.load %arg1[%c2408_515, %c0_516] : memref<2504x64xbf16, #tpu.memory_space<vmem>>, vector<96x64xbf16>
    %cst_517 = arith.constant dense<0.000000e+00> : vector<2x64xf32>
    %765 = tpu.matmul %763, %764, %cst_517 {dimension_numbers = #tpu.dot_dimension_numbers<[1], [0], [0], [1], [0, 0, 1, 1], [], []>} : vector<2x96xbf16>, vector<96x64xbf16>, vector<2x64xf32> -> vector<2x64xf32>
    %c440_518 = arith.constant 440 : index
    %c0_519 = arith.constant 0 : index
    %766 = vector.load %arg2[%c440_518, %c0_519] : memref<584x64xf32, #tpu.memory_space<vmem>>, vector<64x32xf32>
    %c504_520 = arith.constant 504 : index
    %c0_521 = arith.constant 0 : index
    %767 = vector.load %arg2[%c504_520, %c0_521] : memref<584x64xf32, #tpu.memory_space<vmem>>, vector<32x64xf32>
    %cst_522 = arith.constant dense<0.000000e+00> : vector<64xf32>
    %768 = vector.multi_reduction <add>, %759, %cst_522 [0] : vector<2x64xf32> to vector<64xf32>
    %769 = vector.shape_cast %768 : vector<64xf32> to vector<1x64xf32>
    %cst_523 = arith.constant dense<0.000000e+00> : vector<64xf32>
    %770 = vector.multi_reduction <add>, %765, %cst_523 [0] : vector<2x64xf32> to vector<64xf32>
    %771 = vector.shape_cast %770 : vector<64xf32> to vector<1x64xf32>
    %772 = arith.addf %769, %771 : vector<1x64xf32>
    %cst_524 = arith.constant dense<0.000000e+00> : vector<1x32xf32>
    %773 = tpu.matmul %772, %766, %cst_524 {dimension_numbers = #tpu.dot_dimension_numbers<[1], [0], [0], [1], [0, 0, 1, 1], [], []>} : vector<1x64xf32>, vector<64x32xf32>, vector<1x32xf32> -> vector<1x32xf32>
    %cst_525 = arith.constant 1.250000e-01 : f32
    %774 = vector.broadcast %cst_525 : f32 to vector<1x32xf32>
    %775 = arith.mulf %773, %774 : vector<1x32xf32>
    %cst_526 = arith.constant dense<0.000000e+00> : vector<1x64xf32>
    %776 = tpu.matmul %775, %767, %cst_526 {dimension_numbers = #tpu.dot_dimension_numbers<[1], [0], [0], [1], [0, 0, 1, 1], [], []>} : vector<1x32xf32>, vector<32x64xf32>, vector<1x64xf32> -> vector<1x64xf32>
    %777 = vector.broadcast %776 : vector<1x64xf32> to vector<2x64xf32>
    %778 = arith.subf %759, %777 : vector<2x64xf32>
    %779 = vector.broadcast %776 : vector<1x64xf32> to vector<2x64xf32>
    %780 = arith.subf %765, %779 : vector<2x64xf32>
    %781 = arith.mulf %778, %778 : vector<2x64xf32>
    %cst_527 = arith.constant dense<0.000000e+00> : vector<64xf32>
    %782 = vector.multi_reduction <add>, %781, %cst_527 [0] : vector<2x64xf32> to vector<64xf32>
    %783 = vector.shape_cast %782 : vector<64xf32> to vector<1x64xf32>
    %784 = arith.mulf %780, %780 : vector<2x64xf32>
    %cst_528 = arith.constant dense<0.000000e+00> : vector<64xf32>
    %785 = vector.multi_reduction <add>, %784, %cst_528 [0] : vector<2x64xf32> to vector<64xf32>
    %786 = vector.shape_cast %785 : vector<64xf32> to vector<1x64xf32>
    %787 = arith.addf %783, %786 : vector<1x64xf32>
    %cst_529 = arith.constant dense<0.000000e+00> : vector<1x32xf32>
    %788 = tpu.matmul %787, %766, %cst_529 {dimension_numbers = #tpu.dot_dimension_numbers<[1], [0], [0], [1], [0, 0, 1, 1], [], []>} : vector<1x64xf32>, vector<64x32xf32>, vector<1x32xf32> -> vector<1x32xf32>
    %cst_530 = arith.constant 1.250000e-01 : f32
    %789 = vector.broadcast %cst_530 : f32 to vector<1x32xf32>
    %790 = arith.mulf %788, %789 : vector<1x32xf32>
    %cst_531 = arith.constant 9.99999974E-6 : f32
    %791 = vector.broadcast %cst_531 : f32 to vector<1x32xf32>
    %792 = arith.addf %790, %791 : vector<1x32xf32>
    %793 = math.rsqrt %792 : vector<1x32xf32>
    %c568 = arith.constant 568 : index
    %c0_532 = arith.constant 0 : index
    %794 = vector.load %arg2[%c568, %c0_532] : memref<584x64xf32, #tpu.memory_space<vmem>>, vector<1x32xf32>
    %c576 = arith.constant 576 : index
    %c0_533 = arith.constant 0 : index
    %795 = vector.load %arg2[%c576, %c0_533] : memref<584x64xf32, #tpu.memory_space<vmem>>, vector<1x32xf32>
    %796 = arith.mulf %794, %793 : vector<1x32xf32>
    %cst_534 = arith.constant dense<0.000000e+00> : vector<1x64xf32>
    %797 = tpu.matmul %796, %767, %cst_534 {dimension_numbers = #tpu.dot_dimension_numbers<[1], [0], [0], [1], [0, 0, 1, 1], [], []>} : vector<1x32xf32>, vector<32x64xf32>, vector<1x64xf32> -> vector<1x64xf32>
    %cst_535 = arith.constant dense<0.000000e+00> : vector<1x64xf32>
    %798 = tpu.matmul %795, %767, %cst_535 {dimension_numbers = #tpu.dot_dimension_numbers<[1], [0], [0], [1], [0, 0, 1, 1], [], []>} : vector<1x32xf32>, vector<32x64xf32>, vector<1x64xf32> -> vector<1x64xf32>
    %799 = vector.broadcast %797 : vector<1x64xf32> to vector<2x64xf32>
    %800 = arith.mulf %778, %799 : vector<2x64xf32>
    %801 = vector.broadcast %798 : vector<1x64xf32> to vector<2x64xf32>
    %802 = arith.addf %800, %801 : vector<2x64xf32>
    %803 = vector.broadcast %797 : vector<1x64xf32> to vector<2x64xf32>
    %804 = arith.mulf %780, %803 : vector<2x64xf32>
    %805 = vector.broadcast %798 : vector<1x64xf32> to vector<2x64xf32>
    %806 = arith.addf %804, %805 : vector<2x64xf32>
    %c0_536 = arith.constant 0 : index
    %c0_537 = arith.constant 0 : index
    %807 = vector.load %arg11[%c0_536, %c0_537] : memref<8x128xf32, #tpu.memory_space<vmem>>, vector<2x128xf32>
    %808 = arith.truncf %807 : vector<2x128xf32> to vector<2x128xbf16>
    %c2024 = arith.constant 2024 : index
    %c0_538 = arith.constant 0 : index
    %809 = vector.load %arg1[%c2024, %c0_538] : memref<2504x64xbf16, #tpu.memory_space<vmem>>, vector<128x64xbf16>
    %cst_539 = arith.constant dense<0.000000e+00> : vector<2x64xf32>
    %810 = tpu.matmul %808, %809, %cst_539 {dimension_numbers = #tpu.dot_dimension_numbers<[1], [0], [0], [1], [0, 0, 1, 1], [], []>} : vector<2x128xbf16>, vector<128x64xbf16>, vector<2x64xf32> -> vector<2x64xf32>
    %c1_540 = arith.constant 1 : index
    %c0_541 = arith.constant 0 : index
    %811 = vector.load %arg11[%c1_540, %c0_541] : memref<8x128xf32, #tpu.memory_space<vmem>>, vector<2x128xf32>
    %812 = arith.truncf %811 : vector<2x128xf32> to vector<2x128xbf16>
    %c2152 = arith.constant 2152 : index
    %c0_542 = arith.constant 0 : index
    %813 = vector.load %arg1[%c2152, %c0_542] : memref<2504x64xbf16, #tpu.memory_space<vmem>>, vector<128x64xbf16>
    %cst_543 = arith.constant dense<0.000000e+00> : vector<2x64xf32>
    %814 = tpu.matmul %812, %813, %cst_543 {dimension_numbers = #tpu.dot_dimension_numbers<[1], [0], [0], [1], [0, 0, 1, 1], [], []>} : vector<2x128xbf16>, vector<128x64xbf16>, vector<2x64xf32> -> vector<2x64xf32>
    %815 = arith.addf %810, %814 : vector<2x64xf32>
    %c2_544 = arith.constant 2 : index
    %c0_545 = arith.constant 0 : index
    %816 = vector.load %arg11[%c2_544, %c0_545] : memref<8x128xf32, #tpu.memory_space<vmem>>, vector<2x128xf32>
    %817 = arith.truncf %816 : vector<2x128xf32> to vector<2x128xbf16>
    %c2280 = arith.constant 2280 : index
    %c0_546 = arith.constant 0 : index
    %818 = vector.load %arg1[%c2280, %c0_546] : memref<2504x64xbf16, #tpu.memory_space<vmem>>, vector<128x64xbf16>
    %cst_547 = arith.constant dense<0.000000e+00> : vector<2x64xf32>
    %819 = tpu.matmul %817, %818, %cst_547 {dimension_numbers = #tpu.dot_dimension_numbers<[1], [0], [0], [1], [0, 0, 1, 1], [], []>} : vector<2x128xbf16>, vector<128x64xbf16>, vector<2x64xf32> -> vector<2x64xf32>
    %820 = arith.addf %815, %819 : vector<2x64xf32>
    %c4_548 = arith.constant 4 : index
    %c0_549 = arith.constant 0 : index
    %821 = vector.load %arg11[%c4_548, %c0_549] : memref<8x128xf32, #tpu.memory_space<vmem>>, vector<2x128xf32>
    %822 = arith.truncf %821 : vector<2x128xf32> to vector<2x128xbf16>
    %c2024_550 = arith.constant 2024 : index
    %c0_551 = arith.constant 0 : index
    %823 = vector.load %arg1[%c2024_550, %c0_551] : memref<2504x64xbf16, #tpu.memory_space<vmem>>, vector<128x64xbf16>
    %cst_552 = arith.constant dense<0.000000e+00> : vector<2x64xf32>
    %824 = tpu.matmul %822, %823, %cst_552 {dimension_numbers = #tpu.dot_dimension_numbers<[1], [0], [0], [1], [0, 0, 1, 1], [], []>} : vector<2x128xbf16>, vector<128x64xbf16>, vector<2x64xf32> -> vector<2x64xf32>
    %c5_553 = arith.constant 5 : index
    %c0_554 = arith.constant 0 : index
    %825 = vector.load %arg11[%c5_553, %c0_554] : memref<8x128xf32, #tpu.memory_space<vmem>>, vector<2x128xf32>
    %826 = arith.truncf %825 : vector<2x128xf32> to vector<2x128xbf16>
    %c2152_555 = arith.constant 2152 : index
    %c0_556 = arith.constant 0 : index
    %827 = vector.load %arg1[%c2152_555, %c0_556] : memref<2504x64xbf16, #tpu.memory_space<vmem>>, vector<128x64xbf16>
    %cst_557 = arith.constant dense<0.000000e+00> : vector<2x64xf32>
    %828 = tpu.matmul %826, %827, %cst_557 {dimension_numbers = #tpu.dot_dimension_numbers<[1], [0], [0], [1], [0, 0, 1, 1], [], []>} : vector<2x128xbf16>, vector<128x64xbf16>, vector<2x64xf32> -> vector<2x64xf32>
    %829 = arith.addf %824, %828 : vector<2x64xf32>
    %c6_558 = arith.constant 6 : index
    %c0_559 = arith.constant 0 : index
    %830 = vector.load %arg11[%c6_558, %c0_559] : memref<8x128xf32, #tpu.memory_space<vmem>>, vector<2x128xf32>
    %831 = arith.truncf %830 : vector<2x128xf32> to vector<2x128xbf16>
    %c2280_560 = arith.constant 2280 : index
    %c0_561 = arith.constant 0 : index
    %832 = vector.load %arg1[%c2280_560, %c0_561] : memref<2504x64xbf16, #tpu.memory_space<vmem>>, vector<128x64xbf16>
    %cst_562 = arith.constant dense<0.000000e+00> : vector<2x64xf32>
    %833 = tpu.matmul %831, %832, %cst_562 {dimension_numbers = #tpu.dot_dimension_numbers<[1], [0], [0], [1], [0, 0, 1, 1], [], []>} : vector<2x128xbf16>, vector<128x64xbf16>, vector<2x64xf32> -> vector<2x64xf32>
    %834 = arith.addf %829, %833 : vector<2x64xf32>
    %c440_563 = arith.constant 440 : index
    %c0_564 = arith.constant 0 : index
    %835 = vector.load %arg2[%c440_563, %c0_564] : memref<584x64xf32, #tpu.memory_space<vmem>>, vector<64x32xf32>
    %c504_565 = arith.constant 504 : index
    %c0_566 = arith.constant 0 : index
    %836 = vector.load %arg2[%c504_565, %c0_566] : memref<584x64xf32, #tpu.memory_space<vmem>>, vector<32x64xf32>
    %cst_567 = arith.constant dense<0.000000e+00> : vector<64xf32>
    %837 = vector.multi_reduction <add>, %820, %cst_567 [0] : vector<2x64xf32> to vector<64xf32>
    %838 = vector.shape_cast %837 : vector<64xf32> to vector<1x64xf32>
    %cst_568 = arith.constant dense<0.000000e+00> : vector<64xf32>
    %839 = vector.multi_reduction <add>, %834, %cst_568 [0] : vector<2x64xf32> to vector<64xf32>
    %840 = vector.shape_cast %839 : vector<64xf32> to vector<1x64xf32>
    %841 = arith.addf %838, %840 : vector<1x64xf32>
    %cst_569 = arith.constant dense<0.000000e+00> : vector<1x32xf32>
    %842 = tpu.matmul %841, %835, %cst_569 {dimension_numbers = #tpu.dot_dimension_numbers<[1], [0], [0], [1], [0, 0, 1, 1], [], []>} : vector<1x64xf32>, vector<64x32xf32>, vector<1x32xf32> -> vector<1x32xf32>
    %cst_570 = arith.constant 1.250000e-01 : f32
    %843 = vector.broadcast %cst_570 : f32 to vector<1x32xf32>
    %844 = arith.mulf %842, %843 : vector<1x32xf32>
    %cst_571 = arith.constant dense<0.000000e+00> : vector<1x64xf32>
    %845 = tpu.matmul %844, %836, %cst_571 {dimension_numbers = #tpu.dot_dimension_numbers<[1], [0], [0], [1], [0, 0, 1, 1], [], []>} : vector<1x32xf32>, vector<32x64xf32>, vector<1x64xf32> -> vector<1x64xf32>
    %846 = vector.broadcast %845 : vector<1x64xf32> to vector<2x64xf32>
    %847 = arith.subf %820, %846 : vector<2x64xf32>
    %848 = vector.broadcast %845 : vector<1x64xf32> to vector<2x64xf32>
    %849 = arith.subf %834, %848 : vector<2x64xf32>
    %850 = arith.mulf %847, %847 : vector<2x64xf32>
    %cst_572 = arith.constant dense<0.000000e+00> : vector<64xf32>
    %851 = vector.multi_reduction <add>, %850, %cst_572 [0] : vector<2x64xf32> to vector<64xf32>
    %852 = vector.shape_cast %851 : vector<64xf32> to vector<1x64xf32>
    %853 = arith.mulf %849, %849 : vector<2x64xf32>
    %cst_573 = arith.constant dense<0.000000e+00> : vector<64xf32>
    %854 = vector.multi_reduction <add>, %853, %cst_573 [0] : vector<2x64xf32> to vector<64xf32>
    %855 = vector.shape_cast %854 : vector<64xf32> to vector<1x64xf32>
    %856 = arith.addf %852, %855 : vector<1x64xf32>
    %cst_574 = arith.constant dense<0.000000e+00> : vector<1x32xf32>
    %857 = tpu.matmul %856, %835, %cst_574 {dimension_numbers = #tpu.dot_dimension_numbers<[1], [0], [0], [1], [0, 0, 1, 1], [], []>} : vector<1x64xf32>, vector<64x32xf32>, vector<1x32xf32> -> vector<1x32xf32>
    %cst_575 = arith.constant 1.250000e-01 : f32
    %858 = vector.broadcast %cst_575 : f32 to vector<1x32xf32>
    %859 = arith.mulf %857, %858 : vector<1x32xf32>
    %cst_576 = arith.constant 9.99999974E-6 : f32
    %860 = vector.broadcast %cst_576 : f32 to vector<1x32xf32>
    %861 = arith.addf %859, %860 : vector<1x32xf32>
    %862 = math.rsqrt %861 : vector<1x32xf32>
    %c552 = arith.constant 552 : index
    %c0_577 = arith.constant 0 : index
    %863 = vector.load %arg2[%c552, %c0_577] : memref<584x64xf32, #tpu.memory_space<vmem>>, vector<1x32xf32>
    %c560 = arith.constant 560 : index
    %c0_578 = arith.constant 0 : index
    %864 = vector.load %arg2[%c560, %c0_578] : memref<584x64xf32, #tpu.memory_space<vmem>>, vector<1x32xf32>
    %865 = arith.mulf %863, %862 : vector<1x32xf32>
    %cst_579 = arith.constant dense<0.000000e+00> : vector<1x64xf32>
    %866 = tpu.matmul %865, %836, %cst_579 {dimension_numbers = #tpu.dot_dimension_numbers<[1], [0], [0], [1], [0, 0, 1, 1], [], []>} : vector<1x32xf32>, vector<32x64xf32>, vector<1x64xf32> -> vector<1x64xf32>
    %cst_580 = arith.constant dense<0.000000e+00> : vector<1x64xf32>
    %867 = tpu.matmul %864, %836, %cst_580 {dimension_numbers = #tpu.dot_dimension_numbers<[1], [0], [0], [1], [0, 0, 1, 1], [], []>} : vector<1x32xf32>, vector<32x64xf32>, vector<1x64xf32> -> vector<1x64xf32>
    %868 = vector.broadcast %866 : vector<1x64xf32> to vector<2x64xf32>
    %869 = arith.mulf %847, %868 : vector<2x64xf32>
    %870 = vector.broadcast %867 : vector<1x64xf32> to vector<2x64xf32>
    %871 = arith.addf %869, %870 : vector<2x64xf32>
    %872 = arith.addf %871, %802 : vector<2x64xf32>
    %cst_581 = arith.constant 0.000000e+00 : f32
    %873 = vector.broadcast %cst_581 : f32 to vector<2x64xf32>
    %874 = arith.maximumf %872, %873 : vector<2x64xf32>
    %875 = vector.broadcast %866 : vector<1x64xf32> to vector<2x64xf32>
    %876 = arith.mulf %849, %875 : vector<2x64xf32>
    %877 = vector.broadcast %867 : vector<1x64xf32> to vector<2x64xf32>
    %878 = arith.addf %876, %877 : vector<2x64xf32>
    %879 = arith.addf %878, %806 : vector<2x64xf32>
    %cst_582 = arith.constant 0.000000e+00 : f32
    %880 = vector.broadcast %cst_582 : f32 to vector<2x64xf32>
    %881 = arith.maximumf %879, %880 : vector<2x64xf32>
    %c0_583 = arith.constant 0 : index
    %c0_584 = arith.constant 0 : index
    %882 = vector.load %arg3[%c0_583, %c0_584] : memref<4x64xf32, #tpu.memory_space<vmem>>, vector<2x64xf32>
    tpu.vector_store %arg3[%c0_583, %c0_584], %874 {strides = array<i32>} : memref<4x64xf32, #tpu.memory_space<vmem>>, vector<2x64xf32>,
    %c2_585 = arith.constant 2 : index
    %c0_586 = arith.constant 0 : index
    %883 = vector.load %arg3[%c2_585, %c0_586] : memref<4x64xf32, #tpu.memory_space<vmem>>, vector<2x64xf32>
    tpu.vector_store %arg3[%c2_585, %c0_586], %881 {strides = array<i32>} : memref<4x64xf32, #tpu.memory_space<vmem>>, vector<2x64xf32>,
    return
  }
}

</mosaic_0001>

<llo_original>
// kernel: _lambda_.1
$region0: #{_lambda_.1}
  #allocation0 [shape = 'u32[]', space=smem, size = 0x4, offset = 0x4, fixed_abs, tag = 'smem constant byte address 0x4 - core index']
  #allocation1 [shape = 'u32[72,128]{1,0:T(1,128)}', space=vmem, size = 0x9000, scoped, tag = 'internal scratch']
  #allocation2 [shape = 'f32[36,72]{1,0:T(8,128)}', space=vmem, size = 0x5000, scoped, tag = 'scratch operand']
  #allocation3 [shape = 'f32[36,72]{1,0:T(8,128)}', space=vmem, size = 0x5000, scoped, tag = 'scratch operand']
  #allocation4 [shape = 'f32[36,72]{1,0:T(8,128)}', space=vmem, size = 0x5000, scoped, tag = 'scratch operand']
  #allocation5 [shape = 'f32[20,80]{1,0:T(8,128)}', space=vmem, size = 0x3000, scoped, tag = 'scratch operand']
  #allocation6 [shape = 'f32[20,80]{1,0:T(8,128)}', space=vmem, size = 0x3000, scoped, tag = 'scratch operand']
  #allocation7 [shape = 'f32[12,96]{1,0:T(8,128)}', space=vmem, size = 0x2000, scoped, tag = 'scratch operand']
  #allocation8 [shape = 'f32[12,96]{1,0:T(8,128)}', space=vmem, size = 0x2000, scoped, tag = 'scratch operand']
  #allocation9 [shape = 'f32[8,128]{1,0:T(8,128)}', space=vmem, size = 0x1000, scoped, tag = 'scratch operand']
  %s0 = inlined_call_operand.vmem [shape: f32[36,54], index: 0, kind: input, shape index: {}]
  %s1 = inlined_call_operand.hbm [shape: bf16[2504,64], index: 1, kind: input, shape index: {}]
  %s2 = inlined_call_operand.vmem [shape: f32[584,64], index: 2, kind: input, shape index: {}]
  %s3 = inlined_call_operand.vmem [shape: f32[4,64], index: 3, kind: output, shape index: {}]
  %s4 = sld [smem:[#allocation0]]
  $region26: #{_lambda_.1} parent=0
    _
  %s6 = ssub.s32 1, %s4
  %s7 = scalar_select 0, %s6, %s4
  $region1: #{_lambda_.1} parent=0
    #allocation10 [shape = 'u8[641024]{0}', space=vmem, size = 0x9c800, scoped, tag = 'input window, operand 1, single buffered']
    #allocation11 [shape = 's32[1]{0}', space=sflag, size = 0x4, scoped, tag = 'scoped memory for _lambda_.1']
    %8 = vsyncpa [#allocation11], 0
    // Predicated region
    $region2: #{_lambda_.1} parent=1 // pred_check
      _
    $region3: #{_lambda_.1} parent=1 // pred_check_branch
      %10 = sbr.rel (0) target = $region5
    $region4: #{_lambda_.1} parent=1 // pred_region
      _
    $region5: #{_lambda_.1} parent=1 // pred_fallthru
      _
    // Predicated region
    $region6: #{_lambda_.1} parent=1 // pred_check
      _
    $region7: #{_lambda_.1} parent=1 // pred_check_branch
      %12 = sbr.rel (0) target = $region9
    $region8: #{_lambda_.1} parent=1 // pred_region
      %14 = vsyncadd [#allocation11], 0
      %s15 = sshll.u32 %s1, 4
      %s16 = int_to_ptr.hbm [resolvable:$true] %s15
      %s17 = sshll.u32 [#allocation10], 4
      %s18 = int_to_ptr.vmem [resolvable:$true] %s17
      %23 = dma.hbm_to_vmem [thread:$0]  %s16, 20032, %s18, [#allocation11], 64, 64, 4
    $region9: #{_lambda_.1} parent=1 // pred_fallthru
      _
    // Predicated region
    $region10: #{_lambda_.1} parent=1 // pred_check
      _
    $region11: #{_lambda_.1} parent=1 // pred_check_branch
      %25 = sbr.rel (0) target = $region13
    $region12: #{_lambda_.1} parent=1 // pred_region
      _
    $region13: #{_lambda_.1} parent=1 // pred_fallthru
      _
    // Predicated region
    $region14: #{_lambda_.1} parent=1 // pred_check
      _
    $region15: #{_lambda_.1} parent=1 // pred_check_branch
      %27 = sbr.rel (0) target = $region17
    $region16: #{_lambda_.1} parent=1 // pred_region
      %29 = dma.done [#allocation11], 20032
    $region17: #{_lambda_.1} parent=1 // pred_fallthru
      _
    %vm31 = vcmask 588800
    %32 = vst.msk [vmem:[#allocation2] sm:$0xff] %vm31, 0.0
    %33 = vst.msk [vmem:[#allocation2 + $0x8] sm:$0xff] %vm31, 0.0
    %34 = vst.msk [vmem:[#allocation2 + $0x10] sm:$0xff] %vm31, 0.0
    %35 = vst.msk [vmem:[#allocation2 + $0x18] sm:$0xff] %vm31, 0.0
    %vm36 = vcmask 584704
    %37 = vst.msk [vmem:[#allocation2 + $0x20] sm:$0xf] %vm36, 0.0
    %38 = vst.msk [vmem:[#allocation3] sm:$0xff] %vm31, 0.0
    %39 = vst.msk [vmem:[#allocation3 + $0x8] sm:$0xff] %vm31, 0.0
    %40 = vst.msk [vmem:[#allocation3 + $0x10] sm:$0xff] %vm31, 0.0
    %41 = vst.msk [vmem:[#allocation3 + $0x18] sm:$0xff] %vm31, 0.0
    %42 = vst.msk [vmem:[#allocation3 + $0x20] sm:$0xf] %vm36, 0.0
    %43 = vst.msk [vmem:[#allocation4] sm:$0xff] %vm31, 0.0
    %44 = vst.msk [vmem:[#allocation4 + $0x8] sm:$0xff] %vm31, 0.0
    %45 = vst.msk [vmem:[#allocation4 + $0x10] sm:$0xff] %vm31, 0.0
    %46 = vst.msk [vmem:[#allocation4 + $0x18] sm:$0xff] %vm31, 0.0
    %47 = vst.msk [vmem:[#allocation4 + $0x20] sm:$0xf] %vm36, 0.0
    %vm48 = vcmask 654336
    %49 = vst.msk [vmem:[#allocation5] sm:$0xff] %vm48, 0.0
    %50 = vst.msk [vmem:[#allocation5 + $0x8] sm:$0xff] %vm48, 0.0
    %vm51 = vcmask 650240
    %52 = vst.msk [vmem:[#allocation5 + $0x10] sm:$0xf] %vm51, 0.0
    %53 = vst.msk [vmem:[#allocation6] sm:$0xff] %vm48, 0.0
    %54 = vst.msk [vmem:[#allocation6 + $0x8] sm:$0xff] %vm48, 0.0
    %55 = vst.msk [vmem:[#allocation6 + $0x10] sm:$0xf] %vm51, 0.0
    %vm56 = vcmask 785408
    %57 = vst.msk [vmem:[#allocation7] sm:$0xff] %vm56, 0.0
    %vm58 = vcmask 781312
    %59 = vst.msk [vmem:[#allocation7 + $0x8] sm:$0xf] %vm58, 0.0
    %60 = vst.msk [vmem:[#allocation8] sm:$0xff] %vm56, 0.0
    %61 = vst.msk [vmem:[#allocation8 + $0x8] sm:$0xf] %vm58, 0.0
    %62 = vst [vmem:[#allocation9] sm:$0xff] 0.0
    %v63 = vld [vmem:[%s0] sm:$0xff]
    %v64 = vld [vmem:[%s0 + $0x8] sm:$0xff]
    %v65 = vpack.c.bf16 %v64, %v63
    %v66 = vld [vmem:[#allocation10] sm:$0xf]
    %v67 = vld [vmem:[#allocation10 + $0x4] sm:$0xf]
    %v68 = vld [vmem:[#allocation10 + $0x8] sm:$0xf]
    %v69 = vld [vmem:[#allocation10 + $0xc] sm:$0xf]
    %v70 = vld [vmem:[#allocation10 + $0x10] sm:$0xf]
    %v71 = vld [vmem:[#allocation10 + $0x14] sm:$0xf]
    %v72 = vld [vmem:[#allocation10 + $0x18] sm:$0x7]
    %v73 = vld [vmem:[%s0 + $0x1] sm:$0xff]
    %v74 = vld [vmem:[%s0 + $0x9] sm:$0xff]
    %v75 = vpack.c.bf16 %v74, %v73
    %v76 = vld [vmem:[#allocation10 + $0x1c] sm:$0xf]
    %v77 = vld [vmem:[#allocation10 + $0x20] sm:$0xf]
    %v78 = vld [vmem:[#allocation10 + $0x24] sm:$0xf]
    %v79 = vld [vmem:[#allocation10 + $0x28] sm:$0xf]
    %v80 = vld [vmem:[#allocation10 + $0x2c] sm:$0xf]
    %v81 = vld [vmem:[#allocation10 + $0x30] sm:$0xf]
    %v82 = vld [vmem:[#allocation10 + $0x34] sm:$0x7]
    %v90 = vunpack.c.l.b16 %v76
    %v91 = vunpack.c.l.b16 %v77
    %v92 = vunpack.c.l.b16 %v78
    %v93 = vunpack.c.l.b16 %v79
    %v94 = vunpack.c.l.b16 %v80
    %v95 = vunpack.c.l.b16 %v81
    %v96 = vunpack.c.l.b16 %v82
    %v97 = vpack.c.b16 %v91, %v90
    %v98 = vpack.c.b16 %v93, %v92
    %v99 = vpack.c.b16 %v95, %v94
    %v100 = vpack.c.b16 %v96, %v96
    %vm104 = vcmask 441344
    %v106 = vsel %vm104, %v75, 0
    %vm108 = vcmask 1042432
    %v110 = vsel %vm108, %v100, 0
    %112 = vmatpush.bf16.msra.mxu0 0
    %113 = vmatpush.bf16.msra.mxu0 0
    %114 = vmatpush.bf16.msra.mxu0 0
    %115 = vmatpush.bf16.msra.mxu0 0
    %116 = vmatpush.bf16.msra.mxu0 %v110
    %117 = vmatpush.bf16.msra.mxu0 %v99
    %118 = vmatpush.bf16.msra.mxu0 %v98
    %119 = vmatpush.bf16.msra.mxu0 %v97
    %120 = vmatmul.bf16.gmra.mxu0 %v106
    %v121 = vpop.f32.mrf.mxu0
    %v122 = vadd.f32 0.0, %v121
    %v123 = vpop.f32.mrf.mxu0
    %v124 = vadd.f32 0.0, %v123
    %125 = vdwg.mxu0
    %v133 = vunpack.c.l.b16 %v66
    %v134 = vunpack.c.l.b16 %v67
    %v135 = vunpack.c.l.b16 %v68
    %v136 = vunpack.c.l.b16 %v69
    %v137 = vunpack.c.l.b16 %v70
    %v138 = vunpack.c.l.b16 %v71
    %v139 = vunpack.c.l.b16 %v72
    %v140 = vpack.c.b16 %v134, %v133
    %v141 = vpack.c.b16 %v136, %v135
    %v142 = vpack.c.b16 %v138, %v137
    %v143 = vpack.c.b16 %v139, %v139
    %v148 = vsel %vm104, %v65, 0
    %v151 = vsel %vm108, %v143, 0
    %153 = vmatpush.bf16.msra.mxu0 0
    %154 = vmatpush.bf16.msra.mxu0 0
    %155 = vmatpush.bf16.msra.mxu0 0
    %156 = vmatpush.bf16.msra.mxu0 0
    %157 = vmatpush.bf16.msra.mxu0 %v151
    %158 = vmatpush.bf16.msra.mxu0 %v142
    %159 = vmatpush.bf16.msra.mxu0 %v141
    %160 = vmatpush.bf16.msra.mxu0 %v140
    %161 = vmatmul.bf16.gmra.mxu0 %v148
    %v162 = vpop.f32.mrf.mxu0
    %v163 = vadd.f32 %v122, %v162
    %v164 = vpop.f32.mrf.mxu0
    %v165 = vadd.f32 %v124, %v164
    %166 = vdwg.mxu0
    %v167 = vld [vmem:[%s0 + $0x2] sm:$0xff]
    %v168 = vld [vmem:[%s0 + $0xa] sm:$0xff]
    %v169 = vpack.c.bf16 %v168, %v167
    %v170 = vld [vmem:[#allocation10 + $0x38] sm:$0xf]
    %v171 = vld [vmem:[#allocation10 + $0x3c] sm:$0xf]
    %v172 = vld [vmem:[#allocation10 + $0x40] sm:$0xf]
    %v173 = vld [vmem:[#allocation10 + $0x44] sm:$0xf]
    %v174 = vld [vmem:[#allocation10 + $0x48] sm:$0xf]
    %v175 = vld [vmem:[#allocation10 + $0x4c] sm:$0xf]
    %v176 = vld [vmem:[#allocation10 + $0x50] sm:$0x7]
    %v184 = vunpack.c.l.b16 %v170
    %v185 = vunpack.c.l.b16 %v171
    %v186 = vunpack.c.l.b16 %v172
    %v187 = vunpack.c.l.b16 %v173
    %v188 = vunpack.c.l.b16 %v174
    %v189 = vunpack.c.l.b16 %v175
    %v190 = vunpack.c.l.b16 %v176
    %v191 = vpack.c.b16 %v185, %v184
    %v192 = vpack.c.b16 %v187, %v186
    %v193 = vpack.c.b16 %v189, %v188
    %v194 = vpack.c.b16 %v190, %v190
    %v199 = vsel %vm104, %v169, 0
    %v202 = vsel %vm108, %v194, 0
    %204 = vmatpush.bf16.msra.mxu0 0
    %205 = vmatpush.bf16.msra.mxu0 0
    %206 = vmatpush.bf16.msra.mxu0 0
    %207 = vmatpush.bf16.msra.mxu0 0
    %208 = vmatpush.bf16.msra.mxu0 %v202
    %209 = vmatpush.bf16.msra.mxu0 %v193
    %210 = vmatpush.bf16.msra.mxu0 %v192
    %211 = vmatpush.bf16.msra.mxu0 %v191
    %212 = vmatmul.bf16.gmra.mxu0 %v199
    %v213 = vpop.f32.mrf.mxu0
    %v214 = vadd.f32 0.0, %v213
    %v215 = vpop.f32.mrf.mxu0
    %v216 = vadd.f32 0.0, %v215
    %217 = vdwg.mxu0
    %v218 = vadd.f32 %v163, %v214
    %v219 = vadd.f32 %v165, %v216
    %v220 = vld [vmem:[%s0 + $0x12] sm:$0xff]
    %v221 = vld [vmem:[%s0 + $0x1a] sm:$0xff]
    %v222 = vpack.c.bf16 %v221, %v220
    %v223 = vld [vmem:[%s0 + $0x13] sm:$0xff]
    %v224 = vld [vmem:[%s0 + $0x1b] sm:$0xff]
    %v225 = vpack.c.bf16 %v224, %v223
    %v227 = vsel %vm104, %v225, 0
    %229 = vmatpush.bf16.msra.mxu0 0
    %230 = vmatpush.bf16.msra.mxu0 0
    %231 = vmatpush.bf16.msra.mxu0 0
    %232 = vmatpush.bf16.msra.mxu0 0
    %233 = vmatpush.bf16.msra.mxu0 %v110
    %234 = vmatpush.bf16.msra.mxu0 %v99
    %235 = vmatpush.bf16.msra.mxu0 %v98
    %236 = vmatpush.bf16.msra.mxu0 %v97
    %237 = vmatmul.bf16.gmra.mxu0 %v227
    %v238 = vpop.f32.mrf.mxu0
    %v239 = vadd.f32 0.0, %v238
    %v240 = vpop.f32.mrf.mxu0
    %v241 = vadd.f32 0.0, %v240
    %242 = vdwg.mxu0
    %v244 = vsel %vm104, %v222, 0
    %246 = vmatpush.bf16.msra.mxu0 0
    %247 = vmatpush.bf16.msra.mxu0 0
    %248 = vmatpush.bf16.msra.mxu0 0
    %249 = vmatpush.bf16.msra.mxu0 0
    %250 = vmatpush.bf16.msra.mxu0 %v151
    %251 = vmatpush.bf16.msra.mxu0 %v142
    %252 = vmatpush.bf16.msra.mxu0 %v141
    %253 = vmatpush.bf16.msra.mxu0 %v140
    %254 = vmatmul.bf16.gmra.mxu0 %v244
    %v255 = vpop.f32.mrf.mxu0
    %v256 = vadd.f32 %v239, %v255
    %v257 = vpop.f32.mrf.mxu0
    %v258 = vadd.f32 %v241, %v257
    %259 = vdwg.mxu0
    %v260 = vld [vmem:[%s0 + $0x14] sm:$0xff]
    %v261 = vld [vmem:[%s0 + $0x1c] sm:$0xff]
    %v262 = vpack.c.bf16 %v261, %v260
    %v264 = vsel %vm104, %v262, 0
    %266 = vmatpush.bf16.msra.mxu0 0
    %267 = vmatpush.bf16.msra.mxu0 0
    %268 = vmatpush.bf16.msra.mxu0 0
    %269 = vmatpush.bf16.msra.mxu0 0
    %270 = vmatpush.bf16.msra.mxu0 %v202
    %271 = vmatpush.bf16.msra.mxu0 %v193
    %272 = vmatpush.bf16.msra.mxu0 %v192
    %273 = vmatpush.bf16.msra.mxu0 %v191
    %274 = vmatmul.bf16.gmra.mxu0 %v264
    %v275 = vpop.f32.mrf.mxu0
    %v276 = vadd.f32 0.0, %v275
    %v277 = vpop.f32.mrf.mxu0
    %v278 = vadd.f32 0.0, %v277
    %279 = vdwg.mxu0
    %v280 = vadd.f32 %v256, %v276
    %v281 = vadd.f32 %v258, %v278
    %v282 = vld [vmem:[%s2] sm:$0xff]
    %v283 = vld [vmem:[%s2 + $0x8] sm:$0xff]
    %v284 = vld [vmem:[%s2 + $0x10] sm:$0xff]
    %v285 = vld [vmem:[%s2 + $0x18] sm:$0xff]
    %v286 = vld [vmem:[%s2 + $0x20] sm:$0xff]
    %v287 = vld [vmem:[%s2 + $0x28] sm:$0xff]
    %v288 = vld [vmem:[%s2 + $0x30] sm:$0xff]
    %v289 = vld [vmem:[%s2 + $0x38] sm:$0xff]
    %v290 = vld [vmem:[%s2 + $0x40] sm:$0xf]
    %vm291 = vcmask 523264
    %v292 = vsel %vm291, %v218, 0.0
    %v293 = vsel %vm291, %v219, 0.0
    %v294 = vadd.f32 %v292, %v293
    %v295 = vrot.slane %v294, 4
    %v296 = vadd.f32 %v294, %v295
    %v297 = vrot.slane %v296, 2
    %v298 = vadd.f32 %v296, %v297
    %v299 = vrot.slane %v298, 1
    %v300 = vadd.f32 %v298, %v299
    %v301 = vsel %vm291, %v280, 0.0
    %v302 = vsel %vm291, %v281, 0.0
    %v303 = vadd.f32 %v301, %v302
    %v304 = vrot.slane %v303, 4
    %v305 = vadd.f32 %v303, %v304
    %v306 = vrot.slane %v305, 2
    %v307 = vadd.f32 %v305, %v306
    %v308 = vrot.slane %v307, 1
    %v309 = vadd.f32 %v307, %v308
    %v310 = vadd.f32 %v300, %v309
    %v312 = vsel %vm291, %v310, 0
    %314 = vmatpush.msra.mxu0 0.0
    %315 = vmatpush.msra.mxu0 0.0
    %316 = vmatpush.msra.mxu0 0.0
    %317 = vmatpush.msra.mxu0 0.0
    %318 = vmatpush.msra.mxu0 0.0
    %319 = vmatpush.msra.mxu0 0.0
    %320 = vmatpush.msra.mxu0 0.0
    %321 = vmatpush.msra.mxu0 0.0
    %322 = vmatpush.msra.mxu0 %v289
    %323 = vmatpush.msra.mxu0 %v288
    %324 = vmatpush.msra.mxu0 %v287
    %325 = vmatpush.msra.mxu0 %v286
    %326 = vmatpush.msra.mxu0 %v285
    %327 = vmatpush.msra.mxu0 %v284
    %328 = vmatpush.msra.mxu0 %v283
    %329 = vmatpush.msra.mxu0 %v282
    %330 = vmatmul.f32.gmra.mxu0 %v312
    %v331 = vpop.f32.mrf.mxu0
    %v332 = vadd.f32 0.0, %v331
    %333 = vdwg.mxu0
    %v334 = vmul.f32 %v332, 0.001953125
    %vm335 = vcmask 31744
    %v337 = vsel %vm335, %v334, 0
    %vm339 = vcmask 1043456
    %v341 = vsel %vm339, %v290, 0
    %343 = vmatpush.msra.mxu0 0.0
    %344 = vmatpush.msra.mxu0 0.0
    %345 = vmatpush.msra.mxu0 0.0
    %346 = vmatpush.msra.mxu0 0.0
    %347 = vmatpush.msra.mxu0 0.0
    %348 = vmatpush.msra.mxu0 0.0
    %349 = vmatpush.msra.mxu0 0.0
    %350 = vmatpush.msra.mxu0 0.0
    %351 = vmatpush.msra.mxu0 0.0
    %352 = vmatpush.msra.mxu0 0.0
    %353 = vmatpush.msra.mxu0 0.0
    %354 = vmatpush.msra.mxu0 0.0
    %355 = vmatpush.msra.mxu0 0.0
    %356 = vmatpush.msra.mxu0 0.0
    %357 = vmatpush.msra.mxu0 0.0
    %358 = vmatpush.msra.mxu0 %v341
    %359 = vmatmul.f32.gmra.mxu0 %v337
    %v360 = vpop.f32.mrf.mxu0
    %v361 = vadd.f32 0.0, %v360
    %362 = vdwg.mxu0
    %v363 = vperm.slane %v361, 0
    %v364 = vsub.f32 %v218, %v363
    %v365 = vsub.f32 %v219, %v363
    %v366 = vsub.f32 %v280, %v363
    %v367 = vsub.f32 %v281, %v363
    %v368 = vmul.f32 %v364, %v364
    %v369 = vmul.f32 %v365, %v365
    %v370 = vsel %vm291, %v368, 0.0
    %v371 = vsel %vm291, %v369, 0.0
    %v372 = vadd.f32 %v370, %v371
    %v373 = vrot.slane %v372, 4
    %v374 = vadd.f32 %v372, %v373
    %v375 = vrot.slane %v374, 2
    %v376 = vadd.f32 %v374, %v375
    %v377 = vrot.slane %v376, 1
    %v378 = vadd.f32 %v376, %v377
    %v379 = vmul.f32 %v366, %v366
    %v380 = vmul.f32 %v367, %v367
    %v381 = vsel %vm291, %v379, 0.0
    %v382 = vsel %vm291, %v380, 0.0
    %v383 = vadd.f32 %v381, %v382
    %v384 = vrot.slane %v383, 4
    %v385 = vadd.f32 %v383, %v384
    %v386 = vrot.slane %v385, 2
    %v387 = vadd.f32 %v385, %v386
    %v388 = vrot.slane %v387, 1
    %v389 = vadd.f32 %v387, %v388
    %v390 = vadd.f32 %v378, %v389
    %v392 = vsel %vm291, %v390, 0
    %394 = vmatpush.msra.mxu0 0.0
    %395 = vmatpush.msra.mxu0 0.0
    %396 = vmatpush.msra.mxu0 0.0
    %397 = vmatpush.msra.mxu0 0.0
    %398 = vmatpush.msra.mxu0 0.0
    %399 = vmatpush.msra.mxu0 0.0
    %400 = vmatpush.msra.mxu0 0.0
    %401 = vmatpush.msra.mxu0 0.0
    %402 = vmatpush.msra.mxu0 %v289
    %403 = vmatpush.msra.mxu0 %v288
    %404 = vmatpush.msra.mxu0 %v287
    %405 = vmatpush.msra.mxu0 %v286
    %406 = vmatpush.msra.mxu0 %v285
    %407 = vmatpush.msra.mxu0 %v284
    %408 = vmatpush.msra.mxu0 %v283
    %409 = vmatpush.msra.mxu0 %v282
    %410 = vmatmul.f32.gmra.mxu0 %v392
    %v411 = vpop.f32.mrf.mxu0
    %v412 = vadd.f32 0.0, %v411
    %413 = vdwg.mxu0
    %v414 = vmul.f32 %v412, 0.001953125
    %v415 = vadd.f32 %v414, 1e-05
    %v416 = vrsqrt.pop %v415
    %v417 = vmul.f32 %v416, %v415
    %v418 = vmul.f32 %v417, %v416
    %v419 = vmul.f32 0.5, %v418
    %v420 = vsub.f32 1.5, %v419
    %v421 = vmul.f32 %v416, %v420
    %vm422 = vweird.f32 %v415
    %vm423 = vweird.f32 %v416
    %vm424 = vmor %vm422, %vm423
    %v425 = vsel %vm424, %v416, %v421
    %v426 = vld [vmem:[%s2 + $0x48] sm:$0x1]
    %v427 = vld [vmem:[%s2 + $0x50] sm:$0x1]
    %v428 = vmul.f32 %v426, %v425
    %v430 = vsel %vm335, %v428, 0
    %432 = vmatpush.msra.mxu0 0.0
    %433 = vmatpush.msra.mxu0 0.0
    %434 = vmatpush.msra.mxu0 0.0
    %435 = vmatpush.msra.mxu0 0.0
    %436 = vmatpush.msra.mxu0 0.0
    %437 = vmatpush.msra.mxu0 0.0
    %438 = vmatpush.msra.mxu0 0.0
    %439 = vmatpush.msra.mxu0 0.0
    %440 = vmatpush.msra.mxu0 0.0
    %441 = vmatpush.msra.mxu0 0.0
    %442 = vmatpush.msra.mxu0 0.0
    %443 = vmatpush.msra.mxu0 0.0
    %444 = vmatpush.msra.mxu0 0.0
    %445 = vmatpush.msra.mxu0 0.0
    %446 = vmatpush.msra.mxu0 0.0
    %447 = vmatpush.msra.mxu0 %v341
    %448 = vmatmul.f32.gmra.mxu0 %v430
    %v449 = vpop.f32.mrf.mxu0
    %v450 = vadd.f32 0.0, %v449
    %451 = vdwg.mxu0
    %v453 = vsel %vm335, %v427, 0
    %455 = vmatpush.msra.mxu0 0.0
    %456 = vmatpush.msra.mxu0 0.0
    %457 = vmatpush.msra.mxu0 0.0
    %458 = vmatpush.msra.mxu0 0.0
    %459 = vmatpush.msra.mxu0 0.0
    %460 = vmatpush.msra.mxu0 0.0
    %461 = vmatpush.msra.mxu0 0.0
    %462 = vmatpush.msra.mxu0 0.0
    %463 = vmatpush.msra.mxu0 0.0
    %464 = vmatpush.msra.mxu0 0.0
    %465 = vmatpush.msra.mxu0 0.0
    %466 = vmatpush.msra.mxu0 0.0
    %467 = vmatpush.msra.mxu0 0.0
    %468 = vmatpush.msra.mxu0 0.0
    %469 = vmatpush.msra.mxu0 0.0
    %470 = vmatpush.msra.mxu0 %v341
    %471 = vmatmul.f32.gmra.mxu0 %v453
    %v472 = vpop.f32.mrf.mxu0
    %v473 = vadd.f32 0.0, %v472
    %474 = vdwg.mxu0
    %v475 = vperm.slane %v450, 0
    %v476 = vmul.f32 %v364, %v475
    %v477 = vmul.f32 %v365, %v475
    %v478 = vperm.slane %v473, 0
    %v479 = vadd.f32 %v476, %v478
    %v480 = vadd.f32 %v477, %v478
    %v481 = vmax.f32 %v479, 0.0
    %v482 = vmax.f32 %v480, 0.0
    %v483 = vmul.f32 %v366, %v475
    %v484 = vmul.f32 %v367, %v475
    %v485 = vadd.f32 %v483, %v478
    %v486 = vadd.f32 %v484, %v478
    %v487 = vmax.f32 %v485, 0.0
    %v488 = vmax.f32 %v486, 0.0
    %491 = vrot.lane.b32.xlu0 %v481, 4
    %v492 = vpop.permute.xlu0 %491
    %493 = vrot.lane.b32.xlu0 %v482, 4
    %v494 = vpop.permute.xlu0 %493
    %vm497 = vcmask 556064
    %498 = vst.msk [vmem:[#allocation2 + $0x1] sm:$0xff] %vm497, %v492
    %499 = vst.msk [vmem:[#allocation2 + $0x9] sm:$0xff] %vm497, %v494
    %502 = vrot.lane.b32.xlu0 %v487, 4
    %v503 = vpop.permute.xlu0 %502
    %504 = vrot.lane.b32.xlu0 %v488, 4
    %v505 = vpop.permute.xlu0 %504
    %508 = vst.msk [vmem:[#allocation2 + $0x13] sm:$0xff] %vm497, %v503
    %509 = vst.msk [vmem:[#allocation2 + $0x1b] sm:$0xff] %vm497, %v505
    %v510 = vld [vmem:[#allocation2] sm:$0xff]
    %v511 = vld [vmem:[#allocation2 + $0x8] sm:$0xff]
    %v512 = vpack.c.bf16 %v511, %v510
    %v513 = vld [vmem:[#allocation10 + $0x54] sm:$0xf]
    %v514 = vld [vmem:[#allocation10 + $0x58] sm:$0xf]
    %v515 = vld [vmem:[#allocation10 + $0x5c] sm:$0xf]
    %v516 = vld [vmem:[#allocation10 + $0x60] sm:$0xf]
    %v517 = vld [vmem:[#allocation10 + $0x64] sm:$0xf]
    %v518 = vld [vmem:[#allocation10 + $0x68] sm:$0xf]
    %v519 = vld [vmem:[#allocation10 + $0x6c] sm:$0xf]
    %v520 = vld [vmem:[#allocation10 + $0x70] sm:$0xf]
    %v521 = vld [vmem:[#allocation10 + $0x74] sm:$0xf]
    %v522 = vld [vmem:[#allocation2 + $0x1] sm:$0xff]
    %v523 = vld [vmem:[#allocation2 + $0x9] sm:$0xff]
    %v524 = vpack.c.bf16 %v523, %v522
    %v525 = vld [vmem:[#allocation10 + $0x78] sm:$0xf]
    %v526 = vld [vmem:[#allocation10 + $0x7c] sm:$0xf]
    %v527 = vld [vmem:[#allocation10 + $0x80] sm:$0xf]
    %v528 = vld [vmem:[#allocation10 + $0x84] sm:$0xf]
    %v529 = vld [vmem:[#allocation10 + $0x88] sm:$0xf]
    %v530 = vld [vmem:[#allocation10 + $0x8c] sm:$0xf]
    %v531 = vld [vmem:[#allocation10 + $0x90] sm:$0xf]
    %v532 = vld [vmem:[#allocation10 + $0x94] sm:$0xf]
    %v533 = vld [vmem:[#allocation10 + $0x98] sm:$0xf]
    %v543 = vunpack.c.l.b16 %v525
    %v544 = vunpack.c.l.b16 %v526
    %v545 = vunpack.c.l.b16 %v527
    %v546 = vunpack.c.l.b16 %v528
    %v547 = vunpack.c.l.b16 %v529
    %v548 = vunpack.c.l.b16 %v530
    %v549 = vunpack.c.l.b16 %v531
    %v550 = vunpack.c.l.b16 %v532
    %v551 = vunpack.c.l.b16 %v533
    %v552 = vpack.c.b16 %v544, %v543
    %v553 = vpack.c.b16 %v546, %v545
    %v554 = vpack.c.b16 %v548, %v547
    %v555 = vpack.c.b16 %v550, %v549
    %v556 = vpack.c.b16 %v551, %v551
    %v562 = vsel %vm31, %v524, 0
    %v565 = vsel %vm339, %v556, 0
    %567 = vmatpush.bf16.msra.mxu0 0
    %568 = vmatpush.bf16.msra.mxu0 0
    %569 = vmatpush.bf16.msra.mxu0 0
    %570 = vmatpush.bf16.msra.mxu0 %v565
    %571 = vmatpush.bf16.msra.mxu0 %v555
    %572 = vmatpush.bf16.msra.mxu0 %v554
    %573 = vmatpush.bf16.msra.mxu0 %v553
    %574 = vmatpush.bf16.msra.mxu0 %v552
    %575 = vmatmul.bf16.gmra.mxu0 %v562
    %v576 = vpop.f32.mrf.mxu0
    %v577 = vadd.f32 0.0, %v576
    %v578 = vpop.f32.mrf.mxu0
    %v579 = vadd.f32 0.0, %v578
    %580 = vdwg.mxu0
    %v590 = vunpack.c.l.b16 %v513
    %v591 = vunpack.c.l.b16 %v514
    %v592 = vunpack.c.l.b16 %v515
    %v593 = vunpack.c.l.b16 %v516
    %v594 = vunpack.c.l.b16 %v517
    %v595 = vunpack.c.l.b16 %v518
    %v596 = vunpack.c.l.b16 %v519
    %v597 = vunpack.c.l.b16 %v520
    %v598 = vunpack.c.l.b16 %v521
    %v599 = vpack.c.b16 %v591, %v590
    %v600 = vpack.c.b16 %v593, %v592
    %v601 = vpack.c.b16 %v595, %v594
    %v602 = vpack.c.b16 %v597, %v596
    %v603 = vpack.c.b16 %v598, %v598
    %v609 = vsel %vm31, %v512, 0
    %v612 = vsel %vm339, %v603, 0
    %614 = vmatpush.bf16.msra.mxu0 0
    %615 = vmatpush.bf16.msra.mxu0 0
    %616 = vmatpush.bf16.msra.mxu0 0
    %617 = vmatpush.bf16.msra.mxu0 %v612
    %618 = vmatpush.bf16.msra.mxu0 %v602
    %619 = vmatpush.bf16.msra.mxu0 %v601
    %620 = vmatpush.bf16.msra.mxu0 %v600
    %621 = vmatpush.bf16.msra.mxu0 %v599
    %622 = vmatmul.bf16.gmra.mxu0 %v609
    %v623 = vpop.f32.mrf.mxu0
    %v624 = vadd.f32 %v577, %v623
    %v625 = vpop.f32.mrf.mxu0
    %v626 = vadd.f32 %v579, %v625
    %627 = vdwg.mxu0
    %v628 = vld [vmem:[#allocation2 + $0x2] sm:$0xff]
    %v629 = vld [vmem:[#allocation2 + $0xa] sm:$0xff]
    %v630 = vpack.c.bf16 %v629, %v628
    %v631 = vld [vmem:[#allocation10 + $0x9c] sm:$0xf]
    %v632 = vld [vmem:[#allocation10 + $0xa0] sm:$0xf]
    %v633 = vld [vmem:[#allocation10 + $0xa4] sm:$0xf]
    %v634 = vld [vmem:[#allocation10 + $0xa8] sm:$0xf]
    %v635 = vld [vmem:[#allocation10 + $0xac] sm:$0xf]
    %v636 = vld [vmem:[#allocation10 + $0xb0] sm:$0xf]
    %v637 = vld [vmem:[#allocation10 + $0xb4] sm:$0xf]
    %v638 = vld [vmem:[#allocation10 + $0xb8] sm:$0xf]
    %v639 = vld [vmem:[#allocation10 + $0xbc] sm:$0xf]
    %v649 = vunpack.c.l.b16 %v631
    %v650 = vunpack.c.l.b16 %v632
    %v651 = vunpack.c.l.b16 %v633
    %v652 = vunpack.c.l.b16 %v634
    %v653 = vunpack.c.l.b16 %v635
    %v654 = vunpack.c.l.b16 %v636
    %v655 = vunpack.c.l.b16 %v637
    %v656 = vunpack.c.l.b16 %v638
    %v657 = vunpack.c.l.b16 %v639
    %v658 = vpack.c.b16 %v650, %v649
    %v659 = vpack.c.b16 %v652, %v651
    %v660 = vpack.c.b16 %v654, %v653
    %v661 = vpack.c.b16 %v656, %v655
    %v662 = vpack.c.b16 %v657, %v657
    %v668 = vsel %vm31, %v630, 0
    %v671 = vsel %vm339, %v662, 0
    %673 = vmatpush.bf16.msra.mxu0 0
    %674 = vmatpush.bf16.msra.mxu0 0
    %675 = vmatpush.bf16.msra.mxu0 0
    %676 = vmatpush.bf16.msra.mxu0 %v671
    %677 = vmatpush.bf16.msra.mxu0 %v661
    %678 = vmatpush.bf16.msra.mxu0 %v660
    %679 = vmatpush.bf16.msra.mxu0 %v659
    %680 = vmatpush.bf16.msra.mxu0 %v658
    %681 = vmatmul.bf16.gmra.mxu0 %v668
    %v682 = vpop.f32.mrf.mxu0
    %v683 = vadd.f32 0.0, %v682
    %v684 = vpop.f32.mrf.mxu0
    %v685 = vadd.f32 0.0, %v684
    %686 = vdwg.mxu0
    %v687 = vadd.f32 %v624, %v683
    %v688 = vadd.f32 %v626, %v685
    %v689 = vld [vmem:[#allocation2 + $0x12] sm:$0xff]
    %v690 = vld [vmem:[#allocation2 + $0x1a] sm:$0xff]
    %v691 = vpack.c.bf16 %v690, %v689
    %v692 = vld [vmem:[#allocation2 + $0x13] sm:$0xff]
    %v693 = vld [vmem:[#allocation2 + $0x1b] sm:$0xff]
    %v694 = vpack.c.bf16 %v693, %v692
    %v696 = vsel %vm31, %v694, 0
    %698 = vmatpush.bf16.msra.mxu0 0
    %699 = vmatpush.bf16.msra.mxu0 0
    %700 = vmatpush.bf16.msra.mxu0 0
    %701 = vmatpush.bf16.msra.mxu0 %v565
    %702 = vmatpush.bf16.msra.mxu0 %v555
    %703 = vmatpush.bf16.msra.mxu0 %v554
    %704 = vmatpush.bf16.msra.mxu0 %v553
    %705 = vmatpush.bf16.msra.mxu0 %v552
    %706 = vmatmul.bf16.gmra.mxu0 %v696
    %v707 = vpop.f32.mrf.mxu0
    %v708 = vadd.f32 0.0, %v707
    %v709 = vpop.f32.mrf.mxu0
    %v710 = vadd.f32 0.0, %v709
    %711 = vdwg.mxu0
    %v713 = vsel %vm31, %v691, 0
    %715 = vmatpush.bf16.msra.mxu0 0
    %716 = vmatpush.bf16.msra.mxu0 0
    %717 = vmatpush.bf16.msra.mxu0 0
    %718 = vmatpush.bf16.msra.mxu0 %v612
    %719 = vmatpush.bf16.msra.mxu0 %v602
    %720 = vmatpush.bf16.msra.mxu0 %v601
    %721 = vmatpush.bf16.msra.mxu0 %v600
    %722 = vmatpush.bf16.msra.mxu0 %v599
    %723 = vmatmul.bf16.gmra.mxu0 %v713
    %v724 = vpop.f32.mrf.mxu0
    %v725 = vadd.f32 %v708, %v724
    %v726 = vpop.f32.mrf.mxu0
    %v727 = vadd.f32 %v710, %v726
    %728 = vdwg.mxu0
    %v729 = vld [vmem:[#allocation2 + $0x14] sm:$0xff]
    %v730 = vld [vmem:[#allocation2 + $0x1c] sm:$0xff]
    %v731 = vpack.c.bf16 %v730, %v729
    %v733 = vsel %vm31, %v731, 0
    %735 = vmatpush.bf16.msra.mxu0 0
    %736 = vmatpush.bf16.msra.mxu0 0
    %737 = vmatpush.bf16.msra.mxu0 0
    %738 = vmatpush.bf16.msra.mxu0 %v671
    %739 = vmatpush.bf16.msra.mxu0 %v661
    %740 = vmatpush.bf16.msra.mxu0 %v660
    %741 = vmatpush.bf16.msra.mxu0 %v659
    %742 = vmatpush.bf16.msra.mxu0 %v658
    %743 = vmatmul.bf16.gmra.mxu0 %v733
    %v744 = vpop.f32.mrf.mxu0
    %v745 = vadd.f32 0.0, %v744
    %v746 = vpop.f32.mrf.mxu0
    %v747 = vadd.f32 0.0, %v746
    %748 = vdwg.mxu0
    %v749 = vadd.f32 %v725, %v745
    %v750 = vadd.f32 %v727, %v747
    %v751 = vld [vmem:[%s2] sm:$0xff]
    %v752 = vld [vmem:[%s2 + $0x8] sm:$0xff]
    %v753 = vld [vmem:[%s2 + $0x10] sm:$0xff]
    %v754 = vld [vmem:[%s2 + $0x18] sm:$0xff]
    %v755 = vld [vmem:[%s2 + $0x20] sm:$0xff]
    %v756 = vld [vmem:[%s2 + $0x28] sm:$0xff]
    %v757 = vld [vmem:[%s2 + $0x30] sm:$0xff]
    %v758 = vld [vmem:[%s2 + $0x38] sm:$0xff]
    %v759 = vld [vmem:[%s2 + $0x40] sm:$0xf]
    %v760 = vsel %vm291, %v687, 0.0
    %v761 = vsel %vm291, %v688, 0.0
    %v762 = vadd.f32 %v760, %v761
    %v763 = vrot.slane %v762, 4
    %v764 = vadd.f32 %v762, %v763
    %v765 = vrot.slane %v764, 2
    %v766 = vadd.f32 %v764, %v765
    %v767 = vrot.slane %v766, 1
    %v768 = vadd.f32 %v766, %v767
    %v769 = vsel %vm291, %v749, 0.0
    %v770 = vsel %vm291, %v750, 0.0
    %v771 = vadd.f32 %v769, %v770
    %v772 = vrot.slane %v771, 4
    %v773 = vadd.f32 %v771, %v772
    %v774 = vrot.slane %v773, 2
    %v775 = vadd.f32 %v773, %v774
    %v776 = vrot.slane %v775, 1
    %v777 = vadd.f32 %v775, %v776
    %v778 = vadd.f32 %v768, %v777
    %v780 = vsel %vm291, %v778, 0
    %782 = vmatpush.msra.mxu0 0.0
    %783 = vmatpush.msra.mxu0 0.0
    %784 = vmatpush.msra.mxu0 0.0
    %785 = vmatpush.msra.mxu0 0.0
    %786 = vmatpush.msra.mxu0 0.0
    %787 = vmatpush.msra.mxu0 0.0
    %788 = vmatpush.msra.mxu0 0.0
    %789 = vmatpush.msra.mxu0 0.0
    %790 = vmatpush.msra.mxu0 %v758
    %791 = vmatpush.msra.mxu0 %v757
    %792 = vmatpush.msra.mxu0 %v756
    %793 = vmatpush.msra.mxu0 %v755
    %794 = vmatpush.msra.mxu0 %v754
    %795 = vmatpush.msra.mxu0 %v753
    %796 = vmatpush.msra.mxu0 %v752
    %797 = vmatpush.msra.mxu0 %v751
    %798 = vmatmul.f32.gmra.mxu0 %v780
    %v799 = vpop.f32.mrf.mxu0
    %v800 = vadd.f32 0.0, %v799
    %801 = vdwg.mxu0
    %v802 = vmul.f32 %v800, 0.001953125
    %v804 = vsel %vm335, %v802, 0
    %v807 = vsel %vm339, %v759, 0
    %809 = vmatpush.msra.mxu0 0.0
    %810 = vmatpush.msra.mxu0 0.0
    %811 = vmatpush.msra.mxu0 0.0
    %812 = vmatpush.msra.mxu0 0.0
    %813 = vmatpush.msra.mxu0 0.0
    %814 = vmatpush.msra.mxu0 0.0
    %815 = vmatpush.msra.mxu0 0.0
    %816 = vmatpush.msra.mxu0 0.0
    %817 = vmatpush.msra.mxu0 0.0
    %818 = vmatpush.msra.mxu0 0.0
    %819 = vmatpush.msra.mxu0 0.0
    %820 = vmatpush.msra.mxu0 0.0
    %821 = vmatpush.msra.mxu0 0.0
    %822 = vmatpush.msra.mxu0 0.0
    %823 = vmatpush.msra.mxu0 0.0
    %824 = vmatpush.msra.mxu0 %v807
    %825 = vmatmul.f32.gmra.mxu0 %v804
    %v826 = vpop.f32.mrf.mxu0
    %v827 = vadd.f32 0.0, %v826
    %828 = vdwg.mxu0
    %v829 = vperm.slane %v827, 0
    %v830 = vsub.f32 %v687, %v829
    %v831 = vsub.f32 %v688, %v829
    %v832 = vsub.f32 %v749, %v829
    %v833 = vsub.f32 %v750, %v829
    %v834 = vmul.f32 %v830, %v830
    %v835 = vmul.f32 %v831, %v831
    %v836 = vsel %vm291, %v834, 0.0
    %v837 = vsel %vm291, %v835, 0.0
    %v838 = vadd.f32 %v836, %v837
    %v839 = vrot.slane %v838, 4
    %v840 = vadd.f32 %v838, %v839
    %v841 = vrot.slane %v840, 2
    %v842 = vadd.f32 %v840, %v841
    %v843 = vrot.slane %v842, 1
    %v844 = vadd.f32 %v842, %v843
    %v845 = vmul.f32 %v832, %v832
    %v846 = vmul.f32 %v833, %v833
    %v847 = vsel %vm291, %v845, 0.0
    %v848 = vsel %vm291, %v846, 0.0
    %v849 = vadd.f32 %v847, %v848
    %v850 = vrot.slane %v849, 4
    %v851 = vadd.f32 %v849, %v850
    %v852 = vrot.slane %v851, 2
    %v853 = vadd.f32 %v851, %v852
    %v854 = vrot.slane %v853, 1
    %v855 = vadd.f32 %v853, %v854
    %v856 = vadd.f32 %v844, %v855
    %v858 = vsel %vm291, %v856, 0
    %860 = vmatpush.msra.mxu0 0.0
    %861 = vmatpush.msra.mxu0 0.0
    %862 = vmatpush.msra.mxu0 0.0
    %863 = vmatpush.msra.mxu0 0.0
    %864 = vmatpush.msra.mxu0 0.0
    %865 = vmatpush.msra.mxu0 0.0
    %866 = vmatpush.msra.mxu0 0.0
    %867 = vmatpush.msra.mxu0 0.0
    %868 = vmatpush.msra.mxu0 %v758
    %869 = vmatpush.msra.mxu0 %v757
    %870 = vmatpush.msra.mxu0 %v756
    %871 = vmatpush.msra.mxu0 %v755
    %872 = vmatpush.msra.mxu0 %v754
    %873 = vmatpush.msra.mxu0 %v753
    %874 = vmatpush.msra.mxu0 %v752
    %875 = vmatpush.msra.mxu0 %v751
    %876 = vmatmul.f32.gmra.mxu0 %v858
    %v877 = vpop.f32.mrf.mxu0
    %v878 = vadd.f32 0.0, %v877
    %879 = vdwg.mxu0
    %v880 = vmul.f32 %v878, 0.001953125
    %v881 = vadd.f32 %v880, 1e-05
    %v882 = vrsqrt.pop %v881
    %v883 = vmul.f32 %v882, %v881
    %v884 = vmul.f32 %v883, %v882
    %v885 = vmul.f32 0.5, %v884
    %v886 = vsub.f32 1.5, %v885
    %v887 = vmul.f32 %v882, %v886
    %vm888 = vweird.f32 %v881
    %vm889 = vweird.f32 %v882
    %vm890 = vmor %vm888, %vm889
    %v891 = vsel %vm890, %v882, %v887
    %v892 = vld [vmem:[%s2 + $0x58] sm:$0x1]
    %v893 = vld [vmem:[%s2 + $0x60] sm:$0x1]
    %v894 = vmul.f32 %v892, %v891
    %v896 = vsel %vm335, %v894, 0
    %898 = vmatpush.msra.mxu0 0.0
    %899 = vmatpush.msra.mxu0 0.0
    %900 = vmatpush.msra.mxu0 0.0
    %901 = vmatpush.msra.mxu0 0.0
    %902 = vmatpush.msra.mxu0 0.0
    %903 = vmatpush.msra.mxu0 0.0
    %904 = vmatpush.msra.mxu0 0.0
    %905 = vmatpush.msra.mxu0 0.0
    %906 = vmatpush.msra.mxu0 0.0
    %907 = vmatpush.msra.mxu0 0.0
    %908 = vmatpush.msra.mxu0 0.0
    %909 = vmatpush.msra.mxu0 0.0
    %910 = vmatpush.msra.mxu0 0.0
    %911 = vmatpush.msra.mxu0 0.0
    %912 = vmatpush.msra.mxu0 0.0
    %913 = vmatpush.msra.mxu0 %v807
    %914 = vmatmul.f32.gmra.mxu0 %v896
    %v915 = vpop.f32.mrf.mxu0
    %v916 = vadd.f32 0.0, %v915
    %917 = vdwg.mxu0
    %v919 = vsel %vm335, %v893, 0
    %921 = vmatpush.msra.mxu0 0.0
    %922 = vmatpush.msra.mxu0 0.0
    %923 = vmatpush.msra.mxu0 0.0
    %924 = vmatpush.msra.mxu0 0.0
    %925 = vmatpush.msra.mxu0 0.0
    %926 = vmatpush.msra.mxu0 0.0
    %927 = vmatpush.msra.mxu0 0.0
    %928 = vmatpush.msra.mxu0 0.0
    %929 = vmatpush.msra.mxu0 0.0
    %930 = vmatpush.msra.mxu0 0.0
    %931 = vmatpush.msra.mxu0 0.0
    %932 = vmatpush.msra.mxu0 0.0
    %933 = vmatpush.msra.mxu0 0.0
    %934 = vmatpush.msra.mxu0 0.0
    %935 = vmatpush.msra.mxu0 0.0
    %936 = vmatpush.msra.mxu0 %v807
    %937 = vmatmul.f32.gmra.mxu0 %v919
    %v938 = vpop.f32.mrf.mxu0
    %v939 = vadd.f32 0.0, %v938
    %940 = vdwg.mxu0
    %v941 = vperm.slane %v916, 0
    %v942 = vmul.f32 %v830, %v941
    %v943 = vmul.f32 %v831, %v941
    %v944 = vperm.slane %v939, 0
    %v945 = vadd.f32 %v942, %v944
    %v946 = vadd.f32 %v943, %v944
    %v947 = vmax.f32 %v945, 0.0
    %v948 = vmax.f32 %v946, 0.0
    %v949 = vmul.f32 %v832, %v941
    %v950 = vmul.f32 %v833, %v941
    %v951 = vadd.f32 %v949, %v944
    %v952 = vadd.f32 %v950, %v944
    %v953 = vmax.f32 %v951, 0.0
    %v954 = vmax.f32 %v952, 0.0
    %957 = vrot.lane.b32.xlu0 %v947, 4
    %v958 = vpop.permute.xlu0 %957
    %959 = vrot.lane.b32.xlu0 %v948, 4
    %v960 = vpop.permute.xlu0 %959
    %963 = vst.msk [vmem:[#allocation3 + $0x1] sm:$0xff] %vm497, %v958
    %964 = vst.msk [vmem:[#allocation3 + $0x9] sm:$0xff] %vm497, %v960
    %967 = vrot.lane.b32.xlu0 %v953, 4
    %v968 = vpop.permute.xlu0 %967
    %969 = vrot.lane.b32.xlu0 %v954, 4
    %v970 = vpop.permute.xlu0 %969
    %973 = vst.msk [vmem:[#allocation3 + $0x13] sm:$0xff] %vm497, %v968
    %974 = vst.msk [vmem:[#allocation3 + $0x1b] sm:$0xff] %vm497, %v970
    %v975 = vld [vmem:[#allocation2 + $0x1] sm:$0xff]
    %v976 = vld [vmem:[#allocation2 + $0x9] sm:$0xff]
    %v977 = vld [vmem:[#allocation2 + $0x13] sm:$0xff]
    %v978 = vld [vmem:[#allocation2 + $0x1b] sm:$0xff]
    %v979 = vld [vmem:[#allocation3] sm:$0xff]
    %v980 = vld [vmem:[#allocation3 + $0x8] sm:$0xff]
    %v981 = vpack.c.bf16 %v980, %v979
    %v982 = vld [vmem:[#allocation10 + $0xc0] sm:$0xf]
    %v983 = vld [vmem:[#allocation10 + $0xc4] sm:$0xf]
    %v984 = vld [vmem:[#allocation10 + $0xc8] sm:$0xf]
    %v985 = vld [vmem:[#allocation10 + $0xcc] sm:$0xf]
    %v986 = vld [vmem:[#allocation10 + $0xd0] sm:$0xf]
    %v987 = vld [vmem:[#allocation10 + $0xd4] sm:$0xf]
    %v988 = vld [vmem:[#allocation10 + $0xd8] sm:$0xf]
    %v989 = vld [vmem:[#allocation10 + $0xdc] sm:$0xf]
    %v990 = vld [vmem:[#allocation10 + $0xe0] sm:$0xf]
    %v991 = vld [vmem:[#allocation3 + $0x1] sm:$0xff]
    %v992 = vld [vmem:[#allocation3 + $0x9] sm:$0xff]
    %v993 = vpack.c.bf16 %v992, %v991
    %v994 = vld [vmem:[#allocation10 + $0xe4] sm:$0xf]
    %v995 = vld [vmem:[#allocation10 + $0xe8] sm:$0xf]
    %v996 = vld [vmem:[#allocation10 + $0xec] sm:$0xf]
    %v997 = vld [vmem:[#allocation10 + $0xf0] sm:$0xf]
    %v998 = vld [vmem:[#allocation10 + $0xf4] sm:$0xf]
    %v999 = vld [vmem:[#allocation10 + $0xf8] sm:$0xf]
    %v1000 = vld [vmem:[#allocation10 + $0xfc] sm:$0xf]
    %v1001 = vld [vmem:[#allocation10 + $0x100] sm:$0xf]
    %v1002 = vld [vmem:[#allocation10 + $0x104] sm:$0xf]
    %v1012 = vunpack.c.l.b16 %v994
    %v1013 = vunpack.c.l.b16 %v995
    %v1014 = vunpack.c.l.b16 %v996
    %v1015 = vunpack.c.l.b16 %v997
    %v1016 = vunpack.c.l.b16 %v998
    %v1017 = vunpack.c.l.b16 %v999
    %v1018 = vunpack.c.l.b16 %v1000
    %v1019 = vunpack.c.l.b16 %v1001
    %v1020 = vunpack.c.l.b16 %v1002
    %v1021 = vpack.c.b16 %v1013, %v1012
    %v1022 = vpack.c.b16 %v1015, %v1014
    %v1023 = vpack.c.b16 %v1017, %v1016
    %v1024 = vpack.c.b16 %v1019, %v1018
    %v1025 = vpack.c.b16 %v1020, %v1020
    %v1031 = vsel %vm31, %v993, 0
    %v1034 = vsel %vm339, %v1025, 0
    %1036 = vmatpush.bf16.msra.mxu0 0
    %1037 = vmatpush.bf16.msra.mxu0 0
    %1038 = vmatpush.bf16.msra.mxu0 0
    %1039 = vmatpush.bf16.msra.mxu0 %v1034
    %1040 = vmatpush.bf16.msra.mxu0 %v1024
    %1041 = vmatpush.bf16.msra.mxu0 %v1023
    %1042 = vmatpush.bf16.msra.mxu0 %v1022
    %1043 = vmatpush.bf16.msra.mxu0 %v1021
    %1044 = vmatmul.bf16.gmra.mxu0 %v1031
    %v1045 = vpop.f32.mrf.mxu0
    %v1046 = vadd.f32 0.0, %v1045
    %v1047 = vpop.f32.mrf.mxu0
    %v1048 = vadd.f32 0.0, %v1047
    %1049 = vdwg.mxu0
    %v1059 = vunpack.c.l.b16 %v982
    %v1060 = vunpack.c.l.b16 %v983
    %v1061 = vunpack.c.l.b16 %v984
    %v1062 = vunpack.c.l.b16 %v985
    %v1063 = vunpack.c.l.b16 %v986
    %v1064 = vunpack.c.l.b16 %v987
    %v1065 = vunpack.c.l.b16 %v988
    %v1066 = vunpack.c.l.b16 %v989
    %v1067 = vunpack.c.l.b16 %v990
    %v1068 = vpack.c.b16 %v1060, %v1059
    %v1069 = vpack.c.b16 %v1062, %v1061
    %v1070 = vpack.c.b16 %v1064, %v1063
    %v1071 = vpack.c.b16 %v1066, %v1065
    %v1072 = vpack.c.b16 %v1067, %v1067
    %v1078 = vsel %vm31, %v981, 0
    %v1081 = vsel %vm339, %v1072, 0
    %1083 = vmatpush.bf16.msra.mxu0 0
    %1084 = vmatpush.bf16.msra.mxu0 0
    %1085 = vmatpush.bf16.msra.mxu0 0
    %1086 = vmatpush.bf16.msra.mxu0 %v1081
    %1087 = vmatpush.bf16.msra.mxu0 %v1071
    %1088 = vmatpush.bf16.msra.mxu0 %v1070
    %1089 = vmatpush.bf16.msra.mxu0 %v1069
    %1090 = vmatpush.bf16.msra.mxu0 %v1068
    %1091 = vmatmul.bf16.gmra.mxu0 %v1078
    %v1092 = vpop.f32.mrf.mxu0
    %v1093 = vadd.f32 %v1046, %v1092
    %v1094 = vpop.f32.mrf.mxu0
    %v1095 = vadd.f32 %v1048, %v1094
    %1096 = vdwg.mxu0
    %v1097 = vld [vmem:[#allocation3 + $0x2] sm:$0xff]
    %v1098 = vld [vmem:[#allocation3 + $0xa] sm:$0xff]
    %v1099 = vpack.c.bf16 %v1098, %v1097
    %v1100 = vld [vmem:[#allocation10 + $0x108] sm:$0xf]
    %v1101 = vld [vmem:[#allocation10 + $0x10c] sm:$0xf]
    %v1102 = vld [vmem:[#allocation10 + $0x110] sm:$0xf]
    %v1103 = vld [vmem:[#allocation10 + $0x114] sm:$0xf]
    %v1104 = vld [vmem:[#allocation10 + $0x118] sm:$0xf]
    %v1105 = vld [vmem:[#allocation10 + $0x11c] sm:$0xf]
    %v1106 = vld [vmem:[#allocation10 + $0x120] sm:$0xf]
    %v1107 = vld [vmem:[#allocation10 + $0x124] sm:$0xf]
    %v1108 = vld [vmem:[#allocation10 + $0x128] sm:$0xf]
    %v1118 = vunpack.c.l.b16 %v1100
    %v1119 = vunpack.c.l.b16 %v1101
    %v1120 = vunpack.c.l.b16 %v1102
    %v1121 = vunpack.c.l.b16 %v1103
    %v1122 = vunpack.c.l.b16 %v1104
    %v1123 = vunpack.c.l.b16 %v1105
    %v1124 = vunpack.c.l.b16 %v1106
    %v1125 = vunpack.c.l.b16 %v1107
    %v1126 = vunpack.c.l.b16 %v1108
    %v1127 = vpack.c.b16 %v1119, %v1118
    %v1128 = vpack.c.b16 %v1121, %v1120
    %v1129 = vpack.c.b16 %v1123, %v1122
    %v1130 = vpack.c.b16 %v1125, %v1124
    %v1131 = vpack.c.b16 %v1126, %v1126
    %v1137 = vsel %vm31, %v1099, 0
    %v1140 = vsel %vm339, %v1131, 0
    %1142 = vmatpush.bf16.msra.mxu0 0
    %1143 = vmatpush.bf16.msra.mxu0 0
    %1144 = vmatpush.bf16.msra.mxu0 0
    %1145 = vmatpush.bf16.msra.mxu0 %v1140
    %1146 = vmatpush.bf16.msra.mxu0 %v1130
    %1147 = vmatpush.bf16.msra.mxu0 %v1129
    %1148 = vmatpush.bf16.msra.mxu0 %v1128
    %1149 = vmatpush.bf16.msra.mxu0 %v1127
    %1150 = vmatmul.bf16.gmra.mxu0 %v1137
    %v1151 = vpop.f32.mrf.mxu0
    %v1152 = vadd.f32 0.0, %v1151
    %v1153 = vpop.f32.mrf.mxu0
    %v1154 = vadd.f32 0.0, %v1153
    %1155 = vdwg.mxu0
    %v1156 = vadd.f32 %v1093, %v1152
    %v1157 = vadd.f32 %v1095, %v1154
    %v1158 = vld [vmem:[#allocation3 + $0x12] sm:$0xff]
    %v1159 = vld [vmem:[#allocation3 + $0x1a] sm:$0xff]
    %v1160 = vpack.c.bf16 %v1159, %v1158
    %v1161 = vld [vmem:[#allocation3 + $0x13] sm:$0xff]
    %v1162 = vld [vmem:[#allocation3 + $0x1b] sm:$0xff]
    %v1163 = vpack.c.bf16 %v1162, %v1161
    %v1165 = vsel %vm31, %v1163, 0
    %1167 = vmatpush.bf16.msra.mxu0 0
    %1168 = vmatpush.bf16.msra.mxu0 0
    %1169 = vmatpush.bf16.msra.mxu0 0
    %1170 = vmatpush.bf16.msra.mxu0 %v1034
    %1171 = vmatpush.bf16.msra.mxu0 %v1024
    %1172 = vmatpush.bf16.msra.mxu0 %v1023
    %1173 = vmatpush.bf16.msra.mxu0 %v1022
    %1174 = vmatpush.bf16.msra.mxu0 %v1021
    %1175 = vmatmul.bf16.gmra.mxu0 %v1165
    %v1176 = vpop.f32.mrf.mxu0
    %v1177 = vadd.f32 0.0, %v1176
    %v1178 = vpop.f32.mrf.mxu0
    %v1179 = vadd.f32 0.0, %v1178
    %1180 = vdwg.mxu0
    %v1182 = vsel %vm31, %v1160, 0
    %1184 = vmatpush.bf16.msra.mxu0 0
    %1185 = vmatpush.bf16.msra.mxu0 0
    %1186 = vmatpush.bf16.msra.mxu0 0
    %1187 = vmatpush.bf16.msra.mxu0 %v1081
    %1188 = vmatpush.bf16.msra.mxu0 %v1071
    %1189 = vmatpush.bf16.msra.mxu0 %v1070
    %1190 = vmatpush.bf16.msra.mxu0 %v1069
    %1191 = vmatpush.bf16.msra.mxu0 %v1068
    %1192 = vmatmul.bf16.gmra.mxu0 %v1182
    %v1193 = vpop.f32.mrf.mxu0
    %v1194 = vadd.f32 %v1177, %v1193
    %v1195 = vpop.f32.mrf.mxu0
    %v1196 = vadd.f32 %v1179, %v1195
    %1197 = vdwg.mxu0
    %v1198 = vld [vmem:[#allocation3 + $0x14] sm:$0xff]
    %v1199 = vld [vmem:[#allocation3 + $0x1c] sm:$0xff]
    %v1200 = vpack.c.bf16 %v1199, %v1198
    %v1202 = vsel %vm31, %v1200, 0
    %1204 = vmatpush.bf16.msra.mxu0 0
    %1205 = vmatpush.bf16.msra.mxu0 0
    %1206 = vmatpush.bf16.msra.mxu0 0
    %1207 = vmatpush.bf16.msra.mxu0 %v1140
    %1208 = vmatpush.bf16.msra.mxu0 %v1130
    %1209 = vmatpush.bf16.msra.mxu0 %v1129
    %1210 = vmatpush.bf16.msra.mxu0 %v1128
    %1211 = vmatpush.bf16.msra.mxu0 %v1127
    %1212 = vmatmul.bf16.gmra.mxu0 %v1202
    %v1213 = vpop.f32.mrf.mxu0
    %v1214 = vadd.f32 0.0, %v1213
    %v1215 = vpop.f32.mrf.mxu0
    %v1216 = vadd.f32 0.0, %v1215
    %1217 = vdwg.mxu0
    %v1218 = vadd.f32 %v1194, %v1214
    %v1219 = vadd.f32 %v1196, %v1216
    %v1220 = vld [vmem:[%s2] sm:$0xff]
    %v1221 = vld [vmem:[%s2 + $0x8] sm:$0xff]
    %v1222 = vld [vmem:[%s2 + $0x10] sm:$0xff]
    %v1223 = vld [vmem:[%s2 + $0x18] sm:$0xff]
    %v1224 = vld [vmem:[%s2 + $0x20] sm:$0xff]
    %v1225 = vld [vmem:[%s2 + $0x28] sm:$0xff]
    %v1226 = vld [vmem:[%s2 + $0x30] sm:$0xff]
    %v1227 = vld [vmem:[%s2 + $0x38] sm:$0xff]
    %v1228 = vld [vmem:[%s2 + $0x40] sm:$0xf]
    %v1229 = vsel %vm291, %v1156, 0.0
    %v1230 = vsel %vm291, %v1157, 0.0
    %v1231 = vadd.f32 %v1229, %v1230
    %v1232 = vrot.slane %v1231, 4
    %v1233 = vadd.f32 %v1231, %v1232
    %v1234 = vrot.slane %v1233, 2
    %v1235 = vadd.f32 %v1233, %v1234
    %v1236 = vrot.slane %v1235, 1
    %v1237 = vadd.f32 %v1235, %v1236
    %v1238 = vsel %vm291, %v1218, 0.0
    %v1239 = vsel %vm291, %v1219, 0.0
    %v1240 = vadd.f32 %v1238, %v1239
    %v1241 = vrot.slane %v1240, 4
    %v1242 = vadd.f32 %v1240, %v1241
    %v1243 = vrot.slane %v1242, 2
    %v1244 = vadd.f32 %v1242, %v1243
    %v1245 = vrot.slane %v1244, 1
    %v1246 = vadd.f32 %v1244, %v1245
    %v1247 = vadd.f32 %v1237, %v1246
    %v1249 = vsel %vm291, %v1247, 0
    %1251 = vmatpush.msra.mxu0 0.0
    %1252 = vmatpush.msra.mxu0 0.0
    %1253 = vmatpush.msra.mxu0 0.0
    %1254 = vmatpush.msra.mxu0 0.0
    %1255 = vmatpush.msra.mxu0 0.0
    %1256 = vmatpush.msra.mxu0 0.0
    %1257 = vmatpush.msra.mxu0 0.0
    %1258 = vmatpush.msra.mxu0 0.0
    %1259 = vmatpush.msra.mxu0 %v1227
    %1260 = vmatpush.msra.mxu0 %v1226
    %1261 = vmatpush.msra.mxu0 %v1225
    %1262 = vmatpush.msra.mxu0 %v1224
    %1263 = vmatpush.msra.mxu0 %v1223
    %1264 = vmatpush.msra.mxu0 %v1222
    %1265 = vmatpush.msra.mxu0 %v1221
    %1266 = vmatpush.msra.mxu0 %v1220
    %1267 = vmatmul.f32.gmra.mxu0 %v1249
    %v1268 = vpop.f32.mrf.mxu0
    %v1269 = vadd.f32 0.0, %v1268
    %1270 = vdwg.mxu0
    %v1271 = vmul.f32 %v1269, 0.001953125
    %v1273 = vsel %vm335, %v1271, 0
    %v1276 = vsel %vm339, %v1228, 0
    %1278 = vmatpush.msra.mxu0 0.0
    %1279 = vmatpush.msra.mxu0 0.0
    %1280 = vmatpush.msra.mxu0 0.0
    %1281 = vmatpush.msra.mxu0 0.0
    %1282 = vmatpush.msra.mxu0 0.0
    %1283 = vmatpush.msra.mxu0 0.0
    %1284 = vmatpush.msra.mxu0 0.0
    %1285 = vmatpush.msra.mxu0 0.0
    %1286 = vmatpush.msra.mxu0 0.0
    %1287 = vmatpush.msra.mxu0 0.0
    %1288 = vmatpush.msra.mxu0 0.0
    %1289 = vmatpush.msra.mxu0 0.0
    %1290 = vmatpush.msra.mxu0 0.0
    %1291 = vmatpush.msra.mxu0 0.0
    %1292 = vmatpush.msra.mxu0 0.0
    %1293 = vmatpush.msra.mxu0 %v1276
    %1294 = vmatmul.f32.gmra.mxu0 %v1273
    %v1295 = vpop.f32.mrf.mxu0
    %v1296 = vadd.f32 0.0, %v1295
    %1297 = vdwg.mxu0
    %v1298 = vperm.slane %v1296, 0
    %v1299 = vsub.f32 %v1156, %v1298
    %v1300 = vsub.f32 %v1157, %v1298
    %v1301 = vsub.f32 %v1218, %v1298
    %v1302 = vsub.f32 %v1219, %v1298
    %v1303 = vmul.f32 %v1299, %v1299
    %v1304 = vmul.f32 %v1300, %v1300
    %v1305 = vsel %vm291, %v1303, 0.0
    %v1306 = vsel %vm291, %v1304, 0.0
    %v1307 = vadd.f32 %v1305, %v1306
    %v1308 = vrot.slane %v1307, 4
    %v1309 = vadd.f32 %v1307, %v1308
    %v1310 = vrot.slane %v1309, 2
    %v1311 = vadd.f32 %v1309, %v1310
    %v1312 = vrot.slane %v1311, 1
    %v1313 = vadd.f32 %v1311, %v1312
    %v1314 = vmul.f32 %v1301, %v1301
    %v1315 = vmul.f32 %v1302, %v1302
    %v1316 = vsel %vm291, %v1314, 0.0
    %v1317 = vsel %vm291, %v1315, 0.0
    %v1318 = vadd.f32 %v1316, %v1317
    %v1319 = vrot.slane %v1318, 4
    %v1320 = vadd.f32 %v1318, %v1319
    %v1321 = vrot.slane %v1320, 2
    %v1322 = vadd.f32 %v1320, %v1321
    %v1323 = vrot.slane %v1322, 1
    %v1324 = vadd.f32 %v1322, %v1323
    %v1325 = vadd.f32 %v1313, %v1324
    %v1327 = vsel %vm291, %v1325, 0
    %1329 = vmatpush.msra.mxu0 0.0
    %1330 = vmatpush.msra.mxu0 0.0
    %1331 = vmatpush.msra.mxu0 0.0
    %1332 = vmatpush.msra.mxu0 0.0
    %1333 = vmatpush.msra.mxu0 0.0
    %1334 = vmatpush.msra.mxu0 0.0
    %1335 = vmatpush.msra.mxu0 0.0
    %1336 = vmatpush.msra.mxu0 0.0
    %1337 = vmatpush.msra.mxu0 %v1227
    %1338 = vmatpush.msra.mxu0 %v1226
    %1339 = vmatpush.msra.mxu0 %v1225
    %1340 = vmatpush.msra.mxu0 %v1224
    %1341 = vmatpush.msra.mxu0 %v1223
    %1342 = vmatpush.msra.mxu0 %v1222
    %1343 = vmatpush.msra.mxu0 %v1221
    %1344 = vmatpush.msra.mxu0 %v1220
    %1345 = vmatmul.f32.gmra.mxu0 %v1327
    %v1346 = vpop.f32.mrf.mxu0
    %v1347 = vadd.f32 0.0, %v1346
    %1348 = vdwg.mxu0
    %v1349 = vmul.f32 %v1347, 0.001953125
    %v1350 = vadd.f32 %v1349, 1e-05
    %v1351 = vrsqrt.pop %v1350
    %v1352 = vmul.f32 %v1351, %v1350
    %v1353 = vmul.f32 %v1352, %v1351
    %v1354 = vmul.f32 0.5, %v1353
    %v1355 = vsub.f32 1.5, %v1354
    %v1356 = vmul.f32 %v1351, %v1355
    %vm1357 = vweird.f32 %v1350
    %vm1358 = vweird.f32 %v1351
    %vm1359 = vmor %vm1357, %vm1358
    %v1360 = vsel %vm1359, %v1351, %v1356
    %v1361 = vld [vmem:[%s2 + $0x68] sm:$0x1]
    %v1362 = vld [vmem:[%s2 + $0x70] sm:$0x1]
    %v1363 = vmul.f32 %v1361, %v1360
    %v1365 = vsel %vm335, %v1363, 0
    %1367 = vmatpush.msra.mxu0 0.0
    %1368 = vmatpush.msra.mxu0 0.0
    %1369 = vmatpush.msra.mxu0 0.0
    %1370 = vmatpush.msra.mxu0 0.0
    %1371 = vmatpush.msra.mxu0 0.0
    %1372 = vmatpush.msra.mxu0 0.0
    %1373 = vmatpush.msra.mxu0 0.0
    %1374 = vmatpush.msra.mxu0 0.0
    %1375 = vmatpush.msra.mxu0 0.0
    %1376 = vmatpush.msra.mxu0 0.0
    %1377 = vmatpush.msra.mxu0 0.0
    %1378 = vmatpush.msra.mxu0 0.0
    %1379 = vmatpush.msra.mxu0 0.0
    %1380 = vmatpush.msra.mxu0 0.0
    %1381 = vmatpush.msra.mxu0 0.0
    %1382 = vmatpush.msra.mxu0 %v1276
    %1383 = vmatmul.f32.gmra.mxu0 %v1365
    %v1384 = vpop.f32.mrf.mxu0
    %v1385 = vadd.f32 0.0, %v1384
    %1386 = vdwg.mxu0
    %v1388 = vsel %vm335, %v1362, 0
    %1390 = vmatpush.msra.mxu0 0.0
    %1391 = vmatpush.msra.mxu0 0.0
    %1392 = vmatpush.msra.mxu0 0.0
    %1393 = vmatpush.msra.mxu0 0.0
    %1394 = vmatpush.msra.mxu0 0.0
    %1395 = vmatpush.msra.mxu0 0.0
    %1396 = vmatpush.msra.mxu0 0.0
    %1397 = vmatpush.msra.mxu0 0.0
    %1398 = vmatpush.msra.mxu0 0.0
    %1399 = vmatpush.msra.mxu0 0.0
    %1400 = vmatpush.msra.mxu0 0.0
    %1401 = vmatpush.msra.mxu0 0.0
    %1402 = vmatpush.msra.mxu0 0.0
    %1403 = vmatpush.msra.mxu0 0.0
    %1404 = vmatpush.msra.mxu0 0.0
    %1405 = vmatpush.msra.mxu0 %v1276
    %1406 = vmatmul.f32.gmra.mxu0 %v1388
    %v1407 = vpop.f32.mrf.mxu0
    %v1408 = vadd.f32 0.0, %v1407
    %1409 = vdwg.mxu0
    %v1410 = vperm.slane %v1385, 0
    %v1411 = vmul.f32 %v1299, %v1410
    %v1412 = vmul.f32 %v1300, %v1410
    %v1413 = vperm.slane %v1408, 0
    %v1414 = vadd.f32 %v1411, %v1413
    %v1415 = vadd.f32 %v1412, %v1413
    %1418 = vrot.lane.b32.xlu0 %v975, 124
    %v1419 = vpop.permute.xlu0 %1418
    %1420 = vrot.lane.b32.xlu0 %v976, 124
    %v1421 = vpop.permute.xlu0 %1420
    %v1424 = vadd.f32 %v1414, %v1419
    %v1425 = vadd.f32 %v1415, %v1421
    %v1426 = vmax.f32 %v1424, 0.0
    %v1427 = vmax.f32 %v1425, 0.0
    %v1428 = vmul.f32 %v1301, %v1410
    %v1429 = vmul.f32 %v1302, %v1410
    %v1430 = vadd.f32 %v1428, %v1413
    %v1431 = vadd.f32 %v1429, %v1413
    %1434 = vrot.lane.b32.xlu0 %v977, 124
    %v1435 = vpop.permute.xlu0 %1434
    %1436 = vrot.lane.b32.xlu0 %v978, 124
    %v1437 = vpop.permute.xlu0 %1436
    %v1440 = vadd.f32 %v1430, %v1435
    %v1441 = vadd.f32 %v1431, %v1437
    %v1442 = vmax.f32 %v1440, 0.0
    %v1443 = vmax.f32 %v1441, 0.0
    %1446 = vrot.lane.b32.xlu0 %v1426, 4
    %v1447 = vpop.permute.xlu0 %1446
    %1448 = vrot.lane.b32.xlu0 %v1427, 4
    %v1449 = vpop.permute.xlu0 %1448
    %1452 = vst.msk [vmem:[#allocation4 + $0x1] sm:$0xff] %vm497, %v1447
    %1453 = vst.msk [vmem:[#allocation4 + $0x9] sm:$0xff] %vm497, %v1449
    %1456 = vrot.lane.b32.xlu0 %v1442, 4
    %v1457 = vpop.permute.xlu0 %1456
    %1458 = vrot.lane.b32.xlu0 %v1443, 4
    %v1459 = vpop.permute.xlu0 %1458
    %1462 = vst.msk [vmem:[#allocation4 + $0x13] sm:$0xff] %vm497, %v1457
    %1463 = vst.msk [vmem:[#allocation4 + $0x1b] sm:$0xff] %vm497, %v1459
    %v1464 = vld [vmem:[#allocation4] sm:$0xff]
    %v1465 = vld [vmem:[#allocation4 + $0x8] sm:$0xff]
    %v1466 = vld [vmem:[#allocation4 + $0x10] sm:$0x3]
    %v1467 = vld [vmem:[%s2 + $0x78] sm:$0xff]
    %vm1468 = vcmask 146432
    %v1470 = vsel %vm1468, %v1467, 0
    %vm1472 = vcmask 1041408
    %v1474 = vsel %vm1472, %v1466, 0
    %1476 = vmatpush.msra.mxu0 0.0
    %1477 = vmatpush.msra.mxu0 0.0
    %1478 = vmatpush.msra.mxu0 0.0
    %1479 = vmatpush.msra.mxu0 0.0
    %1480 = vmatpush.msra.mxu0 0.0
    %1481 = vmatpush.msra.mxu0 0.0
    %1482 = vmatpush.msra.mxu0 0.0
    %1483 = vmatpush.msra.mxu0 0.0
    %1484 = vmatpush.msra.mxu0 0.0
    %1485 = vmatpush.msra.mxu0 0.0
    %1486 = vmatpush.msra.mxu0 0.0
    %1487 = vmatpush.msra.mxu0 0.0
    %1488 = vmatpush.msra.mxu0 0.0
    %1489 = vmatpush.msra.mxu0 %v1474
    %1490 = vmatpush.msra.mxu0 %v1465
    %1491 = vmatpush.msra.mxu0 %v1464
    %1492 = vmatmul.f32.gmra.mxu0 %v1470
    %v1493 = vpop.f32.mrf.mxu0
    %v1494 = vadd.f32 0.0, %v1493
    %1495 = vdwg.mxu0
    %v1496 = vpack.c.bf16 %v1494, %v1494
    %v1497 = vld [vmem:[#allocation10 + $0x12c] sm:$0xf]
    %v1498 = vld [vmem:[#allocation10 + $0x130] sm:$0xf]
    %v1499 = vld [vmem:[#allocation10 + $0x134] sm:$0xf]
    %v1500 = vld [vmem:[#allocation10 + $0x138] sm:$0xf]
    %v1501 = vld [vmem:[#allocation10 + $0x13c] sm:$0xf]
    %v1502 = vld [vmem:[#allocation10 + $0x140] sm:$0xf]
    %v1503 = vld [vmem:[#allocation10 + $0x144] sm:$0xf]
    %v1504 = vld [vmem:[#allocation10 + $0x148] sm:$0xf]
    %v1505 = vld [vmem:[#allocation10 + $0x14c] sm:$0xf]
    %v1506 = vld [vmem:[%s2 + $0x80] sm:$0xff]
    %v1508 = vsel %vm1468, %v1506, 0
    %1510 = vmatpush.msra.mxu0 0.0
    %1511 = vmatpush.msra.mxu0 0.0
    %1512 = vmatpush.msra.mxu0 0.0
    %1513 = vmatpush.msra.mxu0 0.0
    %1514 = vmatpush.msra.mxu0 0.0
    %1515 = vmatpush.msra.mxu0 0.0
    %1516 = vmatpush.msra.mxu0 0.0
    %1517 = vmatpush.msra.mxu0 0.0
    %1518 = vmatpush.msra.mxu0 0.0
    %1519 = vmatpush.msra.mxu0 0.0
    %1520 = vmatpush.msra.mxu0 0.0
    %1521 = vmatpush.msra.mxu0 0.0
    %1522 = vmatpush.msra.mxu0 0.0
    %1523 = vmatpush.msra.mxu0 %v1474
    %1524 = vmatpush.msra.mxu0 %v1465
    %1525 = vmatpush.msra.mxu0 %v1464
    %1526 = vmatmul.f32.gmra.mxu0 %v1508
    %v1527 = vpop.f32.mrf.mxu0
    %v1528 = vadd.f32 0.0, %v1527
    %1529 = vdwg.mxu0
    %v1530 = vpack.c.bf16 %v1528, %v1528
    %v1531 = vld [vmem:[#allocation10 + $0x150] sm:$0xf]
    %v1532 = vld [vmem:[#allocation10 + $0x154] sm:$0xf]
    %v1533 = vld [vmem:[#allocation10 + $0x158] sm:$0xf]
    %v1534 = vld [vmem:[#allocation10 + $0x15c] sm:$0xf]
    %v1535 = vld [vmem:[#allocation10 + $0x160] sm:$0xf]
    %v1536 = vld [vmem:[#allocation10 + $0x164] sm:$0xf]
    %v1537 = vld [vmem:[#allocation10 + $0x168] sm:$0xf]
    %v1538 = vld [vmem:[#allocation10 + $0x16c] sm:$0xf]
    %v1539 = vld [vmem:[#allocation10 + $0x170] sm:$0xf]
    %v1549 = vunpack.c.l.b16 %v1531
    %v1550 = vunpack.c.l.b16 %v1532
    %v1551 = vunpack.c.l.b16 %v1533
    %v1552 = vunpack.c.l.b16 %v1534
    %v1553 = vunpack.c.l.b16 %v1535
    %v1554 = vunpack.c.l.b16 %v1536
    %v1555 = vunpack.c.l.b16 %v1537
    %v1556 = vunpack.c.l.b16 %v1538
    %v1557 = vunpack.c.l.b16 %v1539
    %v1558 = vpack.c.b16 %v1550, %v1549
    %v1559 = vpack.c.b16 %v1552, %v1551
    %v1560 = vpack.c.b16 %v1554, %v1553
    %v1561 = vpack.c.b16 %v1556, %v1555
    %v1562 = vpack.c.b16 %v1557, %v1557
    %v1568 = vsel %vm31, %v1530, 0
    %v1571 = vsel %vm339, %v1562, 0
    %1573 = vmatpush.bf16.msra.mxu0 0
    %1574 = vmatpush.bf16.msra.mxu0 0
    %1575 = vmatpush.bf16.msra.mxu0 0
    %1576 = vmatpush.bf16.msra.mxu0 %v1571
    %1577 = vmatpush.bf16.msra.mxu0 %v1561
    %1578 = vmatpush.bf16.msra.mxu0 %v1560
    %1579 = vmatpush.bf16.msra.mxu0 %v1559
    %1580 = vmatpush.bf16.msra.mxu0 %v1558
    %1581 = vmatmul.bf16.gmra.mxu0 %v1568
    %v1582 = vpop.f32.mrf.mxu0
    %v1583 = vadd.f32 0.0, %v1582
    %v1584 = vpop.f32.mrf.mxu0
    %1585 = vdwg.mxu0
    %v1595 = vunpack.c.l.b16 %v1497
    %v1596 = vunpack.c.l.b16 %v1498
    %v1597 = vunpack.c.l.b16 %v1499
    %v1598 = vunpack.c.l.b16 %v1500
    %v1599 = vunpack.c.l.b16 %v1501
    %v1600 = vunpack.c.l.b16 %v1502
    %v1601 = vunpack.c.l.b16 %v1503
    %v1602 = vunpack.c.l.b16 %v1504
    %v1603 = vunpack.c.l.b16 %v1505
    %v1604 = vpack.c.b16 %v1596, %v1595
    %v1605 = vpack.c.b16 %v1598, %v1597
    %v1606 = vpack.c.b16 %v1600, %v1599
    %v1607 = vpack.c.b16 %v1602, %v1601
    %v1608 = vpack.c.b16 %v1603, %v1603
    %v1614 = vsel %vm31, %v1496, 0
    %v1617 = vsel %vm339, %v1608, 0
    %1619 = vmatpush.bf16.msra.mxu0 0
    %1620 = vmatpush.bf16.msra.mxu0 0
    %1621 = vmatpush.bf16.msra.mxu0 0
    %1622 = vmatpush.bf16.msra.mxu0 %v1617
    %1623 = vmatpush.bf16.msra.mxu0 %v1607
    %1624 = vmatpush.bf16.msra.mxu0 %v1606
    %1625 = vmatpush.bf16.msra.mxu0 %v1605
    %1626 = vmatpush.bf16.msra.mxu0 %v1604
    %1627 = vmatmul.bf16.gmra.mxu0 %v1614
    %v1628 = vpop.f32.mrf.mxu0
    %v1629 = vadd.f32 %v1583, %v1628
    %v1630 = vpop.f32.mrf.mxu0
    %1631 = vdwg.mxu0
    %v1632 = vld [vmem:[%s2 + $0x88] sm:$0xff]
    %v1634 = vsel %vm1468, %v1632, 0
    %1636 = vmatpush.msra.mxu0 0.0
    %1637 = vmatpush.msra.mxu0 0.0
    %1638 = vmatpush.msra.mxu0 0.0
    %1639 = vmatpush.msra.mxu0 0.0
    %1640 = vmatpush.msra.mxu0 0.0
    %1641 = vmatpush.msra.mxu0 0.0
    %1642 = vmatpush.msra.mxu0 0.0
    %1643 = vmatpush.msra.mxu0 0.0
    %1644 = vmatpush.msra.mxu0 0.0
    %1645 = vmatpush.msra.mxu0 0.0
    %1646 = vmatpush.msra.mxu0 0.0
    %1647 = vmatpush.msra.mxu0 0.0
    %1648 = vmatpush.msra.mxu0 0.0
    %1649 = vmatpush.msra.mxu0 %v1474
    %1650 = vmatpush.msra.mxu0 %v1465
    %1651 = vmatpush.msra.mxu0 %v1464
    %1652 = vmatmul.f32.gmra.mxu0 %v1634
    %v1653 = vpop.f32.mrf.mxu0
    %v1654 = vadd.f32 0.0, %v1653
    %1655 = vdwg.mxu0
    %v1656 = vpack.c.bf16 %v1654, %v1654
    %v1657 = vld [vmem:[#allocation10 + $0x174] sm:$0xf]
    %v1658 = vld [vmem:[#allocation10 + $0x178] sm:$0xf]
    %v1659 = vld [vmem:[#allocation10 + $0x17c] sm:$0xf]
    %v1660 = vld [vmem:[#allocation10 + $0x180] sm:$0xf]
    %v1661 = vld [vmem:[#allocation10 + $0x184] sm:$0xf]
    %v1662 = vld [vmem:[#allocation10 + $0x188] sm:$0xf]
    %v1663 = vld [vmem:[#allocation10 + $0x18c] sm:$0xf]
    %v1664 = vld [vmem:[#allocation10 + $0x190] sm:$0xf]
    %v1665 = vld [vmem:[#allocation10 + $0x194] sm:$0xf]
    %v1675 = vunpack.c.l.b16 %v1657
    %v1676 = vunpack.c.l.b16 %v1658
    %v1677 = vunpack.c.l.b16 %v1659
    %v1678 = vunpack.c.l.b16 %v1660
    %v1679 = vunpack.c.l.b16 %v1661
    %v1680 = vunpack.c.l.b16 %v1662
    %v1681 = vunpack.c.l.b16 %v1663
    %v1682 = vunpack.c.l.b16 %v1664
    %v1683 = vunpack.c.l.b16 %v1665
    %v1684 = vpack.c.b16 %v1676, %v1675
    %v1685 = vpack.c.b16 %v1678, %v1677
    %v1686 = vpack.c.b16 %v1680, %v1679
    %v1687 = vpack.c.b16 %v1682, %v1681
    %v1688 = vpack.c.b16 %v1683, %v1683
    %v1694 = vsel %vm31, %v1656, 0
    %v1697 = vsel %vm339, %v1688, 0
    %1699 = vmatpush.bf16.msra.mxu0 0
    %1700 = vmatpush.bf16.msra.mxu0 0
    %1701 = vmatpush.bf16.msra.mxu0 0
    %1702 = vmatpush.bf16.msra.mxu0 %v1697
    %1703 = vmatpush.bf16.msra.mxu0 %v1687
    %1704 = vmatpush.bf16.msra.mxu0 %v1686
    %1705 = vmatpush.bf16.msra.mxu0 %v1685
    %1706 = vmatpush.bf16.msra.mxu0 %v1684
    %1707 = vmatmul.bf16.gmra.mxu0 %v1694
    %v1708 = vpop.f32.mrf.mxu0
    %v1709 = vadd.f32 0.0, %v1708
    %v1710 = vpop.f32.mrf.mxu0
    %1711 = vdwg.mxu0
    %v1712 = vadd.f32 %v1629, %v1709
    %v1713 = vld [vmem:[#allocation4 + $0x12] sm:$0xff]
    %v1714 = vld [vmem:[#allocation4 + $0x1a] sm:$0xff]
    %v1715 = vld [vmem:[#allocation4 + $0x22] sm:$0x3]
    %v1717 = vsel %vm1472, %v1715, 0
    %1719 = vmatpush.msra.mxu0 0.0
    %1720 = vmatpush.msra.mxu0 0.0
    %1721 = vmatpush.msra.mxu0 0.0
    %1722 = vmatpush.msra.mxu0 0.0
    %1723 = vmatpush.msra.mxu0 0.0
    %1724 = vmatpush.msra.mxu0 0.0
    %1725 = vmatpush.msra.mxu0 0.0
    %1726 = vmatpush.msra.mxu0 0.0
    %1727 = vmatpush.msra.mxu0 0.0
    %1728 = vmatpush.msra.mxu0 0.0
    %1729 = vmatpush.msra.mxu0 0.0
    %1730 = vmatpush.msra.mxu0 0.0
    %1731 = vmatpush.msra.mxu0 0.0
    %1732 = vmatpush.msra.mxu0 %v1717
    %1733 = vmatpush.msra.mxu0 %v1714
    %1734 = vmatpush.msra.mxu0 %v1713
    %1735 = vmatmul.f32.gmra.mxu0 %v1470
    %v1736 = vpop.f32.mrf.mxu0
    %v1737 = vadd.f32 0.0, %v1736
    %1738 = vdwg.mxu0
    %v1739 = vpack.c.bf16 %v1737, %v1737
    %1740 = vmatpush.msra.mxu0 0.0
    %1741 = vmatpush.msra.mxu0 0.0
    %1742 = vmatpush.msra.mxu0 0.0
    %1743 = vmatpush.msra.mxu0 0.0
    %1744 = vmatpush.msra.mxu0 0.0
    %1745 = vmatpush.msra.mxu0 0.0
    %1746 = vmatpush.msra.mxu0 0.0
    %1747 = vmatpush.msra.mxu0 0.0
    %1748 = vmatpush.msra.mxu0 0.0
    %1749 = vmatpush.msra.mxu0 0.0
    %1750 = vmatpush.msra.mxu0 0.0
    %1751 = vmatpush.msra.mxu0 0.0
    %1752 = vmatpush.msra.mxu0 0.0
    %1753 = vmatpush.msra.mxu0 %v1717
    %1754 = vmatpush.msra.mxu0 %v1714
    %1755 = vmatpush.msra.mxu0 %v1713
    %1756 = vmatmul.f32.gmra.mxu0 %v1508
    %v1757 = vpop.f32.mrf.mxu0
    %v1758 = vadd.f32 0.0, %v1757
    %1759 = vdwg.mxu0
    %v1760 = vpack.c.bf16 %v1758, %v1758
    %v1762 = vsel %vm31, %v1760, 0
    %1764 = vmatpush.bf16.msra.mxu0 0
    %1765 = vmatpush.bf16.msra.mxu0 0
    %1766 = vmatpush.bf16.msra.mxu0 0
    %1767 = vmatpush.bf16.msra.mxu0 %v1571
    %1768 = vmatpush.bf16.msra.mxu0 %v1561
    %1769 = vmatpush.bf16.msra.mxu0 %v1560
    %1770 = vmatpush.bf16.msra.mxu0 %v1559
    %1771 = vmatpush.bf16.msra.mxu0 %v1558
    %1772 = vmatmul.bf16.gmra.mxu0 %v1762
    %v1773 = vpop.f32.mrf.mxu0
    %v1774 = vadd.f32 0.0, %v1773
    %v1775 = vpop.f32.mrf.mxu0
    %1776 = vdwg.mxu0
    %v1778 = vsel %vm31, %v1739, 0
    %1780 = vmatpush.bf16.msra.mxu0 0
    %1781 = vmatpush.bf16.msra.mxu0 0
    %1782 = vmatpush.bf16.msra.mxu0 0
    %1783 = vmatpush.bf16.msra.mxu0 %v1617
    %1784 = vmatpush.bf16.msra.mxu0 %v1607
    %1785 = vmatpush.bf16.msra.mxu0 %v1606
    %1786 = vmatpush.bf16.msra.mxu0 %v1605
    %1787 = vmatpush.bf16.msra.mxu0 %v1604
    %1788 = vmatmul.bf16.gmra.mxu0 %v1778
    %v1789 = vpop.f32.mrf.mxu0
    %v1790 = vadd.f32 %v1774, %v1789
    %v1791 = vpop.f32.mrf.mxu0
    %1792 = vdwg.mxu0
    %1793 = vmatpush.msra.mxu0 0.0
    %1794 = vmatpush.msra.mxu0 0.0
    %1795 = vmatpush.msra.mxu0 0.0
    %1796 = vmatpush.msra.mxu0 0.0
    %1797 = vmatpush.msra.mxu0 0.0
    %1798 = vmatpush.msra.mxu0 0.0
    %1799 = vmatpush.msra.mxu0 0.0
    %1800 = vmatpush.msra.mxu0 0.0
    %1801 = vmatpush.msra.mxu0 0.0
    %1802 = vmatpush.msra.mxu0 0.0
    %1803 = vmatpush.msra.mxu0 0.0
    %1804 = vmatpush.msra.mxu0 0.0
    %1805 = vmatpush.msra.mxu0 0.0
    %1806 = vmatpush.msra.mxu0 %v1717
    %1807 = vmatpush.msra.mxu0 %v1714
    %1808 = vmatpush.msra.mxu0 %v1713
    %1809 = vmatmul.f32.gmra.mxu0 %v1634
    %v1810 = vpop.f32.mrf.mxu0
    %v1811 = vadd.f32 0.0, %v1810
    %1812 = vdwg.mxu0
    %v1813 = vpack.c.bf16 %v1811, %v1811
    %v1815 = vsel %vm31, %v1813, 0
    %1817 = vmatpush.bf16.msra.mxu0 0
    %1818 = vmatpush.bf16.msra.mxu0 0
    %1819 = vmatpush.bf16.msra.mxu0 0
    %1820 = vmatpush.bf16.msra.mxu0 %v1697
    %1821 = vmatpush.bf16.msra.mxu0 %v1687
    %1822 = vmatpush.bf16.msra.mxu0 %v1686
    %1823 = vmatpush.bf16.msra.mxu0 %v1685
    %1824 = vmatpush.bf16.msra.mxu0 %v1684
    %1825 = vmatmul.bf16.gmra.mxu0 %v1815
    %v1826 = vpop.f32.mrf.mxu0
    %v1827 = vadd.f32 0.0, %v1826
    %v1828 = vpop.f32.mrf.mxu0
    %1829 = vdwg.mxu0
    %v1830 = vadd.f32 %v1790, %v1827
    %v1831 = vld [vmem:[%s2 + $0x90] sm:$0xff]
    %v1832 = vld [vmem:[%s2 + $0x98] sm:$0xff]
    %v1833 = vld [vmem:[%s2 + $0xa0] sm:$0xff]
    %v1834 = vld [vmem:[%s2 + $0xa8] sm:$0xff]
    %v1835 = vld [vmem:[%s2 + $0xb0] sm:$0xff]
    %v1836 = vld [vmem:[%s2 + $0xb8] sm:$0xff]
    %v1837 = vld [vmem:[%s2 + $0xc0] sm:$0xff]
    %v1838 = vld [vmem:[%s2 + $0xc8] sm:$0xff]
    %v1839 = vld [vmem:[%s2 + $0xd0] sm:$0xff]
    %v1840 = vsel %vm291, %v1712, 0.0
    %v1841 = vrot.slane %v1840, 4
    %v1842 = vadd.f32 %v1840, %v1841
    %v1843 = vrot.slane %v1842, 2
    %v1844 = vadd.f32 %v1842, %v1843
    %v1845 = vrot.slane %v1844, 1
    %v1846 = vadd.f32 %v1844, %v1845
    %v1847 = vsel %vm291, %v1830, 0.0
    %v1848 = vrot.slane %v1847, 4
    %v1849 = vadd.f32 %v1847, %v1848
    %v1850 = vrot.slane %v1849, 2
    %v1851 = vadd.f32 %v1849, %v1850
    %v1852 = vrot.slane %v1851, 1
    %v1853 = vadd.f32 %v1851, %v1852
    %v1854 = vadd.f32 %v1846, %v1853
    %v1856 = vsel %vm291, %v1854, 0
    %1858 = vmatpush.msra.mxu0 0.0
    %1859 = vmatpush.msra.mxu0 0.0
    %1860 = vmatpush.msra.mxu0 0.0
    %1861 = vmatpush.msra.mxu0 0.0
    %1862 = vmatpush.msra.mxu0 0.0
    %1863 = vmatpush.msra.mxu0 0.0
    %1864 = vmatpush.msra.mxu0 0.0
    %1865 = vmatpush.msra.mxu0 0.0
    %1866 = vmatpush.msra.mxu0 %v1838
    %1867 = vmatpush.msra.mxu0 %v1837
    %1868 = vmatpush.msra.mxu0 %v1836
    %1869 = vmatpush.msra.mxu0 %v1835
    %1870 = vmatpush.msra.mxu0 %v1834
    %1871 = vmatpush.msra.mxu0 %v1833
    %1872 = vmatpush.msra.mxu0 %v1832
    %1873 = vmatpush.msra.mxu0 %v1831
    %1874 = vmatmul.f32.gmra.mxu0 %v1856
    %v1875 = vpop.f32.mrf.mxu0
    %v1876 = vadd.f32 0.0, %v1875
    %1877 = vdwg.mxu0
    %v1878 = vmul.f32 %v1876, 0.0078125
    %vm1879 = vcmask 64512
    %v1881 = vsel %vm1879, %v1878, 0
    %1883 = vmatpush.msra.mxu0 0.0
    %1884 = vmatpush.msra.mxu0 0.0
    %1885 = vmatpush.msra.mxu0 0.0
    %1886 = vmatpush.msra.mxu0 0.0
    %1887 = vmatpush.msra.mxu0 0.0
    %1888 = vmatpush.msra.mxu0 0.0
    %1889 = vmatpush.msra.mxu0 0.0
    %1890 = vmatpush.msra.mxu0 0.0
    %1891 = vmatpush.msra.mxu0 0.0
    %1892 = vmatpush.msra.mxu0 0.0
    %1893 = vmatpush.msra.mxu0 0.0
    %1894 = vmatpush.msra.mxu0 0.0
    %1895 = vmatpush.msra.mxu0 0.0
    %1896 = vmatpush.msra.mxu0 0.0
    %1897 = vmatpush.msra.mxu0 0.0
    %1898 = vmatpush.msra.mxu0 %v1839
    %1899 = vmatmul.f32.gmra.mxu0 %v1881
    %v1900 = vpop.f32.mrf.mxu0
    %v1901 = vadd.f32 0.0, %v1900
    %1902 = vdwg.mxu0
    %v1903 = vperm.slane %v1901, 0
    %v1904 = vsub.f32 %v1712, %v1903
    %v1905 = vsub.f32 %v1830, %v1903
    %v1906 = vmul.f32 %v1904, %v1904
    %v1907 = vsel %vm291, %v1906, 0.0
    %v1908 = vrot.slane %v1907, 4
    %v1909 = vadd.f32 %v1907, %v1908
    %v1910 = vrot.slane %v1909, 2
    %v1911 = vadd.f32 %v1909, %v1910
    %v1912 = vrot.slane %v1911, 1
    %v1913 = vadd.f32 %v1911, %v1912
    %v1914 = vmul.f32 %v1905, %v1905
    %v1915 = vsel %vm291, %v1914, 0.0
    %v1916 = vrot.slane %v1915, 4
    %v1917 = vadd.f32 %v1915, %v1916
    %v1918 = vrot.slane %v1917, 2
    %v1919 = vadd.f32 %v1917, %v1918
    %v1920 = vrot.slane %v1919, 1
    %v1921 = vadd.f32 %v1919, %v1920
    %v1922 = vadd.f32 %v1913, %v1921
    %v1924 = vsel %vm291, %v1922, 0
    %1926 = vmatpush.msra.mxu0 0.0
    %1927 = vmatpush.msra.mxu0 0.0
    %1928 = vmatpush.msra.mxu0 0.0
    %1929 = vmatpush.msra.mxu0 0.0
    %1930 = vmatpush.msra.mxu0 0.0
    %1931 = vmatpush.msra.mxu0 0.0
    %1932 = vmatpush.msra.mxu0 0.0
    %1933 = vmatpush.msra.mxu0 0.0
    %1934 = vmatpush.msra.mxu0 %v1838
    %1935 = vmatpush.msra.mxu0 %v1837
    %1936 = vmatpush.msra.mxu0 %v1836
    %1937 = vmatpush.msra.mxu0 %v1835
    %1938 = vmatpush.msra.mxu0 %v1834
    %1939 = vmatpush.msra.mxu0 %v1833
    %1940 = vmatpush.msra.mxu0 %v1832
    %1941 = vmatpush.msra.mxu0 %v1831
    %1942 = vmatmul.f32.gmra.mxu0 %v1924
    %v1943 = vpop.f32.mrf.mxu0
    %v1944 = vadd.f32 0.0, %v1943
    %1945 = vdwg.mxu0
    %v1946 = vmul.f32 %v1944, 0.0078125
    %v1947 = vadd.f32 %v1946, 1e-05
    %v1948 = vrsqrt.pop %v1947
    %v1949 = vmul.f32 %v1948, %v1947
    %v1950 = vmul.f32 %v1949, %v1948
    %v1951 = vmul.f32 0.5, %v1950
    %v1952 = vsub.f32 1.5, %v1951
    %v1953 = vmul.f32 %v1948, %v1952
    %vm1954 = vweird.f32 %v1947
    %vm1955 = vweird.f32 %v1948
    %vm1956 = vmor %vm1954, %vm1955
    %v1957 = vsel %vm1956, %v1948, %v1953
    %v1958 = vld [vmem:[%s2 + $0xd8] sm:$0x1]
    %v1959 = vld [vmem:[%s2 + $0xe0] sm:$0x1]
    %v1960 = vmul.f32 %v1958, %v1957
    %v1962 = vsel %vm1879, %v1960, 0
    %1964 = vmatpush.msra.mxu0 0.0
    %1965 = vmatpush.msra.mxu0 0.0
    %1966 = vmatpush.msra.mxu0 0.0
    %1967 = vmatpush.msra.mxu0 0.0
    %1968 = vmatpush.msra.mxu0 0.0
    %1969 = vmatpush.msra.mxu0 0.0
    %1970 = vmatpush.msra.mxu0 0.0
    %1971 = vmatpush.msra.mxu0 0.0
    %1972 = vmatpush.msra.mxu0 0.0
    %1973 = vmatpush.msra.mxu0 0.0
    %1974 = vmatpush.msra.mxu0 0.0
    %1975 = vmatpush.msra.mxu0 0.0
    %1976 = vmatpush.msra.mxu0 0.0
    %1977 = vmatpush.msra.mxu0 0.0
    %1978 = vmatpush.msra.mxu0 0.0
    %1979 = vmatpush.msra.mxu0 %v1839
    %1980 = vmatmul.f32.gmra.mxu0 %v1962
    %v1981 = vpop.f32.mrf.mxu0
    %v1982 = vadd.f32 0.0, %v1981
    %1983 = vdwg.mxu0
    %v1985 = vsel %vm1879, %v1959, 0
    %1987 = vmatpush.msra.mxu0 0.0
    %1988 = vmatpush.msra.mxu0 0.0
    %1989 = vmatpush.msra.mxu0 0.0
    %1990 = vmatpush.msra.mxu0 0.0
    %1991 = vmatpush.msra.mxu0 0.0
    %1992 = vmatpush.msra.mxu0 0.0
    %1993 = vmatpush.msra.mxu0 0.0
    %1994 = vmatpush.msra.mxu0 0.0
    %1995 = vmatpush.msra.mxu0 0.0
    %1996 = vmatpush.msra.mxu0 0.0
    %1997 = vmatpush.msra.mxu0 0.0
    %1998 = vmatpush.msra.mxu0 0.0
    %1999 = vmatpush.msra.mxu0 0.0
    %2000 = vmatpush.msra.mxu0 0.0
    %2001 = vmatpush.msra.mxu0 0.0
    %2002 = vmatpush.msra.mxu0 %v1839
    %2003 = vmatmul.f32.gmra.mxu0 %v1985
    %v2004 = vpop.f32.mrf.mxu0
    %v2005 = vadd.f32 0.0, %v2004
    %2006 = vdwg.mxu0
    %v2007 = vperm.slane %v1982, 0
    %v2008 = vmul.f32 %v1904, %v2007
    %v2009 = vperm.slane %v2005, 0
    %v2010 = vadd.f32 %v2008, %v2009
    %v2011 = vmax.f32 %v2010, 0.0
    %v2012 = vmul.f32 %v1905, %v2007
    %v2013 = vadd.f32 %v2012, %v2009
    %v2014 = vmax.f32 %v2013, 0.0
    %2016 = vrot.lane.b32.xlu0 %v2011, 8
    %v2017 = vpop.permute.xlu0 %2016
    %vm2019 = vcmask 588864
    %2020 = vst.msk [vmem:[#allocation5 + $0x1] sm:$0xff] %vm2019, %v2017
    %2022 = vrot.lane.b32.xlu0 %v2014, 8
    %v2023 = vpop.permute.xlu0 %2022
    %2025 = vst.msk [vmem:[#allocation5 + $0xb] sm:$0xff] %vm2019, %v2023
    %v2026 = vld [vmem:[#allocation4] sm:$0xff]
    %v2027 = vld [vmem:[#allocation4 + $0x8] sm:$0xff]
    %v2028 = vld [vmem:[#allocation4 + $0x10] sm:$0x3]
    %v2029 = vld [vmem:[%s2 + $0x80] sm:$0xff]
    %v2031 = vsel %vm1468, %v2029, 0
    %v2034 = vsel %vm1472, %v2028, 0
    %2036 = vmatpush.msra.mxu0 0.0
    %2037 = vmatpush.msra.mxu0 0.0
    %2038 = vmatpush.msra.mxu0 0.0
    %2039 = vmatpush.msra.mxu0 0.0
    %2040 = vmatpush.msra.mxu0 0.0
    %2041 = vmatpush.msra.mxu0 0.0
    %2042 = vmatpush.msra.mxu0 0.0
    %2043 = vmatpush.msra.mxu0 0.0
    %2044 = vmatpush.msra.mxu0 0.0
    %2045 = vmatpush.msra.mxu0 0.0
    %2046 = vmatpush.msra.mxu0 0.0
    %2047 = vmatpush.msra.mxu0 0.0
    %2048 = vmatpush.msra.mxu0 0.0
    %2049 = vmatpush.msra.mxu0 %v2034
    %2050 = vmatpush.msra.mxu0 %v2027
    %2051 = vmatpush.msra.mxu0 %v2026
    %2052 = vmatmul.f32.gmra.mxu0 %v2031
    %v2053 = vpop.f32.mrf.mxu0
    %v2054 = vadd.f32 0.0, %v2053
    %2055 = vdwg.mxu0
    %v2056 = vpack.c.bf16 %v2054, %v2054
    %v2057 = vld [vmem:[#allocation10 + $0x210] sm:$0xf]
    %v2058 = vld [vmem:[#allocation10 + $0x214] sm:$0xf]
    %v2059 = vld [vmem:[#allocation10 + $0x218] sm:$0xf]
    %v2060 = vld [vmem:[#allocation10 + $0x21c] sm:$0xf]
    %v2061 = vld [vmem:[#allocation10 + $0x220] sm:$0xf]
    %v2062 = vld [vmem:[#allocation10 + $0x224] sm:$0xf]
    %v2063 = vld [vmem:[#allocation10 + $0x228] sm:$0xf]
    %v2064 = vld [vmem:[#allocation10 + $0x22c] sm:$0xf]
    %v2065 = vld [vmem:[#allocation10 + $0x230] sm:$0xf]
    %v2075 = vunpack.c.l.b16 %v2057
    %v2076 = vunpack.c.l.b16 %v2058
    %v2077 = vunpack.c.l.b16 %v2059
    %v2078 = vunpack.c.l.b16 %v2060
    %v2079 = vunpack.c.l.b16 %v2061
    %v2080 = vunpack.c.l.b16 %v2062
    %v2081 = vunpack.c.l.b16 %v2063
    %v2082 = vunpack.c.l.b16 %v2064
    %v2083 = vunpack.c.l.b16 %v2065
    %v2084 = vpack.c.b16 %v2076, %v2075
    %v2085 = vpack.c.b16 %v2078, %v2077
    %v2086 = vpack.c.b16 %v2080, %v2079
    %v2087 = vpack.c.b16 %v2082, %v2081
    %v2088 = vpack.c.b16 %v2083, %v2083
    %v2094 = vsel %vm31, %v2056, 0
    %v2097 = vsel %vm339, %v2088, 0
    %2099 = vmatpush.bf16.msra.mxu0 0
    %2100 = vmatpush.bf16.msra.mxu0 0
    %2101 = vmatpush.bf16.msra.mxu0 0
    %2102 = vmatpush.bf16.msra.mxu0 %v2097
    %2103 = vmatpush.bf16.msra.mxu0 %v2087
    %2104 = vmatpush.bf16.msra.mxu0 %v2086
    %2105 = vmatpush.bf16.msra.mxu0 %v2085
    %2106 = vmatpush.bf16.msra.mxu0 %v2084
    %2107 = vmatmul.bf16.gmra.mxu0 %v2094
    %v2108 = vpop.f32.mrf.mxu0
    %v2109 = vadd.f32 0.0, %v2108
    %v2110 = vpop.f32.mrf.mxu0
    %2111 = vdwg.mxu0
    %v2112 = vld [vmem:[#allocation4 + $0x12] sm:$0xff]
    %v2113 = vld [vmem:[#allocation4 + $0x1a] sm:$0xff]
    %v2114 = vld [vmem:[#allocation4 + $0x22] sm:$0x3]
    %v2116 = vsel %vm1472, %v2114, 0
    %2118 = vmatpush.msra.mxu0 0.0
    %2119 = vmatpush.msra.mxu0 0.0
    %2120 = vmatpush.msra.mxu0 0.0
    %2121 = vmatpush.msra.mxu0 0.0
    %2122 = vmatpush.msra.mxu0 0.0
    %2123 = vmatpush.msra.mxu0 0.0
    %2124 = vmatpush.msra.mxu0 0.0
    %2125 = vmatpush.msra.mxu0 0.0
    %2126 = vmatpush.msra.mxu0 0.0
    %2127 = vmatpush.msra.mxu0 0.0
    %2128 = vmatpush.msra.mxu0 0.0
    %2129 = vmatpush.msra.mxu0 0.0
    %2130 = vmatpush.msra.mxu0 0.0
    %2131 = vmatpush.msra.mxu0 %v2116
    %2132 = vmatpush.msra.mxu0 %v2113
    %2133 = vmatpush.msra.mxu0 %v2112
    %2134 = vmatmul.f32.gmra.mxu0 %v2031
    %v2135 = vpop.f32.mrf.mxu0
    %v2136 = vadd.f32 0.0, %v2135
    %2137 = vdwg.mxu0
    %v2138 = vpack.c.bf16 %v2136, %v2136
    %v2140 = vsel %vm31, %v2138, 0
    %2142 = vmatpush.bf16.msra.mxu0 0
    %2143 = vmatpush.bf16.msra.mxu0 0
    %2144 = vmatpush.bf16.msra.mxu0 0
    %2145 = vmatpush.bf16.msra.mxu0 %v2097
    %2146 = vmatpush.bf16.msra.mxu0 %v2087
    %2147 = vmatpush.bf16.msra.mxu0 %v2086
    %2148 = vmatpush.bf16.msra.mxu0 %v2085
    %2149 = vmatpush.bf16.msra.mxu0 %v2084
    %2150 = vmatmul.bf16.gmra.mxu0 %v2140
    %v2151 = vpop.f32.mrf.mxu0
    %v2152 = vadd.f32 0.0, %v2151
    %v2153 = vpop.f32.mrf.mxu0
    %2154 = vdwg.mxu0
    %v2155 = vld [vmem:[%s2 + $0x90] sm:$0xff]
    %v2156 = vld [vmem:[%s2 + $0x98] sm:$0xff]
    %v2157 = vld [vmem:[%s2 + $0xa0] sm:$0xff]
    %v2158 = vld [vmem:[%s2 + $0xa8] sm:$0xff]
    %v2159 = vld [vmem:[%s2 + $0xb0] sm:$0xff]
    %v2160 = vld [vmem:[%s2 + $0xb8] sm:$0xff]
    %v2161 = vld [vmem:[%s2 + $0xc0] sm:$0xff]
    %v2162 = vld [vmem:[%s2 + $0xc8] sm:$0xff]
    %v2163 = vld [vmem:[%s2 + $0xd0] sm:$0xff]
    %v2164 = vsel %vm291, %v2109, 0.0
    %v2165 = vrot.slane %v2164, 4
    %v2166 = vadd.f32 %v2164, %v2165
    %v2167 = vrot.slane %v2166, 2
    %v2168 = vadd.f32 %v2166, %v2167
    %v2169 = vrot.slane %v2168, 1
    %v2170 = vadd.f32 %v2168, %v2169
    %v2171 = vsel %vm291, %v2152, 0.0
    %v2172 = vrot.slane %v2171, 4
    %v2173 = vadd.f32 %v2171, %v2172
    %v2174 = vrot.slane %v2173, 2
    %v2175 = vadd.f32 %v2173, %v2174
    %v2176 = vrot.slane %v2175, 1
    %v2177 = vadd.f32 %v2175, %v2176
    %v2178 = vadd.f32 %v2170, %v2177
    %v2180 = vsel %vm291, %v2178, 0
    %2182 = vmatpush.msra.mxu0 0.0
    %2183 = vmatpush.msra.mxu0 0.0
    %2184 = vmatpush.msra.mxu0 0.0
    %2185 = vmatpush.msra.mxu0 0.0
    %2186 = vmatpush.msra.mxu0 0.0
    %2187 = vmatpush.msra.mxu0 0.0
    %2188 = vmatpush.msra.mxu0 0.0
    %2189 = vmatpush.msra.mxu0 0.0
    %2190 = vmatpush.msra.mxu0 %v2162
    %2191 = vmatpush.msra.mxu0 %v2161
    %2192 = vmatpush.msra.mxu0 %v2160
    %2193 = vmatpush.msra.mxu0 %v2159
    %2194 = vmatpush.msra.mxu0 %v2158
    %2195 = vmatpush.msra.mxu0 %v2157
    %2196 = vmatpush.msra.mxu0 %v2156
    %2197 = vmatpush.msra.mxu0 %v2155
    %2198 = vmatmul.f32.gmra.mxu0 %v2180
    %v2199 = vpop.f32.mrf.mxu0
    %v2200 = vadd.f32 0.0, %v2199
    %2201 = vdwg.mxu0
    %v2202 = vmul.f32 %v2200, 0.0078125
    %v2204 = vsel %vm1879, %v2202, 0
    %2206 = vmatpush.msra.mxu0 0.0
    %2207 = vmatpush.msra.mxu0 0.0
    %2208 = vmatpush.msra.mxu0 0.0
    %2209 = vmatpush.msra.mxu0 0.0
    %2210 = vmatpush.msra.mxu0 0.0
    %2211 = vmatpush.msra.mxu0 0.0
    %2212 = vmatpush.msra.mxu0 0.0
    %2213 = vmatpush.msra.mxu0 0.0
    %2214 = vmatpush.msra.mxu0 0.0
    %2215 = vmatpush.msra.mxu0 0.0
    %2216 = vmatpush.msra.mxu0 0.0
    %2217 = vmatpush.msra.mxu0 0.0
    %2218 = vmatpush.msra.mxu0 0.0
    %2219 = vmatpush.msra.mxu0 0.0
    %2220 = vmatpush.msra.mxu0 0.0
    %2221 = vmatpush.msra.mxu0 %v2163
    %2222 = vmatmul.f32.gmra.mxu0 %v2204
    %v2223 = vpop.f32.mrf.mxu0
    %v2224 = vadd.f32 0.0, %v2223
    %2225 = vdwg.mxu0
    %v2226 = vperm.slane %v2224, 0
    %v2227 = vsub.f32 %v2109, %v2226
    %v2228 = vsub.f32 %v2152, %v2226
    %v2229 = vmul.f32 %v2227, %v2227
    %v2230 = vsel %vm291, %v2229, 0.0
    %v2231 = vrot.slane %v2230, 4
    %v2232 = vadd.f32 %v2230, %v2231
    %v2233 = vrot.slane %v2232, 2
    %v2234 = vadd.f32 %v2232, %v2233
    %v2235 = vrot.slane %v2234, 1
    %v2236 = vadd.f32 %v2234, %v2235
    %v2237 = vmul.f32 %v2228, %v2228
    %v2238 = vsel %vm291, %v2237, 0.0
    %v2239 = vrot.slane %v2238, 4
    %v2240 = vadd.f32 %v2238, %v2239
    %v2241 = vrot.slane %v2240, 2
    %v2242 = vadd.f32 %v2240, %v2241
    %v2243 = vrot.slane %v2242, 1
    %v2244 = vadd.f32 %v2242, %v2243
    %v2245 = vadd.f32 %v2236, %v2244
    %v2247 = vsel %vm291, %v2245, 0
    %2249 = vmatpush.msra.mxu0 0.0
    %2250 = vmatpush.msra.mxu0 0.0
    %2251 = vmatpush.msra.mxu0 0.0
    %2252 = vmatpush.msra.mxu0 0.0
    %2253 = vmatpush.msra.mxu0 0.0
    %2254 = vmatpush.msra.mxu0 0.0
    %2255 = vmatpush.msra.mxu0 0.0
    %2256 = vmatpush.msra.mxu0 0.0
    %2257 = vmatpush.msra.mxu0 %v2162
    %2258 = vmatpush.msra.mxu0 %v2161
    %2259 = vmatpush.msra.mxu0 %v2160
    %2260 = vmatpush.msra.mxu0 %v2159
    %2261 = vmatpush.msra.mxu0 %v2158
    %2262 = vmatpush.msra.mxu0 %v2157
    %2263 = vmatpush.msra.mxu0 %v2156
    %2264 = vmatpush.msra.mxu0 %v2155
    %2265 = vmatmul.f32.gmra.mxu0 %v2247
    %v2266 = vpop.f32.mrf.mxu0
    %v2267 = vadd.f32 0.0, %v2266
    %2268 = vdwg.mxu0
    %v2269 = vmul.f32 %v2267, 0.0078125
    %v2270 = vadd.f32 %v2269, 1e-05
    %v2271 = vrsqrt.pop %v2270
    %v2272 = vmul.f32 %v2271, %v2270
    %v2273 = vmul.f32 %v2272, %v2271
    %v2274 = vmul.f32 0.5, %v2273
    %v2275 = vsub.f32 1.5, %v2274
    %v2276 = vmul.f32 %v2271, %v2275
    %vm2277 = vweird.f32 %v2270
    %vm2278 = vweird.f32 %v2271
    %vm2279 = vmor %vm2277, %vm2278
    %v2280 = vsel %vm2279, %v2271, %v2276
    %v2281 = vld [vmem:[%s2 + $0xf8] sm:$0x1]
    %v2282 = vld [vmem:[%s2 + $0x100] sm:$0x1]
    %v2283 = vmul.f32 %v2281, %v2280
    %v2285 = vsel %vm1879, %v2283, 0
    %2287 = vmatpush.msra.mxu0 0.0
    %2288 = vmatpush.msra.mxu0 0.0
    %2289 = vmatpush.msra.mxu0 0.0
    %2290 = vmatpush.msra.mxu0 0.0
    %2291 = vmatpush.msra.mxu0 0.0
    %2292 = vmatpush.msra.mxu0 0.0
    %2293 = vmatpush.msra.mxu0 0.0
    %2294 = vmatpush.msra.mxu0 0.0
    %2295 = vmatpush.msra.mxu0 0.0
    %2296 = vmatpush.msra.mxu0 0.0
    %2297 = vmatpush.msra.mxu0 0.0
    %2298 = vmatpush.msra.mxu0 0.0
    %2299 = vmatpush.msra.mxu0 0.0
    %2300 = vmatpush.msra.mxu0 0.0
    %2301 = vmatpush.msra.mxu0 0.0
    %2302 = vmatpush.msra.mxu0 %v2163
    %2303 = vmatmul.f32.gmra.mxu0 %v2285
    %v2304 = vpop.f32.mrf.mxu0
    %v2305 = vadd.f32 0.0, %v2304
    %2306 = vdwg.mxu0
    %v2308 = vsel %vm1879, %v2282, 0
    %2310 = vmatpush.msra.mxu0 0.0
    %2311 = vmatpush.msra.mxu0 0.0
    %2312 = vmatpush.msra.mxu0 0.0
    %2313 = vmatpush.msra.mxu0 0.0
    %2314 = vmatpush.msra.mxu0 0.0
    %2315 = vmatpush.msra.mxu0 0.0
    %2316 = vmatpush.msra.mxu0 0.0
    %2317 = vmatpush.msra.mxu0 0.0
    %2318 = vmatpush.msra.mxu0 0.0
    %2319 = vmatpush.msra.mxu0 0.0
    %2320 = vmatpush.msra.mxu0 0.0
    %2321 = vmatpush.msra.mxu0 0.0
    %2322 = vmatpush.msra.mxu0 0.0
    %2323 = vmatpush.msra.mxu0 0.0
    %2324 = vmatpush.msra.mxu0 0.0
    %2325 = vmatpush.msra.mxu0 %v2163
    %2326 = vmatmul.f32.gmra.mxu0 %v2308
    %v2327 = vpop.f32.mrf.mxu0
    %v2328 = vadd.f32 0.0, %v2327
    %2329 = vdwg.mxu0
    %v2330 = vperm.slane %v2305, 0
    %v2331 = vmul.f32 %v2227, %v2330
    %v2332 = vperm.slane %v2328, 0
    %v2333 = vadd.f32 %v2331, %v2332
    %v2334 = vmul.f32 %v2228, %v2330
    %v2335 = vadd.f32 %v2334, %v2332
    %v2336 = vld [vmem:[#allocation5] sm:$0xff]
    %v2337 = vpack.c.bf16 %v2336, %v2336
    %v2338 = vld [vmem:[#allocation10 + $0x198] sm:$0xf]
    %v2339 = vld [vmem:[#allocation10 + $0x19c] sm:$0xf]
    %v2340 = vld [vmem:[#allocation10 + $0x1a0] sm:$0xf]
    %v2341 = vld [vmem:[#allocation10 + $0x1a4] sm:$0xf]
    %v2342 = vld [vmem:[#allocation10 + $0x1a8] sm:$0xf]
    %v2343 = vld [vmem:[#allocation10 + $0x1ac] sm:$0xf]
    %v2344 = vld [vmem:[#allocation10 + $0x1b0] sm:$0xf]
    %v2345 = vld [vmem:[#allocation10 + $0x1b4] sm:$0xf]
    %v2346 = vld [vmem:[#allocation10 + $0x1b8] sm:$0xf]
    %v2347 = vld [vmem:[#allocation10 + $0x1bc] sm:$0xf]
    %v2348 = vld [vmem:[#allocation5 + $0x1] sm:$0xff]
    %v2349 = vpack.c.bf16 %v2348, %v2348
    %v2350 = vld [vmem:[#allocation10 + $0x1c0] sm:$0xf]
    %v2351 = vld [vmem:[#allocation10 + $0x1c4] sm:$0xf]
    %v2352 = vld [vmem:[#allocation10 + $0x1c8] sm:$0xf]
    %v2353 = vld [vmem:[#allocation10 + $0x1cc] sm:$0xf]
    %v2354 = vld [vmem:[#allocation10 + $0x1d0] sm:$0xf]
    %v2355 = vld [vmem:[#allocation10 + $0x1d4] sm:$0xf]
    %v2356 = vld [vmem:[#allocation10 + $0x1d8] sm:$0xf]
    %v2357 = vld [vmem:[#allocation10 + $0x1dc] sm:$0xf]
    %v2358 = vld [vmem:[#allocation10 + $0x1e0] sm:$0xf]
    %v2359 = vld [vmem:[#allocation10 + $0x1e4] sm:$0xf]
    %v2370 = vunpack.c.l.b16 %v2350
    %v2371 = vunpack.c.l.b16 %v2351
    %v2372 = vunpack.c.l.b16 %v2352
    %v2373 = vunpack.c.l.b16 %v2353
    %v2374 = vunpack.c.l.b16 %v2354
    %v2375 = vunpack.c.l.b16 %v2355
    %v2376 = vunpack.c.l.b16 %v2356
    %v2377 = vunpack.c.l.b16 %v2357
    %v2378 = vunpack.c.l.b16 %v2358
    %v2379 = vunpack.c.l.b16 %v2359
    %v2380 = vpack.c.b16 %v2371, %v2370
    %v2381 = vpack.c.b16 %v2373, %v2372
    %v2382 = vpack.c.b16 %v2375, %v2374
    %v2383 = vpack.c.b16 %v2377, %v2376
    %v2384 = vpack.c.b16 %v2379, %v2378
    %v2391 = vsel %vm48, %v2349, 0
    %2393 = vmatpush.bf16.msra.mxu0 0
    %2394 = vmatpush.bf16.msra.mxu0 0
    %2395 = vmatpush.bf16.msra.mxu0 0
    %2396 = vmatpush.bf16.msra.mxu0 %v2384
    %2397 = vmatpush.bf16.msra.mxu0 %v2383
    %2398 = vmatpush.bf16.msra.mxu0 %v2382
    %2399 = vmatpush.bf16.msra.mxu0 %v2381
    %2400 = vmatpush.bf16.msra.mxu0 %v2380
    %2401 = vmatmul.bf16.gmra.mxu0 %v2391
    %v2402 = vpop.f32.mrf.mxu0
    %v2403 = vadd.f32 0.0, %v2402
    %v2404 = vpop.f32.mrf.mxu0
    %2405 = vdwg.mxu0
    %v2416 = vunpack.c.l.b16 %v2338
    %v2417 = vunpack.c.l.b16 %v2339
    %v2418 = vunpack.c.l.b16 %v2340
    %v2419 = vunpack.c.l.b16 %v2341
    %v2420 = vunpack.c.l.b16 %v2342
    %v2421 = vunpack.c.l.b16 %v2343
    %v2422 = vunpack.c.l.b16 %v2344
    %v2423 = vunpack.c.l.b16 %v2345
    %v2424 = vunpack.c.l.b16 %v2346
    %v2425 = vunpack.c.l.b16 %v2347
    %v2426 = vpack.c.b16 %v2417, %v2416
    %v2427 = vpack.c.b16 %v2419, %v2418
    %v2428 = vpack.c.b16 %v2421, %v2420
    %v2429 = vpack.c.b16 %v2423, %v2422
    %v2430 = vpack.c.b16 %v2425, %v2424
    %v2437 = vsel %vm48, %v2337, 0
    %2439 = vmatpush.bf16.msra.mxu0 0
    %2440 = vmatpush.bf16.msra.mxu0 0
    %2441 = vmatpush.bf16.msra.mxu0 0
    %2442 = vmatpush.bf16.msra.mxu0 %v2430
    %2443 = vmatpush.bf16.msra.mxu0 %v2429
    %2444 = vmatpush.bf16.msra.mxu0 %v2428
    %2445 = vmatpush.bf16.msra.mxu0 %v2427
    %2446 = vmatpush.bf16.msra.mxu0 %v2426
    %2447 = vmatmul.bf16.gmra.mxu0 %v2437
    %v2448 = vpop.f32.mrf.mxu0
    %v2449 = vadd.f32 %v2403, %v2448
    %v2450 = vpop.f32.mrf.mxu0
    %2451 = vdwg.mxu0
    %v2452 = vld [vmem:[#allocation5 + $0x2] sm:$0xff]
    %v2453 = vpack.c.bf16 %v2452, %v2452
    %v2454 = vld [vmem:[#allocation10 + $0x1e8] sm:$0xf]
    %v2455 = vld [vmem:[#allocation10 + $0x1ec] sm:$0xf]
    %v2456 = vld [vmem:[#allocation10 + $0x1f0] sm:$0xf]
    %v2457 = vld [vmem:[#allocation10 + $0x1f4] sm:$0xf]
    %v2458 = vld [vmem:[#allocation10 + $0x1f8] sm:$0xf]
    %v2459 = vld [vmem:[#allocation10 + $0x1fc] sm:$0xf]
    %v2460 = vld [vmem:[#allocation10 + $0x200] sm:$0xf]
    %v2461 = vld [vmem:[#allocation10 + $0x204] sm:$0xf]
    %v2462 = vld [vmem:[#allocation10 + $0x208] sm:$0xf]
    %v2463 = vld [vmem:[#allocation10 + $0x20c] sm:$0xf]
    %v2474 = vunpack.c.l.b16 %v2454
    %v2475 = vunpack.c.l.b16 %v2455
    %v2476 = vunpack.c.l.b16 %v2456
    %v2477 = vunpack.c.l.b16 %v2457
    %v2478 = vunpack.c.l.b16 %v2458
    %v2479 = vunpack.c.l.b16 %v2459
    %v2480 = vunpack.c.l.b16 %v2460
    %v2481 = vunpack.c.l.b16 %v2461
    %v2482 = vunpack.c.l.b16 %v2462
    %v2483 = vunpack.c.l.b16 %v2463
    %v2484 = vpack.c.b16 %v2475, %v2474
    %v2485 = vpack.c.b16 %v2477, %v2476
    %v2486 = vpack.c.b16 %v2479, %v2478
    %v2487 = vpack.c.b16 %v2481, %v2480
    %v2488 = vpack.c.b16 %v2483, %v2482
    %v2495 = vsel %vm48, %v2453, 0
    %2497 = vmatpush.bf16.msra.mxu0 0
    %2498 = vmatpush.bf16.msra.mxu0 0
    %2499 = vmatpush.bf16.msra.mxu0 0
    %2500 = vmatpush.bf16.msra.mxu0 %v2488
    %2501 = vmatpush.bf16.msra.mxu0 %v2487
    %2502 = vmatpush.bf16.msra.mxu0 %v2486
    %2503 = vmatpush.bf16.msra.mxu0 %v2485
    %2504 = vmatpush.bf16.msra.mxu0 %v2484
    %2505 = vmatmul.bf16.gmra.mxu0 %v2495
    %v2506 = vpop.f32.mrf.mxu0
    %v2507 = vadd.f32 0.0, %v2506
    %v2508 = vpop.f32.mrf.mxu0
    %2509 = vdwg.mxu0
    %v2510 = vadd.f32 %v2449, %v2507
    %v2511 = vld [vmem:[#allocation5 + $0xa] sm:$0xff]
    %v2512 = vpack.c.bf16 %v2511, %v2511
    %v2513 = vld [vmem:[#allocation5 + $0xb] sm:$0xff]
    %v2514 = vpack.c.bf16 %v2513, %v2513
    %v2516 = vsel %vm48, %v2514, 0
    %2518 = vmatpush.bf16.msra.mxu0 0
    %2519 = vmatpush.bf16.msra.mxu0 0
    %2520 = vmatpush.bf16.msra.mxu0 0
    %2521 = vmatpush.bf16.msra.mxu0 %v2384
    %2522 = vmatpush.bf16.msra.mxu0 %v2383
    %2523 = vmatpush.bf16.msra.mxu0 %v2382
    %2524 = vmatpush.bf16.msra.mxu0 %v2381
    %2525 = vmatpush.bf16.msra.mxu0 %v2380
    %2526 = vmatmul.bf16.gmra.mxu0 %v2516
    %v2527 = vpop.f32.mrf.mxu0
    %v2528 = vadd.f32 0.0, %v2527
    %v2529 = vpop.f32.mrf.mxu0
    %2530 = vdwg.mxu0
    %v2532 = vsel %vm48, %v2512, 0
    %2534 = vmatpush.bf16.msra.mxu0 0
    %2535 = vmatpush.bf16.msra.mxu0 0
    %2536 = vmatpush.bf16.msra.mxu0 0
    %2537 = vmatpush.bf16.msra.mxu0 %v2430
    %2538 = vmatpush.bf16.msra.mxu0 %v2429
    %2539 = vmatpush.bf16.msra.mxu0 %v2428
    %2540 = vmatpush.bf16.msra.mxu0 %v2427
    %2541 = vmatpush.bf16.msra.mxu0 %v2426
    %2542 = vmatmul.bf16.gmra.mxu0 %v2532
    %v2543 = vpop.f32.mrf.mxu0
    %v2544 = vadd.f32 %v2528, %v2543
    %v2545 = vpop.f32.mrf.mxu0
    %2546 = vdwg.mxu0
    %v2547 = vld [vmem:[#allocation5 + $0xc] sm:$0xff]
    %v2548 = vpack.c.bf16 %v2547, %v2547
    %v2550 = vsel %vm48, %v2548, 0
    %2552 = vmatpush.bf16.msra.mxu0 0
    %2553 = vmatpush.bf16.msra.mxu0 0
    %2554 = vmatpush.bf16.msra.mxu0 0
    %2555 = vmatpush.bf16.msra.mxu0 %v2488
    %2556 = vmatpush.bf16.msra.mxu0 %v2487
    %2557 = vmatpush.bf16.msra.mxu0 %v2486
    %2558 = vmatpush.bf16.msra.mxu0 %v2485
    %2559 = vmatpush.bf16.msra.mxu0 %v2484
    %2560 = vmatmul.bf16.gmra.mxu0 %v2550
    %v2561 = vpop.f32.mrf.mxu0
    %v2562 = vadd.f32 0.0, %v2561
    %v2563 = vpop.f32.mrf.mxu0
    %2564 = vdwg.mxu0
    %v2565 = vadd.f32 %v2544, %v2562
    %v2566 = vsel %vm291, %v2510, 0.0
    %v2567 = vrot.slane %v2566, 4
    %v2568 = vadd.f32 %v2566, %v2567
    %v2569 = vrot.slane %v2568, 2
    %v2570 = vadd.f32 %v2568, %v2569
    %v2571 = vrot.slane %v2570, 1
    %v2572 = vadd.f32 %v2570, %v2571
    %v2573 = vsel %vm291, %v2565, 0.0
    %v2574 = vrot.slane %v2573, 4
    %v2575 = vadd.f32 %v2573, %v2574
    %v2576 = vrot.slane %v2575, 2
    %v2577 = vadd.f32 %v2575, %v2576
    %v2578 = vrot.slane %v2577, 1
    %v2579 = vadd.f32 %v2577, %v2578
    %v2580 = vadd.f32 %v2572, %v2579
    %v2582 = vsel %vm291, %v2580, 0
    %2584 = vmatpush.msra.mxu0 0.0
    %2585 = vmatpush.msra.mxu0 0.0
    %2586 = vmatpush.msra.mxu0 0.0
    %2587 = vmatpush.msra.mxu0 0.0
    %2588 = vmatpush.msra.mxu0 0.0
    %2589 = vmatpush.msra.mxu0 0.0
    %2590 = vmatpush.msra.mxu0 0.0
    %2591 = vmatpush.msra.mxu0 0.0
    %2592 = vmatpush.msra.mxu0 %v2162
    %2593 = vmatpush.msra.mxu0 %v2161
    %2594 = vmatpush.msra.mxu0 %v2160
    %2595 = vmatpush.msra.mxu0 %v2159
    %2596 = vmatpush.msra.mxu0 %v2158
    %2597 = vmatpush.msra.mxu0 %v2157
    %2598 = vmatpush.msra.mxu0 %v2156
    %2599 = vmatpush.msra.mxu0 %v2155
    %2600 = vmatmul.f32.gmra.mxu0 %v2582
    %v2601 = vpop.f32.mrf.mxu0
    %v2602 = vadd.f32 0.0, %v2601
    %2603 = vdwg.mxu0
    %v2604 = vmul.f32 %v2602, 0.0078125
    %v2606 = vsel %vm1879, %v2604, 0
    %2608 = vmatpush.msra.mxu0 0.0
    %2609 = vmatpush.msra.mxu0 0.0
    %2610 = vmatpush.msra.mxu0 0.0
    %2611 = vmatpush.msra.mxu0 0.0
    %2612 = vmatpush.msra.mxu0 0.0
    %2613 = vmatpush.msra.mxu0 0.0
    %2614 = vmatpush.msra.mxu0 0.0
    %2615 = vmatpush.msra.mxu0 0.0
    %2616 = vmatpush.msra.mxu0 0.0
    %2617 = vmatpush.msra.mxu0 0.0
    %2618 = vmatpush.msra.mxu0 0.0
    %2619 = vmatpush.msra.mxu0 0.0
    %2620 = vmatpush.msra.mxu0 0.0
    %2621 = vmatpush.msra.mxu0 0.0
    %2622 = vmatpush.msra.mxu0 0.0
    %2623 = vmatpush.msra.mxu0 %v2163
    %2624 = vmatmul.f32.gmra.mxu0 %v2606
    %v2625 = vpop.f32.mrf.mxu0
    %v2626 = vadd.f32 0.0, %v2625
    %2627 = vdwg.mxu0
    %v2628 = vperm.slane %v2626, 0
    %v2629 = vsub.f32 %v2510, %v2628
    %v2630 = vsub.f32 %v2565, %v2628
    %v2631 = vmul.f32 %v2629, %v2629
    %v2632 = vsel %vm291, %v2631, 0.0
    %v2633 = vrot.slane %v2632, 4
    %v2634 = vadd.f32 %v2632, %v2633
    %v2635 = vrot.slane %v2634, 2
    %v2636 = vadd.f32 %v2634, %v2635
    %v2637 = vrot.slane %v2636, 1
    %v2638 = vadd.f32 %v2636, %v2637
    %v2639 = vmul.f32 %v2630, %v2630
    %v2640 = vsel %vm291, %v2639, 0.0
    %v2641 = vrot.slane %v2640, 4
    %v2642 = vadd.f32 %v2640, %v2641
    %v2643 = vrot.slane %v2642, 2
    %v2644 = vadd.f32 %v2642, %v2643
    %v2645 = vrot.slane %v2644, 1
    %v2646 = vadd.f32 %v2644, %v2645
    %v2647 = vadd.f32 %v2638, %v2646
    %v2649 = vsel %vm291, %v2647, 0
    %2651 = vmatpush.msra.mxu0 0.0
    %2652 = vmatpush.msra.mxu0 0.0
    %2653 = vmatpush.msra.mxu0 0.0
    %2654 = vmatpush.msra.mxu0 0.0
    %2655 = vmatpush.msra.mxu0 0.0
    %2656 = vmatpush.msra.mxu0 0.0
    %2657 = vmatpush.msra.mxu0 0.0
    %2658 = vmatpush.msra.mxu0 0.0
    %2659 = vmatpush.msra.mxu0 %v2162
    %2660 = vmatpush.msra.mxu0 %v2161
    %2661 = vmatpush.msra.mxu0 %v2160
    %2662 = vmatpush.msra.mxu0 %v2159
    %2663 = vmatpush.msra.mxu0 %v2158
    %2664 = vmatpush.msra.mxu0 %v2157
    %2665 = vmatpush.msra.mxu0 %v2156
    %2666 = vmatpush.msra.mxu0 %v2155
    %2667 = vmatmul.f32.gmra.mxu0 %v2649
    %v2668 = vpop.f32.mrf.mxu0
    %v2669 = vadd.f32 0.0, %v2668
    %2670 = vdwg.mxu0
    %v2671 = vmul.f32 %v2669, 0.0078125
    %v2672 = vadd.f32 %v2671, 1e-05
    %v2673 = vrsqrt.pop %v2672
    %v2674 = vmul.f32 %v2673, %v2672
    %v2675 = vmul.f32 %v2674, %v2673
    %v2676 = vmul.f32 0.5, %v2675
    %v2677 = vsub.f32 1.5, %v2676
    %v2678 = vmul.f32 %v2673, %v2677
    %vm2679 = vweird.f32 %v2672
    %vm2680 = vweird.f32 %v2673
    %vm2681 = vmor %vm2679, %vm2680
    %v2682 = vsel %vm2681, %v2673, %v2678
    %v2683 = vld [vmem:[%s2 + $0xe8] sm:$0x1]
    %v2684 = vld [vmem:[%s2 + $0xf0] sm:$0x1]
    %v2685 = vmul.f32 %v2683, %v2682
    %v2687 = vsel %vm1879, %v2685, 0
    %2689 = vmatpush.msra.mxu0 0.0
    %2690 = vmatpush.msra.mxu0 0.0
    %2691 = vmatpush.msra.mxu0 0.0
    %2692 = vmatpush.msra.mxu0 0.0
    %2693 = vmatpush.msra.mxu0 0.0
    %2694 = vmatpush.msra.mxu0 0.0
    %2695 = vmatpush.msra.mxu0 0.0
    %2696 = vmatpush.msra.mxu0 0.0
    %2697 = vmatpush.msra.mxu0 0.0
    %2698 = vmatpush.msra.mxu0 0.0
    %2699 = vmatpush.msra.mxu0 0.0
    %2700 = vmatpush.msra.mxu0 0.0
    %2701 = vmatpush.msra.mxu0 0.0
    %2702 = vmatpush.msra.mxu0 0.0
    %2703 = vmatpush.msra.mxu0 0.0
    %2704 = vmatpush.msra.mxu0 %v2163
    %2705 = vmatmul.f32.gmra.mxu0 %v2687
    %v2706 = vpop.f32.mrf.mxu0
    %v2707 = vadd.f32 0.0, %v2706
    %2708 = vdwg.mxu0
    %v2710 = vsel %vm1879, %v2684, 0
    %2712 = vmatpush.msra.mxu0 0.0
    %2713 = vmatpush.msra.mxu0 0.0
    %2714 = vmatpush.msra.mxu0 0.0
    %2715 = vmatpush.msra.mxu0 0.0
    %2716 = vmatpush.msra.mxu0 0.0
    %2717 = vmatpush.msra.mxu0 0.0
    %2718 = vmatpush.msra.mxu0 0.0
    %2719 = vmatpush.msra.mxu0 0.0
    %2720 = vmatpush.msra.mxu0 0.0
    %2721 = vmatpush.msra.mxu0 0.0
    %2722 = vmatpush.msra.mxu0 0.0
    %2723 = vmatpush.msra.mxu0 0.0
    %2724 = vmatpush.msra.mxu0 0.0
    %2725 = vmatpush.msra.mxu0 0.0
    %2726 = vmatpush.msra.mxu0 0.0
    %2727 = vmatpush.msra.mxu0 %v2163
    %2728 = vmatmul.f32.gmra.mxu0 %v2710
    %v2729 = vpop.f32.mrf.mxu0
    %v2730 = vadd.f32 0.0, %v2729
    %2731 = vdwg.mxu0
    %v2732 = vperm.slane %v2707, 0
    %v2733 = vmul.f32 %v2629, %v2732
    %v2734 = vperm.slane %v2730, 0
    %v2735 = vadd.f32 %v2733, %v2734
    %v2736 = vadd.f32 %v2735, %v2333
    %v2737 = vmax.f32 %v2736, 0.0
    %v2738 = vmul.f32 %v2630, %v2732
    %v2739 = vadd.f32 %v2738, %v2734
    %v2740 = vadd.f32 %v2739, %v2335
    %v2741 = vmax.f32 %v2740, 0.0
    %2743 = vrot.lane.b32.xlu0 %v2737, 8
    %v2744 = vpop.permute.xlu0 %2743
    %2746 = vst.msk [vmem:[#allocation6 + $0x1] sm:$0xff] %vm2019, %v2744
    %2748 = vrot.lane.b32.xlu0 %v2741, 8
    %v2749 = vpop.permute.xlu0 %2748
    %2751 = vst.msk [vmem:[#allocation6 + $0xb] sm:$0xff] %vm2019, %v2749
    %v2752 = vld [vmem:[#allocation6] sm:$0xff]
    %v2753 = vld [vmem:[#allocation6 + $0x8] sm:$0x3]
    %v2754 = vld [vmem:[%s2 + $0x108] sm:$0xf]
    %vm2755 = vcmask 80896
    %v2757 = vsel %vm2755, %v2754, 0
    %v2760 = vsel %vm1472, %v2753, 0
    %2762 = vmatpush.msra.mxu0 0.0
    %2763 = vmatpush.msra.mxu0 0.0
    %2764 = vmatpush.msra.mxu0 0.0
    %2765 = vmatpush.msra.mxu0 0.0
    %2766 = vmatpush.msra.mxu0 0.0
    %2767 = vmatpush.msra.mxu0 0.0
    %2768 = vmatpush.msra.mxu0 0.0
    %2769 = vmatpush.msra.mxu0 0.0
    %2770 = vmatpush.msra.mxu0 0.0
    %2771 = vmatpush.msra.mxu0 0.0
    %2772 = vmatpush.msra.mxu0 0.0
    %2773 = vmatpush.msra.mxu0 0.0
    %2774 = vmatpush.msra.mxu0 0.0
    %2775 = vmatpush.msra.mxu0 0.0
    %2776 = vmatpush.msra.mxu0 %v2760
    %2777 = vmatpush.msra.mxu0 %v2752
    %2778 = vmatmul.f32.gmra.mxu0 %v2757
    %v2779 = vpop.f32.mrf.mxu0
    %v2780 = vadd.f32 0.0, %v2779
    %2781 = vdwg.mxu0
    %v2782 = vpack.c.bf16 %v2780, %v2780
    %v2783 = vld [vmem:[#allocation10 + $0x234] sm:$0xf]
    %v2784 = vld [vmem:[#allocation10 + $0x238] sm:$0xf]
    %v2785 = vld [vmem:[#allocation10 + $0x23c] sm:$0xf]
    %v2786 = vld [vmem:[#allocation10 + $0x240] sm:$0xf]
    %v2787 = vld [vmem:[#allocation10 + $0x244] sm:$0xf]
    %v2788 = vld [vmem:[#allocation10 + $0x248] sm:$0xf]
    %v2789 = vld [vmem:[#allocation10 + $0x24c] sm:$0xf]
    %v2790 = vld [vmem:[#allocation10 + $0x250] sm:$0xf]
    %v2791 = vld [vmem:[#allocation10 + $0x254] sm:$0xf]
    %v2792 = vld [vmem:[#allocation10 + $0x258] sm:$0xf]
    %v2793 = vld [vmem:[%s2 + $0x110] sm:$0xf]
    %v2795 = vsel %vm2755, %v2793, 0
    %2797 = vmatpush.msra.mxu0 0.0
    %2798 = vmatpush.msra.mxu0 0.0
    %2799 = vmatpush.msra.mxu0 0.0
    %2800 = vmatpush.msra.mxu0 0.0
    %2801 = vmatpush.msra.mxu0 0.0
    %2802 = vmatpush.msra.mxu0 0.0
    %2803 = vmatpush.msra.mxu0 0.0
    %2804 = vmatpush.msra.mxu0 0.0
    %2805 = vmatpush.msra.mxu0 0.0
    %2806 = vmatpush.msra.mxu0 0.0
    %2807 = vmatpush.msra.mxu0 0.0
    %2808 = vmatpush.msra.mxu0 0.0
    %2809 = vmatpush.msra.mxu0 0.0
    %2810 = vmatpush.msra.mxu0 0.0
    %2811 = vmatpush.msra.mxu0 %v2760
    %2812 = vmatpush.msra.mxu0 %v2752
    %2813 = vmatmul.f32.gmra.mxu0 %v2795
    %v2814 = vpop.f32.mrf.mxu0
    %v2815 = vadd.f32 0.0, %v2814
    %2816 = vdwg.mxu0
    %v2817 = vpack.c.bf16 %v2815, %v2815
    %v2818 = vld [vmem:[#allocation10 + $0x25c] sm:$0xf]
    %v2819 = vld [vmem:[#allocation10 + $0x260] sm:$0xf]
    %v2820 = vld [vmem:[#allocation10 + $0x264] sm:$0xf]
    %v2821 = vld [vmem:[#allocation10 + $0x268] sm:$0xf]
    %v2822 = vld [vmem:[#allocation10 + $0x26c] sm:$0xf]
    %v2823 = vld [vmem:[#allocation10 + $0x270] sm:$0xf]
    %v2824 = vld [vmem:[#allocation10 + $0x274] sm:$0xf]
    %v2825 = vld [vmem:[#allocation10 + $0x278] sm:$0xf]
    %v2826 = vld [vmem:[#allocation10 + $0x27c] sm:$0xf]
    %v2827 = vld [vmem:[#allocation10 + $0x280] sm:$0xf]
    %v2838 = vunpack.c.l.b16 %v2818
    %v2839 = vunpack.c.l.b16 %v2819
    %v2840 = vunpack.c.l.b16 %v2820
    %v2841 = vunpack.c.l.b16 %v2821
    %v2842 = vunpack.c.l.b16 %v2822
    %v2843 = vunpack.c.l.b16 %v2823
    %v2844 = vunpack.c.l.b16 %v2824
    %v2845 = vunpack.c.l.b16 %v2825
    %v2846 = vunpack.c.l.b16 %v2826
    %v2847 = vunpack.c.l.b16 %v2827
    %v2848 = vpack.c.b16 %v2839, %v2838
    %v2849 = vpack.c.b16 %v2841, %v2840
    %v2850 = vpack.c.b16 %v2843, %v2842
    %v2851 = vpack.c.b16 %v2845, %v2844
    %v2852 = vpack.c.b16 %v2847, %v2846
    %v2859 = vsel %vm48, %v2817, 0
    %2861 = vmatpush.bf16.msra.mxu0 0
    %2862 = vmatpush.bf16.msra.mxu0 0
    %2863 = vmatpush.bf16.msra.mxu0 0
    %2864 = vmatpush.bf16.msra.mxu0 %v2852
    %2865 = vmatpush.bf16.msra.mxu0 %v2851
    %2866 = vmatpush.bf16.msra.mxu0 %v2850
    %2867 = vmatpush.bf16.msra.mxu0 %v2849
    %2868 = vmatpush.bf16.msra.mxu0 %v2848
    %2869 = vmatmul.bf16.gmra.mxu0 %v2859
    %v2870 = vpop.f32.mrf.mxu0
    %v2871 = vadd.f32 0.0, %v2870
    %v2872 = vpop.f32.mrf.mxu0
    %2873 = vdwg.mxu0
    %v2884 = vunpack.c.l.b16 %v2783
    %v2885 = vunpack.c.l.b16 %v2784
    %v2886 = vunpack.c.l.b16 %v2785
    %v2887 = vunpack.c.l.b16 %v2786
    %v2888 = vunpack.c.l.b16 %v2787
    %v2889 = vunpack.c.l.b16 %v2788
    %v2890 = vunpack.c.l.b16 %v2789
    %v2891 = vunpack.c.l.b16 %v2790
    %v2892 = vunpack.c.l.b16 %v2791
    %v2893 = vunpack.c.l.b16 %v2792
    %v2894 = vpack.c.b16 %v2885, %v2884
    %v2895 = vpack.c.b16 %v2887, %v2886
    %v2896 = vpack.c.b16 %v2889, %v2888
    %v2897 = vpack.c.b16 %v2891, %v2890
    %v2898 = vpack.c.b16 %v2893, %v2892
    %v2905 = vsel %vm48, %v2782, 0
    %2907 = vmatpush.bf16.msra.mxu0 0
    %2908 = vmatpush.bf16.msra.mxu0 0
    %2909 = vmatpush.bf16.msra.mxu0 0
    %2910 = vmatpush.bf16.msra.mxu0 %v2898
    %2911 = vmatpush.bf16.msra.mxu0 %v2897
    %2912 = vmatpush.bf16.msra.mxu0 %v2896
    %2913 = vmatpush.bf16.msra.mxu0 %v2895
    %2914 = vmatpush.bf16.msra.mxu0 %v2894
    %2915 = vmatmul.bf16.gmra.mxu0 %v2905
    %v2916 = vpop.f32.mrf.mxu0
    %v2917 = vadd.f32 %v2871, %v2916
    %v2918 = vpop.f32.mrf.mxu0
    %2919 = vdwg.mxu0
    %v2920 = vld [vmem:[%s2 + $0x118] sm:$0xf]
    %v2922 = vsel %vm2755, %v2920, 0
    %2924 = vmatpush.msra.mxu0 0.0
    %2925 = vmatpush.msra.mxu0 0.0
    %2926 = vmatpush.msra.mxu0 0.0
    %2927 = vmatpush.msra.mxu0 0.0
    %2928 = vmatpush.msra.mxu0 0.0
    %2929 = vmatpush.msra.mxu0 0.0
    %2930 = vmatpush.msra.mxu0 0.0
    %2931 = vmatpush.msra.mxu0 0.0
    %2932 = vmatpush.msra.mxu0 0.0
    %2933 = vmatpush.msra.mxu0 0.0
    %2934 = vmatpush.msra.mxu0 0.0
    %2935 = vmatpush.msra.mxu0 0.0
    %2936 = vmatpush.msra.mxu0 0.0
    %2937 = vmatpush.msra.mxu0 0.0
    %2938 = vmatpush.msra.mxu0 %v2760
    %2939 = vmatpush.msra.mxu0 %v2752
    %2940 = vmatmul.f32.gmra.mxu0 %v2922
    %v2941 = vpop.f32.mrf.mxu0
    %v2942 = vadd.f32 0.0, %v2941
    %2943 = vdwg.mxu0
    %v2944 = vpack.c.bf16 %v2942, %v2942
    %v2945 = vld [vmem:[#allocation10 + $0x284] sm:$0xf]
    %v2946 = vld [vmem:[#allocation10 + $0x288] sm:$0xf]
    %v2947 = vld [vmem:[#allocation10 + $0x28c] sm:$0xf]
    %v2948 = vld [vmem:[#allocation10 + $0x290] sm:$0xf]
    %v2949 = vld [vmem:[#allocation10 + $0x294] sm:$0xf]
    %v2950 = vld [vmem:[#allocation10 + $0x298] sm:$0xf]
    %v2951 = vld [vmem:[#allocation10 + $0x29c] sm:$0xf]
    %v2952 = vld [vmem:[#allocation10 + $0x2a0] sm:$0xf]
    %v2953 = vld [vmem:[#allocation10 + $0x2a4] sm:$0xf]
    %v2954 = vld [vmem:[#allocation10 + $0x2a8] sm:$0xf]
    %v2965 = vunpack.c.l.b16 %v2945
    %v2966 = vunpack.c.l.b16 %v2946
    %v2967 = vunpack.c.l.b16 %v2947
    %v2968 = vunpack.c.l.b16 %v2948
    %v2969 = vunpack.c.l.b16 %v2949
    %v2970 = vunpack.c.l.b16 %v2950
    %v2971 = vunpack.c.l.b16 %v2951
    %v2972 = vunpack.c.l.b16 %v2952
    %v2973 = vunpack.c.l.b16 %v2953
    %v2974 = vunpack.c.l.b16 %v2954
    %v2975 = vpack.c.b16 %v2966, %v2965
    %v2976 = vpack.c.b16 %v2968, %v2967
    %v2977 = vpack.c.b16 %v2970, %v2969
    %v2978 = vpack.c.b16 %v2972, %v2971
    %v2979 = vpack.c.b16 %v2974, %v2973
    %v2986 = vsel %vm48, %v2944, 0
    %2988 = vmatpush.bf16.msra.mxu0 0
    %2989 = vmatpush.bf16.msra.mxu0 0
    %2990 = vmatpush.bf16.msra.mxu0 0
    %2991 = vmatpush.bf16.msra.mxu0 %v2979
    %2992 = vmatpush.bf16.msra.mxu0 %v2978
    %2993 = vmatpush.bf16.msra.mxu0 %v2977
    %2994 = vmatpush.bf16.msra.mxu0 %v2976
    %2995 = vmatpush.bf16.msra.mxu0 %v2975
    %2996 = vmatmul.bf16.gmra.mxu0 %v2986
    %v2997 = vpop.f32.mrf.mxu0
    %v2998 = vadd.f32 0.0, %v2997
    %v2999 = vpop.f32.mrf.mxu0
    %3000 = vdwg.mxu0
    %v3001 = vadd.f32 %v2917, %v2998
    %v3002 = vld [vmem:[#allocation6 + $0xa] sm:$0xff]
    %v3003 = vld [vmem:[#allocation6 + $0x12] sm:$0x3]
    %v3005 = vsel %vm1472, %v3003, 0
    %3007 = vmatpush.msra.mxu0 0.0
    %3008 = vmatpush.msra.mxu0 0.0
    %3009 = vmatpush.msra.mxu0 0.0
    %3010 = vmatpush.msra.mxu0 0.0
    %3011 = vmatpush.msra.mxu0 0.0
    %3012 = vmatpush.msra.mxu0 0.0
    %3013 = vmatpush.msra.mxu0 0.0
    %3014 = vmatpush.msra.mxu0 0.0
    %3015 = vmatpush.msra.mxu0 0.0
    %3016 = vmatpush.msra.mxu0 0.0
    %3017 = vmatpush.msra.mxu0 0.0
    %3018 = vmatpush.msra.mxu0 0.0
    %3019 = vmatpush.msra.mxu0 0.0
    %3020 = vmatpush.msra.mxu0 0.0
    %3021 = vmatpush.msra.mxu0 %v3005
    %3022 = vmatpush.msra.mxu0 %v3002
    %3023 = vmatmul.f32.gmra.mxu0 %v2757
    %v3024 = vpop.f32.mrf.mxu0
    %v3025 = vadd.f32 0.0, %v3024
    %3026 = vdwg.mxu0
    %v3027 = vpack.c.bf16 %v3025, %v3025
    %3028 = vmatpush.msra.mxu0 0.0
    %3029 = vmatpush.msra.mxu0 0.0
    %3030 = vmatpush.msra.mxu0 0.0
    %3031 = vmatpush.msra.mxu0 0.0
    %3032 = vmatpush.msra.mxu0 0.0
    %3033 = vmatpush.msra.mxu0 0.0
    %3034 = vmatpush.msra.mxu0 0.0
    %3035 = vmatpush.msra.mxu0 0.0
    %3036 = vmatpush.msra.mxu0 0.0
    %3037 = vmatpush.msra.mxu0 0.0
    %3038 = vmatpush.msra.mxu0 0.0
    %3039 = vmatpush.msra.mxu0 0.0
    %3040 = vmatpush.msra.mxu0 0.0
    %3041 = vmatpush.msra.mxu0 0.0
    %3042 = vmatpush.msra.mxu0 %v3005
    %3043 = vmatpush.msra.mxu0 %v3002
    %3044 = vmatmul.f32.gmra.mxu0 %v2795
    %v3045 = vpop.f32.mrf.mxu0
    %v3046 = vadd.f32 0.0, %v3045
    %3047 = vdwg.mxu0
    %v3048 = vpack.c.bf16 %v3046, %v3046
    %v3050 = vsel %vm48, %v3048, 0
    %3052 = vmatpush.bf16.msra.mxu0 0
    %3053 = vmatpush.bf16.msra.mxu0 0
    %3054 = vmatpush.bf16.msra.mxu0 0
    %3055 = vmatpush.bf16.msra.mxu0 %v2852
    %3056 = vmatpush.bf16.msra.mxu0 %v2851
    %3057 = vmatpush.bf16.msra.mxu0 %v2850
    %3058 = vmatpush.bf16.msra.mxu0 %v2849
    %3059 = vmatpush.bf16.msra.mxu0 %v2848
    %3060 = vmatmul.bf16.gmra.mxu0 %v3050
    %v3061 = vpop.f32.mrf.mxu0
    %v3062 = vadd.f32 0.0, %v3061
    %v3063 = vpop.f32.mrf.mxu0
    %3064 = vdwg.mxu0
    %v3066 = vsel %vm48, %v3027, 0
    %3068 = vmatpush.bf16.msra.mxu0 0
    %3069 = vmatpush.bf16.msra.mxu0 0
    %3070 = vmatpush.bf16.msra.mxu0 0
    %3071 = vmatpush.bf16.msra.mxu0 %v2898
    %3072 = vmatpush.bf16.msra.mxu0 %v2897
    %3073 = vmatpush.bf16.msra.mxu0 %v2896
    %3074 = vmatpush.bf16.msra.mxu0 %v2895
    %3075 = vmatpush.bf16.msra.mxu0 %v2894
    %3076 = vmatmul.bf16.gmra.mxu0 %v3066
    %v3077 = vpop.f32.mrf.mxu0
    %v3078 = vadd.f32 %v3062, %v3077
    %v3079 = vpop.f32.mrf.mxu0
    %3080 = vdwg.mxu0
    %3081 = vmatpush.msra.mxu0 0.0
    %3082 = vmatpush.msra.mxu0 0.0
    %3083 = vmatpush.msra.mxu0 0.0
    %3084 = vmatpush.msra.mxu0 0.0
    %3085 = vmatpush.msra.mxu0 0.0
    %3086 = vmatpush.msra.mxu0 0.0
    %3087 = vmatpush.msra.mxu0 0.0
    %3088 = vmatpush.msra.mxu0 0.0
    %3089 = vmatpush.msra.mxu0 0.0
    %3090 = vmatpush.msra.mxu0 0.0
    %3091 = vmatpush.msra.mxu0 0.0
    %3092 = vmatpush.msra.mxu0 0.0
    %3093 = vmatpush.msra.mxu0 0.0
    %3094 = vmatpush.msra.mxu0 0.0
    %3095 = vmatpush.msra.mxu0 %v3005
    %3096 = vmatpush.msra.mxu0 %v3002
    %3097 = vmatmul.f32.gmra.mxu0 %v2922
    %v3098 = vpop.f32.mrf.mxu0
    %v3099 = vadd.f32 0.0, %v3098
    %3100 = vdwg.mxu0
    %v3101 = vpack.c.bf16 %v3099, %v3099
    %v3103 = vsel %vm48, %v3101, 0
    %3105 = vmatpush.bf16.msra.mxu0 0
    %3106 = vmatpush.bf16.msra.mxu0 0
    %3107 = vmatpush.bf16.msra.mxu0 0
    %3108 = vmatpush.bf16.msra.mxu0 %v2979
    %3109 = vmatpush.bf16.msra.mxu0 %v2978
    %3110 = vmatpush.bf16.msra.mxu0 %v2977
    %3111 = vmatpush.bf16.msra.mxu0 %v2976
    %3112 = vmatpush.bf16.msra.mxu0 %v2975
    %3113 = vmatmul.bf16.gmra.mxu0 %v3103
    %v3114 = vpop.f32.mrf.mxu0
    %v3115 = vadd.f32 0.0, %v3114
    %v3116 = vpop.f32.mrf.mxu0
    %3117 = vdwg.mxu0
    %v3118 = vadd.f32 %v3078, %v3115
    %v3119 = vld [vmem:[%s2 + $0x120] sm:$0xff]
    %v3120 = vld [vmem:[%s2 + $0x128] sm:$0xff]
    %v3121 = vld [vmem:[%s2 + $0x130] sm:$0xff]
    %v3122 = vld [vmem:[%s2 + $0x138] sm:$0xff]
    %v3123 = vld [vmem:[%s2 + $0x140] sm:$0xff]
    %v3124 = vld [vmem:[%s2 + $0x148] sm:$0xff]
    %v3125 = vld [vmem:[%s2 + $0x150] sm:$0xff]
    %v3126 = vld [vmem:[%s2 + $0x158] sm:$0xff]
    %v3127 = vld [vmem:[%s2 + $0x160] sm:$0xff]
    %v3128 = vld [vmem:[%s2 + $0x168] sm:$0xff]
    %vm3129 = vcmask 519168
    %v3130 = vsel %vm3129, %v3001, 0.0
    %v3131 = vrot.slane %v3130, 4
    %v3132 = vadd.f32 %v3130, %v3131
    %v3133 = vrot.slane %v3132, 2
    %v3134 = vadd.f32 %v3132, %v3133
    %v3135 = vrot.slane %v3134, 1
    %v3136 = vadd.f32 %v3134, %v3135
    %v3137 = vsel %vm3129, %v3118, 0.0
    %v3138 = vrot.slane %v3137, 4
    %v3139 = vadd.f32 %v3137, %v3138
    %v3140 = vrot.slane %v3139, 2
    %v3141 = vadd.f32 %v3139, %v3140
    %v3142 = vrot.slane %v3141, 1
    %v3143 = vadd.f32 %v3141, %v3142
    %v3144 = vadd.f32 %v3136, %v3143
    %v3146 = vsel %vm291, %v3144, 0
    %3148 = vmatpush.msra.mxu0 0.0
    %3149 = vmatpush.msra.mxu0 0.0
    %3150 = vmatpush.msra.mxu0 0.0
    %3151 = vmatpush.msra.mxu0 0.0
    %3152 = vmatpush.msra.mxu0 0.0
    %3153 = vmatpush.msra.mxu0 0.0
    %3154 = vmatpush.msra.mxu0 0.0
    %3155 = vmatpush.msra.mxu0 0.0
    %3156 = vmatpush.msra.mxu0 %v3126
    %3157 = vmatpush.msra.mxu0 %v3125
    %3158 = vmatpush.msra.mxu0 %v3124
    %3159 = vmatpush.msra.mxu0 %v3123
    %3160 = vmatpush.msra.mxu0 %v3122
    %3161 = vmatpush.msra.mxu0 %v3121
    %3162 = vmatpush.msra.mxu0 %v3120
    %3163 = vmatpush.msra.mxu0 %v3119
    %3164 = vmatmul.f32.gmra.mxu0 %v3146
    %v3165 = vpop.f32.mrf.mxu0
    %v3166 = vadd.f32 0.0, %v3165
    %3167 = vdwg.mxu0
    %v3168 = vmul.f32 %v3166, 0.03125
    %vm3169 = vcmask 130048
    %v3171 = vsel %vm3169, %v3168, 0
    %3173 = vmatpush.msra.mxu0 0.0
    %3174 = vmatpush.msra.mxu0 0.0
    %3175 = vmatpush.msra.mxu0 0.0
    %3176 = vmatpush.msra.mxu0 0.0
    %3177 = vmatpush.msra.mxu0 0.0
    %3178 = vmatpush.msra.mxu0 0.0
    %3179 = vmatpush.msra.mxu0 0.0
    %3180 = vmatpush.msra.mxu0 0.0
    %3181 = vmatpush.msra.mxu0 0.0
    %3182 = vmatpush.msra.mxu0 0.0
    %3183 = vmatpush.msra.mxu0 0.0
    %3184 = vmatpush.msra.mxu0 0.0
    %3185 = vmatpush.msra.mxu0 0.0
    %3186 = vmatpush.msra.mxu0 0.0
    %3187 = vmatpush.msra.mxu0 %v3128
    %3188 = vmatpush.msra.mxu0 %v3127
    %3189 = vmatmul.f32.gmra.mxu0 %v3171
    %v3190 = vpop.f32.mrf.mxu0
    %v3191 = vadd.f32 0.0, %v3190
    %3192 = vdwg.mxu0
    %v3193 = vperm.slane %v3191, 0
    %v3194 = vsub.f32 %v3001, %v3193
    %v3195 = vsub.f32 %v3118, %v3193
    %v3196 = vmul.f32 %v3194, %v3194
    %v3197 = vsel %vm3129, %v3196, 0.0
    %v3198 = vrot.slane %v3197, 4
    %v3199 = vadd.f32 %v3197, %v3198
    %v3200 = vrot.slane %v3199, 2
    %v3201 = vadd.f32 %v3199, %v3200
    %v3202 = vrot.slane %v3201, 1
    %v3203 = vadd.f32 %v3201, %v3202
    %v3204 = vmul.f32 %v3195, %v3195
    %v3205 = vsel %vm3129, %v3204, 0.0
    %v3206 = vrot.slane %v3205, 4
    %v3207 = vadd.f32 %v3205, %v3206
    %v3208 = vrot.slane %v3207, 2
    %v3209 = vadd.f32 %v3207, %v3208
    %v3210 = vrot.slane %v3209, 1
    %v3211 = vadd.f32 %v3209, %v3210
    %v3212 = vadd.f32 %v3203, %v3211
    %v3214 = vsel %vm291, %v3212, 0
    %3216 = vmatpush.msra.mxu0 0.0
    %3217 = vmatpush.msra.mxu0 0.0
    %3218 = vmatpush.msra.mxu0 0.0
    %3219 = vmatpush.msra.mxu0 0.0
    %3220 = vmatpush.msra.mxu0 0.0
    %3221 = vmatpush.msra.mxu0 0.0
    %3222 = vmatpush.msra.mxu0 0.0
    %3223 = vmatpush.msra.mxu0 0.0
    %3224 = vmatpush.msra.mxu0 %v3126
    %3225 = vmatpush.msra.mxu0 %v3125
    %3226 = vmatpush.msra.mxu0 %v3124
    %3227 = vmatpush.msra.mxu0 %v3123
    %3228 = vmatpush.msra.mxu0 %v3122
    %3229 = vmatpush.msra.mxu0 %v3121
    %3230 = vmatpush.msra.mxu0 %v3120
    %3231 = vmatpush.msra.mxu0 %v3119
    %3232 = vmatmul.f32.gmra.mxu0 %v3214
    %v3233 = vpop.f32.mrf.mxu0
    %v3234 = vadd.f32 0.0, %v3233
    %3235 = vdwg.mxu0
    %v3236 = vmul.f32 %v3234, 0.03125
    %v3237 = vadd.f32 %v3236, 1e-05
    %v3238 = vrsqrt.pop %v3237
    %v3239 = vmul.f32 %v3238, %v3237
    %v3240 = vmul.f32 %v3239, %v3238
    %v3241 = vmul.f32 0.5, %v3240
    %v3242 = vsub.f32 1.5, %v3241
    %v3243 = vmul.f32 %v3238, %v3242
    %vm3244 = vweird.f32 %v3237
    %vm3245 = vweird.f32 %v3238
    %vm3246 = vmor %vm3244, %vm3245
    %v3247 = vsel %vm3246, %v3238, %v3243
    %v3248 = vld [vmem:[%s2 + $0x170] sm:$0x1]
    %v3249 = vld [vmem:[%s2 + $0x178] sm:$0x1]
    %v3250 = vmul.f32 %v3248, %v3247
    %v3252 = vsel %vm3169, %v3250, 0
    %3254 = vmatpush.msra.mxu0 0.0
    %3255 = vmatpush.msra.mxu0 0.0
    %3256 = vmatpush.msra.mxu0 0.0
    %3257 = vmatpush.msra.mxu0 0.0
    %3258 = vmatpush.msra.mxu0 0.0
    %3259 = vmatpush.msra.mxu0 0.0
    %3260 = vmatpush.msra.mxu0 0.0
    %3261 = vmatpush.msra.mxu0 0.0
    %3262 = vmatpush.msra.mxu0 0.0
    %3263 = vmatpush.msra.mxu0 0.0
    %3264 = vmatpush.msra.mxu0 0.0
    %3265 = vmatpush.msra.mxu0 0.0
    %3266 = vmatpush.msra.mxu0 0.0
    %3267 = vmatpush.msra.mxu0 0.0
    %3268 = vmatpush.msra.mxu0 %v3128
    %3269 = vmatpush.msra.mxu0 %v3127
    %3270 = vmatmul.f32.gmra.mxu0 %v3252
    %v3271 = vpop.f32.mrf.mxu0
    %v3272 = vadd.f32 0.0, %v3271
    %3273 = vdwg.mxu0
    %v3275 = vsel %vm3169, %v3249, 0
    %3277 = vmatpush.msra.mxu0 0.0
    %3278 = vmatpush.msra.mxu0 0.0
    %3279 = vmatpush.msra.mxu0 0.0
    %3280 = vmatpush.msra.mxu0 0.0
    %3281 = vmatpush.msra.mxu0 0.0
    %3282 = vmatpush.msra.mxu0 0.0
    %3283 = vmatpush.msra.mxu0 0.0
    %3284 = vmatpush.msra.mxu0 0.0
    %3285 = vmatpush.msra.mxu0 0.0
    %3286 = vmatpush.msra.mxu0 0.0
    %3287 = vmatpush.msra.mxu0 0.0
    %3288 = vmatpush.msra.mxu0 0.0
    %3289 = vmatpush.msra.mxu0 0.0
    %3290 = vmatpush.msra.mxu0 0.0
    %3291 = vmatpush.msra.mxu0 %v3128
    %3292 = vmatpush.msra.mxu0 %v3127
    %3293 = vmatmul.f32.gmra.mxu0 %v3275
    %v3294 = vpop.f32.mrf.mxu0
    %v3295 = vadd.f32 0.0, %v3294
    %3296 = vdwg.mxu0
    %v3297 = vperm.slane %v3272, 0
    %v3298 = vmul.f32 %v3194, %v3297
    %v3299 = vperm.slane %v3295, 0
    %v3300 = vadd.f32 %v3298, %v3299
    %v3301 = vmax.f32 %v3300, 0.0
    %v3302 = vmul.f32 %v3195, %v3297
    %v3303 = vadd.f32 %v3302, %v3299
    %v3304 = vmax.f32 %v3303, 0.0
    %3306 = vrot.lane.b32.xlu0 %v3301, 16
    %v3307 = vpop.permute.xlu0 %3306
    %vm3309 = vcmask 650368
    %3310 = vst.msk [vmem:[#allocation7 + $0x1] sm:$0xf] %vm3309, %v3307
    %3312 = vrot.lane.b32.xlu0 %v3304, 16
    %v3313 = vpop.permute.xlu0 %3312
    %3315 = vst.msk [vmem:[#allocation7 + $0x7] sm:$0xf] %vm3309, %v3313
    %v3316 = vld [vmem:[#allocation6] sm:$0xff]
    %v3317 = vld [vmem:[#allocation6 + $0x8] sm:$0x3]
    %v3318 = vld [vmem:[%s2 + $0x110] sm:$0xf]
    %v3320 = vsel %vm2755, %v3318, 0
    %v3323 = vsel %vm1472, %v3317, 0
    %3325 = vmatpush.msra.mxu0 0.0
    %3326 = vmatpush.msra.mxu0 0.0
    %3327 = vmatpush.msra.mxu0 0.0
    %3328 = vmatpush.msra.mxu0 0.0
    %3329 = vmatpush.msra.mxu0 0.0
    %3330 = vmatpush.msra.mxu0 0.0
    %3331 = vmatpush.msra.mxu0 0.0
    %3332 = vmatpush.msra.mxu0 0.0
    %3333 = vmatpush.msra.mxu0 0.0
    %3334 = vmatpush.msra.mxu0 0.0
    %3335 = vmatpush.msra.mxu0 0.0
    %3336 = vmatpush.msra.mxu0 0.0
    %3337 = vmatpush.msra.mxu0 0.0
    %3338 = vmatpush.msra.mxu0 0.0
    %3339 = vmatpush.msra.mxu0 %v3323
    %3340 = vmatpush.msra.mxu0 %v3316
    %3341 = vmatmul.f32.gmra.mxu0 %v3320
    %v3342 = vpop.f32.mrf.mxu0
    %v3343 = vadd.f32 0.0, %v3342
    %3344 = vdwg.mxu0
    %v3345 = vpack.c.bf16 %v3343, %v3343
    %v3346 = vld [vmem:[#allocation10 + $0x33c] sm:$0xf]
    %v3347 = vld [vmem:[#allocation10 + $0x340] sm:$0xf]
    %v3348 = vld [vmem:[#allocation10 + $0x344] sm:$0xf]
    %v3349 = vld [vmem:[#allocation10 + $0x348] sm:$0xf]
    %v3350 = vld [vmem:[#allocation10 + $0x34c] sm:$0xf]
    %v3351 = vld [vmem:[#allocation10 + $0x350] sm:$0xf]
    %v3352 = vld [vmem:[#allocation10 + $0x354] sm:$0xf]
    %v3353 = vld [vmem:[#allocation10 + $0x358] sm:$0xf]
    %v3354 = vld [vmem:[#allocation10 + $0x35c] sm:$0xf]
    %v3355 = vld [vmem:[#allocation10 + $0x360] sm:$0xf]
    %v3366 = vunpack.c.l.b16 %v3346
    %v3367 = vunpack.c.l.b16 %v3347
    %v3368 = vunpack.c.l.b16 %v3348
    %v3369 = vunpack.c.l.b16 %v3349
    %v3370 = vunpack.c.l.b16 %v3350
    %v3371 = vunpack.c.l.b16 %v3351
    %v3372 = vunpack.c.l.b16 %v3352
    %v3373 = vunpack.c.l.b16 %v3353
    %v3374 = vunpack.c.l.b16 %v3354
    %v3375 = vunpack.c.l.b16 %v3355
    %v3376 = vpack.c.b16 %v3367, %v3366
    %v3377 = vpack.c.b16 %v3369, %v3368
    %v3378 = vpack.c.b16 %v3371, %v3370
    %v3379 = vpack.c.b16 %v3373, %v3372
    %v3380 = vpack.c.b16 %v3375, %v3374
    %v3387 = vsel %vm48, %v3345, 0
    %3389 = vmatpush.bf16.msra.mxu0 0
    %3390 = vmatpush.bf16.msra.mxu0 0
    %3391 = vmatpush.bf16.msra.mxu0 0
    %3392 = vmatpush.bf16.msra.mxu0 %v3380
    %3393 = vmatpush.bf16.msra.mxu0 %v3379
    %3394 = vmatpush.bf16.msra.mxu0 %v3378
    %3395 = vmatpush.bf16.msra.mxu0 %v3377
    %3396 = vmatpush.bf16.msra.mxu0 %v3376
    %3397 = vmatmul.bf16.gmra.mxu0 %v3387
    %v3398 = vpop.f32.mrf.mxu0
    %v3399 = vadd.f32 0.0, %v3398
    %v3400 = vpop.f32.mrf.mxu0
    %3401 = vdwg.mxu0
    %v3402 = vld [vmem:[#allocation6 + $0xa] sm:$0xff]
    %v3403 = vld [vmem:[#allocation6 + $0x12] sm:$0x3]
    %v3405 = vsel %vm1472, %v3403, 0
    %3407 = vmatpush.msra.mxu0 0.0
    %3408 = vmatpush.msra.mxu0 0.0
    %3409 = vmatpush.msra.mxu0 0.0
    %3410 = vmatpush.msra.mxu0 0.0
    %3411 = vmatpush.msra.mxu0 0.0
    %3412 = vmatpush.msra.mxu0 0.0
    %3413 = vmatpush.msra.mxu0 0.0
    %3414 = vmatpush.msra.mxu0 0.0
    %3415 = vmatpush.msra.mxu0 0.0
    %3416 = vmatpush.msra.mxu0 0.0
    %3417 = vmatpush.msra.mxu0 0.0
    %3418 = vmatpush.msra.mxu0 0.0
    %3419 = vmatpush.msra.mxu0 0.0
    %3420 = vmatpush.msra.mxu0 0.0
    %3421 = vmatpush.msra.mxu0 %v3405
    %3422 = vmatpush.msra.mxu0 %v3402
    %3423 = vmatmul.f32.gmra.mxu0 %v3320
    %v3424 = vpop.f32.mrf.mxu0
    %v3425 = vadd.f32 0.0, %v3424
    %3426 = vdwg.mxu0
    %v3427 = vpack.c.bf16 %v3425, %v3425
    %v3429 = vsel %vm48, %v3427, 0
    %3431 = vmatpush.bf16.msra.mxu0 0
    %3432 = vmatpush.bf16.msra.mxu0 0
    %3433 = vmatpush.bf16.msra.mxu0 0
    %3434 = vmatpush.bf16.msra.mxu0 %v3380
    %3435 = vmatpush.bf16.msra.mxu0 %v3379
    %3436 = vmatpush.bf16.msra.mxu0 %v3378
    %3437 = vmatpush.bf16.msra.mxu0 %v3377
    %3438 = vmatpush.bf16.msra.mxu0 %v3376
    %3439 = vmatmul.bf16.gmra.mxu0 %v3429
    %v3440 = vpop.f32.mrf.mxu0
    %v3441 = vadd.f32 0.0, %v3440
    %v3442 = vpop.f32.mrf.mxu0
    %3443 = vdwg.mxu0
    %v3444 = vld [vmem:[%s2 + $0x120] sm:$0xff]
    %v3445 = vld [vmem:[%s2 + $0x128] sm:$0xff]
    %v3446 = vld [vmem:[%s2 + $0x130] sm:$0xff]
    %v3447 = vld [vmem:[%s2 + $0x138] sm:$0xff]
    %v3448 = vld [vmem:[%s2 + $0x140] sm:$0xff]
    %v3449 = vld [vmem:[%s2 + $0x148] sm:$0xff]
    %v3450 = vld [vmem:[%s2 + $0x150] sm:$0xff]
    %v3451 = vld [vmem:[%s2 + $0x158] sm:$0xff]
    %v3452 = vld [vmem:[%s2 + $0x160] sm:$0xff]
    %v3453 = vld [vmem:[%s2 + $0x168] sm:$0xff]
    %v3454 = vsel %vm3129, %v3399, 0.0
    %v3455 = vrot.slane %v3454, 4
    %v3456 = vadd.f32 %v3454, %v3455
    %v3457 = vrot.slane %v3456, 2
    %v3458 = vadd.f32 %v3456, %v3457
    %v3459 = vrot.slane %v3458, 1
    %v3460 = vadd.f32 %v3458, %v3459
    %v3461 = vsel %vm3129, %v3441, 0.0
    %v3462 = vrot.slane %v3461, 4
    %v3463 = vadd.f32 %v3461, %v3462
    %v3464 = vrot.slane %v3463, 2
    %v3465 = vadd.f32 %v3463, %v3464
    %v3466 = vrot.slane %v3465, 1
    %v3467 = vadd.f32 %v3465, %v3466
    %v3468 = vadd.f32 %v3460, %v3467
    %v3470 = vsel %vm291, %v3468, 0
    %3472 = vmatpush.msra.mxu0 0.0
    %3473 = vmatpush.msra.mxu0 0.0
    %3474 = vmatpush.msra.mxu0 0.0
    %3475 = vmatpush.msra.mxu0 0.0
    %3476 = vmatpush.msra.mxu0 0.0
    %3477 = vmatpush.msra.mxu0 0.0
    %3478 = vmatpush.msra.mxu0 0.0
    %3479 = vmatpush.msra.mxu0 0.0
    %3480 = vmatpush.msra.mxu0 %v3451
    %3481 = vmatpush.msra.mxu0 %v3450
    %3482 = vmatpush.msra.mxu0 %v3449
    %3483 = vmatpush.msra.mxu0 %v3448
    %3484 = vmatpush.msra.mxu0 %v3447
    %3485 = vmatpush.msra.mxu0 %v3446
    %3486 = vmatpush.msra.mxu0 %v3445
    %3487 = vmatpush.msra.mxu0 %v3444
    %3488 = vmatmul.f32.gmra.mxu0 %v3470
    %v3489 = vpop.f32.mrf.mxu0
    %v3490 = vadd.f32 0.0, %v3489
    %3491 = vdwg.mxu0
    %v3492 = vmul.f32 %v3490, 0.03125
    %v3494 = vsel %vm3169, %v3492, 0
    %3496 = vmatpush.msra.mxu0 0.0
    %3497 = vmatpush.msra.mxu0 0.0
    %3498 = vmatpush.msra.mxu0 0.0
    %3499 = vmatpush.msra.mxu0 0.0
    %3500 = vmatpush.msra.mxu0 0.0
    %3501 = vmatpush.msra.mxu0 0.0
    %3502 = vmatpush.msra.mxu0 0.0
    %3503 = vmatpush.msra.mxu0 0.0
    %3504 = vmatpush.msra.mxu0 0.0
    %3505 = vmatpush.msra.mxu0 0.0
    %3506 = vmatpush.msra.mxu0 0.0
    %3507 = vmatpush.msra.mxu0 0.0
    %3508 = vmatpush.msra.mxu0 0.0
    %3509 = vmatpush.msra.mxu0 0.0
    %3510 = vmatpush.msra.mxu0 %v3453
    %3511 = vmatpush.msra.mxu0 %v3452
    %3512 = vmatmul.f32.gmra.mxu0 %v3494
    %v3513 = vpop.f32.mrf.mxu0
    %v3514 = vadd.f32 0.0, %v3513
    %3515 = vdwg.mxu0
    %v3516 = vperm.slane %v3514, 0
    %v3517 = vsub.f32 %v3399, %v3516
    %v3518 = vsub.f32 %v3441, %v3516
    %v3519 = vmul.f32 %v3517, %v3517
    %v3520 = vsel %vm3129, %v3519, 0.0
    %v3521 = vrot.slane %v3520, 4
    %v3522 = vadd.f32 %v3520, %v3521
    %v3523 = vrot.slane %v3522, 2
    %v3524 = vadd.f32 %v3522, %v3523
    %v3525 = vrot.slane %v3524, 1
    %v3526 = vadd.f32 %v3524, %v3525
    %v3527 = vmul.f32 %v3518, %v3518
    %v3528 = vsel %vm3129, %v3527, 0.0
    %v3529 = vrot.slane %v3528, 4
    %v3530 = vadd.f32 %v3528, %v3529
    %v3531 = vrot.slane %v3530, 2
    %v3532 = vadd.f32 %v3530, %v3531
    %v3533 = vrot.slane %v3532, 1
    %v3534 = vadd.f32 %v3532, %v3533
    %v3535 = vadd.f32 %v3526, %v3534
    %v3537 = vsel %vm291, %v3535, 0
    %3539 = vmatpush.msra.mxu0 0.0
    %3540 = vmatpush.msra.mxu0 0.0
    %3541 = vmatpush.msra.mxu0 0.0
    %3542 = vmatpush.msra.mxu0 0.0
    %3543 = vmatpush.msra.mxu0 0.0
    %3544 = vmatpush.msra.mxu0 0.0
    %3545 = vmatpush.msra.mxu0 0.0
    %3546 = vmatpush.msra.mxu0 0.0
    %3547 = vmatpush.msra.mxu0 %v3451
    %3548 = vmatpush.msra.mxu0 %v3450
    %3549 = vmatpush.msra.mxu0 %v3449
    %3550 = vmatpush.msra.mxu0 %v3448
    %3551 = vmatpush.msra.mxu0 %v3447
    %3552 = vmatpush.msra.mxu0 %v3446
    %3553 = vmatpush.msra.mxu0 %v3445
    %3554 = vmatpush.msra.mxu0 %v3444
    %3555 = vmatmul.f32.gmra.mxu0 %v3537
    %v3556 = vpop.f32.mrf.mxu0
    %v3557 = vadd.f32 0.0, %v3556
    %3558 = vdwg.mxu0
    %v3559 = vmul.f32 %v3557, 0.03125
    %v3560 = vadd.f32 %v3559, 1e-05
    %v3561 = vrsqrt.pop %v3560
    %v3562 = vmul.f32 %v3561, %v3560
    %v3563 = vmul.f32 %v3562, %v3561
    %v3564 = vmul.f32 0.5, %v3563
    %v3565 = vsub.f32 1.5, %v3564
    %v3566 = vmul.f32 %v3561, %v3565
    %vm3567 = vweird.f32 %v3560
    %vm3568 = vweird.f32 %v3561
    %vm3569 = vmor %vm3567, %vm3568
    %v3570 = vsel %vm3569, %v3561, %v3566
    %v3571 = vld [vmem:[%s2 + $0x190] sm:$0x1]
    %v3572 = vld [vmem:[%s2 + $0x198] sm:$0x1]
    %v3573 = vmul.f32 %v3571, %v3570
    %v3575 = vsel %vm3169, %v3573, 0
    %3577 = vmatpush.msra.mxu0 0.0
    %3578 = vmatpush.msra.mxu0 0.0
    %3579 = vmatpush.msra.mxu0 0.0
    %3580 = vmatpush.msra.mxu0 0.0
    %3581 = vmatpush.msra.mxu0 0.0
    %3582 = vmatpush.msra.mxu0 0.0
    %3583 = vmatpush.msra.mxu0 0.0
    %3584 = vmatpush.msra.mxu0 0.0
    %3585 = vmatpush.msra.mxu0 0.0
    %3586 = vmatpush.msra.mxu0 0.0
    %3587 = vmatpush.msra.mxu0 0.0
    %3588 = vmatpush.msra.mxu0 0.0
    %3589 = vmatpush.msra.mxu0 0.0
    %3590 = vmatpush.msra.mxu0 0.0
    %3591 = vmatpush.msra.mxu0 %v3453
    %3592 = vmatpush.msra.mxu0 %v3452
    %3593 = vmatmul.f32.gmra.mxu0 %v3575
    %v3594 = vpop.f32.mrf.mxu0
    %v3595 = vadd.f32 0.0, %v3594
    %3596 = vdwg.mxu0
    %v3598 = vsel %vm3169, %v3572, 0
    %3600 = vmatpush.msra.mxu0 0.0
    %3601 = vmatpush.msra.mxu0 0.0
    %3602 = vmatpush.msra.mxu0 0.0
    %3603 = vmatpush.msra.mxu0 0.0
    %3604 = vmatpush.msra.mxu0 0.0
    %3605 = vmatpush.msra.mxu0 0.0
    %3606 = vmatpush.msra.mxu0 0.0
    %3607 = vmatpush.msra.mxu0 0.0
    %3608 = vmatpush.msra.mxu0 0.0
    %3609 = vmatpush.msra.mxu0 0.0
    %3610 = vmatpush.msra.mxu0 0.0
    %3611 = vmatpush.msra.mxu0 0.0
    %3612 = vmatpush.msra.mxu0 0.0
    %3613 = vmatpush.msra.mxu0 0.0
    %3614 = vmatpush.msra.mxu0 %v3453
    %3615 = vmatpush.msra.mxu0 %v3452
    %3616 = vmatmul.f32.gmra.mxu0 %v3598
    %v3617 = vpop.f32.mrf.mxu0
    %v3618 = vadd.f32 0.0, %v3617
    %3619 = vdwg.mxu0
    %v3620 = vperm.slane %v3595, 0
    %v3621 = vmul.f32 %v3517, %v3620
    %v3622 = vperm.slane %v3618, 0
    %v3623 = vadd.f32 %v3621, %v3622
    %v3624 = vmul.f32 %v3518, %v3620
    %v3625 = vadd.f32 %v3624, %v3622
    %v3626 = vld [vmem:[#allocation7] sm:$0xf]
    %v3627 = vpack.c.bf16 %v3626, %v3626
    %v3628 = vld [vmem:[#allocation10 + $0x2ac] sm:$0xf]
    %v3629 = vld [vmem:[#allocation10 + $0x2b0] sm:$0xf]
    %v3630 = vld [vmem:[#allocation10 + $0x2b4] sm:$0xf]
    %v3631 = vld [vmem:[#allocation10 + $0x2b8] sm:$0xf]
    %v3632 = vld [vmem:[#allocation10 + $0x2bc] sm:$0xf]
    %v3633 = vld [vmem:[#allocation10 + $0x2c0] sm:$0xf]
    %v3634 = vld [vmem:[#allocation10 + $0x2c4] sm:$0xf]
    %v3635 = vld [vmem:[#allocation10 + $0x2c8] sm:$0xf]
    %v3636 = vld [vmem:[#allocation10 + $0x2cc] sm:$0xf]
    %v3637 = vld [vmem:[#allocation10 + $0x2d0] sm:$0xf]
    %v3638 = vld [vmem:[#allocation10 + $0x2d4] sm:$0xf]
    %v3639 = vld [vmem:[#allocation10 + $0x2d8] sm:$0xf]
    %v3640 = vld [vmem:[#allocation7 + $0x1] sm:$0xf]
    %v3641 = vpack.c.bf16 %v3640, %v3640
    %v3642 = vld [vmem:[#allocation10 + $0x2dc] sm:$0xf]
    %v3643 = vld [vmem:[#allocation10 + $0x2e0] sm:$0xf]
    %v3644 = vld [vmem:[#allocation10 + $0x2e4] sm:$0xf]
    %v3645 = vld [vmem:[#allocation10 + $0x2e8] sm:$0xf]
    %v3646 = vld [vmem:[#allocation10 + $0x2ec] sm:$0xf]
    %v3647 = vld [vmem:[#allocation10 + $0x2f0] sm:$0xf]
    %v3648 = vld [vmem:[#allocation10 + $0x2f4] sm:$0xf]
    %v3649 = vld [vmem:[#allocation10 + $0x2f8] sm:$0xf]
    %v3650 = vld [vmem:[#allocation10 + $0x2fc] sm:$0xf]
    %v3651 = vld [vmem:[#allocation10 + $0x300] sm:$0xf]
    %v3652 = vld [vmem:[#allocation10 + $0x304] sm:$0xf]
    %v3653 = vld [vmem:[#allocation10 + $0x308] sm:$0xf]
    %v3666 = vunpack.c.l.b16 %v3642
    %v3667 = vunpack.c.l.b16 %v3643
    %v3668 = vunpack.c.l.b16 %v3644
    %v3669 = vunpack.c.l.b16 %v3645
    %v3670 = vunpack.c.l.b16 %v3646
    %v3671 = vunpack.c.l.b16 %v3647
    %v3672 = vunpack.c.l.b16 %v3648
    %v3673 = vunpack.c.l.b16 %v3649
    %v3674 = vunpack.c.l.b16 %v3650
    %v3675 = vunpack.c.l.b16 %v3651
    %v3676 = vunpack.c.l.b16 %v3652
    %v3677 = vunpack.c.l.b16 %v3653
    %v3678 = vpack.c.b16 %v3667, %v3666
    %v3679 = vpack.c.b16 %v3669, %v3668
    %v3680 = vpack.c.b16 %v3671, %v3670
    %v3681 = vpack.c.b16 %v3673, %v3672
    %v3682 = vpack.c.b16 %v3675, %v3674
    %v3683 = vpack.c.b16 %v3677, %v3676
    %v3691 = vsel %vm56, %v3641, 0
    %3693 = vmatpush.bf16.msra.mxu0 0
    %3694 = vmatpush.bf16.msra.mxu0 0
    %3695 = vmatpush.bf16.msra.mxu0 %v3683
    %3696 = vmatpush.bf16.msra.mxu0 %v3682
    %3697 = vmatpush.bf16.msra.mxu0 %v3681
    %3698 = vmatpush.bf16.msra.mxu0 %v3680
    %3699 = vmatpush.bf16.msra.mxu0 %v3679
    %3700 = vmatpush.bf16.msra.mxu0 %v3678
    %3701 = vmatmul.bf16.gmra.mxu0 %v3691
    %v3702 = vpop.f32.mrf.mxu0
    %v3703 = vadd.f32 0.0, %v3702
    %v3704 = vpop.f32.mrf.mxu0
    %3705 = vdwg.mxu0
    %v3718 = vunpack.c.l.b16 %v3628
    %v3719 = vunpack.c.l.b16 %v3629
    %v3720 = vunpack.c.l.b16 %v3630
    %v3721 = vunpack.c.l.b16 %v3631
    %v3722 = vunpack.c.l.b16 %v3632
    %v3723 = vunpack.c.l.b16 %v3633
    %v3724 = vunpack.c.l.b16 %v3634
    %v3725 = vunpack.c.l.b16 %v3635
    %v3726 = vunpack.c.l.b16 %v3636
    %v3727 = vunpack.c.l.b16 %v3637
    %v3728 = vunpack.c.l.b16 %v3638
    %v3729 = vunpack.c.l.b16 %v3639
    %v3730 = vpack.c.b16 %v3719, %v3718
    %v3731 = vpack.c.b16 %v3721, %v3720
    %v3732 = vpack.c.b16 %v3723, %v3722
    %v3733 = vpack.c.b16 %v3725, %v3724
    %v3734 = vpack.c.b16 %v3727, %v3726
    %v3735 = vpack.c.b16 %v3729, %v3728
    %v3743 = vsel %vm56, %v3627, 0
    %3745 = vmatpush.bf16.msra.mxu0 0
    %3746 = vmatpush.bf16.msra.mxu0 0
    %3747 = vmatpush.bf16.msra.mxu0 %v3735
    %3748 = vmatpush.bf16.msra.mxu0 %v3734
    %3749 = vmatpush.bf16.msra.mxu0 %v3733
    %3750 = vmatpush.bf16.msra.mxu0 %v3732
    %3751 = vmatpush.bf16.msra.mxu0 %v3731
    %3752 = vmatpush.bf16.msra.mxu0 %v3730
    %3753 = vmatmul.bf16.gmra.mxu0 %v3743
    %v3754 = vpop.f32.mrf.mxu0
    %v3755 = vadd.f32 %v3703, %v3754
    %v3756 = vpop.f32.mrf.mxu0
    %3757 = vdwg.mxu0
    %v3758 = vld [vmem:[#allocation7 + $0x2] sm:$0xf]
    %v3759 = vpack.c.bf16 %v3758, %v3758
    %v3760 = vld [vmem:[#allocation10 + $0x30c] sm:$0xf]
    %v3761 = vld [vmem:[#allocation10 + $0x310] sm:$0xf]
    %v3762 = vld [vmem:[#allocation10 + $0x314] sm:$0xf]
    %v3763 = vld [vmem:[#allocation10 + $0x318] sm:$0xf]
    %v3764 = vld [vmem:[#allocation10 + $0x31c] sm:$0xf]
    %v3765 = vld [vmem:[#allocation10 + $0x320] sm:$0xf]
    %v3766 = vld [vmem:[#allocation10 + $0x324] sm:$0xf]
    %v3767 = vld [vmem:[#allocation10 + $0x328] sm:$0xf]
    %v3768 = vld [vmem:[#allocation10 + $0x32c] sm:$0xf]
    %v3769 = vld [vmem:[#allocation10 + $0x330] sm:$0xf]
    %v3770 = vld [vmem:[#allocation10 + $0x334] sm:$0xf]
    %v3771 = vld [vmem:[#allocation10 + $0x338] sm:$0xf]
    %v3784 = vunpack.c.l.b16 %v3760
    %v3785 = vunpack.c.l.b16 %v3761
    %v3786 = vunpack.c.l.b16 %v3762
    %v3787 = vunpack.c.l.b16 %v3763
    %v3788 = vunpack.c.l.b16 %v3764
    %v3789 = vunpack.c.l.b16 %v3765
    %v3790 = vunpack.c.l.b16 %v3766
    %v3791 = vunpack.c.l.b16 %v3767
    %v3792 = vunpack.c.l.b16 %v3768
    %v3793 = vunpack.c.l.b16 %v3769
    %v3794 = vunpack.c.l.b16 %v3770
    %v3795 = vunpack.c.l.b16 %v3771
    %v3796 = vpack.c.b16 %v3785, %v3784
    %v3797 = vpack.c.b16 %v3787, %v3786
    %v3798 = vpack.c.b16 %v3789, %v3788
    %v3799 = vpack.c.b16 %v3791, %v3790
    %v3800 = vpack.c.b16 %v3793, %v3792
    %v3801 = vpack.c.b16 %v3795, %v3794
    %v3809 = vsel %vm56, %v3759, 0
    %3811 = vmatpush.bf16.msra.mxu0 0
    %3812 = vmatpush.bf16.msra.mxu0 0
    %3813 = vmatpush.bf16.msra.mxu0 %v3801
    %3814 = vmatpush.bf16.msra.mxu0 %v3800
    %3815 = vmatpush.bf16.msra.mxu0 %v3799
    %3816 = vmatpush.bf16.msra.mxu0 %v3798
    %3817 = vmatpush.bf16.msra.mxu0 %v3797
    %3818 = vmatpush.bf16.msra.mxu0 %v3796
    %3819 = vmatmul.bf16.gmra.mxu0 %v3809
    %v3820 = vpop.f32.mrf.mxu0
    %v3821 = vadd.f32 0.0, %v3820
    %v3822 = vpop.f32.mrf.mxu0
    %3823 = vdwg.mxu0
    %v3824 = vadd.f32 %v3755, %v3821
    %v3825 = vld [vmem:[#allocation7 + $0x6] sm:$0xf]
    %v3826 = vpack.c.bf16 %v3825, %v3825
    %v3827 = vld [vmem:[#allocation7 + $0x7] sm:$0xf]
    %v3828 = vpack.c.bf16 %v3827, %v3827
    %v3830 = vsel %vm56, %v3828, 0
    %3832 = vmatpush.bf16.msra.mxu0 0
    %3833 = vmatpush.bf16.msra.mxu0 0
    %3834 = vmatpush.bf16.msra.mxu0 %v3683
    %3835 = vmatpush.bf16.msra.mxu0 %v3682
    %3836 = vmatpush.bf16.msra.mxu0 %v3681
    %3837 = vmatpush.bf16.msra.mxu0 %v3680
    %3838 = vmatpush.bf16.msra.mxu0 %v3679
    %3839 = vmatpush.bf16.msra.mxu0 %v3678
    %3840 = vmatmul.bf16.gmra.mxu0 %v3830
    %v3841 = vpop.f32.mrf.mxu0
    %v3842 = vadd.f32 0.0, %v3841
    %v3843 = vpop.f32.mrf.mxu0
    %3844 = vdwg.mxu0
    %v3846 = vsel %vm56, %v3826, 0
    %3848 = vmatpush.bf16.msra.mxu0 0
    %3849 = vmatpush.bf16.msra.mxu0 0
    %3850 = vmatpush.bf16.msra.mxu0 %v3735
    %3851 = vmatpush.bf16.msra.mxu0 %v3734
    %3852 = vmatpush.bf16.msra.mxu0 %v3733
    %3853 = vmatpush.bf16.msra.mxu0 %v3732
    %3854 = vmatpush.bf16.msra.mxu0 %v3731
    %3855 = vmatpush.bf16.msra.mxu0 %v3730
    %3856 = vmatmul.bf16.gmra.mxu0 %v3846
    %v3857 = vpop.f32.mrf.mxu0
    %v3858 = vadd.f32 %v3842, %v3857
    %v3859 = vpop.f32.mrf.mxu0
    %3860 = vdwg.mxu0
    %v3861 = vld [vmem:[#allocation7 + $0x8] sm:$0xf]
    %v3862 = vpack.c.bf16 %v3861, %v3861
    %v3864 = vsel %vm56, %v3862, 0
    %3866 = vmatpush.bf16.msra.mxu0 0
    %3867 = vmatpush.bf16.msra.mxu0 0
    %3868 = vmatpush.bf16.msra.mxu0 %v3801
    %3869 = vmatpush.bf16.msra.mxu0 %v3800
    %3870 = vmatpush.bf16.msra.mxu0 %v3799
    %3871 = vmatpush.bf16.msra.mxu0 %v3798
    %3872 = vmatpush.bf16.msra.mxu0 %v3797
    %3873 = vmatpush.bf16.msra.mxu0 %v3796
    %3874 = vmatmul.bf16.gmra.mxu0 %v3864
    %v3875 = vpop.f32.mrf.mxu0
    %v3876 = vadd.f32 0.0, %v3875
    %v3877 = vpop.f32.mrf.mxu0
    %3878 = vdwg.mxu0
    %v3879 = vadd.f32 %v3858, %v3876
    %v3880 = vsel %vm3129, %v3824, 0.0
    %v3881 = vrot.slane %v3880, 4
    %v3882 = vadd.f32 %v3880, %v3881
    %v3883 = vrot.slane %v3882, 2
    %v3884 = vadd.f32 %v3882, %v3883
    %v3885 = vrot.slane %v3884, 1
    %v3886 = vadd.f32 %v3884, %v3885
    %v3887 = vsel %vm3129, %v3879, 0.0
    %v3888 = vrot.slane %v3887, 4
    %v3889 = vadd.f32 %v3887, %v3888
    %v3890 = vrot.slane %v3889, 2
    %v3891 = vadd.f32 %v3889, %v3890
    %v3892 = vrot.slane %v3891, 1
    %v3893 = vadd.f32 %v3891, %v3892
    %v3894 = vadd.f32 %v3886, %v3893
    %v3896 = vsel %vm291, %v3894, 0
    %3898 = vmatpush.msra.mxu0 0.0
    %3899 = vmatpush.msra.mxu0 0.0
    %3900 = vmatpush.msra.mxu0 0.0
    %3901 = vmatpush.msra.mxu0 0.0
    %3902 = vmatpush.msra.mxu0 0.0
    %3903 = vmatpush.msra.mxu0 0.0
    %3904 = vmatpush.msra.mxu0 0.0
    %3905 = vmatpush.msra.mxu0 0.0
    %3906 = vmatpush.msra.mxu0 %v3451
    %3907 = vmatpush.msra.mxu0 %v3450
    %3908 = vmatpush.msra.mxu0 %v3449
    %3909 = vmatpush.msra.mxu0 %v3448
    %3910 = vmatpush.msra.mxu0 %v3447
    %3911 = vmatpush.msra.mxu0 %v3446
    %3912 = vmatpush.msra.mxu0 %v3445
    %3913 = vmatpush.msra.mxu0 %v3444
    %3914 = vmatmul.f32.gmra.mxu0 %v3896
    %v3915 = vpop.f32.mrf.mxu0
    %v3916 = vadd.f32 0.0, %v3915
    %3917 = vdwg.mxu0
    %v3918 = vmul.f32 %v3916, 0.03125
    %v3920 = vsel %vm3169, %v3918, 0
    %3922 = vmatpush.msra.mxu0 0.0
    %3923 = vmatpush.msra.mxu0 0.0
    %3924 = vmatpush.msra.mxu0 0.0
    %3925 = vmatpush.msra.mxu0 0.0
    %3926 = vmatpush.msra.mxu0 0.0
    %3927 = vmatpush.msra.mxu0 0.0
    %3928 = vmatpush.msra.mxu0 0.0
    %3929 = vmatpush.msra.mxu0 0.0
    %3930 = vmatpush.msra.mxu0 0.0
    %3931 = vmatpush.msra.mxu0 0.0
    %3932 = vmatpush.msra.mxu0 0.0
    %3933 = vmatpush.msra.mxu0 0.0
    %3934 = vmatpush.msra.mxu0 0.0
    %3935 = vmatpush.msra.mxu0 0.0
    %3936 = vmatpush.msra.mxu0 %v3453
    %3937 = vmatpush.msra.mxu0 %v3452
    %3938 = vmatmul.f32.gmra.mxu0 %v3920
    %v3939 = vpop.f32.mrf.mxu0
    %v3940 = vadd.f32 0.0, %v3939
    %3941 = vdwg.mxu0
    %v3942 = vperm.slane %v3940, 0
    %v3943 = vsub.f32 %v3824, %v3942
    %v3944 = vsub.f32 %v3879, %v3942
    %v3945 = vmul.f32 %v3943, %v3943
    %v3946 = vsel %vm3129, %v3945, 0.0
    %v3947 = vrot.slane %v3946, 4
    %v3948 = vadd.f32 %v3946, %v3947
    %v3949 = vrot.slane %v3948, 2
    %v3950 = vadd.f32 %v3948, %v3949
    %v3951 = vrot.slane %v3950, 1
    %v3952 = vadd.f32 %v3950, %v3951
    %v3953 = vmul.f32 %v3944, %v3944
    %v3954 = vsel %vm3129, %v3953, 0.0
    %v3955 = vrot.slane %v3954, 4
    %v3956 = vadd.f32 %v3954, %v3955
    %v3957 = vrot.slane %v3956, 2
    %v3958 = vadd.f32 %v3956, %v3957
    %v3959 = vrot.slane %v3958, 1
    %v3960 = vadd.f32 %v3958, %v3959
    %v3961 = vadd.f32 %v3952, %v3960
    %v3963 = vsel %vm291, %v3961, 0
    %3965 = vmatpush.msra.mxu0 0.0
    %3966 = vmatpush.msra.mxu0 0.0
    %3967 = vmatpush.msra.mxu0 0.0
    %3968 = vmatpush.msra.mxu0 0.0
    %3969 = vmatpush.msra.mxu0 0.0
    %3970 = vmatpush.msra.mxu0 0.0
    %3971 = vmatpush.msra.mxu0 0.0
    %3972 = vmatpush.msra.mxu0 0.0
    %3973 = vmatpush.msra.mxu0 %v3451
    %3974 = vmatpush.msra.mxu0 %v3450
    %3975 = vmatpush.msra.mxu0 %v3449
    %3976 = vmatpush.msra.mxu0 %v3448
    %3977 = vmatpush.msra.mxu0 %v3447
    %3978 = vmatpush.msra.mxu0 %v3446
    %3979 = vmatpush.msra.mxu0 %v3445
    %3980 = vmatpush.msra.mxu0 %v3444
    %3981 = vmatmul.f32.gmra.mxu0 %v3963
    %v3982 = vpop.f32.mrf.mxu0
    %v3983 = vadd.f32 0.0, %v3982
    %3984 = vdwg.mxu0
    %v3985 = vmul.f32 %v3983, 0.03125
    %v3986 = vadd.f32 %v3985, 1e-05
    %v3987 = vrsqrt.pop %v3986
    %v3988 = vmul.f32 %v3987, %v3986
    %v3989 = vmul.f32 %v3988, %v3987
    %v3990 = vmul.f32 0.5, %v3989
    %v3991 = vsub.f32 1.5, %v3990
    %v3992 = vmul.f32 %v3987, %v3991
    %vm3993 = vweird.f32 %v3986
    %vm3994 = vweird.f32 %v3987
    %vm3995 = vmor %vm3993, %vm3994
    %v3996 = vsel %vm3995, %v3987, %v3992
    %v3997 = vld [vmem:[%s2 + $0x180] sm:$0x1]
    %v3998 = vld [vmem:[%s2 + $0x188] sm:$0x1]
    %v3999 = vmul.f32 %v3997, %v3996
    %v4001 = vsel %vm3169, %v3999, 0
    %4003 = vmatpush.msra.mxu0 0.0
    %4004 = vmatpush.msra.mxu0 0.0
    %4005 = vmatpush.msra.mxu0 0.0
    %4006 = vmatpush.msra.mxu0 0.0
    %4007 = vmatpush.msra.mxu0 0.0
    %4008 = vmatpush.msra.mxu0 0.0
    %4009 = vmatpush.msra.mxu0 0.0
    %4010 = vmatpush.msra.mxu0 0.0
    %4011 = vmatpush.msra.mxu0 0.0
    %4012 = vmatpush.msra.mxu0 0.0
    %4013 = vmatpush.msra.mxu0 0.0
    %4014 = vmatpush.msra.mxu0 0.0
    %4015 = vmatpush.msra.mxu0 0.0
    %4016 = vmatpush.msra.mxu0 0.0
    %4017 = vmatpush.msra.mxu0 %v3453
    %4018 = vmatpush.msra.mxu0 %v3452
    %4019 = vmatmul.f32.gmra.mxu0 %v4001
    %v4020 = vpop.f32.mrf.mxu0
    %v4021 = vadd.f32 0.0, %v4020
    %4022 = vdwg.mxu0
    %v4024 = vsel %vm3169, %v3998, 0
    %4026 = vmatpush.msra.mxu0 0.0
    %4027 = vmatpush.msra.mxu0 0.0
    %4028 = vmatpush.msra.mxu0 0.0
    %4029 = vmatpush.msra.mxu0 0.0
    %4030 = vmatpush.msra.mxu0 0.0
    %4031 = vmatpush.msra.mxu0 0.0
    %4032 = vmatpush.msra.mxu0 0.0
    %4033 = vmatpush.msra.mxu0 0.0
    %4034 = vmatpush.msra.mxu0 0.0
    %4035 = vmatpush.msra.mxu0 0.0
    %4036 = vmatpush.msra.mxu0 0.0
    %4037 = vmatpush.msra.mxu0 0.0
    %4038 = vmatpush.msra.mxu0 0.0
    %4039 = vmatpush.msra.mxu0 0.0
    %4040 = vmatpush.msra.mxu0 %v3453
    %4041 = vmatpush.msra.mxu0 %v3452
    %4042 = vmatmul.f32.gmra.mxu0 %v4024
    %v4043 = vpop.f32.mrf.mxu0
    %v4044 = vadd.f32 0.0, %v4043
    %4045 = vdwg.mxu0
    %v4046 = vperm.slane %v4021, 0
    %v4047 = vmul.f32 %v3943, %v4046
    %v4048 = vperm.slane %v4044, 0
    %v4049 = vadd.f32 %v4047, %v4048
    %v4050 = vadd.f32 %v4049, %v3623
    %v4051 = vmax.f32 %v4050, 0.0
    %v4052 = vmul.f32 %v3944, %v4046
    %v4053 = vadd.f32 %v4052, %v4048
    %v4054 = vadd.f32 %v4053, %v3625
    %v4055 = vmax.f32 %v4054, 0.0
    %4057 = vrot.lane.b32.xlu0 %v4051, 16
    %v4058 = vpop.permute.xlu0 %4057
    %4060 = vst.msk [vmem:[#allocation8 + $0x1] sm:$0xf] %vm3309, %v4058
    %4062 = vrot.lane.b32.xlu0 %v4055, 16
    %v4063 = vpop.permute.xlu0 %4062
    %4065 = vst.msk [vmem:[#allocation8 + $0x7] sm:$0xf] %vm3309, %v4063
    %v4066 = vld [vmem:[#allocation8] sm:$0x3f]
    %v4067 = vld [vmem:[%s2 + $0x1a0] sm:$0x3]
    %vm4068 = vcmask 48128
    %v4070 = vsel %vm4068, %v4067, 0
    %vm4072 = vcmask 1045504
    %v4074 = vsel %vm4072, %v4066, 0
    %4076 = vmatpush.msra.mxu0 0.0
    %4077 = vmatpush.msra.mxu0 0.0
    %4078 = vmatpush.msra.mxu0 0.0
    %4079 = vmatpush.msra.mxu0 0.0
    %4080 = vmatpush.msra.mxu0 0.0
    %4081 = vmatpush.msra.mxu0 0.0
    %4082 = vmatpush.msra.mxu0 0.0
    %4083 = vmatpush.msra.mxu0 0.0
    %4084 = vmatpush.msra.mxu0 0.0
    %4085 = vmatpush.msra.mxu0 0.0
    %4086 = vmatpush.msra.mxu0 0.0
    %4087 = vmatpush.msra.mxu0 0.0
    %4088 = vmatpush.msra.mxu0 0.0
    %4089 = vmatpush.msra.mxu0 0.0
    %4090 = vmatpush.msra.mxu0 0.0
    %4091 = vmatpush.msra.mxu0 %v4074
    %4092 = vmatmul.f32.gmra.mxu0 %v4070
    %v4093 = vpop.f32.mrf.mxu0
    %v4094 = vadd.f32 0.0, %v4093
    %4095 = vdwg.mxu0
    %v4096 = vpack.c.bf16 %v4094, %v4094
    %v4097 = vld [vmem:[#allocation10 + $0x364] sm:$0xf]
    %v4098 = vld [vmem:[#allocation10 + $0x368] sm:$0xf]
    %v4099 = vld [vmem:[#allocation10 + $0x36c] sm:$0xf]
    %v4100 = vld [vmem:[#allocation10 + $0x370] sm:$0xf]
    %v4101 = vld [vmem:[#allocation10 + $0x374] sm:$0xf]
    %v4102 = vld [vmem:[#allocation10 + $0x378] sm:$0xf]
    %v4103 = vld [vmem:[#allocation10 + $0x37c] sm:$0xf]
    %v4104 = vld [vmem:[#allocation10 + $0x380] sm:$0xf]
    %v4105 = vld [vmem:[#allocation10 + $0x384] sm:$0xf]
    %v4106 = vld [vmem:[#allocation10 + $0x388] sm:$0xf]
    %v4107 = vld [vmem:[#allocation10 + $0x38c] sm:$0xf]
    %v4108 = vld [vmem:[#allocation10 + $0x390] sm:$0xf]
    %v4109 = vld [vmem:[%s2 + $0x1a8] sm:$0x3]
    %v4111 = vsel %vm4068, %v4109, 0
    %4113 = vmatpush.msra.mxu0 0.0
    %4114 = vmatpush.msra.mxu0 0.0
    %4115 = vmatpush.msra.mxu0 0.0
    %4116 = vmatpush.msra.mxu0 0.0
    %4117 = vmatpush.msra.mxu0 0.0
    %4118 = vmatpush.msra.mxu0 0.0
    %4119 = vmatpush.msra.mxu0 0.0
    %4120 = vmatpush.msra.mxu0 0.0
    %4121 = vmatpush.msra.mxu0 0.0
    %4122 = vmatpush.msra.mxu0 0.0
    %4123 = vmatpush.msra.mxu0 0.0
    %4124 = vmatpush.msra.mxu0 0.0
    %4125 = vmatpush.msra.mxu0 0.0
    %4126 = vmatpush.msra.mxu0 0.0
    %4127 = vmatpush.msra.mxu0 0.0
    %4128 = vmatpush.msra.mxu0 %v4074
    %4129 = vmatmul.f32.gmra.mxu0 %v4111
    %v4130 = vpop.f32.mrf.mxu0
    %v4131 = vadd.f32 0.0, %v4130
    %4132 = vdwg.mxu0
    %v4133 = vpack.c.bf16 %v4131, %v4131
    %v4134 = vld [vmem:[#allocation10 + $0x394] sm:$0xf]
    %v4135 = vld [vmem:[#allocation10 + $0x398] sm:$0xf]
    %v4136 = vld [vmem:[#allocation10 + $0x39c] sm:$0xf]
    %v4137 = vld [vmem:[#allocation10 + $0x3a0] sm:$0xf]
    %v4138 = vld [vmem:[#allocation10 + $0x3a4] sm:$0xf]
    %v4139 = vld [vmem:[#allocation10 + $0x3a8] sm:$0xf]
    %v4140 = vld [vmem:[#allocation10 + $0x3ac] sm:$0xf]
    %v4141 = vld [vmem:[#allocation10 + $0x3b0] sm:$0xf]
    %v4142 = vld [vmem:[#allocation10 + $0x3b4] sm:$0xf]
    %v4143 = vld [vmem:[#allocation10 + $0x3b8] sm:$0xf]
    %v4144 = vld [vmem:[#allocation10 + $0x3bc] sm:$0xf]
    %v4145 = vld [vmem:[#allocation10 + $0x3c0] sm:$0xf]
    %v4158 = vunpack.c.l.b16 %v4134
    %v4159 = vunpack.c.l.b16 %v4135
    %v4160 = vunpack.c.l.b16 %v4136
    %v4161 = vunpack.c.l.b16 %v4137
    %v4162 = vunpack.c.l.b16 %v4138
    %v4163 = vunpack.c.l.b16 %v4139
    %v4164 = vunpack.c.l.b16 %v4140
    %v4165 = vunpack.c.l.b16 %v4141
    %v4166 = vunpack.c.l.b16 %v4142
    %v4167 = vunpack.c.l.b16 %v4143
    %v4168 = vunpack.c.l.b16 %v4144
    %v4169 = vunpack.c.l.b16 %v4145
    %v4170 = vpack.c.b16 %v4159, %v4158
    %v4171 = vpack.c.b16 %v4161, %v4160
    %v4172 = vpack.c.b16 %v4163, %v4162
    %v4173 = vpack.c.b16 %v4165, %v4164
    %v4174 = vpack.c.b16 %v4167, %v4166
    %v4175 = vpack.c.b16 %v4169, %v4168
    %v4183 = vsel %vm56, %v4133, 0
    %4185 = vmatpush.bf16.msra.mxu0 0
    %4186 = vmatpush.bf16.msra.mxu0 0
    %4187 = vmatpush.bf16.msra.mxu0 %v4175
    %4188 = vmatpush.bf16.msra.mxu0 %v4174
    %4189 = vmatpush.bf16.msra.mxu0 %v4173
    %4190 = vmatpush.bf16.msra.mxu0 %v4172
    %4191 = vmatpush.bf16.msra.mxu0 %v4171
    %4192 = vmatpush.bf16.msra.mxu0 %v4170
    %4193 = vmatmul.bf16.gmra.mxu0 %v4183
    %v4194 = vpop.f32.mrf.mxu0
    %v4195 = vadd.f32 0.0, %v4194
    %v4196 = vpop.f32.mrf.mxu0
    %4197 = vdwg.mxu0
    %v4210 = vunpack.c.l.b16 %v4097
    %v4211 = vunpack.c.l.b16 %v4098
    %v4212 = vunpack.c.l.b16 %v4099
    %v4213 = vunpack.c.l.b16 %v4100
    %v4214 = vunpack.c.l.b16 %v4101
    %v4215 = vunpack.c.l.b16 %v4102
    %v4216 = vunpack.c.l.b16 %v4103
    %v4217 = vunpack.c.l.b16 %v4104
    %v4218 = vunpack.c.l.b16 %v4105
    %v4219 = vunpack.c.l.b16 %v4106
    %v4220 = vunpack.c.l.b16 %v4107
    %v4221 = vunpack.c.l.b16 %v4108
    %v4222 = vpack.c.b16 %v4211, %v4210
    %v4223 = vpack.c.b16 %v4213, %v4212
    %v4224 = vpack.c.b16 %v4215, %v4214
    %v4225 = vpack.c.b16 %v4217, %v4216
    %v4226 = vpack.c.b16 %v4219, %v4218
    %v4227 = vpack.c.b16 %v4221, %v4220
    %v4235 = vsel %vm56, %v4096, 0
    %4237 = vmatpush.bf16.msra.mxu0 0
    %4238 = vmatpush.bf16.msra.mxu0 0
    %4239 = vmatpush.bf16.msra.mxu0 %v4227
    %4240 = vmatpush.bf16.msra.mxu0 %v4226
    %4241 = vmatpush.bf16.msra.mxu0 %v4225
    %4242 = vmatpush.bf16.msra.mxu0 %v4224
    %4243 = vmatpush.bf16.msra.mxu0 %v4223
    %4244 = vmatpush.bf16.msra.mxu0 %v4222
    %4245 = vmatmul.bf16.gmra.mxu0 %v4235
    %v4246 = vpop.f32.mrf.mxu0
    %v4247 = vadd.f32 %v4195, %v4246
    %v4248 = vpop.f32.mrf.mxu0
    %4249 = vdwg.mxu0
    %v4250 = vld [vmem:[%s2 + $0x1b0] sm:$0x3]
    %v4252 = vsel %vm4068, %v4250, 0
    %4254 = vmatpush.msra.mxu0 0.0
    %4255 = vmatpush.msra.mxu0 0.0
    %4256 = vmatpush.msra.mxu0 0.0
    %4257 = vmatpush.msra.mxu0 0.0
    %4258 = vmatpush.msra.mxu0 0.0
    %4259 = vmatpush.msra.mxu0 0.0
    %4260 = vmatpush.msra.mxu0 0.0
    %4261 = vmatpush.msra.mxu0 0.0
    %4262 = vmatpush.msra.mxu0 0.0
    %4263 = vmatpush.msra.mxu0 0.0
    %4264 = vmatpush.msra.mxu0 0.0
    %4265 = vmatpush.msra.mxu0 0.0
    %4266 = vmatpush.msra.mxu0 0.0
    %4267 = vmatpush.msra.mxu0 0.0
    %4268 = vmatpush.msra.mxu0 0.0
    %4269 = vmatpush.msra.mxu0 %v4074
    %4270 = vmatmul.f32.gmra.mxu0 %v4252
    %v4271 = vpop.f32.mrf.mxu0
    %v4272 = vadd.f32 0.0, %v4271
    %4273 = vdwg.mxu0
    %v4274 = vpack.c.bf16 %v4272, %v4272
    %v4275 = vld [vmem:[#allocation10 + $0x3c4] sm:$0xf]
    %v4276 = vld [vmem:[#allocation10 + $0x3c8] sm:$0xf]
    %v4277 = vld [vmem:[#allocation10 + $0x3cc] sm:$0xf]
    %v4278 = vld [vmem:[#allocation10 + $0x3d0] sm:$0xf]
    %v4279 = vld [vmem:[#allocation10 + $0x3d4] sm:$0xf]
    %v4280 = vld [vmem:[#allocation10 + $0x3d8] sm:$0xf]
    %v4281 = vld [vmem:[#allocation10 + $0x3dc] sm:$0xf]
    %v4282 = vld [vmem:[#allocation10 + $0x3e0] sm:$0xf]
    %v4283 = vld [vmem:[#allocation10 + $0x3e4] sm:$0xf]
    %v4284 = vld [vmem:[#allocation10 + $0x3e8] sm:$0xf]
    %v4285 = vld [vmem:[#allocation10 + $0x3ec] sm:$0xf]
    %v4286 = vld [vmem:[#allocation10 + $0x3f0] sm:$0xf]
    %v4299 = vunpack.c.l.b16 %v4275
    %v4300 = vunpack.c.l.b16 %v4276
    %v4301 = vunpack.c.l.b16 %v4277
    %v4302 = vunpack.c.l.b16 %v4278
    %v4303 = vunpack.c.l.b16 %v4279
    %v4304 = vunpack.c.l.b16 %v4280
    %v4305 = vunpack.c.l.b16 %v4281
    %v4306 = vunpack.c.l.b16 %v4282
    %v4307 = vunpack.c.l.b16 %v4283
    %v4308 = vunpack.c.l.b16 %v4284
    %v4309 = vunpack.c.l.b16 %v4285
    %v4310 = vunpack.c.l.b16 %v4286
    %v4311 = vpack.c.b16 %v4300, %v4299
    %v4312 = vpack.c.b16 %v4302, %v4301
    %v4313 = vpack.c.b16 %v4304, %v4303
    %v4314 = vpack.c.b16 %v4306, %v4305
    %v4315 = vpack.c.b16 %v4308, %v4307
    %v4316 = vpack.c.b16 %v4310, %v4309
    %v4324 = vsel %vm56, %v4274, 0
    %4326 = vmatpush.bf16.msra.mxu0 0
    %4327 = vmatpush.bf16.msra.mxu0 0
    %4328 = vmatpush.bf16.msra.mxu0 %v4316
    %4329 = vmatpush.bf16.msra.mxu0 %v4315
    %4330 = vmatpush.bf16.msra.mxu0 %v4314
    %4331 = vmatpush.bf16.msra.mxu0 %v4313
    %4332 = vmatpush.bf16.msra.mxu0 %v4312
    %4333 = vmatpush.bf16.msra.mxu0 %v4311
    %4334 = vmatmul.bf16.gmra.mxu0 %v4324
    %v4335 = vpop.f32.mrf.mxu0
    %v4336 = vadd.f32 0.0, %v4335
    %v4337 = vpop.f32.mrf.mxu0
    %4338 = vdwg.mxu0
    %v4339 = vadd.f32 %v4247, %v4336
    %v4340 = vld [vmem:[#allocation8 + $0x6] sm:$0x3f]
    %v4342 = vsel %vm4072, %v4340, 0
    %4344 = vmatpush.msra.mxu0 0.0
    %4345 = vmatpush.msra.mxu0 0.0
    %4346 = vmatpush.msra.mxu0 0.0
    %4347 = vmatpush.msra.mxu0 0.0
    %4348 = vmatpush.msra.mxu0 0.0
    %4349 = vmatpush.msra.mxu0 0.0
    %4350 = vmatpush.msra.mxu0 0.0
    %4351 = vmatpush.msra.mxu0 0.0
    %4352 = vmatpush.msra.mxu0 0.0
    %4353 = vmatpush.msra.mxu0 0.0
    %4354 = vmatpush.msra.mxu0 0.0
    %4355 = vmatpush.msra.mxu0 0.0
    %4356 = vmatpush.msra.mxu0 0.0
    %4357 = vmatpush.msra.mxu0 0.0
    %4358 = vmatpush.msra.mxu0 0.0
    %4359 = vmatpush.msra.mxu0 %v4342
    %4360 = vmatmul.f32.gmra.mxu0 %v4070
    %v4361 = vpop.f32.mrf.mxu0
    %v4362 = vadd.f32 0.0, %v4361
    %4363 = vdwg.mxu0
    %v4364 = vpack.c.bf16 %v4362, %v4362
    %4365 = vmatpush.msra.mxu0 0.0
    %4366 = vmatpush.msra.mxu0 0.0
    %4367 = vmatpush.msra.mxu0 0.0
    %4368 = vmatpush.msra.mxu0 0.0
    %4369 = vmatpush.msra.mxu0 0.0
    %4370 = vmatpush.msra.mxu0 0.0
    %4371 = vmatpush.msra.mxu0 0.0
    %4372 = vmatpush.msra.mxu0 0.0
    %4373 = vmatpush.msra.mxu0 0.0
    %4374 = vmatpush.msra.mxu0 0.0
    %4375 = vmatpush.msra.mxu0 0.0
    %4376 = vmatpush.msra.mxu0 0.0
    %4377 = vmatpush.msra.mxu0 0.0
    %4378 = vmatpush.msra.mxu0 0.0
    %4379 = vmatpush.msra.mxu0 0.0
    %4380 = vmatpush.msra.mxu0 %v4342
    %4381 = vmatmul.f32.gmra.mxu0 %v4111
    %v4382 = vpop.f32.mrf.mxu0
    %v4383 = vadd.f32 0.0, %v4382
    %4384 = vdwg.mxu0
    %v4385 = vpack.c.bf16 %v4383, %v4383
    %v4387 = vsel %vm56, %v4385, 0
    %4389 = vmatpush.bf16.msra.mxu0 0
    %4390 = vmatpush.bf16.msra.mxu0 0
    %4391 = vmatpush.bf16.msra.mxu0 %v4175
    %4392 = vmatpush.bf16.msra.mxu0 %v4174
    %4393 = vmatpush.bf16.msra.mxu0 %v4173
    %4394 = vmatpush.bf16.msra.mxu0 %v4172
    %4395 = vmatpush.bf16.msra.mxu0 %v4171
    %4396 = vmatpush.bf16.msra.mxu0 %v4170
    %4397 = vmatmul.bf16.gmra.mxu0 %v4387
    %v4398 = vpop.f32.mrf.mxu0
    %v4399 = vadd.f32 0.0, %v4398
    %v4400 = vpop.f32.mrf.mxu0
    %4401 = vdwg.mxu0
    %v4403 = vsel %vm56, %v4364, 0
    %4405 = vmatpush.bf16.msra.mxu0 0
    %4406 = vmatpush.bf16.msra.mxu0 0
    %4407 = vmatpush.bf16.msra.mxu0 %v4227
    %4408 = vmatpush.bf16.msra.mxu0 %v4226
    %4409 = vmatpush.bf16.msra.mxu0 %v4225
    %4410 = vmatpush.bf16.msra.mxu0 %v4224
    %4411 = vmatpush.bf16.msra.mxu0 %v4223
    %4412 = vmatpush.bf16.msra.mxu0 %v4222
    %4413 = vmatmul.bf16.gmra.mxu0 %v4403
    %v4414 = vpop.f32.mrf.mxu0
    %v4415 = vadd.f32 %v4399, %v4414
    %v4416 = vpop.f32.mrf.mxu0
    %4417 = vdwg.mxu0
    %4418 = vmatpush.msra.mxu0 0.0
    %4419 = vmatpush.msra.mxu0 0.0
    %4420 = vmatpush.msra.mxu0 0.0
    %4421 = vmatpush.msra.mxu0 0.0
    %4422 = vmatpush.msra.mxu0 0.0
    %4423 = vmatpush.msra.mxu0 0.0
    %4424 = vmatpush.msra.mxu0 0.0
    %4425 = vmatpush.msra.mxu0 0.0
    %4426 = vmatpush.msra.mxu0 0.0
    %4427 = vmatpush.msra.mxu0 0.0
    %4428 = vmatpush.msra.mxu0 0.0
    %4429 = vmatpush.msra.mxu0 0.0
    %4430 = vmatpush.msra.mxu0 0.0
    %4431 = vmatpush.msra.mxu0 0.0
    %4432 = vmatpush.msra.mxu0 0.0
    %4433 = vmatpush.msra.mxu0 %v4342
    %4434 = vmatmul.f32.gmra.mxu0 %v4252
    %v4435 = vpop.f32.mrf.mxu0
    %v4436 = vadd.f32 0.0, %v4435
    %4437 = vdwg.mxu0
    %v4438 = vpack.c.bf16 %v4436, %v4436
    %v4440 = vsel %vm56, %v4438, 0
    %4442 = vmatpush.bf16.msra.mxu0 0
    %4443 = vmatpush.bf16.msra.mxu0 0
    %4444 = vmatpush.bf16.msra.mxu0 %v4316
    %4445 = vmatpush.bf16.msra.mxu0 %v4315
    %4446 = vmatpush.bf16.msra.mxu0 %v4314
    %4447 = vmatpush.bf16.msra.mxu0 %v4313
    %4448 = vmatpush.bf16.msra.mxu0 %v4312
    %4449 = vmatpush.bf16.msra.mxu0 %v4311
    %4450 = vmatmul.bf16.gmra.mxu0 %v4440
    %v4451 = vpop.f32.mrf.mxu0
    %v4452 = vadd.f32 0.0, %v4451
    %v4453 = vpop.f32.mrf.mxu0
    %4454 = vdwg.mxu0
    %v4455 = vadd.f32 %v4415, %v4452
    %v4456 = vld [vmem:[%s2 + $0x1b8] sm:$0xff]
    %v4457 = vld [vmem:[%s2 + $0x1c0] sm:$0xff]
    %v4458 = vld [vmem:[%s2 + $0x1c8] sm:$0xff]
    %v4459 = vld [vmem:[%s2 + $0x1d0] sm:$0xff]
    %v4460 = vld [vmem:[%s2 + $0x1d8] sm:$0xff]
    %v4461 = vld [vmem:[%s2 + $0x1e0] sm:$0xff]
    %v4462 = vld [vmem:[%s2 + $0x1e8] sm:$0xff]
    %v4463 = vld [vmem:[%s2 + $0x1f0] sm:$0xff]
    %v4464 = vld [vmem:[%s2 + $0x1f8] sm:$0xff]
    %v4465 = vld [vmem:[%s2 + $0x200] sm:$0xff]
    %v4466 = vld [vmem:[%s2 + $0x208] sm:$0xff]
    %v4467 = vld [vmem:[%s2 + $0x210] sm:$0xff]
    %vm4468 = vcmask 517120
    %v4469 = vsel %vm4468, %v4339, 0.0
    %v4470 = vrot.slane %v4469, 4
    %v4471 = vadd.f32 %v4469, %v4470
    %v4472 = vrot.slane %v4471, 2
    %v4473 = vadd.f32 %v4471, %v4472
    %v4474 = vrot.slane %v4473, 1
    %v4475 = vadd.f32 %v4473, %v4474
    %v4476 = vsel %vm4468, %v4455, 0.0
    %v4477 = vrot.slane %v4476, 4
    %v4478 = vadd.f32 %v4476, %v4477
    %v4479 = vrot.slane %v4478, 2
    %v4480 = vadd.f32 %v4478, %v4479
    %v4481 = vrot.slane %v4480, 1
    %v4482 = vadd.f32 %v4480, %v4481
    %v4483 = vadd.f32 %v4475, %v4482
    %v4485 = vsel %vm291, %v4483, 0
    %4487 = vmatpush.msra.mxu0 0.0
    %4488 = vmatpush.msra.mxu0 0.0
    %4489 = vmatpush.msra.mxu0 0.0
    %4490 = vmatpush.msra.mxu0 0.0
    %4491 = vmatpush.msra.mxu0 0.0
    %4492 = vmatpush.msra.mxu0 0.0
    %4493 = vmatpush.msra.mxu0 0.0
    %4494 = vmatpush.msra.mxu0 0.0
    %4495 = vmatpush.msra.mxu0 %v4463
    %4496 = vmatpush.msra.mxu0 %v4462
    %4497 = vmatpush.msra.mxu0 %v4461
    %4498 = vmatpush.msra.mxu0 %v4460
    %4499 = vmatpush.msra.mxu0 %v4459
    %4500 = vmatpush.msra.mxu0 %v4458
    %4501 = vmatpush.msra.mxu0 %v4457
    %4502 = vmatpush.msra.mxu0 %v4456
    %4503 = vmatmul.f32.gmra.mxu0 %v4485
    %v4504 = vpop.f32.mrf.mxu0
    %v4505 = vadd.f32 0.0, %v4504
    %4506 = vdwg.mxu0
    %v4507 = vmul.f32 %v4505, 0.125
    %vm4508 = vcmask 261120
    %v4510 = vsel %vm4508, %v4507, 0
    %4512 = vmatpush.msra.mxu0 0.0
    %4513 = vmatpush.msra.mxu0 0.0
    %4514 = vmatpush.msra.mxu0 0.0
    %4515 = vmatpush.msra.mxu0 0.0
    %4516 = vmatpush.msra.mxu0 0.0
    %4517 = vmatpush.msra.mxu0 0.0
    %4518 = vmatpush.msra.mxu0 0.0
    %4519 = vmatpush.msra.mxu0 0.0
    %4520 = vmatpush.msra.mxu0 0.0
    %4521 = vmatpush.msra.mxu0 0.0
    %4522 = vmatpush.msra.mxu0 0.0
    %4523 = vmatpush.msra.mxu0 0.0
    %4524 = vmatpush.msra.mxu0 %v4467
    %4525 = vmatpush.msra.mxu0 %v4466
    %4526 = vmatpush.msra.mxu0 %v4465
    %4527 = vmatpush.msra.mxu0 %v4464
    %4528 = vmatmul.f32.gmra.mxu0 %v4510
    %v4529 = vpop.f32.mrf.mxu0
    %v4530 = vadd.f32 0.0, %v4529
    %4531 = vdwg.mxu0
    %v4532 = vperm.slane %v4530, 0
    %v4533 = vsub.f32 %v4339, %v4532
    %v4534 = vsub.f32 %v4455, %v4532
    %v4535 = vmul.f32 %v4533, %v4533
    %v4536 = vsel %vm4468, %v4535, 0.0
    %v4537 = vrot.slane %v4536, 4
    %v4538 = vadd.f32 %v4536, %v4537
    %v4539 = vrot.slane %v4538, 2
    %v4540 = vadd.f32 %v4538, %v4539
    %v4541 = vrot.slane %v4540, 1
    %v4542 = vadd.f32 %v4540, %v4541
    %v4543 = vmul.f32 %v4534, %v4534
    %v4544 = vsel %vm4468, %v4543, 0.0
    %v4545 = vrot.slane %v4544, 4
    %v4546 = vadd.f32 %v4544, %v4545
    %v4547 = vrot.slane %v4546, 2
    %v4548 = vadd.f32 %v4546, %v4547
    %v4549 = vrot.slane %v4548, 1
    %v4550 = vadd.f32 %v4548, %v4549
    %v4551 = vadd.f32 %v4542, %v4550
    %v4553 = vsel %vm291, %v4551, 0
    %4555 = vmatpush.msra.mxu0 0.0
    %4556 = vmatpush.msra.mxu0 0.0
    %4557 = vmatpush.msra.mxu0 0.0
    %4558 = vmatpush.msra.mxu0 0.0
    %4559 = vmatpush.msra.mxu0 0.0
    %4560 = vmatpush.msra.mxu0 0.0
    %4561 = vmatpush.msra.mxu0 0.0
    %4562 = vmatpush.msra.mxu0 0.0
    %4563 = vmatpush.msra.mxu0 %v4463
    %4564 = vmatpush.msra.mxu0 %v4462
    %4565 = vmatpush.msra.mxu0 %v4461
    %4566 = vmatpush.msra.mxu0 %v4460
    %4567 = vmatpush.msra.mxu0 %v4459
    %4568 = vmatpush.msra.mxu0 %v4458
    %4569 = vmatpush.msra.mxu0 %v4457
    %4570 = vmatpush.msra.mxu0 %v4456
    %4571 = vmatmul.f32.gmra.mxu0 %v4553
    %v4572 = vpop.f32.mrf.mxu0
    %v4573 = vadd.f32 0.0, %v4572
    %4574 = vdwg.mxu0
    %v4575 = vmul.f32 %v4573, 0.125
    %v4576 = vadd.f32 %v4575, 1e-05
    %v4577 = vrsqrt.pop %v4576
    %v4578 = vmul.f32 %v4577, %v4576
    %v4579 = vmul.f32 %v4578, %v4577
    %v4580 = vmul.f32 0.5, %v4579
    %v4581 = vsub.f32 1.5, %v4580
    %v4582 = vmul.f32 %v4577, %v4581
    %vm4583 = vweird.f32 %v4576
    %vm4584 = vweird.f32 %v4577
    %vm4585 = vmor %vm4583, %vm4584
    %v4586 = vsel %vm4585, %v4577, %v4582
    %v4587 = vld [vmem:[%s2 + $0x218] sm:$0x1]
    %v4588 = vld [vmem:[%s2 + $0x220] sm:$0x1]
    %v4589 = vmul.f32 %v4587, %v4586
    %v4591 = vsel %vm4508, %v4589, 0
    %4593 = vmatpush.msra.mxu0 0.0
    %4594 = vmatpush.msra.mxu0 0.0
    %4595 = vmatpush.msra.mxu0 0.0
    %4596 = vmatpush.msra.mxu0 0.0
    %4597 = vmatpush.msra.mxu0 0.0
    %4598 = vmatpush.msra.mxu0 0.0
    %4599 = vmatpush.msra.mxu0 0.0
    %4600 = vmatpush.msra.mxu0 0.0
    %4601 = vmatpush.msra.mxu0 0.0
    %4602 = vmatpush.msra.mxu0 0.0
    %4603 = vmatpush.msra.mxu0 0.0
    %4604 = vmatpush.msra.mxu0 0.0
    %4605 = vmatpush.msra.mxu0 %v4467
    %4606 = vmatpush.msra.mxu0 %v4466
    %4607 = vmatpush.msra.mxu0 %v4465
    %4608 = vmatpush.msra.mxu0 %v4464
    %4609 = vmatmul.f32.gmra.mxu0 %v4591
    %v4610 = vpop.f32.mrf.mxu0
    %v4611 = vadd.f32 0.0, %v4610
    %4612 = vdwg.mxu0
    %v4614 = vsel %vm4508, %v4588, 0
    %4616 = vmatpush.msra.mxu0 0.0
    %4617 = vmatpush.msra.mxu0 0.0
    %4618 = vmatpush.msra.mxu0 0.0
    %4619 = vmatpush.msra.mxu0 0.0
    %4620 = vmatpush.msra.mxu0 0.0
    %4621 = vmatpush.msra.mxu0 0.0
    %4622 = vmatpush.msra.mxu0 0.0
    %4623 = vmatpush.msra.mxu0 0.0
    %4624 = vmatpush.msra.mxu0 0.0
    %4625 = vmatpush.msra.mxu0 0.0
    %4626 = vmatpush.msra.mxu0 0.0
    %4627 = vmatpush.msra.mxu0 0.0
    %4628 = vmatpush.msra.mxu0 %v4467
    %4629 = vmatpush.msra.mxu0 %v4466
    %4630 = vmatpush.msra.mxu0 %v4465
    %4631 = vmatpush.msra.mxu0 %v4464
    %4632 = vmatmul.f32.gmra.mxu0 %v4614
    %v4633 = vpop.f32.mrf.mxu0
    %v4634 = vadd.f32 0.0, %v4633
    %4635 = vdwg.mxu0
    %v4636 = vperm.slane %v4611, 0
    %v4637 = vmul.f32 %v4533, %v4636
    %v4638 = vperm.slane %v4634, 0
    %v4639 = vadd.f32 %v4637, %v4638
    %v4640 = vmax.f32 %v4639, 0.0
    %v4641 = vmul.f32 %v4534, %v4636
    %v4642 = vadd.f32 %v4641, %v4638
    %v4643 = vmax.f32 %v4642, 0.0
    %4645 = vrot.lane.b32.xlu0 %v4640, 32
    %v4646 = vpop.permute.xlu0 %4645
    %vm4648 = vcmask 779520
    %4649 = vst.msk [vmem:[#allocation9 + $0x1] sm:$0x3] %vm4648, %v4646
    %4651 = vrot.lane.b32.xlu0 %v4643, 32
    %v4652 = vpop.permute.xlu0 %4651
    %4654 = vst.msk [vmem:[#allocation9 + $0x5] sm:$0x3] %vm4648, %v4652
    %v4655 = vld [vmem:[#allocation8] sm:$0x3f]
    %v4656 = vld [vmem:[%s2 + $0x1a8] sm:$0x3]
    %v4658 = vsel %vm4068, %v4656, 0
    %v4661 = vsel %vm4072, %v4655, 0
    %4663 = vmatpush.msra.mxu0 0.0
    %4664 = vmatpush.msra.mxu0 0.0
    %4665 = vmatpush.msra.mxu0 0.0
    %4666 = vmatpush.msra.mxu0 0.0
    %4667 = vmatpush.msra.mxu0 0.0
    %4668 = vmatpush.msra.mxu0 0.0
    %4669 = vmatpush.msra.mxu0 0.0
    %4670 = vmatpush.msra.mxu0 0.0
    %4671 = vmatpush.msra.mxu0 0.0
    %4672 = vmatpush.msra.mxu0 0.0
    %4673 = vmatpush.msra.mxu0 0.0
    %4674 = vmatpush.msra.mxu0 0.0
    %4675 = vmatpush.msra.mxu0 0.0
    %4676 = vmatpush.msra.mxu0 0.0
    %4677 = vmatpush.msra.mxu0 0.0
    %4678 = vmatpush.msra.mxu0 %v4661
    %4679 = vmatmul.f32.gmra.mxu0 %v4658
    %v4680 = vpop.f32.mrf.mxu0
    %v4681 = vadd.f32 0.0, %v4680
    %4682 = vdwg.mxu0
    %v4683 = vpack.c.bf16 %v4681, %v4681
    %v4684 = vld [vmem:[#allocation10 + $0x4b4] sm:$0xf]
    %v4685 = vld [vmem:[#allocation10 + $0x4b8] sm:$0xf]
    %v4686 = vld [vmem:[#allocation10 + $0x4bc] sm:$0xf]
    %v4687 = vld [vmem:[#allocation10 + $0x4c0] sm:$0xf]
    %v4688 = vld [vmem:[#allocation10 + $0x4c4] sm:$0xf]
    %v4689 = vld [vmem:[#allocation10 + $0x4c8] sm:$0xf]
    %v4690 = vld [vmem:[#allocation10 + $0x4cc] sm:$0xf]
    %v4691 = vld [vmem:[#allocation10 + $0x4d0] sm:$0xf]
    %v4692 = vld [vmem:[#allocation10 + $0x4d4] sm:$0xf]
    %v4693 = vld [vmem:[#allocation10 + $0x4d8] sm:$0xf]
    %v4694 = vld [vmem:[#allocation10 + $0x4dc] sm:$0xf]
    %v4695 = vld [vmem:[#allocation10 + $0x4e0] sm:$0xf]
    %v4708 = vunpack.c.l.b16 %v4684
    %v4709 = vunpack.c.l.b16 %v4685
    %v4710 = vunpack.c.l.b16 %v4686
    %v4711 = vunpack.c.l.b16 %v4687
    %v4712 = vunpack.c.l.b16 %v4688
    %v4713 = vunpack.c.l.b16 %v4689
    %v4714 = vunpack.c.l.b16 %v4690
    %v4715 = vunpack.c.l.b16 %v4691
    %v4716 = vunpack.c.l.b16 %v4692
    %v4717 = vunpack.c.l.b16 %v4693
    %v4718 = vunpack.c.l.b16 %v4694
    %v4719 = vunpack.c.l.b16 %v4695
    %v4720 = vpack.c.b16 %v4709, %v4708
    %v4721 = vpack.c.b16 %v4711, %v4710
    %v4722 = vpack.c.b16 %v4713, %v4712
    %v4723 = vpack.c.b16 %v4715, %v4714
    %v4724 = vpack.c.b16 %v4717, %v4716
    %v4725 = vpack.c.b16 %v4719, %v4718
    %v4733 = vsel %vm56, %v4683, 0
    %4735 = vmatpush.bf16.msra.mxu0 0
    %4736 = vmatpush.bf16.msra.mxu0 0
    %4737 = vmatpush.bf16.msra.mxu0 %v4725
    %4738 = vmatpush.bf16.msra.mxu0 %v4724
    %4739 = vmatpush.bf16.msra.mxu0 %v4723
    %4740 = vmatpush.bf16.msra.mxu0 %v4722
    %4741 = vmatpush.bf16.msra.mxu0 %v4721
    %4742 = vmatpush.bf16.msra.mxu0 %v4720
    %4743 = vmatmul.bf16.gmra.mxu0 %v4733
    %v4744 = vpop.f32.mrf.mxu0
    %v4745 = vadd.f32 0.0, %v4744
    %v4746 = vpop.f32.mrf.mxu0
    %4747 = vdwg.mxu0
    %v4748 = vld [vmem:[#allocation8 + $0x6] sm:$0x3f]
    %v4750 = vsel %vm4072, %v4748, 0
    %4752 = vmatpush.msra.mxu0 0.0
    %4753 = vmatpush.msra.mxu0 0.0
    %4754 = vmatpush.msra.mxu0 0.0
    %4755 = vmatpush.msra.mxu0 0.0
    %4756 = vmatpush.msra.mxu0 0.0
    %4757 = vmatpush.msra.mxu0 0.0
    %4758 = vmatpush.msra.mxu0 0.0
    %4759 = vmatpush.msra.mxu0 0.0
    %4760 = vmatpush.msra.mxu0 0.0
    %4761 = vmatpush.msra.mxu0 0.0
    %4762 = vmatpush.msra.mxu0 0.0
    %4763 = vmatpush.msra.mxu0 0.0
    %4764 = vmatpush.msra.mxu0 0.0
    %4765 = vmatpush.msra.mxu0 0.0
    %4766 = vmatpush.msra.mxu0 0.0
    %4767 = vmatpush.msra.mxu0 %v4750
    %4768 = vmatmul.f32.gmra.mxu0 %v4658
    %v4769 = vpop.f32.mrf.mxu0
    %v4770 = vadd.f32 0.0, %v4769
    %4771 = vdwg.mxu0
    %v4772 = vpack.c.bf16 %v4770, %v4770
    %v4774 = vsel %vm56, %v4772, 0
    %4776 = vmatpush.bf16.msra.mxu0 0
    %4777 = vmatpush.bf16.msra.mxu0 0
    %4778 = vmatpush.bf16.msra.mxu0 %v4725
    %4779 = vmatpush.bf16.msra.mxu0 %v4724
    %4780 = vmatpush.bf16.msra.mxu0 %v4723
    %4781 = vmatpush.bf16.msra.mxu0 %v4722
    %4782 = vmatpush.bf16.msra.mxu0 %v4721
    %4783 = vmatpush.bf16.msra.mxu0 %v4720
    %4784 = vmatmul.bf16.gmra.mxu0 %v4774
    %v4785 = vpop.f32.mrf.mxu0
    %v4786 = vadd.f32 0.0, %v4785
    %v4787 = vpop.f32.mrf.mxu0
    %4788 = vdwg.mxu0
    %v4789 = vld [vmem:[%s2 + $0x1b8] sm:$0xff]
    %v4790 = vld [vmem:[%s2 + $0x1c0] sm:$0xff]
    %v4791 = vld [vmem:[%s2 + $0x1c8] sm:$0xff]
    %v4792 = vld [vmem:[%s2 + $0x1d0] sm:$0xff]
    %v4793 = vld [vmem:[%s2 + $0x1d8] sm:$0xff]
    %v4794 = vld [vmem:[%s2 + $0x1e0] sm:$0xff]
    %v4795 = vld [vmem:[%s2 + $0x1e8] sm:$0xff]
    %v4796 = vld [vmem:[%s2 + $0x1f0] sm:$0xff]
    %v4797 = vld [vmem:[%s2 + $0x1f8] sm:$0xff]
    %v4798 = vld [vmem:[%s2 + $0x200] sm:$0xff]
    %v4799 = vld [vmem:[%s2 + $0x208] sm:$0xff]
    %v4800 = vld [vmem:[%s2 + $0x210] sm:$0xff]
    %v4801 = vsel %vm4468, %v4745, 0.0
    %v4802 = vrot.slane %v4801, 4
    %v4803 = vadd.f32 %v4801, %v4802
    %v4804 = vrot.slane %v4803, 2
    %v4805 = vadd.f32 %v4803, %v4804
    %v4806 = vrot.slane %v4805, 1
    %v4807 = vadd.f32 %v4805, %v4806
    %v4808 = vsel %vm4468, %v4786, 0.0
    %v4809 = vrot.slane %v4808, 4
    %v4810 = vadd.f32 %v4808, %v4809
    %v4811 = vrot.slane %v4810, 2
    %v4812 = vadd.f32 %v4810, %v4811
    %v4813 = vrot.slane %v4812, 1
    %v4814 = vadd.f32 %v4812, %v4813
    %v4815 = vadd.f32 %v4807, %v4814
    %v4817 = vsel %vm291, %v4815, 0
    %4819 = vmatpush.msra.mxu0 0.0
    %4820 = vmatpush.msra.mxu0 0.0
    %4821 = vmatpush.msra.mxu0 0.0
    %4822 = vmatpush.msra.mxu0 0.0
    %4823 = vmatpush.msra.mxu0 0.0
    %4824 = vmatpush.msra.mxu0 0.0
    %4825 = vmatpush.msra.mxu0 0.0
    %4826 = vmatpush.msra.mxu0 0.0
    %4827 = vmatpush.msra.mxu0 %v4796
    %4828 = vmatpush.msra.mxu0 %v4795
    %4829 = vmatpush.msra.mxu0 %v4794
    %4830 = vmatpush.msra.mxu0 %v4793
    %4831 = vmatpush.msra.mxu0 %v4792
    %4832 = vmatpush.msra.mxu0 %v4791
    %4833 = vmatpush.msra.mxu0 %v4790
    %4834 = vmatpush.msra.mxu0 %v4789
    %4835 = vmatmul.f32.gmra.mxu0 %v4817
    %v4836 = vpop.f32.mrf.mxu0
    %v4837 = vadd.f32 0.0, %v4836
    %4838 = vdwg.mxu0
    %v4839 = vmul.f32 %v4837, 0.125
    %v4841 = vsel %vm4508, %v4839, 0
    %4843 = vmatpush.msra.mxu0 0.0
    %4844 = vmatpush.msra.mxu0 0.0
    %4845 = vmatpush.msra.mxu0 0.0
    %4846 = vmatpush.msra.mxu0 0.0
    %4847 = vmatpush.msra.mxu0 0.0
    %4848 = vmatpush.msra.mxu0 0.0
    %4849 = vmatpush.msra.mxu0 0.0
    %4850 = vmatpush.msra.mxu0 0.0
    %4851 = vmatpush.msra.mxu0 0.0
    %4852 = vmatpush.msra.mxu0 0.0
    %4853 = vmatpush.msra.mxu0 0.0
    %4854 = vmatpush.msra.mxu0 0.0
    %4855 = vmatpush.msra.mxu0 %v4800
    %4856 = vmatpush.msra.mxu0 %v4799
    %4857 = vmatpush.msra.mxu0 %v4798
    %4858 = vmatpush.msra.mxu0 %v4797
    %4859 = vmatmul.f32.gmra.mxu0 %v4841
    %v4860 = vpop.f32.mrf.mxu0
    %v4861 = vadd.f32 0.0, %v4860
    %4862 = vdwg.mxu0
    %v4863 = vperm.slane %v4861, 0
    %v4864 = vsub.f32 %v4745, %v4863
    %v4865 = vsub.f32 %v4786, %v4863
    %v4866 = vmul.f32 %v4864, %v4864
    %v4867 = vsel %vm4468, %v4866, 0.0
    %v4868 = vrot.slane %v4867, 4
    %v4869 = vadd.f32 %v4867, %v4868
    %v4870 = vrot.slane %v4869, 2
    %v4871 = vadd.f32 %v4869, %v4870
    %v4872 = vrot.slane %v4871, 1
    %v4873 = vadd.f32 %v4871, %v4872
    %v4874 = vmul.f32 %v4865, %v4865
    %v4875 = vsel %vm4468, %v4874, 0.0
    %v4876 = vrot.slane %v4875, 4
    %v4877 = vadd.f32 %v4875, %v4876
    %v4878 = vrot.slane %v4877, 2
    %v4879 = vadd.f32 %v4877, %v4878
    %v4880 = vrot.slane %v4879, 1
    %v4881 = vadd.f32 %v4879, %v4880
    %v4882 = vadd.f32 %v4873, %v4881
    %v4884 = vsel %vm291, %v4882, 0
    %4886 = vmatpush.msra.mxu0 0.0
    %4887 = vmatpush.msra.mxu0 0.0
    %4888 = vmatpush.msra.mxu0 0.0
    %4889 = vmatpush.msra.mxu0 0.0
    %4890 = vmatpush.msra.mxu0 0.0
    %4891 = vmatpush.msra.mxu0 0.0
    %4892 = vmatpush.msra.mxu0 0.0
    %4893 = vmatpush.msra.mxu0 0.0
    %4894 = vmatpush.msra.mxu0 %v4796
    %4895 = vmatpush.msra.mxu0 %v4795
    %4896 = vmatpush.msra.mxu0 %v4794
    %4897 = vmatpush.msra.mxu0 %v4793
    %4898 = vmatpush.msra.mxu0 %v4792
    %4899 = vmatpush.msra.mxu0 %v4791
    %4900 = vmatpush.msra.mxu0 %v4790
    %4901 = vmatpush.msra.mxu0 %v4789
    %4902 = vmatmul.f32.gmra.mxu0 %v4884
    %v4903 = vpop.f32.mrf.mxu0
    %v4904 = vadd.f32 0.0, %v4903
    %4905 = vdwg.mxu0
    %v4906 = vmul.f32 %v4904, 0.125
    %v4907 = vadd.f32 %v4906, 1e-05
    %v4908 = vrsqrt.pop %v4907
    %v4909 = vmul.f32 %v4908, %v4907
    %v4910 = vmul.f32 %v4909, %v4908
    %v4911 = vmul.f32 0.5, %v4910
    %v4912 = vsub.f32 1.5, %v4911
    %v4913 = vmul.f32 %v4908, %v4912
    %vm4914 = vweird.f32 %v4907
    %vm4915 = vweird.f32 %v4908
    %vm4916 = vmor %vm4914, %vm4915
    %v4917 = vsel %vm4916, %v4908, %v4913
    %v4918 = vld [vmem:[%s2 + $0x238] sm:$0x1]
    %v4919 = vld [vmem:[%s2 + $0x240] sm:$0x1]
    %v4920 = vmul.f32 %v4918, %v4917
    %v4922 = vsel %vm4508, %v4920, 0
    %4924 = vmatpush.msra.mxu0 0.0
    %4925 = vmatpush.msra.mxu0 0.0
    %4926 = vmatpush.msra.mxu0 0.0
    %4927 = vmatpush.msra.mxu0 0.0
    %4928 = vmatpush.msra.mxu0 0.0
    %4929 = vmatpush.msra.mxu0 0.0
    %4930 = vmatpush.msra.mxu0 0.0
    %4931 = vmatpush.msra.mxu0 0.0
    %4932 = vmatpush.msra.mxu0 0.0
    %4933 = vmatpush.msra.mxu0 0.0
    %4934 = vmatpush.msra.mxu0 0.0
    %4935 = vmatpush.msra.mxu0 0.0
    %4936 = vmatpush.msra.mxu0 %v4800
    %4937 = vmatpush.msra.mxu0 %v4799
    %4938 = vmatpush.msra.mxu0 %v4798
    %4939 = vmatpush.msra.mxu0 %v4797
    %4940 = vmatmul.f32.gmra.mxu0 %v4922
    %v4941 = vpop.f32.mrf.mxu0
    %v4942 = vadd.f32 0.0, %v4941
    %4943 = vdwg.mxu0
    %v4945 = vsel %vm4508, %v4919, 0
    %4947 = vmatpush.msra.mxu0 0.0
    %4948 = vmatpush.msra.mxu0 0.0
    %4949 = vmatpush.msra.mxu0 0.0
    %4950 = vmatpush.msra.mxu0 0.0
    %4951 = vmatpush.msra.mxu0 0.0
    %4952 = vmatpush.msra.mxu0 0.0
    %4953 = vmatpush.msra.mxu0 0.0
    %4954 = vmatpush.msra.mxu0 0.0
    %4955 = vmatpush.msra.mxu0 0.0
    %4956 = vmatpush.msra.mxu0 0.0
    %4957 = vmatpush.msra.mxu0 0.0
    %4958 = vmatpush.msra.mxu0 0.0
    %4959 = vmatpush.msra.mxu0 %v4800
    %4960 = vmatpush.msra.mxu0 %v4799
    %4961 = vmatpush.msra.mxu0 %v4798
    %4962 = vmatpush.msra.mxu0 %v4797
    %4963 = vmatmul.f32.gmra.mxu0 %v4945
    %v4964 = vpop.f32.mrf.mxu0
    %v4965 = vadd.f32 0.0, %v4964
    %4966 = vdwg.mxu0
    %v4967 = vperm.slane %v4942, 0
    %v4968 = vmul.f32 %v4864, %v4967
    %v4969 = vperm.slane %v4965, 0
    %v4970 = vadd.f32 %v4968, %v4969
    %v4971 = vmul.f32 %v4865, %v4967
    %v4972 = vadd.f32 %v4971, %v4969
    %v4973 = vld [vmem:[#allocation9] sm:$0x3]
    %v4974 = vpack.c.bf16 %v4973, %v4973
    %v4975 = vld [vmem:[#allocation10 + $0x3f4] sm:$0xf]
    %v4976 = vld [vmem:[#allocation10 + $0x3f8] sm:$0xf]
    %v4977 = vld [vmem:[#allocation10 + $0x3fc] sm:$0xf]
    %v4978 = vld [vmem:[#allocation10 + $0x400] sm:$0xf]
    %v4979 = vld [vmem:[#allocation10 + $0x404] sm:$0xf]
    %v4980 = vld [vmem:[#allocation10 + $0x408] sm:$0xf]
    %v4981 = vld [vmem:[#allocation10 + $0x40c] sm:$0xf]
    %v4982 = vld [vmem:[#allocation10 + $0x410] sm:$0xf]
    %v4983 = vld [vmem:[#allocation10 + $0x414] sm:$0xf]
    %v4984 = vld [vmem:[#allocation10 + $0x418] sm:$0xf]
    %v4985 = vld [vmem:[#allocation10 + $0x41c] sm:$0xf]
    %v4986 = vld [vmem:[#allocation10 + $0x420] sm:$0xf]
    %v4987 = vld [vmem:[#allocation10 + $0x424] sm:$0xf]
    %v4988 = vld [vmem:[#allocation10 + $0x428] sm:$0xf]
    %v4989 = vld [vmem:[#allocation10 + $0x42c] sm:$0xf]
    %v4990 = vld [vmem:[#allocation10 + $0x430] sm:$0xf]
    %v4991 = vld [vmem:[#allocation9 + $0x1] sm:$0x3]
    %v4992 = vpack.c.bf16 %v4991, %v4991
    %v4993 = vld [vmem:[#allocation10 + $0x434] sm:$0xf]
    %v4994 = vld [vmem:[#allocation10 + $0x438] sm:$0xf]
    %v4995 = vld [vmem:[#allocation10 + $0x43c] sm:$0xf]
    %v4996 = vld [vmem:[#allocation10 + $0x440] sm:$0xf]
    %v4997 = vld [vmem:[#allocation10 + $0x444] sm:$0xf]
    %v4998 = vld [vmem:[#allocation10 + $0x448] sm:$0xf]
    %v4999 = vld [vmem:[#allocation10 + $0x44c] sm:$0xf]
    %v5000 = vld [vmem:[#allocation10 + $0x450] sm:$0xf]
    %v5001 = vld [vmem:[#allocation10 + $0x454] sm:$0xf]
    %v5002 = vld [vmem:[#allocation10 + $0x458] sm:$0xf]
    %v5003 = vld [vmem:[#allocation10 + $0x45c] sm:$0xf]
    %v5004 = vld [vmem:[#allocation10 + $0x460] sm:$0xf]
    %v5005 = vld [vmem:[#allocation10 + $0x464] sm:$0xf]
    %v5006 = vld [vmem:[#allocation10 + $0x468] sm:$0xf]
    %v5007 = vld [vmem:[#allocation10 + $0x46c] sm:$0xf]
    %v5008 = vld [vmem:[#allocation10 + $0x470] sm:$0xf]
    %v5025 = vunpack.c.l.b16 %v4993
    %v5026 = vunpack.c.l.b16 %v4994
    %v5027 = vunpack.c.l.b16 %v4995
    %v5028 = vunpack.c.l.b16 %v4996
    %v5029 = vunpack.c.l.b16 %v4997
    %v5030 = vunpack.c.l.b16 %v4998
    %v5031 = vunpack.c.l.b16 %v4999
    %v5032 = vunpack.c.l.b16 %v5000
    %v5033 = vunpack.c.l.b16 %v5001
    %v5034 = vunpack.c.l.b16 %v5002
    %v5035 = vunpack.c.l.b16 %v5003
    %v5036 = vunpack.c.l.b16 %v5004
    %v5037 = vunpack.c.l.b16 %v5005
    %v5038 = vunpack.c.l.b16 %v5006
    %v5039 = vunpack.c.l.b16 %v5007
    %v5040 = vunpack.c.l.b16 %v5008
    %v5041 = vpack.c.b16 %v5026, %v5025
    %v5042 = vpack.c.b16 %v5028, %v5027
    %v5043 = vpack.c.b16 %v5030, %v5029
    %v5044 = vpack.c.b16 %v5032, %v5031
    %v5045 = vpack.c.b16 %v5034, %v5033
    %v5046 = vpack.c.b16 %v5036, %v5035
    %v5047 = vpack.c.b16 %v5038, %v5037
    %v5048 = vpack.c.b16 %v5040, %v5039
    %5057 = vmatpush.bf16.msra.mxu0 %v5048
    %5058 = vmatpush.bf16.msra.mxu0 %v5047
    %5059 = vmatpush.bf16.msra.mxu0 %v5046
    %5060 = vmatpush.bf16.msra.mxu0 %v5045
    %5061 = vmatpush.bf16.msra.mxu0 %v5044
    %5062 = vmatpush.bf16.msra.mxu0 %v5043
    %5063 = vmatpush.bf16.msra.mxu0 %v5042
    %5064 = vmatpush.bf16.msra.mxu0 %v5041
    %5065 = vmatmul.bf16.gmra.mxu0 %v4992
    %v5066 = vpop.f32.mrf.mxu0
    %v5067 = vadd.f32 0.0, %v5066
    %v5068 = vpop.f32.mrf.mxu0
    %5069 = vdwg.mxu0
    %v5086 = vunpack.c.l.b16 %v4975
    %v5087 = vunpack.c.l.b16 %v4976
    %v5088 = vunpack.c.l.b16 %v4977
    %v5089 = vunpack.c.l.b16 %v4978
    %v5090 = vunpack.c.l.b16 %v4979
    %v5091 = vunpack.c.l.b16 %v4980
    %v5092 = vunpack.c.l.b16 %v4981
    %v5093 = vunpack.c.l.b16 %v4982
    %v5094 = vunpack.c.l.b16 %v4983
    %v5095 = vunpack.c.l.b16 %v4984
    %v5096 = vunpack.c.l.b16 %v4985
    %v5097 = vunpack.c.l.b16 %v4986
    %v5098 = vunpack.c.l.b16 %v4987
    %v5099 = vunpack.c.l.b16 %v4988
    %v5100 = vunpack.c.l.b16 %v4989
    %v5101 = vunpack.c.l.b16 %v4990
    %v5102 = vpack.c.b16 %v5087, %v5086
    %v5103 = vpack.c.b16 %v5089, %v5088
    %v5104 = vpack.c.b16 %v5091, %v5090
    %v5105 = vpack.c.b16 %v5093, %v5092
    %v5106 = vpack.c.b16 %v5095, %v5094
    %v5107 = vpack.c.b16 %v5097, %v5096
    %v5108 = vpack.c.b16 %v5099, %v5098
    %v5109 = vpack.c.b16 %v5101, %v5100
    %5118 = vmatpush.bf16.msra.mxu0 %v5109
    %5119 = vmatpush.bf16.msra.mxu0 %v5108
    %5120 = vmatpush.bf16.msra.mxu0 %v5107
    %5121 = vmatpush.bf16.msra.mxu0 %v5106
    %5122 = vmatpush.bf16.msra.mxu0 %v5105
    %5123 = vmatpush.bf16.msra.mxu0 %v5104
    %5124 = vmatpush.bf16.msra.mxu0 %v5103
    %5125 = vmatpush.bf16.msra.mxu0 %v5102
    %5126 = vmatmul.bf16.gmra.mxu0 %v4974
    %v5127 = vpop.f32.mrf.mxu0
    %v5128 = vadd.f32 %v5067, %v5127
    %v5129 = vpop.f32.mrf.mxu0
    %5130 = vdwg.mxu0
    %v5131 = vld [vmem:[#allocation9 + $0x2] sm:$0x3]
    %v5132 = vpack.c.bf16 %v5131, %v5131
    %v5133 = vld [vmem:[#allocation10 + $0x474] sm:$0xf]
    %v5134 = vld [vmem:[#allocation10 + $0x478] sm:$0xf]
    %v5135 = vld [vmem:[#allocation10 + $0x47c] sm:$0xf]
    %v5136 = vld [vmem:[#allocation10 + $0x480] sm:$0xf]
    %v5137 = vld [vmem:[#allocation10 + $0x484] sm:$0xf]
    %v5138 = vld [vmem:[#allocation10 + $0x488] sm:$0xf]
    %v5139 = vld [vmem:[#allocation10 + $0x48c] sm:$0xf]
    %v5140 = vld [vmem:[#allocation10 + $0x490] sm:$0xf]
    %v5141 = vld [vmem:[#allocation10 + $0x494] sm:$0xf]
    %v5142 = vld [vmem:[#allocation10 + $0x498] sm:$0xf]
    %v5143 = vld [vmem:[#allocation10 + $0x49c] sm:$0xf]
    %v5144 = vld [vmem:[#allocation10 + $0x4a0] sm:$0xf]
    %v5145 = vld [vmem:[#allocation10 + $0x4a4] sm:$0xf]
    %v5146 = vld [vmem:[#allocation10 + $0x4a8] sm:$0xf]
    %v5147 = vld [vmem:[#allocation10 + $0x4ac] sm:$0xf]
    %v5148 = vld [vmem:[#allocation10 + $0x4b0] sm:$0xf]
    %v5165 = vunpack.c.l.b16 %v5133
    %v5166 = vunpack.c.l.b16 %v5134
    %v5167 = vunpack.c.l.b16 %v5135
    %v5168 = vunpack.c.l.b16 %v5136
    %v5169 = vunpack.c.l.b16 %v5137
    %v5170 = vunpack.c.l.b16 %v5138
    %v5171 = vunpack.c.l.b16 %v5139
    %v5172 = vunpack.c.l.b16 %v5140
    %v5173 = vunpack.c.l.b16 %v5141
    %v5174 = vunpack.c.l.b16 %v5142
    %v5175 = vunpack.c.l.b16 %v5143
    %v5176 = vunpack.c.l.b16 %v5144
    %v5177 = vunpack.c.l.b16 %v5145
    %v5178 = vunpack.c.l.b16 %v5146
    %v5179 = vunpack.c.l.b16 %v5147
    %v5180 = vunpack.c.l.b16 %v5148
    %v5181 = vpack.c.b16 %v5166, %v5165
    %v5182 = vpack.c.b16 %v5168, %v5167
    %v5183 = vpack.c.b16 %v5170, %v5169
    %v5184 = vpack.c.b16 %v5172, %v5171
    %v5185 = vpack.c.b16 %v5174, %v5173
    %v5186 = vpack.c.b16 %v5176, %v5175
    %v5187 = vpack.c.b16 %v5178, %v5177
    %v5188 = vpack.c.b16 %v5180, %v5179
    %5197 = vmatpush.bf16.msra.mxu0 %v5188
    %5198 = vmatpush.bf16.msra.mxu0 %v5187
    %5199 = vmatpush.bf16.msra.mxu0 %v5186
    %5200 = vmatpush.bf16.msra.mxu0 %v5185
    %5201 = vmatpush.bf16.msra.mxu0 %v5184
    %5202 = vmatpush.bf16.msra.mxu0 %v5183
    %5203 = vmatpush.bf16.msra.mxu0 %v5182
    %5204 = vmatpush.bf16.msra.mxu0 %v5181
    %5205 = vmatmul.bf16.gmra.mxu0 %v5132
    %v5206 = vpop.f32.mrf.mxu0
    %v5207 = vadd.f32 0.0, %v5206
    %v5208 = vpop.f32.mrf.mxu0
    %5209 = vdwg.mxu0
    %v5210 = vadd.f32 %v5128, %v5207
    %v5211 = vld [vmem:[#allocation9 + $0x4] sm:$0x3]
    %v5212 = vpack.c.bf16 %v5211, %v5211
    %v5213 = vld [vmem:[#allocation9 + $0x5] sm:$0x3]
    %v5214 = vpack.c.bf16 %v5213, %v5213
    %5215 = vmatpush.bf16.msra.mxu0 %v5048
    %5216 = vmatpush.bf16.msra.mxu0 %v5047
    %5217 = vmatpush.bf16.msra.mxu0 %v5046
    %5218 = vmatpush.bf16.msra.mxu0 %v5045
    %5219 = vmatpush.bf16.msra.mxu0 %v5044
    %5220 = vmatpush.bf16.msra.mxu0 %v5043
    %5221 = vmatpush.bf16.msra.mxu0 %v5042
    %5222 = vmatpush.bf16.msra.mxu0 %v5041
    %5223 = vmatmul.bf16.gmra.mxu0 %v5214
    %v5224 = vpop.f32.mrf.mxu0
    %v5225 = vadd.f32 0.0, %v5224
    %v5226 = vpop.f32.mrf.mxu0
    %5227 = vdwg.mxu0
    %5228 = vmatpush.bf16.msra.mxu0 %v5109
    %5229 = vmatpush.bf16.msra.mxu0 %v5108
    %5230 = vmatpush.bf16.msra.mxu0 %v5107
    %5231 = vmatpush.bf16.msra.mxu0 %v5106
    %5232 = vmatpush.bf16.msra.mxu0 %v5105
    %5233 = vmatpush.bf16.msra.mxu0 %v5104
    %5234 = vmatpush.bf16.msra.mxu0 %v5103
    %5235 = vmatpush.bf16.msra.mxu0 %v5102
    %5236 = vmatmul.bf16.gmra.mxu0 %v5212
    %v5237 = vpop.f32.mrf.mxu0
    %v5238 = vadd.f32 %v5225, %v5237
    %v5239 = vpop.f32.mrf.mxu0
    %5240 = vdwg.mxu0
    %v5241 = vld [vmem:[#allocation9 + $0x6] sm:$0x3]
    %v5242 = vpack.c.bf16 %v5241, %v5241
    %5243 = vmatpush.bf16.msra.mxu0 %v5188
    %5244 = vmatpush.bf16.msra.mxu0 %v5187
    %5245 = vmatpush.bf16.msra.mxu0 %v5186
    %5246 = vmatpush.bf16.msra.mxu0 %v5185
    %5247 = vmatpush.bf16.msra.mxu0 %v5184
    %5248 = vmatpush.bf16.msra.mxu0 %v5183
    %5249 = vmatpush.bf16.msra.mxu0 %v5182
    %5250 = vmatpush.bf16.msra.mxu0 %v5181
    %5251 = vmatmul.bf16.gmra.mxu0 %v5242
    %v5252 = vpop.f32.mrf.mxu0
    %v5253 = vadd.f32 0.0, %v5252
    %v5254 = vpop.f32.mrf.mxu0
    %5255 = vdwg.mxu0
    %v5256 = vadd.f32 %v5238, %v5253
    %v5257 = vsel %vm4468, %v5210, 0.0
    %v5258 = vrot.slane %v5257, 4
    %v5259 = vadd.f32 %v5257, %v5258
    %v5260 = vrot.slane %v5259, 2
    %v5261 = vadd.f32 %v5259, %v5260
    %v5262 = vrot.slane %v5261, 1
    %v5263 = vadd.f32 %v5261, %v5262
    %v5264 = vsel %vm4468, %v5256, 0.0
    %v5265 = vrot.slane %v5264, 4
    %v5266 = vadd.f32 %v5264, %v5265
    %v5267 = vrot.slane %v5266, 2
    %v5268 = vadd.f32 %v5266, %v5267
    %v5269 = vrot.slane %v5268, 1
    %v5270 = vadd.f32 %v5268, %v5269
    %v5271 = vadd.f32 %v5263, %v5270
    %v5273 = vsel %vm291, %v5271, 0
    %5275 = vmatpush.msra.mxu0 0.0
    %5276 = vmatpush.msra.mxu0 0.0
    %5277 = vmatpush.msra.mxu0 0.0
    %5278 = vmatpush.msra.mxu0 0.0
    %5279 = vmatpush.msra.mxu0 0.0
    %5280 = vmatpush.msra.mxu0 0.0
    %5281 = vmatpush.msra.mxu0 0.0
    %5282 = vmatpush.msra.mxu0 0.0
    %5283 = vmatpush.msra.mxu0 %v4796
    %5284 = vmatpush.msra.mxu0 %v4795
    %5285 = vmatpush.msra.mxu0 %v4794
    %5286 = vmatpush.msra.mxu0 %v4793
    %5287 = vmatpush.msra.mxu0 %v4792
    %5288 = vmatpush.msra.mxu0 %v4791
    %5289 = vmatpush.msra.mxu0 %v4790
    %5290 = vmatpush.msra.mxu0 %v4789
    %5291 = vmatmul.f32.gmra.mxu0 %v5273
    %v5292 = vpop.f32.mrf.mxu0
    %v5293 = vadd.f32 0.0, %v5292
    %5294 = vdwg.mxu0
    %v5295 = vmul.f32 %v5293, 0.125
    %v5297 = vsel %vm4508, %v5295, 0
    %5299 = vmatpush.msra.mxu0 0.0
    %5300 = vmatpush.msra.mxu0 0.0
    %5301 = vmatpush.msra.mxu0 0.0
    %5302 = vmatpush.msra.mxu0 0.0
    %5303 = vmatpush.msra.mxu0 0.0
    %5304 = vmatpush.msra.mxu0 0.0
    %5305 = vmatpush.msra.mxu0 0.0
    %5306 = vmatpush.msra.mxu0 0.0
    %5307 = vmatpush.msra.mxu0 0.0
    %5308 = vmatpush.msra.mxu0 0.0
    %5309 = vmatpush.msra.mxu0 0.0
    %5310 = vmatpush.msra.mxu0 0.0
    %5311 = vmatpush.msra.mxu0 %v4800
    %5312 = vmatpush.msra.mxu0 %v4799
    %5313 = vmatpush.msra.mxu0 %v4798
    %5314 = vmatpush.msra.mxu0 %v4797
    %5315 = vmatmul.f32.gmra.mxu0 %v5297
    %v5316 = vpop.f32.mrf.mxu0
    %v5317 = vadd.f32 0.0, %v5316
    %5318 = vdwg.mxu0
    %v5319 = vperm.slane %v5317, 0
    %v5320 = vsub.f32 %v5210, %v5319
    %v5321 = vsub.f32 %v5256, %v5319
    %v5322 = vmul.f32 %v5320, %v5320
    %v5323 = vsel %vm4468, %v5322, 0.0
    %v5324 = vrot.slane %v5323, 4
    %v5325 = vadd.f32 %v5323, %v5324
    %v5326 = vrot.slane %v5325, 2
    %v5327 = vadd.f32 %v5325, %v5326
    %v5328 = vrot.slane %v5327, 1
    %v5329 = vadd.f32 %v5327, %v5328
    %v5330 = vmul.f32 %v5321, %v5321
    %v5331 = vsel %vm4468, %v5330, 0.0
    %v5332 = vrot.slane %v5331, 4
    %v5333 = vadd.f32 %v5331, %v5332
    %v5334 = vrot.slane %v5333, 2
    %v5335 = vadd.f32 %v5333, %v5334
    %v5336 = vrot.slane %v5335, 1
    %v5337 = vadd.f32 %v5335, %v5336
    %v5338 = vadd.f32 %v5329, %v5337
    %v5340 = vsel %vm291, %v5338, 0
    %5342 = vmatpush.msra.mxu0 0.0
    %5343 = vmatpush.msra.mxu0 0.0
    %5344 = vmatpush.msra.mxu0 0.0
    %5345 = vmatpush.msra.mxu0 0.0
    %5346 = vmatpush.msra.mxu0 0.0
    %5347 = vmatpush.msra.mxu0 0.0
    %5348 = vmatpush.msra.mxu0 0.0
    %5349 = vmatpush.msra.mxu0 0.0
    %5350 = vmatpush.msra.mxu0 %v4796
    %5351 = vmatpush.msra.mxu0 %v4795
    %5352 = vmatpush.msra.mxu0 %v4794
    %5353 = vmatpush.msra.mxu0 %v4793
    %5354 = vmatpush.msra.mxu0 %v4792
    %5355 = vmatpush.msra.mxu0 %v4791
    %5356 = vmatpush.msra.mxu0 %v4790
    %5357 = vmatpush.msra.mxu0 %v4789
    %5358 = vmatmul.f32.gmra.mxu0 %v5340
    %v5359 = vpop.f32.mrf.mxu0
    %v5360 = vadd.f32 0.0, %v5359
    %5361 = vdwg.mxu0
    %v5362 = vmul.f32 %v5360, 0.125
    %v5363 = vadd.f32 %v5362, 1e-05
    %v5364 = vrsqrt.pop %v5363
    %v5365 = vmul.f32 %v5364, %v5363
    %v5366 = vmul.f32 %v5365, %v5364
    %v5367 = vmul.f32 0.5, %v5366
    %v5368 = vsub.f32 1.5, %v5367
    %v5369 = vmul.f32 %v5364, %v5368
    %vm5370 = vweird.f32 %v5363
    %vm5371 = vweird.f32 %v5364
    %vm5372 = vmor %vm5370, %vm5371
    %v5373 = vsel %vm5372, %v5364, %v5369
    %v5374 = vld [vmem:[%s2 + $0x228] sm:$0x1]
    %v5375 = vld [vmem:[%s2 + $0x230] sm:$0x1]
    %v5376 = vmul.f32 %v5374, %v5373
    %v5378 = vsel %vm4508, %v5376, 0
    %5380 = vmatpush.msra.mxu0 0.0
    %5381 = vmatpush.msra.mxu0 0.0
    %5382 = vmatpush.msra.mxu0 0.0
    %5383 = vmatpush.msra.mxu0 0.0
    %5384 = vmatpush.msra.mxu0 0.0
    %5385 = vmatpush.msra.mxu0 0.0
    %5386 = vmatpush.msra.mxu0 0.0
    %5387 = vmatpush.msra.mxu0 0.0
    %5388 = vmatpush.msra.mxu0 0.0
    %5389 = vmatpush.msra.mxu0 0.0
    %5390 = vmatpush.msra.mxu0 0.0
    %5391 = vmatpush.msra.mxu0 0.0
    %5392 = vmatpush.msra.mxu0 %v4800
    %5393 = vmatpush.msra.mxu0 %v4799
    %5394 = vmatpush.msra.mxu0 %v4798
    %5395 = vmatpush.msra.mxu0 %v4797
    %5396 = vmatmul.f32.gmra.mxu0 %v5378
    %v5397 = vpop.f32.mrf.mxu0
    %v5398 = vadd.f32 0.0, %v5397
    %5399 = vdwg.mxu0
    %v5401 = vsel %vm4508, %v5375, 0
    %5403 = vmatpush.msra.mxu0 0.0
    %5404 = vmatpush.msra.mxu0 0.0
    %5405 = vmatpush.msra.mxu0 0.0
    %5406 = vmatpush.msra.mxu0 0.0
    %5407 = vmatpush.msra.mxu0 0.0
    %5408 = vmatpush.msra.mxu0 0.0
    %5409 = vmatpush.msra.mxu0 0.0
    %5410 = vmatpush.msra.mxu0 0.0
    %5411 = vmatpush.msra.mxu0 0.0
    %5412 = vmatpush.msra.mxu0 0.0
    %5413 = vmatpush.msra.mxu0 0.0
    %5414 = vmatpush.msra.mxu0 0.0
    %5415 = vmatpush.msra.mxu0 %v4800
    %5416 = vmatpush.msra.mxu0 %v4799
    %5417 = vmatpush.msra.mxu0 %v4798
    %5418 = vmatpush.msra.mxu0 %v4797
    %5419 = vmatmul.f32.gmra.mxu0 %v5401
    %v5420 = vpop.f32.mrf.mxu0
    %v5421 = vadd.f32 0.0, %v5420
    %5422 = vdwg.mxu0
    %v5423 = vperm.slane %v5398, 0
    %v5424 = vmul.f32 %v5320, %v5423
    %v5425 = vperm.slane %v5421, 0
    %v5426 = vadd.f32 %v5424, %v5425
    %v5427 = vadd.f32 %v5426, %v4970
    %v5428 = vmax.f32 %v5427, 0.0
    %v5429 = vmul.f32 %v5321, %v5423
    %v5430 = vadd.f32 %v5429, %v5425
    %v5431 = vadd.f32 %v5430, %v4972
    %v5432 = vmax.f32 %v5431, 0.0
    %5433 = vst.msk [vmem:[%s3] sm:$0x3] %vm4468, %v5428
    %5434 = vst.msk [vmem:[%s3 + $0x2] sm:$0x3] %vm4468, %v5432
    // Predicated region
    $region18: #{_lambda_.1} parent=1 // pred_check
      _
    $region19: #{_lambda_.1} parent=1 // pred_check_branch
      %5436 = sbr.rel (0) target = $region21
    $region20: #{_lambda_.1} parent=1 // pred_region
      _
    $region21: #{_lambda_.1} parent=1 // pred_fallthru
      _
    // Predicated region
    $region22: #{_lambda_.1} parent=1 // pred_check
      _
    $region23: #{_lambda_.1} parent=1 // pred_check_branch
      %5438 = sbr.rel (0) target = $region25
    $region24: #{_lambda_.1} parent=1 // pred_region
      _
    $region25: #{_lambda_.1} parent=1 // pred_fallthru
      _
    %5439 = vsyncpa [#allocation11], 1

</llo_original>
